<compile_context>
chip_gen: v5e
topology: v5e:2x2
jax: 0.10.0
libtpu: 0.0.40
codegen_flags: <defaults>
</compile_context>

<pallas_src>
import math

import numpy as np
import jax
import jax.numpy as jnp
from jax.experimental import pallas as pl
from jax.experimental.pallas import tpu as pltpu

_C1 = 0.01 ** 2
_C2 = 0.03 ** 2


def gaussian_window_1d(window_size: int, sigma: float) -> np.ndarray:
    center = window_size // 2
    g = np.array(
        [math.exp(-((x - center) ** 2) / float(2 * sigma ** 2)) for x in range(window_size)],
        dtype=np.float64,
    )
    g = g / g.sum()
    return g.astype(np.float32)


def _band_matrices(H: int, W: int, window_size: int, sigma: float = 1.5):
    """Banded, symmetric matrices implementing the separable 'same' (zero-padded) blur.

    Row blur along H:  blurred = A @ X   with A (H, H)
    Col blur along W:  blurred = X @ B   with B (W, W)
    Out-of-range taps are simply absent (== zero padding), matching F.conv2d.
    Both matrices are symmetric (the Gaussian window is symmetric), so the row
    blur can equally be applied as a right-multiply: (X^T) @ A.
    """
    g = gaussian_window_1d(window_size, sigma)
    pad = window_size // 2
    A = np.zeros((H, H), np.float32)
    for i in range(H):
        for k in range(max(0, i - pad), min(H, i + pad + 1)):
            A[i, k] = g[k - i + pad]
    B = np.zeros((W, W), np.float32)
    for j in range(W):
        for k in range(max(0, j - pad), min(W, j + pad + 1)):
            B[k, j] = g[k - j + pad]
    return A, B


def _make_ssim_kernel(Bp: int, H: int, W: int):
    def kernel(x_ref, y_ref, a_ref, b_ref, out_ref):
        A = a_ref[...]  # (H, H) symmetric row-blur matrix
        B = b_ref[...]  # (W, W) symmetric col-blur matrix

        # Fold the (pred + 1) / 2 rescale into the kernel (no extra HBM pass).
        x = (x_ref[...].astype(jnp.float32) + 1.0) * 0.5  # (Bp, H, W)
        y = (y_ref[...].astype(jnp.float32) + 1.0) * 0.5

        def blur(m):  # (Bp, H, W) -> (Bp*W, H), fully on the MXU
            # W-blur: batch folded into M (free reshape, no weight broadcast).
            z = jnp.dot(m.reshape(Bp * H, W), B,
                        preferred_element_type=jnp.float32,
                        precision=jax.lax.Precision.HIGHEST)
            # Single minor-dims relayout so the H-blur is also a plain 2-D matmul.
            z = jnp.transpose(z.reshape(Bp, H, W), (0, 2, 1)).reshape(Bp * W, H)
            # H-blur: right-multiply by (symmetric) A.
            return jnp.dot(z, A,
                           preferred_element_type=jnp.float32,
                           precision=jax.lax.Precision.HIGHEST)

        # Elementwise SSIM math stays in the (Bp*W, H) post-matmul layout.
        mu1 = blur(x)
        mu2 = blur(y)
        e11 = blur(x * x)
        e22 = blur(y * y)
        e12 = blur(x * y)

        mu1_sq = mu1 * mu1
        mu2_sq = mu2 * mu2
        mu1_mu2 = mu1 * mu2
        sigma1_sq = e11 - mu1_sq
        sigma2_sq = e22 - mu2_sq
        sigma12 = e12 - mu1_mu2

        numer = (2.0 * mu1_mu2 + _C1) * (2.0 * sigma12 + _C2)
        denom = (mu1_sq + mu2_sq + _C1) * (sigma1_sq + sigma2_sq + _C2)
        # EUP approx reciprocal + one Newton step (~1e-7 rel err) instead of a
        # VALU-path divide; denom >= C1*C2 > 0 so this is always well-defined.
        r = pl.reciprocal(denom, approx=True)
        r = r * (2.0 - denom * r)
        ssim_map = numer * r

        # One partial sum per grid step (no per-plane masking loop); padded tail
        # planes contribute exactly H*W each and are subtracted in the wrapper.
        out_ref[...] = jnp.reshape(jnp.sum(ssim_map), (1, 1, 1))

    return kernel


def _vmem_budget_bytes():
    """(working-set budget used to size Bp, compiler vmem limit) per TPU generation."""
    try:
        cap = pltpu.get_tpu_info().vmem_capacity_bytes
    except Exception:
        cap = 64 << 20  # conservative default (v7x-class)
    if cap <= (64 << 20):
        # v7x: 64 MiB per TensorCore, and megacore "parallel" duplicates the
        # working set per core -> stay well inside.
        return 14 << 20, 40 << 20
    # v5e / v6e: 128 MiB physical (default scoped limit is only 16/32 MiB, so
    # raise vmem_limit_bytes explicitly).
    return 28 << 20, 80 << 20


def _choose_plane_batch(nc: int, h: int, w: int, budget_bytes: int) -> int:
    """Planes per grid step.  ~20 live f32 (H, W) slabs per plane in-kernel
    (x, y, 5 blurred maps, blur/epilogue temps, double-buffered input blocks)."""
    per_plane = 20 * h * w * 4
    bp = budget_bytes // max(per_plane, 1)
    return int(max(1, min(nc, bp, 1024)))


def ssim_loss_pallas(pred: jax.Array, target: jax.Array, window_size: int = 11) -> jax.Array:
    """1 - SSIM(pred, target), matching SSIMLoss.forward with size_average=True."""
    assert pred.shape == target.shape and pred.ndim == 4
    N, C, H, W = pred.shape
    NC = N * C

    budget, vmem_limit = _vmem_budget_bytes()
    Bp = _choose_plane_batch(NC, H, W, budget)
    n_blocks = -(-NC // Bp)
    NC_pad = n_blocks * Bp
    padn = NC_pad - NC

    x = pred.reshape(NC, H, W)
    y = target.reshape(NC, H, W)
    if padn:
        x = jnp.pad(x, ((0, padn), (0, 0), (0, 0)))
        y = jnp.pad(y, ((0, padn), (0, 0), (0, 0)))

    A_np, B_np = _band_matrices(H, W, window_size, sigma=1.5)
    A = jnp.asarray(A_np)
    Bm = jnp.asarray(B_np)

    kernel = _make_ssim_kernel(Bp, H, W)

    partials = pl.pallas_call(
        kernel,
        out_shape=jax.ShapeDtypeStruct((n_blocks, 1, 1), jnp.float32),
        grid=(n_blocks,),
        in_specs=[
            pl.BlockSpec((Bp, H, W), lambda i: (i, 0, 0)),
            pl.BlockSpec((Bp, H, W), lambda i: (i, 0, 0)),
            pl.BlockSpec((H, H), lambda i: (0, 0)),
            pl.BlockSpec((W, W), lambda i: (0, 0)),
        ],
        # Each grid step writes its own partial sum -> axis stays "parallel"
        # (megacore on v7x); the tiny per-step store is amortized by a large Bp.
        out_specs=pl.BlockSpec((1, 1, 1), lambda i: (i, 0, 0)),
        compiler_params=pltpu.CompilerParams(
            dimension_semantics=("parallel",),
            vmem_limit_bytes=vmem_limit,
        ),
    )(x, y, A, Bm)

    # Padded tail planes have pred == target == 0 through identical pipelines,
    # so each contributes exactly 1.0 * H * W to the summed SSIM map.
    total = jnp.sum(partials) - jnp.float32(padn * H * W)
    mean_ssim = total / jnp.float32(NC * H * W)
    return 1.0 - mean_ssim


def ssim_loss_reference(pred: jax.Array, target: jax.Array, window_size: int = 11) -> jax.Array:
    """Pure-JAX reference mirroring the PyTorch module (for validation only)."""
    N, C, H, W = pred.shape
    pad = window_size // 2
    x = (pred.astype(jnp.float32) + 1.0) / 2.0
    y = (target.astype(jnp.float32) + 1.0) / 2.0
    g = gaussian_window_1d(window_size, 1.5)
    w2d = jnp.asarray(np.outer(g, g).astype(np.float32))
    wconv = jnp.broadcast_to(w2d[None, None], (C, 1, window_size, window_size))

    def conv(img):
        return jax.lax.conv_general_dilated(
            img, wconv, window_strides=(1, 1), padding=[(pad, pad), (pad, pad)],
            feature_group_count=C, dimension_numbers=("NCHW", "OIHW", "NCHW"),
            precision=jax.lax.Precision.HIGHEST,
        )

    mu1, mu2 = conv(x), conv(y)
    mu1_sq, mu2_sq, mu1_mu2 = mu1 * mu1, mu2 * mu2, mu1 * mu2
    sigma1_sq = conv(x * x) - mu1_sq
    sigma2_sq = conv(y * y) - mu2_sq
    sigma12 = conv(x * y) - mu1_mu2
    ssim_map = ((2 * mu1_mu2 + _C1) * (2 * sigma12 + _C2)) / (
        (mu1_sq + mu2_sq + _C1) * (sigma1_sq + sigma2_sq + _C2))
    return 1.0 - jnp.mean(ssim_map)


if __name__ == "__main__":
    key = jax.random.PRNGKey(0)
    k1, k2 = jax.random.split(key)
    # SSIM inputs are expected in [-1, 1] (the forward rescales them to [0, 1]).
    pred = jax.random.uniform(k1, (2, 4, 16, 16), jnp.float32, minval=-1.0, maxval=1.0)
    target = jax.random.uniform(k2, (2, 4, 16, 16), jnp.float32, minval=-1.0, maxval=1.0)

    loss = jax.block_until_ready(ssim_loss_pallas(pred, target))
    loss_ref = jax.block_until_ready(ssim_loss_reference(pred, target))

    assert np.isfinite(float(loss))
    assert abs(float(loss) - float(loss_ref)) < 1e-4, (float(loss), float(loss_ref))
    print("KERNEL_OK")
</pallas_src>

<mosaic_0001>
module attributes {stable_mosaic.version = 11 : i64} {
  func.func @kernel(%arg0: i32, %arg1: memref<8x16x16xf32, #tpu.memory_space<vmem>>, %arg2: memref<8x16x16xf32, #tpu.memory_space<vmem>>, %arg3: memref<16x16xf32, #tpu.memory_space<vmem>>, %arg4: memref<16x16xf32, #tpu.memory_space<vmem>>, %arg5: memref<1x1x1xf32, #tpu.memory_space<vmem>>) attributes {dimension_semantics = [#tpu.dimension_semantics<parallel>], iteration_bounds = array<i64: 1>, scalar_prefetch = 0 : i64, scratch_operands = 0 : i64, tpu.core_type = #tpu.core_type<tc>, window_params = [{transform_indices = @transform_0, window_bounds = array<i64: 8, 16, 16>}, {transform_indices = @transform_1, window_bounds = array<i64: 8, 16, 16>}, {pipeline_mode = #tpu.pipeline_mode<synchronous>, transform_indices = @transform_2, window_bounds = array<i64: 16, 16>}, {pipeline_mode = #tpu.pipeline_mode<synchronous>, transform_indices = @transform_3, window_bounds = array<i64: 16, 16>}, {transform_indices = @transform_4, window_bounds = array<i64: 1, 1, 1>}]} {
    %c0 = arith.constant 0 : index
    %c0_0 = arith.constant 0 : index
    %0 = vector.load %arg3[%c0, %c0_0] : memref<16x16xf32, #tpu.memory_space<vmem>>, vector<16x16xf32>
    %c0_1 = arith.constant 0 : index
    %c0_2 = arith.constant 0 : index
    %1 = vector.load %arg4[%c0_1, %c0_2] : memref<16x16xf32, #tpu.memory_space<vmem>>, vector<16x16xf32>
    %c0_3 = arith.constant 0 : index
    %c0_4 = arith.constant 0 : index
    %c0_5 = arith.constant 0 : index
    %2 = vector.load %arg1[%c0_3, %c0_4, %c0_5] : memref<8x16x16xf32, #tpu.memory_space<vmem>>, vector<8x16x16xf32>
    %cst = arith.constant 1.000000e+00 : f32
    %3 = vector.broadcast %cst : f32 to vector<8x16x16xf32>
    %4 = arith.addf %2, %3 : vector<8x16x16xf32>
    %cst_6 = arith.constant 5.000000e-01 : f32
    %5 = vector.broadcast %cst_6 : f32 to vector<8x16x16xf32>
    %6 = arith.mulf %4, %5 : vector<8x16x16xf32>
    %c0_7 = arith.constant 0 : index
    %c0_8 = arith.constant 0 : index
    %c0_9 = arith.constant 0 : index
    %7 = vector.load %arg2[%c0_7, %c0_8, %c0_9] : memref<8x16x16xf32, #tpu.memory_space<vmem>>, vector<8x16x16xf32>
    %cst_10 = arith.constant 1.000000e+00 : f32
    %8 = vector.broadcast %cst_10 : f32 to vector<8x16x16xf32>
    %9 = arith.addf %7, %8 : vector<8x16x16xf32>
    %cst_11 = arith.constant 5.000000e-01 : f32
    %10 = vector.broadcast %cst_11 : f32 to vector<8x16x16xf32>
    %11 = arith.mulf %9, %10 : vector<8x16x16xf32>
    %12 = vector.shape_cast %6 : vector<8x16x16xf32> to vector<128x16xf32>
    %cst_12 = arith.constant dense<0.000000e+00> : vector<128x16xf32>
    %13 = tpu.matmul %12, %1, %cst_12 {dimension_numbers = #tpu.dot_dimension_numbers<[1], [0], [0], [1], [0, 0, 1, 1], [], []>, precision = #tpu.contract_precision<fp32>} : vector<128x16xf32>, vector<16x16xf32>, vector<128x16xf32> -> vector<128x16xf32>
    %14 = vector.shape_cast %13 : vector<128x16xf32> to vector<8x16x16xf32>
    %15 = tpu.transpose %14, [0, 2, 1] : vector<8x16x16xf32> -> vector<8x16x16xf32>
    %16 = vector.shape_cast %15 : vector<8x16x16xf32> to vector<128x16xf32>
    %cst_13 = arith.constant dense<0.000000e+00> : vector<128x16xf32>
    %17 = tpu.matmul %16, %0, %cst_13 {dimension_numbers = #tpu.dot_dimension_numbers<[1], [0], [0], [1], [0, 0, 1, 1], [], []>, precision = #tpu.contract_precision<fp32>} : vector<128x16xf32>, vector<16x16xf32>, vector<128x16xf32> -> vector<128x16xf32>
    %18 = vector.shape_cast %11 : vector<8x16x16xf32> to vector<128x16xf32>
    %cst_14 = arith.constant dense<0.000000e+00> : vector<128x16xf32>
    %19 = tpu.matmul %18, %1, %cst_14 {dimension_numbers = #tpu.dot_dimension_numbers<[1], [0], [0], [1], [0, 0, 1, 1], [], []>, precision = #tpu.contract_precision<fp32>} : vector<128x16xf32>, vector<16x16xf32>, vector<128x16xf32> -> vector<128x16xf32>
    %20 = vector.shape_cast %19 : vector<128x16xf32> to vector<8x16x16xf32>
    %21 = tpu.transpose %20, [0, 2, 1] : vector<8x16x16xf32> -> vector<8x16x16xf32>
    %22 = vector.shape_cast %21 : vector<8x16x16xf32> to vector<128x16xf32>
    %cst_15 = arith.constant dense<0.000000e+00> : vector<128x16xf32>
    %23 = tpu.matmul %22, %0, %cst_15 {dimension_numbers = #tpu.dot_dimension_numbers<[1], [0], [0], [1], [0, 0, 1, 1], [], []>, precision = #tpu.contract_precision<fp32>} : vector<128x16xf32>, vector<16x16xf32>, vector<128x16xf32> -> vector<128x16xf32>
    %24 = arith.mulf %6, %6 : vector<8x16x16xf32>
    %25 = vector.shape_cast %24 : vector<8x16x16xf32> to vector<128x16xf32>
    %cst_16 = arith.constant dense<0.000000e+00> : vector<128x16xf32>
    %26 = tpu.matmul %25, %1, %cst_16 {dimension_numbers = #tpu.dot_dimension_numbers<[1], [0], [0], [1], [0, 0, 1, 1], [], []>, precision = #tpu.contract_precision<fp32>} : vector<128x16xf32>, vector<16x16xf32>, vector<128x16xf32> -> vector<128x16xf32>
    %27 = vector.shape_cast %26 : vector<128x16xf32> to vector<8x16x16xf32>
    %28 = tpu.transpose %27, [0, 2, 1] : vector<8x16x16xf32> -> vector<8x16x16xf32>
    %29 = vector.shape_cast %28 : vector<8x16x16xf32> to vector<128x16xf32>
    %cst_17 = arith.constant dense<0.000000e+00> : vector<128x16xf32>
    %30 = tpu.matmul %29, %0, %cst_17 {dimension_numbers = #tpu.dot_dimension_numbers<[1], [0], [0], [1], [0, 0, 1, 1], [], []>, precision = #tpu.contract_precision<fp32>} : vector<128x16xf32>, vector<16x16xf32>, vector<128x16xf32> -> vector<128x16xf32>
    %31 = arith.mulf %11, %11 : vector<8x16x16xf32>
    %32 = vector.shape_cast %31 : vector<8x16x16xf32> to vector<128x16xf32>
    %cst_18 = arith.constant dense<0.000000e+00> : vector<128x16xf32>
    %33 = tpu.matmul %32, %1, %cst_18 {dimension_numbers = #tpu.dot_dimension_numbers<[1], [0], [0], [1], [0, 0, 1, 1], [], []>, precision = #tpu.contract_precision<fp32>} : vector<128x16xf32>, vector<16x16xf32>, vector<128x16xf32> -> vector<128x16xf32>
    %34 = vector.shape_cast %33 : vector<128x16xf32> to vector<8x16x16xf32>
    %35 = tpu.transpose %34, [0, 2, 1] : vector<8x16x16xf32> -> vector<8x16x16xf32>
    %36 = vector.shape_cast %35 : vector<8x16x16xf32> to vector<128x16xf32>
    %cst_19 = arith.constant dense<0.000000e+00> : vector<128x16xf32>
    %37 = tpu.matmul %36, %0, %cst_19 {dimension_numbers = #tpu.dot_dimension_numbers<[1], [0], [0], [1], [0, 0, 1, 1], [], []>, precision = #tpu.contract_precision<fp32>} : vector<128x16xf32>, vector<16x16xf32>, vector<128x16xf32> -> vector<128x16xf32>
    %38 = arith.mulf %6, %11 : vector<8x16x16xf32>
    %39 = vector.shape_cast %38 : vector<8x16x16xf32> to vector<128x16xf32>
    %cst_20 = arith.constant dense<0.000000e+00> : vector<128x16xf32>
    %40 = tpu.matmul %39, %1, %cst_20 {dimension_numbers = #tpu.dot_dimension_numbers<[1], [0], [0], [1], [0, 0, 1, 1], [], []>, precision = #tpu.contract_precision<fp32>} : vector<128x16xf32>, vector<16x16xf32>, vector<128x16xf32> -> vector<128x16xf32>
    %41 = vector.shape_cast %40 : vector<128x16xf32> to vector<8x16x16xf32>
    %42 = tpu.transpose %41, [0, 2, 1] : vector<8x16x16xf32> -> vector<8x16x16xf32>
    %43 = vector.shape_cast %42 : vector<8x16x16xf32> to vector<128x16xf32>
    %cst_21 = arith.constant dense<0.000000e+00> : vector<128x16xf32>
    %44 = tpu.matmul %43, %0, %cst_21 {dimension_numbers = #tpu.dot_dimension_numbers<[1], [0], [0], [1], [0, 0, 1, 1], [], []>, precision = #tpu.contract_precision<fp32>} : vector<128x16xf32>, vector<16x16xf32>, vector<128x16xf32> -> vector<128x16xf32>
    %45 = arith.mulf %17, %17 : vector<128x16xf32>
    %46 = arith.mulf %23, %23 : vector<128x16xf32>
    %47 = arith.mulf %17, %23 : vector<128x16xf32>
    %48 = arith.subf %30, %45 : vector<128x16xf32>
    %49 = arith.subf %37, %46 : vector<128x16xf32>
    %50 = arith.subf %44, %47 : vector<128x16xf32>
    %cst_22 = arith.constant 2.000000e+00 : f32
    %51 = vector.broadcast %cst_22 : f32 to vector<128x16xf32>
    %52 = arith.mulf %51, %47 : vector<128x16xf32>
    %cst_23 = arith.constant 9.99999974E-5 : f32
    %53 = vector.broadcast %cst_23 : f32 to vector<128x16xf32>
    %54 = arith.addf %52, %53 : vector<128x16xf32>
    %cst_24 = arith.constant 2.000000e+00 : f32
    %55 = vector.broadcast %cst_24 : f32 to vector<128x16xf32>
    %56 = arith.mulf %55, %50 : vector<128x16xf32>
    %cst_25 = arith.constant 8.99999984E-4 : f32
    %57 = vector.broadcast %cst_25 : f32 to vector<128x16xf32>
    %58 = arith.addf %56, %57 : vector<128x16xf32>
    %59 = arith.mulf %54, %58 : vector<128x16xf32>
    %60 = arith.addf %45, %46 : vector<128x16xf32>
    %cst_26 = arith.constant 9.99999974E-5 : f32
    %61 = vector.broadcast %cst_26 : f32 to vector<128x16xf32>
    %62 = arith.addf %60, %61 : vector<128x16xf32>
    %63 = arith.addf %48, %49 : vector<128x16xf32>
    %cst_27 = arith.constant 8.99999984E-4 : f32
    %64 = vector.broadcast %cst_27 : f32 to vector<128x16xf32>
    %65 = arith.addf %63, %64 : vector<128x16xf32>
    %66 = arith.mulf %62, %65 : vector<128x16xf32>
    %67 = tpu.reciprocal %66 {approx = true} : vector<128x16xf32> -> vector<128x16xf32>
    %68 = arith.mulf %66, %67 : vector<128x16xf32>
    %cst_28 = arith.constant 2.000000e+00 : f32
    %69 = vector.broadcast %cst_28 : f32 to vector<128x16xf32>
    %70 = arith.subf %69, %68 : vector<128x16xf32>
    %71 = arith.mulf %67, %70 : vector<128x16xf32>
    %72 = arith.mulf %59, %71 : vector<128x16xf32>
    %73 = vector.shape_cast %72 : vector<128x16xf32> to vector<1x128x16xf32>
    %cst_29 = arith.constant dense<0.000000e+00> : vector<1xf32>
    %74 = vector.multi_reduction <add>, %73, %cst_29 [1, 2] : vector<1x128x16xf32> to vector<1xf32>
    %75 = vector.shape_cast %74 : vector<1xf32> to vector<1x1x1xf32>
    %76 = vector.extract %75[0, 0, 0] : f32 from vector<1x1x1xf32>
    %77 = vector.broadcast %76 : f32 to vector<1x1x1xf32>
    %c0_30 = arith.constant 0 : index
    %c0_31 = arith.constant 0 : index
    %c0_32 = arith.constant 0 : index
    %78 = vector.load %arg5[%c0_30, %c0_31, %c0_32] : memref<1x1x1xf32, #tpu.memory_space<vmem>>, vector<1x1x1xf32>
    tpu.vector_store %arg5[%c0_30, %c0_31, %c0_32], %77 {strides = array<i32>} : memref<1x1x1xf32, #tpu.memory_space<vmem>>, vector<1x1x1xf32>,
    return
  }
  func.func @transform_0(%arg0: i32) -> (i32, i32, i32) {
    %c0_i32 = arith.constant 0 : i32
    %c0_i32_0 = arith.constant 0 : i32
    %c0_i32_1 = arith.constant 0 : i32
    return %arg0, %c0_i32, %c0_i32_0 : i32, i32, i32
  }
  func.func @transform_1(%arg0: i32) -> (i32, i32, i32) {
    %c0_i32 = arith.constant 0 : i32
    %c0_i32_0 = arith.constant 0 : i32
    %c0_i32_1 = arith.constant 0 : i32
    return %arg0, %c0_i32, %c0_i32_0 : i32, i32, i32
  }
  func.func @transform_2(%arg0: i32) -> (i32, i32) {
    %c0_i32 = arith.constant 0 : i32
    %c0_i32_0 = arith.constant 0 : i32
    %c0_i32_1 = arith.constant 0 : i32
    return %c0_i32, %c0_i32_0 : i32, i32
  }
  func.func @transform_3(%arg0: i32) -> (i32, i32) {
    %c0_i32 = arith.constant 0 : i32
    %c0_i32_0 = arith.constant 0 : i32
    %c0_i32_1 = arith.constant 0 : i32
    return %c0_i32, %c0_i32_0 : i32, i32
  }
  func.func @transform_4(%arg0: i32) -> (i32, i32, i32) {
    %c0_i32 = arith.constant 0 : i32
    %c0_i32_0 = arith.constant 0 : i32
    %c0_i32_1 = arith.constant 0 : i32
    return %arg0, %c0_i32, %c0_i32_0 : i32, i32, i32
  }
}

</mosaic_0001>

<llo_original>
// kernel: tpu_custom_call.1
$region0: #{tpu_custom_call.1}
  #allocation0 [shape = 'u32[]', space=smem, size = 0x4, offset = 0x4, fixed_abs, tag = 'smem constant byte address 0x4 - core index']
  #allocation1 [shape = 'u32[72,128]{1,0:T(1,128)}', space=vmem, size = 0x9000, scoped, tag = 'internal scratch']
  %s0 = inlined_call_operand.hbm [shape: f32[8,16,16], index: 0, kind: input, shape index: {}]
  %s1 = inlined_call_operand.hbm [shape: f32[8,16,16], index: 1, kind: input, shape index: {}]
  %s2 = inlined_call_operand.hbm [shape: f32[16,16], index: 2, kind: input, shape index: {}]
  %s3 = inlined_call_operand.hbm [shape: f32[16,16], index: 3, kind: input, shape index: {}]
  %s4 = inlined_call_operand.hbm [shape: f32[1,1,1], index: 4, kind: output, shape index: {}]
  %s5 = sld [smem:[#allocation0]]
  $region42: #{tpu_custom_call.1} parent=0
    _
  %s7 = ssub.s32 1, %s5
  %s8 = scalar_select 0, %s7, %s5
  $region1: #{tpu_custom_call.1} parent=0
    #allocation2 [shape = 'u8[65536]{0}', space=vmem, size = 0x10000, scoped, tag = 'input window, operand 0, single buffered']
    #allocation3 [shape = 's32[1]{0}', space=sflag, size = 0x4, scoped, tag = 'scoped memory for tpu_custom_call.1']
    #allocation4 [shape = 's32[1]{0}', space=sflag, size = 0x4, scoped, tag = 'scoped memory for tpu_custom_call.1']
    #allocation5 [shape = 'u8[65536]{0}', space=vmem, size = 0x10000, scoped, tag = 'input window, operand 1, single buffered']
    #allocation6 [shape = 's32[1]{0}', space=sflag, size = 0x4, scoped, tag = 'scoped memory for tpu_custom_call.1']
    #allocation7 [shape = 'u8[8192]{0}', space=vmem, size = 0x2000, scoped, tag = 'input window, operand 2, single buffered']
    #allocation8 [shape = 'u8[8192]{0}', space=vmem, size = 0x2000, scoped, tag = 'input window, operand 3, single buffered']
    #allocation9 [shape = 's32[1]{0}', space=sflag, size = 0x4, scoped, tag = 'scoped memory for tpu_custom_call.1']
    #allocation10 [shape = 'u8[512]{0}', space=vmem, size = 0x400, scoped, tag = 'output window, operand 0, single buffered']
    %9 = vsyncpa [#allocation3], 0
    %10 = vsyncpa [#allocation6], 0
    %11 = vsyncpa [#allocation9], 0
    %12 = vsyncpa [#allocation4], 0
    // Predicated region
    $region2: #{tpu_custom_call.1} parent=1 // pred_check
      _
    $region3: #{tpu_custom_call.1} parent=1 // pred_check_branch
      %14 = sbr.rel (0) target = $region5
    $region4: #{tpu_custom_call.1} parent=1 // pred_region
      %16 = vsyncadd [#allocation3], 0
      %s17 = sshll.u32 %s0, 4
      %s18 = int_to_ptr.hbm [resolvable:$true] %s17
      %s19 = sshll.u32 [#allocation2], 4
      %s20 = int_to_ptr.vmem [resolvable:$true] %s19
      %25 = dma.hbm_to_vmem [thread:$0]  %s18, 2048, %s20, [#allocation3], 128, 128, 8
    $region5: #{tpu_custom_call.1} parent=1 // pred_fallthru
      _
    // Predicated region
    $region6: #{tpu_custom_call.1} parent=1 // pred_check
      _
    $region7: #{tpu_custom_call.1} parent=1 // pred_check_branch
      %27 = sbr.rel (0) target = $region9
    $region8: #{tpu_custom_call.1} parent=1 // pred_region
      %29 = vsyncadd [#allocation6], 0
      %s30 = sshll.u32 %s1, 4
      %s31 = int_to_ptr.hbm [resolvable:$true] %s30
      %s32 = sshll.u32 [#allocation5], 4
      %s33 = int_to_ptr.vmem [resolvable:$true] %s32
      %38 = dma.hbm_to_vmem [thread:$0]  %s31, 2048, %s33, [#allocation6], 128, 128, 8
    $region9: #{tpu_custom_call.1} parent=1 // pred_fallthru
      _
    // Predicated region
    $region10: #{tpu_custom_call.1} parent=1 // pred_check
      _
    $region11: #{tpu_custom_call.1} parent=1 // pred_check_branch
      %40 = sbr.rel (0) target = $region13
    $region12: #{tpu_custom_call.1} parent=1 // pred_region
      %42 = vsyncadd [#allocation6], 0
      %s43 = sshll.u32 %s2, 4
      %s44 = int_to_ptr.hbm [resolvable:$true] %s43
      %s45 = sshll.u32 [#allocation7], 4
      %s46 = int_to_ptr.vmem [resolvable:$true] %s45
      %51 = dma.hbm_to_vmem [thread:$0]  %s44, 256, %s46, [#allocation6], 128, 128, 8
    $region13: #{tpu_custom_call.1} parent=1 // pred_fallthru
      _
    // Predicated region
    $region14: #{tpu_custom_call.1} parent=1 // pred_check
      _
    $region15: #{tpu_custom_call.1} parent=1 // pred_check_branch
      %53 = sbr.rel (0) target = $region17
    $region16: #{tpu_custom_call.1} parent=1 // pred_region
      %55 = vsyncadd [#allocation9], 0
      %s56 = sshll.u32 %s3, 4
      %s57 = int_to_ptr.hbm [resolvable:$true] %s56
      %s58 = sshll.u32 [#allocation8], 4
      %s59 = int_to_ptr.vmem [resolvable:$true] %s58
      %64 = dma.hbm_to_vmem [thread:$0]  %s57, 256, %s59, [#allocation9], 128, 128, 8
    $region17: #{tpu_custom_call.1} parent=1 // pred_fallthru
      _
    // Predicated region
    $region18: #{tpu_custom_call.1} parent=1 // pred_check
      _
    $region19: #{tpu_custom_call.1} parent=1 // pred_check_branch
      %66 = sbr.rel (0) target = $region21
    $region20: #{tpu_custom_call.1} parent=1 // pred_region
      %68 = dma.done [#allocation3], 2048
    $region21: #{tpu_custom_call.1} parent=1 // pred_fallthru
      _
    // Predicated region
    $region22: #{tpu_custom_call.1} parent=1 // pred_check
      _
    $region23: #{tpu_custom_call.1} parent=1 // pred_check_branch
      %70 = sbr.rel (0) target = $region25
    $region24: #{tpu_custom_call.1} parent=1 // pred_region
      %72 = dma.done [#allocation6], 2048
    $region25: #{tpu_custom_call.1} parent=1 // pred_fallthru
      _
    // Predicated region
    $region26: #{tpu_custom_call.1} parent=1 // pred_check
      _
    $region27: #{tpu_custom_call.1} parent=1 // pred_check_branch
      %74 = sbr.rel (0) target = $region29
    $region28: #{tpu_custom_call.1} parent=1 // pred_region
      %76 = dma.done [#allocation6], 256
    $region29: #{tpu_custom_call.1} parent=1 // pred_fallthru
      _
    // Predicated region
    $region30: #{tpu_custom_call.1} parent=1 // pred_check
      _
    $region31: #{tpu_custom_call.1} parent=1 // pred_check_branch
      %78 = sbr.rel (0) target = $region33
    $region32: #{tpu_custom_call.1} parent=1 // pred_region
      %80 = dma.done [#allocation9], 256
    $region33: #{tpu_custom_call.1} parent=1 // pred_fallthru
      _
    %v81 = vld [vmem:[#allocation7] sm:$0xff]
    %v82 = vld [vmem:[#allocation7 + $0x8] sm:$0xff]
    %v83 = vld [vmem:[#allocation8] sm:$0xff]
    %v84 = vld [vmem:[#allocation8 + $0x8] sm:$0xff]
    %v85 = vld [vmem:[#allocation2] sm:$0xff]
    %v86 = vld [vmem:[#allocation2 + $0x8] sm:$0xff]
    %v87 = vld [vmem:[#allocation2 + $0x10] sm:$0xff]
    %v88 = vld [vmem:[#allocation2 + $0x18] sm:$0xff]
    %v89 = vld [vmem:[#allocation2 + $0x20] sm:$0xff]
    %v90 = vld [vmem:[#allocation2 + $0x28] sm:$0xff]
    %v91 = vld [vmem:[#allocation2 + $0x30] sm:$0xff]
    %v92 = vld [vmem:[#allocation2 + $0x38] sm:$0xff]
    %v93 = vld [vmem:[#allocation2 + $0x40] sm:$0xff]
    %v94 = vld [vmem:[#allocation2 + $0x48] sm:$0xff]
    %v95 = vld [vmem:[#allocation2 + $0x50] sm:$0xff]
    %v96 = vld [vmem:[#allocation2 + $0x58] sm:$0xff]
    %v97 = vld [vmem:[#allocation2 + $0x60] sm:$0xff]
    %v98 = vld [vmem:[#allocation2 + $0x68] sm:$0xff]
    %v99 = vld [vmem:[#allocation2 + $0x70] sm:$0xff]
    %v100 = vld [vmem:[#allocation2 + $0x78] sm:$0xff]
    %v101 = vadd.f32 %v85, 1.0
    %v102 = vadd.f32 %v86, 1.0
    %v103 = vadd.f32 %v87, 1.0
    %v104 = vadd.f32 %v88, 1.0
    %v105 = vadd.f32 %v89, 1.0
    %v106 = vadd.f32 %v90, 1.0
    %v107 = vadd.f32 %v91, 1.0
    %v108 = vadd.f32 %v92, 1.0
    %v109 = vadd.f32 %v93, 1.0
    %v110 = vadd.f32 %v94, 1.0
    %v111 = vadd.f32 %v95, 1.0
    %v112 = vadd.f32 %v96, 1.0
    %v113 = vadd.f32 %v97, 1.0
    %v114 = vadd.f32 %v98, 1.0
    %v115 = vadd.f32 %v99, 1.0
    %v116 = vadd.f32 %v100, 1.0
    %v117 = vmul.f32 %v101, 0.5
    %v118 = vmul.f32 %v102, 0.5
    %v119 = vmul.f32 %v103, 0.5
    %v120 = vmul.f32 %v104, 0.5
    %v121 = vmul.f32 %v105, 0.5
    %v122 = vmul.f32 %v106, 0.5
    %v123 = vmul.f32 %v107, 0.5
    %v124 = vmul.f32 %v108, 0.5
    %v125 = vmul.f32 %v109, 0.5
    %v126 = vmul.f32 %v110, 0.5
    %v127 = vmul.f32 %v111, 0.5
    %v128 = vmul.f32 %v112, 0.5
    %v129 = vmul.f32 %v113, 0.5
    %v130 = vmul.f32 %v114, 0.5
    %v131 = vmul.f32 %v115, 0.5
    %v132 = vmul.f32 %v116, 0.5
    %v133 = vld [vmem:[#allocation5] sm:$0xff]
    %v134 = vld [vmem:[#allocation5 + $0x8] sm:$0xff]
    %v135 = vld [vmem:[#allocation5 + $0x10] sm:$0xff]
    %v136 = vld [vmem:[#allocation5 + $0x18] sm:$0xff]
    %v137 = vld [vmem:[#allocation5 + $0x20] sm:$0xff]
    %v138 = vld [vmem:[#allocation5 + $0x28] sm:$0xff]
    %v139 = vld [vmem:[#allocation5 + $0x30] sm:$0xff]
    %v140 = vld [vmem:[#allocation5 + $0x38] sm:$0xff]
    %v141 = vld [vmem:[#allocation5 + $0x40] sm:$0xff]
    %v142 = vld [vmem:[#allocation5 + $0x48] sm:$0xff]
    %v143 = vld [vmem:[#allocation5 + $0x50] sm:$0xff]
    %v144 = vld [vmem:[#allocation5 + $0x58] sm:$0xff]
    %v145 = vld [vmem:[#allocation5 + $0x60] sm:$0xff]
    %v146 = vld [vmem:[#allocation5 + $0x68] sm:$0xff]
    %v147 = vld [vmem:[#allocation5 + $0x70] sm:$0xff]
    %v148 = vld [vmem:[#allocation5 + $0x78] sm:$0xff]
    %v149 = vadd.f32 %v133, 1.0
    %v150 = vadd.f32 %v134, 1.0
    %v151 = vadd.f32 %v135, 1.0
    %v152 = vadd.f32 %v136, 1.0
    %v153 = vadd.f32 %v137, 1.0
    %v154 = vadd.f32 %v138, 1.0
    %v155 = vadd.f32 %v139, 1.0
    %v156 = vadd.f32 %v140, 1.0
    %v157 = vadd.f32 %v141, 1.0
    %v158 = vadd.f32 %v142, 1.0
    %v159 = vadd.f32 %v143, 1.0
    %v160 = vadd.f32 %v144, 1.0
    %v161 = vadd.f32 %v145, 1.0
    %v162 = vadd.f32 %v146, 1.0
    %v163 = vadd.f32 %v147, 1.0
    %v164 = vadd.f32 %v148, 1.0
    %v165 = vmul.f32 %v149, 0.5
    %v166 = vmul.f32 %v150, 0.5
    %v167 = vmul.f32 %v151, 0.5
    %v168 = vmul.f32 %v152, 0.5
    %v169 = vmul.f32 %v153, 0.5
    %v170 = vmul.f32 %v154, 0.5
    %v171 = vmul.f32 %v155, 0.5
    %v172 = vmul.f32 %v156, 0.5
    %v173 = vmul.f32 %v157, 0.5
    %v174 = vmul.f32 %v158, 0.5
    %v175 = vmul.f32 %v159, 0.5
    %v176 = vmul.f32 %v160, 0.5
    %v177 = vmul.f32 %v161, 0.5
    %v178 = vmul.f32 %v162, 0.5
    %v179 = vmul.f32 %v163, 0.5
    %v180 = vmul.f32 %v164, 0.5
    %vm181 = vcmask 130048
    %v183 = vsel %vm181, %v117, 0
    %v186 = vsel %vm181, %v118, 0
    %v189 = vsel %vm181, %v119, 0
    %v192 = vsel %vm181, %v120, 0
    %v195 = vsel %vm181, %v121, 0
    %v198 = vsel %vm181, %v122, 0
    %v201 = vsel %vm181, %v123, 0
    %v204 = vsel %vm181, %v124, 0
    %v207 = vsel %vm181, %v125, 0
    %v210 = vsel %vm181, %v126, 0
    %v213 = vsel %vm181, %v127, 0
    %v216 = vsel %vm181, %v128, 0
    %v219 = vsel %vm181, %v129, 0
    %v222 = vsel %vm181, %v130, 0
    %v225 = vsel %vm181, %v131, 0
    %v228 = vsel %vm181, %v132, 0
    %230 = vmatpush.msra.mxu0 0.0
    %231 = vmatpush.msra.mxu0 0.0
    %232 = vmatpush.msra.mxu0 0.0
    %233 = vmatpush.msra.mxu0 0.0
    %234 = vmatpush.msra.mxu0 0.0
    %235 = vmatpush.msra.mxu0 0.0
    %236 = vmatpush.msra.mxu0 0.0
    %237 = vmatpush.msra.mxu0 0.0
    %238 = vmatpush.msra.mxu0 0.0
    %239 = vmatpush.msra.mxu0 0.0
    %240 = vmatpush.msra.mxu0 0.0
    %241 = vmatpush.msra.mxu0 0.0
    %242 = vmatpush.msra.mxu0 0.0
    %243 = vmatpush.msra.mxu0 0.0
    %v244 = vand.u32 %v84, 4294901760
    %245 = vmatpush.msra.mxu0 %v244
    %v246 = vand.u32 %v83, 4294901760
    %247 = vmatpush.msra.mxu0 %v246
    %v248 = vand.u32 %v183, 4294901760
    %v249 = vsub.f32 %v183, %v248
    %v250 = vand.u32 %v249, 4294901760
    %v251 = vsub.f32 %v249, %v250
    %v252 = vand.u32 %v251, 4294901760
    %253 = vmatmul.f32.gmra.mxu0 %v252
    %v254 = vpop.f32.mrf.mxu0
    %v255 = vadd.f32 0.0, %v254
    %v256 = vand.u32 %v186, 4294901760
    %v257 = vsub.f32 %v186, %v256
    %v258 = vand.u32 %v257, 4294901760
    %v259 = vsub.f32 %v257, %v258
    %v260 = vand.u32 %v259, 4294901760
    %261 = vmatmul.f32.gmra.mxu0 %v260
    %v262 = vpop.f32.mrf.mxu0
    %v263 = vadd.f32 0.0, %v262
    %v264 = vand.u32 %v189, 4294901760
    %v265 = vsub.f32 %v189, %v264
    %v266 = vand.u32 %v265, 4294901760
    %v267 = vsub.f32 %v265, %v266
    %v268 = vand.u32 %v267, 4294901760
    %269 = vmatmul.f32.gmra.mxu0 %v268
    %v270 = vpop.f32.mrf.mxu0
    %v271 = vadd.f32 0.0, %v270
    %v272 = vand.u32 %v192, 4294901760
    %v273 = vsub.f32 %v192, %v272
    %v274 = vand.u32 %v273, 4294901760
    %v275 = vsub.f32 %v273, %v274
    %v276 = vand.u32 %v275, 4294901760
    %277 = vmatmul.f32.gmra.mxu0 %v276
    %v278 = vpop.f32.mrf.mxu0
    %v279 = vadd.f32 0.0, %v278
    %v280 = vand.u32 %v195, 4294901760
    %v281 = vsub.f32 %v195, %v280
    %v282 = vand.u32 %v281, 4294901760
    %v283 = vsub.f32 %v281, %v282
    %v284 = vand.u32 %v283, 4294901760
    %285 = vmatmul.f32.gmra.mxu0 %v284
    %v286 = vpop.f32.mrf.mxu0
    %v287 = vadd.f32 0.0, %v286
    %v288 = vand.u32 %v198, 4294901760
    %v289 = vsub.f32 %v198, %v288
    %v290 = vand.u32 %v289, 4294901760
    %v291 = vsub.f32 %v289, %v290
    %v292 = vand.u32 %v291, 4294901760
    %293 = vmatmul.f32.gmra.mxu0 %v292
    %v294 = vpop.f32.mrf.mxu0
    %v295 = vadd.f32 0.0, %v294
    %v296 = vand.u32 %v201, 4294901760
    %v297 = vsub.f32 %v201, %v296
    %v298 = vand.u32 %v297, 4294901760
    %v299 = vsub.f32 %v297, %v298
    %v300 = vand.u32 %v299, 4294901760
    %301 = vmatmul.f32.gmra.mxu0 %v300
    %v302 = vpop.f32.mrf.mxu0
    %v303 = vadd.f32 0.0, %v302
    %v304 = vand.u32 %v204, 4294901760
    %v305 = vsub.f32 %v204, %v304
    %v306 = vand.u32 %v305, 4294901760
    %v307 = vsub.f32 %v305, %v306
    %v308 = vand.u32 %v307, 4294901760
    %309 = vmatmul.f32.gmra.mxu0 %v308
    %v310 = vpop.f32.mrf.mxu0
    %v311 = vadd.f32 0.0, %v310
    %v312 = vand.u32 %v207, 4294901760
    %v313 = vsub.f32 %v207, %v312
    %v314 = vand.u32 %v313, 4294901760
    %v315 = vsub.f32 %v313, %v314
    %v316 = vand.u32 %v315, 4294901760
    %317 = vmatmul.f32.gmra.mxu0 %v316
    %v318 = vpop.f32.mrf.mxu0
    %v319 = vadd.f32 0.0, %v318
    %v320 = vand.u32 %v210, 4294901760
    %v321 = vsub.f32 %v210, %v320
    %v322 = vand.u32 %v321, 4294901760
    %v323 = vsub.f32 %v321, %v322
    %v324 = vand.u32 %v323, 4294901760
    %325 = vmatmul.f32.gmra.mxu0 %v324
    %v326 = vpop.f32.mrf.mxu0
    %v327 = vadd.f32 0.0, %v326
    %v328 = vand.u32 %v213, 4294901760
    %v329 = vsub.f32 %v213, %v328
    %v330 = vand.u32 %v329, 4294901760
    %v331 = vsub.f32 %v329, %v330
    %v332 = vand.u32 %v331, 4294901760
    %333 = vmatmul.f32.gmra.mxu0 %v332
    %v334 = vpop.f32.mrf.mxu0
    %v335 = vadd.f32 0.0, %v334
    %v336 = vand.u32 %v216, 4294901760
    %v337 = vsub.f32 %v216, %v336
    %v338 = vand.u32 %v337, 4294901760
    %v339 = vsub.f32 %v337, %v338
    %v340 = vand.u32 %v339, 4294901760
    %341 = vmatmul.f32.gmra.mxu0 %v340
    %v342 = vpop.f32.mrf.mxu0
    %v343 = vadd.f32 0.0, %v342
    %v344 = vand.u32 %v219, 4294901760
    %v345 = vsub.f32 %v219, %v344
    %v346 = vand.u32 %v345, 4294901760
    %v347 = vsub.f32 %v345, %v346
    %v348 = vand.u32 %v347, 4294901760
    %349 = vmatmul.f32.gmra.mxu0 %v348
    %v350 = vpop.f32.mrf.mxu0
    %v351 = vadd.f32 0.0, %v350
    %v352 = vand.u32 %v222, 4294901760
    %v353 = vsub.f32 %v222, %v352
    %v354 = vand.u32 %v353, 4294901760
    %v355 = vsub.f32 %v353, %v354
    %v356 = vand.u32 %v355, 4294901760
    %357 = vmatmul.f32.gmra.mxu0 %v356
    %v358 = vpop.f32.mrf.mxu0
    %v359 = vadd.f32 0.0, %v358
    %v360 = vand.u32 %v225, 4294901760
    %v361 = vsub.f32 %v225, %v360
    %v362 = vand.u32 %v361, 4294901760
    %v363 = vsub.f32 %v361, %v362
    %v364 = vand.u32 %v363, 4294901760
    %365 = vmatmul.f32.gmra.mxu0 %v364
    %v366 = vpop.f32.mrf.mxu0
    %v367 = vadd.f32 0.0, %v366
    %v368 = vand.u32 %v228, 4294901760
    %v369 = vsub.f32 %v228, %v368
    %v370 = vand.u32 %v369, 4294901760
    %v371 = vsub.f32 %v369, %v370
    %v372 = vand.u32 %v371, 4294901760
    %373 = vmatmul.f32.gmra.mxu0 %v372
    %v374 = vpop.f32.mrf.mxu0
    %v375 = vadd.f32 0.0, %v374
    %376 = vdwg.mxu0
    %377 = vmatpush.msra.mxu0 0.0
    %378 = vmatpush.msra.mxu0 0.0
    %379 = vmatpush.msra.mxu0 0.0
    %380 = vmatpush.msra.mxu0 0.0
    %381 = vmatpush.msra.mxu0 0.0
    %382 = vmatpush.msra.mxu0 0.0
    %383 = vmatpush.msra.mxu0 0.0
    %384 = vmatpush.msra.mxu0 0.0
    %385 = vmatpush.msra.mxu0 0.0
    %386 = vmatpush.msra.mxu0 0.0
    %387 = vmatpush.msra.mxu0 0.0
    %388 = vmatpush.msra.mxu0 0.0
    %389 = vmatpush.msra.mxu0 0.0
    %390 = vmatpush.msra.mxu0 0.0
    %v391 = vand.u32 %v84, 4294901760
    %v392 = vsub.f32 %v84, %v391
    %v393 = vand.u32 %v392, 4294901760
    %v394 = vsub.f32 %v392, %v393
    %v395 = vand.u32 %v394, 4294901760
    %396 = vmatpush.msra.mxu0 %v395
    %v397 = vand.u32 %v83, 4294901760
    %v398 = vsub.f32 %v83, %v397
    %v399 = vand.u32 %v398, 4294901760
    %v400 = vsub.f32 %v398, %v399
    %v401 = vand.u32 %v400, 4294901760
    %402 = vmatpush.msra.mxu0 %v401
    %v403 = vand.u32 %v183, 4294901760
    %404 = vmatmul.f32.gmra.mxu0 %v403
    %v405 = vpop.f32.mrf.mxu0
    %v406 = vadd.f32 %v255, %v405
    %v407 = vand.u32 %v186, 4294901760
    %408 = vmatmul.f32.gmra.mxu0 %v407
    %v409 = vpop.f32.mrf.mxu0
    %v410 = vadd.f32 %v263, %v409
    %v411 = vand.u32 %v189, 4294901760
    %412 = vmatmul.f32.gmra.mxu0 %v411
    %v413 = vpop.f32.mrf.mxu0
    %v414 = vadd.f32 %v271, %v413
    %v415 = vand.u32 %v192, 4294901760
    %416 = vmatmul.f32.gmra.mxu0 %v415
    %v417 = vpop.f32.mrf.mxu0
    %v418 = vadd.f32 %v279, %v417
    %v419 = vand.u32 %v195, 4294901760
    %420 = vmatmul.f32.gmra.mxu0 %v419
    %v421 = vpop.f32.mrf.mxu0
    %v422 = vadd.f32 %v287, %v421
    %v423 = vand.u32 %v198, 4294901760
    %424 = vmatmul.f32.gmra.mxu0 %v423
    %v425 = vpop.f32.mrf.mxu0
    %v426 = vadd.f32 %v295, %v425
    %v427 = vand.u32 %v201, 4294901760
    %428 = vmatmul.f32.gmra.mxu0 %v427
    %v429 = vpop.f32.mrf.mxu0
    %v430 = vadd.f32 %v303, %v429
    %v431 = vand.u32 %v204, 4294901760
    %432 = vmatmul.f32.gmra.mxu0 %v431
    %v433 = vpop.f32.mrf.mxu0
    %v434 = vadd.f32 %v311, %v433
    %v435 = vand.u32 %v207, 4294901760
    %436 = vmatmul.f32.gmra.mxu0 %v435
    %v437 = vpop.f32.mrf.mxu0
    %v438 = vadd.f32 %v319, %v437
    %v439 = vand.u32 %v210, 4294901760
    %440 = vmatmul.f32.gmra.mxu0 %v439
    %v441 = vpop.f32.mrf.mxu0
    %v442 = vadd.f32 %v327, %v441
    %v443 = vand.u32 %v213, 4294901760
    %444 = vmatmul.f32.gmra.mxu0 %v443
    %v445 = vpop.f32.mrf.mxu0
    %v446 = vadd.f32 %v335, %v445
    %v447 = vand.u32 %v216, 4294901760
    %448 = vmatmul.f32.gmra.mxu0 %v447
    %v449 = vpop.f32.mrf.mxu0
    %v450 = vadd.f32 %v343, %v449
    %v451 = vand.u32 %v219, 4294901760
    %452 = vmatmul.f32.gmra.mxu0 %v451
    %v453 = vpop.f32.mrf.mxu0
    %v454 = vadd.f32 %v351, %v453
    %v455 = vand.u32 %v222, 4294901760
    %456 = vmatmul.f32.gmra.mxu0 %v455
    %v457 = vpop.f32.mrf.mxu0
    %v458 = vadd.f32 %v359, %v457
    %v459 = vand.u32 %v225, 4294901760
    %460 = vmatmul.f32.gmra.mxu0 %v459
    %v461 = vpop.f32.mrf.mxu0
    %v462 = vadd.f32 %v367, %v461
    %v463 = vand.u32 %v228, 4294901760
    %464 = vmatmul.f32.gmra.mxu0 %v463
    %v465 = vpop.f32.mrf.mxu0
    %v466 = vadd.f32 %v375, %v465
    %467 = vdwg.mxu0
    %468 = vmatpush.msra.mxu0 0.0
    %469 = vmatpush.msra.mxu0 0.0
    %470 = vmatpush.msra.mxu0 0.0
    %471 = vmatpush.msra.mxu0 0.0
    %472 = vmatpush.msra.mxu0 0.0
    %473 = vmatpush.msra.mxu0 0.0
    %474 = vmatpush.msra.mxu0 0.0
    %475 = vmatpush.msra.mxu0 0.0
    %476 = vmatpush.msra.mxu0 0.0
    %477 = vmatpush.msra.mxu0 0.0
    %478 = vmatpush.msra.mxu0 0.0
    %479 = vmatpush.msra.mxu0 0.0
    %480 = vmatpush.msra.mxu0 0.0
    %481 = vmatpush.msra.mxu0 0.0
    %v482 = vand.u32 %v84, 4294901760
    %v483 = vsub.f32 %v84, %v482
    %484 = vmatpush.msra.mxu0 %v483
    %v485 = vand.u32 %v83, 4294901760
    %v486 = vsub.f32 %v83, %v485
    %487 = vmatpush.msra.mxu0 %v486
    %v488 = vand.u32 %v183, 4294901760
    %v489 = vsub.f32 %v183, %v488
    %490 = vmatmul.f32.gmra.mxu0 %v489
    %v491 = vpop.f32.mrf.mxu0
    %v492 = vadd.f32 %v406, %v491
    %v493 = vand.u32 %v186, 4294901760
    %v494 = vsub.f32 %v186, %v493
    %495 = vmatmul.f32.gmra.mxu0 %v494
    %v496 = vpop.f32.mrf.mxu0
    %v497 = vadd.f32 %v410, %v496
    %v498 = vand.u32 %v189, 4294901760
    %v499 = vsub.f32 %v189, %v498
    %500 = vmatmul.f32.gmra.mxu0 %v499
    %v501 = vpop.f32.mrf.mxu0
    %v502 = vadd.f32 %v414, %v501
    %v503 = vand.u32 %v192, 4294901760
    %v504 = vsub.f32 %v192, %v503
    %505 = vmatmul.f32.gmra.mxu0 %v504
    %v506 = vpop.f32.mrf.mxu0
    %v507 = vadd.f32 %v418, %v506
    %v508 = vand.u32 %v195, 4294901760
    %v509 = vsub.f32 %v195, %v508
    %510 = vmatmul.f32.gmra.mxu0 %v509
    %v511 = vpop.f32.mrf.mxu0
    %v512 = vadd.f32 %v422, %v511
    %v513 = vand.u32 %v198, 4294901760
    %v514 = vsub.f32 %v198, %v513
    %515 = vmatmul.f32.gmra.mxu0 %v514
    %v516 = vpop.f32.mrf.mxu0
    %v517 = vadd.f32 %v426, %v516
    %v518 = vand.u32 %v201, 4294901760
    %v519 = vsub.f32 %v201, %v518
    %520 = vmatmul.f32.gmra.mxu0 %v519
    %v521 = vpop.f32.mrf.mxu0
    %v522 = vadd.f32 %v430, %v521
    %v523 = vand.u32 %v204, 4294901760
    %v524 = vsub.f32 %v204, %v523
    %525 = vmatmul.f32.gmra.mxu0 %v524
    %v526 = vpop.f32.mrf.mxu0
    %v527 = vadd.f32 %v434, %v526
    %v528 = vand.u32 %v207, 4294901760
    %v529 = vsub.f32 %v207, %v528
    %530 = vmatmul.f32.gmra.mxu0 %v529
    %v531 = vpop.f32.mrf.mxu0
    %v532 = vadd.f32 %v438, %v531
    %v533 = vand.u32 %v210, 4294901760
    %v534 = vsub.f32 %v210, %v533
    %535 = vmatmul.f32.gmra.mxu0 %v534
    %v536 = vpop.f32.mrf.mxu0
    %v537 = vadd.f32 %v442, %v536
    %v538 = vand.u32 %v213, 4294901760
    %v539 = vsub.f32 %v213, %v538
    %540 = vmatmul.f32.gmra.mxu0 %v539
    %v541 = vpop.f32.mrf.mxu0
    %v542 = vadd.f32 %v446, %v541
    %v543 = vand.u32 %v216, 4294901760
    %v544 = vsub.f32 %v216, %v543
    %545 = vmatmul.f32.gmra.mxu0 %v544
    %v546 = vpop.f32.mrf.mxu0
    %v547 = vadd.f32 %v450, %v546
    %v548 = vand.u32 %v219, 4294901760
    %v549 = vsub.f32 %v219, %v548
    %550 = vmatmul.f32.gmra.mxu0 %v549
    %v551 = vpop.f32.mrf.mxu0
    %v552 = vadd.f32 %v454, %v551
    %v553 = vand.u32 %v222, 4294901760
    %v554 = vsub.f32 %v222, %v553
    %555 = vmatmul.f32.gmra.mxu0 %v554
    %v556 = vpop.f32.mrf.mxu0
    %v557 = vadd.f32 %v458, %v556
    %v558 = vand.u32 %v225, 4294901760
    %v559 = vsub.f32 %v225, %v558
    %560 = vmatmul.f32.gmra.mxu0 %v559
    %v561 = vpop.f32.mrf.mxu0
    %v562 = vadd.f32 %v462, %v561
    %v563 = vand.u32 %v228, 4294901760
    %v564 = vsub.f32 %v228, %v563
    %565 = vmatmul.f32.gmra.mxu0 %v564
    %v566 = vpop.f32.mrf.mxu0
    %v567 = vadd.f32 %v466, %v566
    %568 = vdwg.mxu0
    %569 = vmatpush.msra.mxu0 0.0
    %570 = vmatpush.msra.mxu0 0.0
    %571 = vmatpush.msra.mxu0 0.0
    %572 = vmatpush.msra.mxu0 0.0
    %573 = vmatpush.msra.mxu0 0.0
    %574 = vmatpush.msra.mxu0 0.0
    %575 = vmatpush.msra.mxu0 0.0
    %576 = vmatpush.msra.mxu0 0.0
    %577 = vmatpush.msra.mxu0 0.0
    %578 = vmatpush.msra.mxu0 0.0
    %579 = vmatpush.msra.mxu0 0.0
    %580 = vmatpush.msra.mxu0 0.0
    %581 = vmatpush.msra.mxu0 0.0
    %582 = vmatpush.msra.mxu0 0.0
    %v583 = vand.u32 %v84, 4294901760
    %584 = vmatpush.msra.mxu0 %v583
    %v585 = vand.u32 %v83, 4294901760
    %586 = vmatpush.msra.mxu0 %v585
    %v587 = vand.u32 %v183, 4294901760
    %v588 = vsub.f32 %v183, %v587
    %v589 = vand.u32 %v588, 4294901760
    %590 = vmatmul.f32.gmra.mxu0 %v589
    %v591 = vpop.f32.mrf.mxu0
    %v592 = vadd.f32 %v492, %v591
    %v593 = vand.u32 %v186, 4294901760
    %v594 = vsub.f32 %v186, %v593
    %v595 = vand.u32 %v594, 4294901760
    %596 = vmatmul.f32.gmra.mxu0 %v595
    %v597 = vpop.f32.mrf.mxu0
    %v598 = vadd.f32 %v497, %v597
    %v599 = vand.u32 %v189, 4294901760
    %v600 = vsub.f32 %v189, %v599
    %v601 = vand.u32 %v600, 4294901760
    %602 = vmatmul.f32.gmra.mxu0 %v601
    %v603 = vpop.f32.mrf.mxu0
    %v604 = vadd.f32 %v502, %v603
    %v605 = vand.u32 %v192, 4294901760
    %v606 = vsub.f32 %v192, %v605
    %v607 = vand.u32 %v606, 4294901760
    %608 = vmatmul.f32.gmra.mxu0 %v607
    %v609 = vpop.f32.mrf.mxu0
    %v610 = vadd.f32 %v507, %v609
    %v611 = vand.u32 %v195, 4294901760
    %v612 = vsub.f32 %v195, %v611
    %v613 = vand.u32 %v612, 4294901760
    %614 = vmatmul.f32.gmra.mxu0 %v613
    %v615 = vpop.f32.mrf.mxu0
    %v616 = vadd.f32 %v512, %v615
    %v617 = vand.u32 %v198, 4294901760
    %v618 = vsub.f32 %v198, %v617
    %v619 = vand.u32 %v618, 4294901760
    %620 = vmatmul.f32.gmra.mxu0 %v619
    %v621 = vpop.f32.mrf.mxu0
    %v622 = vadd.f32 %v517, %v621
    %v623 = vand.u32 %v201, 4294901760
    %v624 = vsub.f32 %v201, %v623
    %v625 = vand.u32 %v624, 4294901760
    %626 = vmatmul.f32.gmra.mxu0 %v625
    %v627 = vpop.f32.mrf.mxu0
    %v628 = vadd.f32 %v522, %v627
    %v629 = vand.u32 %v204, 4294901760
    %v630 = vsub.f32 %v204, %v629
    %v631 = vand.u32 %v630, 4294901760
    %632 = vmatmul.f32.gmra.mxu0 %v631
    %v633 = vpop.f32.mrf.mxu0
    %v634 = vadd.f32 %v527, %v633
    %v635 = vand.u32 %v207, 4294901760
    %v636 = vsub.f32 %v207, %v635
    %v637 = vand.u32 %v636, 4294901760
    %638 = vmatmul.f32.gmra.mxu0 %v637
    %v639 = vpop.f32.mrf.mxu0
    %v640 = vadd.f32 %v532, %v639
    %v641 = vand.u32 %v210, 4294901760
    %v642 = vsub.f32 %v210, %v641
    %v643 = vand.u32 %v642, 4294901760
    %644 = vmatmul.f32.gmra.mxu0 %v643
    %v645 = vpop.f32.mrf.mxu0
    %v646 = vadd.f32 %v537, %v645
    %v647 = vand.u32 %v213, 4294901760
    %v648 = vsub.f32 %v213, %v647
    %v649 = vand.u32 %v648, 4294901760
    %650 = vmatmul.f32.gmra.mxu0 %v649
    %v651 = vpop.f32.mrf.mxu0
    %v652 = vadd.f32 %v542, %v651
    %v653 = vand.u32 %v216, 4294901760
    %v654 = vsub.f32 %v216, %v653
    %v655 = vand.u32 %v654, 4294901760
    %656 = vmatmul.f32.gmra.mxu0 %v655
    %v657 = vpop.f32.mrf.mxu0
    %v658 = vadd.f32 %v547, %v657
    %v659 = vand.u32 %v219, 4294901760
    %v660 = vsub.f32 %v219, %v659
    %v661 = vand.u32 %v660, 4294901760
    %662 = vmatmul.f32.gmra.mxu0 %v661
    %v663 = vpop.f32.mrf.mxu0
    %v664 = vadd.f32 %v552, %v663
    %v665 = vand.u32 %v222, 4294901760
    %v666 = vsub.f32 %v222, %v665
    %v667 = vand.u32 %v666, 4294901760
    %668 = vmatmul.f32.gmra.mxu0 %v667
    %v669 = vpop.f32.mrf.mxu0
    %v670 = vadd.f32 %v557, %v669
    %v671 = vand.u32 %v225, 4294901760
    %v672 = vsub.f32 %v225, %v671
    %v673 = vand.u32 %v672, 4294901760
    %674 = vmatmul.f32.gmra.mxu0 %v673
    %v675 = vpop.f32.mrf.mxu0
    %v676 = vadd.f32 %v562, %v675
    %v677 = vand.u32 %v228, 4294901760
    %v678 = vsub.f32 %v228, %v677
    %v679 = vand.u32 %v678, 4294901760
    %680 = vmatmul.f32.gmra.mxu0 %v679
    %v681 = vpop.f32.mrf.mxu0
    %v682 = vadd.f32 %v567, %v681
    %683 = vdwg.mxu0
    %684 = vmatpush.msra.mxu0 0.0
    %685 = vmatpush.msra.mxu0 0.0
    %686 = vmatpush.msra.mxu0 0.0
    %687 = vmatpush.msra.mxu0 0.0
    %688 = vmatpush.msra.mxu0 0.0
    %689 = vmatpush.msra.mxu0 0.0
    %690 = vmatpush.msra.mxu0 0.0
    %691 = vmatpush.msra.mxu0 0.0
    %692 = vmatpush.msra.mxu0 0.0
    %693 = vmatpush.msra.mxu0 0.0
    %694 = vmatpush.msra.mxu0 0.0
    %695 = vmatpush.msra.mxu0 0.0
    %696 = vmatpush.msra.mxu0 0.0
    %697 = vmatpush.msra.mxu0 0.0
    %v698 = vand.u32 %v84, 4294901760
    %v699 = vsub.f32 %v84, %v698
    %v700 = vand.u32 %v699, 4294901760
    %701 = vmatpush.msra.mxu0 %v700
    %v702 = vand.u32 %v83, 4294901760
    %v703 = vsub.f32 %v83, %v702
    %v704 = vand.u32 %v703, 4294901760
    %705 = vmatpush.msra.mxu0 %v704
    %v706 = vand.u32 %v183, 4294901760
    %707 = vmatmul.f32.gmra.mxu0 %v706
    %v708 = vpop.f32.mrf.mxu0
    %v709 = vadd.f32 %v592, %v708
    %v710 = vand.u32 %v186, 4294901760
    %711 = vmatmul.f32.gmra.mxu0 %v710
    %v712 = vpop.f32.mrf.mxu0
    %v713 = vadd.f32 %v598, %v712
    %v714 = vand.u32 %v189, 4294901760
    %715 = vmatmul.f32.gmra.mxu0 %v714
    %v716 = vpop.f32.mrf.mxu0
    %v717 = vadd.f32 %v604, %v716
    %v718 = vand.u32 %v192, 4294901760
    %719 = vmatmul.f32.gmra.mxu0 %v718
    %v720 = vpop.f32.mrf.mxu0
    %v721 = vadd.f32 %v610, %v720
    %v722 = vand.u32 %v195, 4294901760
    %723 = vmatmul.f32.gmra.mxu0 %v722
    %v724 = vpop.f32.mrf.mxu0
    %v725 = vadd.f32 %v616, %v724
    %v726 = vand.u32 %v198, 4294901760
    %727 = vmatmul.f32.gmra.mxu0 %v726
    %v728 = vpop.f32.mrf.mxu0
    %v729 = vadd.f32 %v622, %v728
    %v730 = vand.u32 %v201, 4294901760
    %731 = vmatmul.f32.gmra.mxu0 %v730
    %v732 = vpop.f32.mrf.mxu0
    %v733 = vadd.f32 %v628, %v732
    %v734 = vand.u32 %v204, 4294901760
    %735 = vmatmul.f32.gmra.mxu0 %v734
    %v736 = vpop.f32.mrf.mxu0
    %v737 = vadd.f32 %v634, %v736
    %v738 = vand.u32 %v207, 4294901760
    %739 = vmatmul.f32.gmra.mxu0 %v738
    %v740 = vpop.f32.mrf.mxu0
    %v741 = vadd.f32 %v640, %v740
    %v742 = vand.u32 %v210, 4294901760
    %743 = vmatmul.f32.gmra.mxu0 %v742
    %v744 = vpop.f32.mrf.mxu0
    %v745 = vadd.f32 %v646, %v744
    %v746 = vand.u32 %v213, 4294901760
    %747 = vmatmul.f32.gmra.mxu0 %v746
    %v748 = vpop.f32.mrf.mxu0
    %v749 = vadd.f32 %v652, %v748
    %v750 = vand.u32 %v216, 4294901760
    %751 = vmatmul.f32.gmra.mxu0 %v750
    %v752 = vpop.f32.mrf.mxu0
    %v753 = vadd.f32 %v658, %v752
    %v754 = vand.u32 %v219, 4294901760
    %755 = vmatmul.f32.gmra.mxu0 %v754
    %v756 = vpop.f32.mrf.mxu0
    %v757 = vadd.f32 %v664, %v756
    %v758 = vand.u32 %v222, 4294901760
    %759 = vmatmul.f32.gmra.mxu0 %v758
    %v760 = vpop.f32.mrf.mxu0
    %v761 = vadd.f32 %v670, %v760
    %v762 = vand.u32 %v225, 4294901760
    %763 = vmatmul.f32.gmra.mxu0 %v762
    %v764 = vpop.f32.mrf.mxu0
    %v765 = vadd.f32 %v676, %v764
    %v766 = vand.u32 %v228, 4294901760
    %767 = vmatmul.f32.gmra.mxu0 %v766
    %v768 = vpop.f32.mrf.mxu0
    %v769 = vadd.f32 %v682, %v768
    %770 = vdwg.mxu0
    %771 = vmatpush.msra.mxu0 0.0
    %772 = vmatpush.msra.mxu0 0.0
    %773 = vmatpush.msra.mxu0 0.0
    %774 = vmatpush.msra.mxu0 0.0
    %775 = vmatpush.msra.mxu0 0.0
    %776 = vmatpush.msra.mxu0 0.0
    %777 = vmatpush.msra.mxu0 0.0
    %778 = vmatpush.msra.mxu0 0.0
    %779 = vmatpush.msra.mxu0 0.0
    %780 = vmatpush.msra.mxu0 0.0
    %781 = vmatpush.msra.mxu0 0.0
    %782 = vmatpush.msra.mxu0 0.0
    %783 = vmatpush.msra.mxu0 0.0
    %784 = vmatpush.msra.mxu0 0.0
    %v785 = vand.u32 %v84, 4294901760
    %786 = vmatpush.msra.mxu0 %v785
    %v787 = vand.u32 %v83, 4294901760
    %788 = vmatpush.msra.mxu0 %v787
    %v789 = vand.u32 %v183, 4294901760
    %790 = vmatmul.f32.gmra.mxu0 %v789
    %v791 = vpop.f32.mrf.mxu0
    %v792 = vadd.f32 %v709, %v791
    %v793 = vand.u32 %v186, 4294901760
    %794 = vmatmul.f32.gmra.mxu0 %v793
    %v795 = vpop.f32.mrf.mxu0
    %v796 = vadd.f32 %v713, %v795
    %v797 = vand.u32 %v189, 4294901760
    %798 = vmatmul.f32.gmra.mxu0 %v797
    %v799 = vpop.f32.mrf.mxu0
    %v800 = vadd.f32 %v717, %v799
    %v801 = vand.u32 %v192, 4294901760
    %802 = vmatmul.f32.gmra.mxu0 %v801
    %v803 = vpop.f32.mrf.mxu0
    %v804 = vadd.f32 %v721, %v803
    %v805 = vand.u32 %v195, 4294901760
    %806 = vmatmul.f32.gmra.mxu0 %v805
    %v807 = vpop.f32.mrf.mxu0
    %v808 = vadd.f32 %v725, %v807
    %v809 = vand.u32 %v198, 4294901760
    %810 = vmatmul.f32.gmra.mxu0 %v809
    %v811 = vpop.f32.mrf.mxu0
    %v812 = vadd.f32 %v729, %v811
    %v813 = vand.u32 %v201, 4294901760
    %814 = vmatmul.f32.gmra.mxu0 %v813
    %v815 = vpop.f32.mrf.mxu0
    %v816 = vadd.f32 %v733, %v815
    %v817 = vand.u32 %v204, 4294901760
    %818 = vmatmul.f32.gmra.mxu0 %v817
    %v819 = vpop.f32.mrf.mxu0
    %v820 = vadd.f32 %v737, %v819
    %v821 = vand.u32 %v207, 4294901760
    %822 = vmatmul.f32.gmra.mxu0 %v821
    %v823 = vpop.f32.mrf.mxu0
    %v824 = vadd.f32 %v741, %v823
    %v825 = vand.u32 %v210, 4294901760
    %826 = vmatmul.f32.gmra.mxu0 %v825
    %v827 = vpop.f32.mrf.mxu0
    %v828 = vadd.f32 %v745, %v827
    %v829 = vand.u32 %v213, 4294901760
    %830 = vmatmul.f32.gmra.mxu0 %v829
    %v831 = vpop.f32.mrf.mxu0
    %v832 = vadd.f32 %v749, %v831
    %v833 = vand.u32 %v216, 4294901760
    %834 = vmatmul.f32.gmra.mxu0 %v833
    %v835 = vpop.f32.mrf.mxu0
    %v836 = vadd.f32 %v753, %v835
    %v837 = vand.u32 %v219, 4294901760
    %838 = vmatmul.f32.gmra.mxu0 %v837
    %v839 = vpop.f32.mrf.mxu0
    %v840 = vadd.f32 %v757, %v839
    %v841 = vand.u32 %v222, 4294901760
    %842 = vmatmul.f32.gmra.mxu0 %v841
    %v843 = vpop.f32.mrf.mxu0
    %v844 = vadd.f32 %v761, %v843
    %v845 = vand.u32 %v225, 4294901760
    %846 = vmatmul.f32.gmra.mxu0 %v845
    %v847 = vpop.f32.mrf.mxu0
    %v848 = vadd.f32 %v765, %v847
    %v849 = vand.u32 %v228, 4294901760
    %850 = vmatmul.f32.gmra.mxu0 %v849
    %v851 = vpop.f32.mrf.mxu0
    %v852 = vadd.f32 %v769, %v851
    %853 = vdwg.mxu0
    %854 = vxpose.xlu0.b32.start [1/16] %v792, 128
    %855 = vxpose.xlu0.b32.cont [2/16] %v796, 128
    %856 = vxpose.xlu0.b32.cont [3/16] 0.0, 128
    %857 = vxpose.xlu0.b32.cont [4/16] 0.0, 128
    %858 = vxpose.xlu0.b32.cont [5/16] 0.0, 128
    %859 = vxpose.xlu0.b32.cont [6/16] 0.0, 128
    %860 = vxpose.xlu0.b32.cont [7/16] 0.0, 128
    %861 = vxpose.xlu0.b32.cont [8/16] 0.0, 128
    %862 = vxpose.xlu0.b32.cont [9/16] 0.0, 128
    %863 = vxpose.xlu0.b32.cont [10/16] 0.0, 128
    %864 = vxpose.xlu0.b32.cont [11/16] 0.0, 128
    %865 = vxpose.xlu0.b32.cont [12/16] 0.0, 128
    %866 = vxpose.xlu0.b32.cont [13/16] 0.0, 128
    %867 = vxpose.xlu0.b32.cont [14/16] 0.0, 128
    %868 = vxpose.xlu0.b32.cont [15/16] 0.0, 128
    %869 = vxpose.xlu0.b32.end [16/16] 0.0, 128
    %v870 = vpop.trf.xlu0
    %v871 = vpop.trf.xlu0
    %v872 = vpop.trf.xlu0
    %v873 = vpop.trf.xlu0
    %v874 = vpop.trf.xlu0
    %v875 = vpop.trf.xlu0
    %v876 = vpop.trf.xlu0
    %v877 = vpop.trf.xlu0
    %v878 = vpop.trf.xlu0
    %v879 = vpop.trf.xlu0
    %v880 = vpop.trf.xlu0
    %v881 = vpop.trf.xlu0
    %v882 = vpop.trf.xlu0
    %v883 = vpop.trf.xlu0
    %v884 = vpop.trf.xlu0
    %v885 = vpop.trf.xlu0
    %886 = vxpose.xlu0.b32.start [1/16] %v800, 128
    %887 = vxpose.xlu0.b32.cont [2/16] %v804, 128
    %888 = vxpose.xlu0.b32.cont [3/16] 0.0, 128
    %889 = vxpose.xlu0.b32.cont [4/16] 0.0, 128
    %890 = vxpose.xlu0.b32.cont [5/16] 0.0, 128
    %891 = vxpose.xlu0.b32.cont [6/16] 0.0, 128
    %892 = vxpose.xlu0.b32.cont [7/16] 0.0, 128
    %893 = vxpose.xlu0.b32.cont [8/16] 0.0, 128
    %894 = vxpose.xlu0.b32.cont [9/16] 0.0, 128
    %895 = vxpose.xlu0.b32.cont [10/16] 0.0, 128
    %896 = vxpose.xlu0.b32.cont [11/16] 0.0, 128
    %897 = vxpose.xlu0.b32.cont [12/16] 0.0, 128
    %898 = vxpose.xlu0.b32.cont [13/16] 0.0, 128
    %899 = vxpose.xlu0.b32.cont [14/16] 0.0, 128
    %900 = vxpose.xlu0.b32.cont [15/16] 0.0, 128
    %901 = vxpose.xlu0.b32.end [16/16] 0.0, 128
    %v902 = vpop.trf.xlu0
    %v903 = vpop.trf.xlu0
    %v904 = vpop.trf.xlu0
    %v905 = vpop.trf.xlu0
    %v906 = vpop.trf.xlu0
    %v907 = vpop.trf.xlu0
    %v908 = vpop.trf.xlu0
    %v909 = vpop.trf.xlu0
    %v910 = vpop.trf.xlu0
    %v911 = vpop.trf.xlu0
    %v912 = vpop.trf.xlu0
    %v913 = vpop.trf.xlu0
    %v914 = vpop.trf.xlu0
    %v915 = vpop.trf.xlu0
    %v916 = vpop.trf.xlu0
    %v917 = vpop.trf.xlu0
    %918 = vxpose.xlu0.b32.start [1/16] %v808, 128
    %919 = vxpose.xlu0.b32.cont [2/16] %v812, 128
    %920 = vxpose.xlu0.b32.cont [3/16] 0.0, 128
    %921 = vxpose.xlu0.b32.cont [4/16] 0.0, 128
    %922 = vxpose.xlu0.b32.cont [5/16] 0.0, 128
    %923 = vxpose.xlu0.b32.cont [6/16] 0.0, 128
    %924 = vxpose.xlu0.b32.cont [7/16] 0.0, 128
    %925 = vxpose.xlu0.b32.cont [8/16] 0.0, 128
    %926 = vxpose.xlu0.b32.cont [9/16] 0.0, 128
    %927 = vxpose.xlu0.b32.cont [10/16] 0.0, 128
    %928 = vxpose.xlu0.b32.cont [11/16] 0.0, 128
    %929 = vxpose.xlu0.b32.cont [12/16] 0.0, 128
    %930 = vxpose.xlu0.b32.cont [13/16] 0.0, 128
    %931 = vxpose.xlu0.b32.cont [14/16] 0.0, 128
    %932 = vxpose.xlu0.b32.cont [15/16] 0.0, 128
    %933 = vxpose.xlu0.b32.end [16/16] 0.0, 128
    %v934 = vpop.trf.xlu0
    %v935 = vpop.trf.xlu0
    %v936 = vpop.trf.xlu0
    %v937 = vpop.trf.xlu0
    %v938 = vpop.trf.xlu0
    %v939 = vpop.trf.xlu0
    %v940 = vpop.trf.xlu0
    %v941 = vpop.trf.xlu0
    %v942 = vpop.trf.xlu0
    %v943 = vpop.trf.xlu0
    %v944 = vpop.trf.xlu0
    %v945 = vpop.trf.xlu0
    %v946 = vpop.trf.xlu0
    %v947 = vpop.trf.xlu0
    %v948 = vpop.trf.xlu0
    %v949 = vpop.trf.xlu0
    %950 = vxpose.xlu0.b32.start [1/16] %v816, 128
    %951 = vxpose.xlu0.b32.cont [2/16] %v820, 128
    %952 = vxpose.xlu0.b32.cont [3/16] 0.0, 128
    %953 = vxpose.xlu0.b32.cont [4/16] 0.0, 128
    %954 = vxpose.xlu0.b32.cont [5/16] 0.0, 128
    %955 = vxpose.xlu0.b32.cont [6/16] 0.0, 128
    %956 = vxpose.xlu0.b32.cont [7/16] 0.0, 128
    %957 = vxpose.xlu0.b32.cont [8/16] 0.0, 128
    %958 = vxpose.xlu0.b32.cont [9/16] 0.0, 128
    %959 = vxpose.xlu0.b32.cont [10/16] 0.0, 128
    %960 = vxpose.xlu0.b32.cont [11/16] 0.0, 128
    %961 = vxpose.xlu0.b32.cont [12/16] 0.0, 128
    %962 = vxpose.xlu0.b32.cont [13/16] 0.0, 128
    %963 = vxpose.xlu0.b32.cont [14/16] 0.0, 128
    %964 = vxpose.xlu0.b32.cont [15/16] 0.0, 128
    %965 = vxpose.xlu0.b32.end [16/16] 0.0, 128
    %v966 = vpop.trf.xlu0
    %v967 = vpop.trf.xlu0
    %v968 = vpop.trf.xlu0
    %v969 = vpop.trf.xlu0
    %v970 = vpop.trf.xlu0
    %v971 = vpop.trf.xlu0
    %v972 = vpop.trf.xlu0
    %v973 = vpop.trf.xlu0
    %v974 = vpop.trf.xlu0
    %v975 = vpop.trf.xlu0
    %v976 = vpop.trf.xlu0
    %v977 = vpop.trf.xlu0
    %v978 = vpop.trf.xlu0
    %v979 = vpop.trf.xlu0
    %v980 = vpop.trf.xlu0
    %v981 = vpop.trf.xlu0
    %982 = vxpose.xlu0.b32.start [1/16] %v824, 128
    %983 = vxpose.xlu0.b32.cont [2/16] %v828, 128
    %984 = vxpose.xlu0.b32.cont [3/16] 0.0, 128
    %985 = vxpose.xlu0.b32.cont [4/16] 0.0, 128
    %986 = vxpose.xlu0.b32.cont [5/16] 0.0, 128
    %987 = vxpose.xlu0.b32.cont [6/16] 0.0, 128
    %988 = vxpose.xlu0.b32.cont [7/16] 0.0, 128
    %989 = vxpose.xlu0.b32.cont [8/16] 0.0, 128
    %990 = vxpose.xlu0.b32.cont [9/16] 0.0, 128
    %991 = vxpose.xlu0.b32.cont [10/16] 0.0, 128
    %992 = vxpose.xlu0.b32.cont [11/16] 0.0, 128
    %993 = vxpose.xlu0.b32.cont [12/16] 0.0, 128
    %994 = vxpose.xlu0.b32.cont [13/16] 0.0, 128
    %995 = vxpose.xlu0.b32.cont [14/16] 0.0, 128
    %996 = vxpose.xlu0.b32.cont [15/16] 0.0, 128
    %997 = vxpose.xlu0.b32.end [16/16] 0.0, 128
    %v998 = vpop.trf.xlu0
    %v999 = vpop.trf.xlu0
    %v1000 = vpop.trf.xlu0
    %v1001 = vpop.trf.xlu0
    %v1002 = vpop.trf.xlu0
    %v1003 = vpop.trf.xlu0
    %v1004 = vpop.trf.xlu0
    %v1005 = vpop.trf.xlu0
    %v1006 = vpop.trf.xlu0
    %v1007 = vpop.trf.xlu0
    %v1008 = vpop.trf.xlu0
    %v1009 = vpop.trf.xlu0
    %v1010 = vpop.trf.xlu0
    %v1011 = vpop.trf.xlu0
    %v1012 = vpop.trf.xlu0
    %v1013 = vpop.trf.xlu0
    %1014 = vxpose.xlu0.b32.start [1/16] %v832, 128
    %1015 = vxpose.xlu0.b32.cont [2/16] %v836, 128
    %1016 = vxpose.xlu0.b32.cont [3/16] 0.0, 128
    %1017 = vxpose.xlu0.b32.cont [4/16] 0.0, 128
    %1018 = vxpose.xlu0.b32.cont [5/16] 0.0, 128
    %1019 = vxpose.xlu0.b32.cont [6/16] 0.0, 128
    %1020 = vxpose.xlu0.b32.cont [7/16] 0.0, 128
    %1021 = vxpose.xlu0.b32.cont [8/16] 0.0, 128
    %1022 = vxpose.xlu0.b32.cont [9/16] 0.0, 128
    %1023 = vxpose.xlu0.b32.cont [10/16] 0.0, 128
    %1024 = vxpose.xlu0.b32.cont [11/16] 0.0, 128
    %1025 = vxpose.xlu0.b32.cont [12/16] 0.0, 128
    %1026 = vxpose.xlu0.b32.cont [13/16] 0.0, 128
    %1027 = vxpose.xlu0.b32.cont [14/16] 0.0, 128
    %1028 = vxpose.xlu0.b32.cont [15/16] 0.0, 128
    %1029 = vxpose.xlu0.b32.end [16/16] 0.0, 128
    %v1030 = vpop.trf.xlu0
    %v1031 = vpop.trf.xlu0
    %v1032 = vpop.trf.xlu0
    %v1033 = vpop.trf.xlu0
    %v1034 = vpop.trf.xlu0
    %v1035 = vpop.trf.xlu0
    %v1036 = vpop.trf.xlu0
    %v1037 = vpop.trf.xlu0
    %v1038 = vpop.trf.xlu0
    %v1039 = vpop.trf.xlu0
    %v1040 = vpop.trf.xlu0
    %v1041 = vpop.trf.xlu0
    %v1042 = vpop.trf.xlu0
    %v1043 = vpop.trf.xlu0
    %v1044 = vpop.trf.xlu0
    %v1045 = vpop.trf.xlu0
    %1046 = vxpose.xlu0.b32.start [1/16] %v840, 128
    %1047 = vxpose.xlu0.b32.cont [2/16] %v844, 128
    %1048 = vxpose.xlu0.b32.cont [3/16] 0.0, 128
    %1049 = vxpose.xlu0.b32.cont [4/16] 0.0, 128
    %1050 = vxpose.xlu0.b32.cont [5/16] 0.0, 128
    %1051 = vxpose.xlu0.b32.cont [6/16] 0.0, 128
    %1052 = vxpose.xlu0.b32.cont [7/16] 0.0, 128
    %1053 = vxpose.xlu0.b32.cont [8/16] 0.0, 128
    %1054 = vxpose.xlu0.b32.cont [9/16] 0.0, 128
    %1055 = vxpose.xlu0.b32.cont [10/16] 0.0, 128
    %1056 = vxpose.xlu0.b32.cont [11/16] 0.0, 128
    %1057 = vxpose.xlu0.b32.cont [12/16] 0.0, 128
    %1058 = vxpose.xlu0.b32.cont [13/16] 0.0, 128
    %1059 = vxpose.xlu0.b32.cont [14/16] 0.0, 128
    %1060 = vxpose.xlu0.b32.cont [15/16] 0.0, 128
    %1061 = vxpose.xlu0.b32.end [16/16] 0.0, 128
    %v1062 = vpop.trf.xlu0
    %v1063 = vpop.trf.xlu0
    %v1064 = vpop.trf.xlu0
    %v1065 = vpop.trf.xlu0
    %v1066 = vpop.trf.xlu0
    %v1067 = vpop.trf.xlu0
    %v1068 = vpop.trf.xlu0
    %v1069 = vpop.trf.xlu0
    %v1070 = vpop.trf.xlu0
    %v1071 = vpop.trf.xlu0
    %v1072 = vpop.trf.xlu0
    %v1073 = vpop.trf.xlu0
    %v1074 = vpop.trf.xlu0
    %v1075 = vpop.trf.xlu0
    %v1076 = vpop.trf.xlu0
    %v1077 = vpop.trf.xlu0
    %1078 = vxpose.xlu0.b32.start [1/16] %v848, 128
    %1079 = vxpose.xlu0.b32.cont [2/16] %v852, 128
    %1080 = vxpose.xlu0.b32.cont [3/16] 0.0, 128
    %1081 = vxpose.xlu0.b32.cont [4/16] 0.0, 128
    %1082 = vxpose.xlu0.b32.cont [5/16] 0.0, 128
    %1083 = vxpose.xlu0.b32.cont [6/16] 0.0, 128
    %1084 = vxpose.xlu0.b32.cont [7/16] 0.0, 128
    %1085 = vxpose.xlu0.b32.cont [8/16] 0.0, 128
    %1086 = vxpose.xlu0.b32.cont [9/16] 0.0, 128
    %1087 = vxpose.xlu0.b32.cont [10/16] 0.0, 128
    %1088 = vxpose.xlu0.b32.cont [11/16] 0.0, 128
    %1089 = vxpose.xlu0.b32.cont [12/16] 0.0, 128
    %1090 = vxpose.xlu0.b32.cont [13/16] 0.0, 128
    %1091 = vxpose.xlu0.b32.cont [14/16] 0.0, 128
    %1092 = vxpose.xlu0.b32.cont [15/16] 0.0, 128
    %1093 = vxpose.xlu0.b32.end [16/16] 0.0, 128
    %v1094 = vpop.trf.xlu0
    %v1095 = vpop.trf.xlu0
    %v1096 = vpop.trf.xlu0
    %v1097 = vpop.trf.xlu0
    %v1098 = vpop.trf.xlu0
    %v1099 = vpop.trf.xlu0
    %v1100 = vpop.trf.xlu0
    %v1101 = vpop.trf.xlu0
    %v1102 = vpop.trf.xlu0
    %v1103 = vpop.trf.xlu0
    %v1104 = vpop.trf.xlu0
    %v1105 = vpop.trf.xlu0
    %v1106 = vpop.trf.xlu0
    %v1107 = vpop.trf.xlu0
    %v1108 = vpop.trf.xlu0
    %v1109 = vpop.trf.xlu0
    %v1111 = vsel %vm181, %v870, 0
    %v1114 = vsel %vm181, %v871, 0
    %v1117 = vsel %vm181, %v902, 0
    %v1120 = vsel %vm181, %v903, 0
    %v1123 = vsel %vm181, %v934, 0
    %v1126 = vsel %vm181, %v935, 0
    %v1129 = vsel %vm181, %v966, 0
    %v1132 = vsel %vm181, %v967, 0
    %v1135 = vsel %vm181, %v998, 0
    %v1138 = vsel %vm181, %v999, 0
    %v1141 = vsel %vm181, %v1030, 0
    %v1144 = vsel %vm181, %v1031, 0
    %v1147 = vsel %vm181, %v1062, 0
    %v1150 = vsel %vm181, %v1063, 0
    %v1153 = vsel %vm181, %v1094, 0
    %v1156 = vsel %vm181, %v1095, 0
    %1158 = vmatpush.msra.mxu0 0.0
    %1159 = vmatpush.msra.mxu0 0.0
    %1160 = vmatpush.msra.mxu0 0.0
    %1161 = vmatpush.msra.mxu0 0.0
    %1162 = vmatpush.msra.mxu0 0.0
    %1163 = vmatpush.msra.mxu0 0.0
    %1164 = vmatpush.msra.mxu0 0.0
    %1165 = vmatpush.msra.mxu0 0.0
    %1166 = vmatpush.msra.mxu0 0.0
    %1167 = vmatpush.msra.mxu0 0.0
    %1168 = vmatpush.msra.mxu0 0.0
    %1169 = vmatpush.msra.mxu0 0.0
    %1170 = vmatpush.msra.mxu0 0.0
    %1171 = vmatpush.msra.mxu0 0.0
    %v1172 = vand.u32 %v82, 4294901760
    %1173 = vmatpush.msra.mxu0 %v1172
    %v1174 = vand.u32 %v81, 4294901760
    %1175 = vmatpush.msra.mxu0 %v1174
    %v1176 = vand.u32 %v1111, 4294901760
    %v1177 = vsub.f32 %v1111, %v1176
    %v1178 = vand.u32 %v1177, 4294901760
    %v1179 = vsub.f32 %v1177, %v1178
    %v1180 = vand.u32 %v1179, 4294901760
    %1181 = vmatmul.f32.gmra.mxu0 %v1180
    %v1182 = vpop.f32.mrf.mxu0
    %v1183 = vadd.f32 0.0, %v1182
    %v1184 = vand.u32 %v1114, 4294901760
    %v1185 = vsub.f32 %v1114, %v1184
    %v1186 = vand.u32 %v1185, 4294901760
    %v1187 = vsub.f32 %v1185, %v1186
    %v1188 = vand.u32 %v1187, 4294901760
    %1189 = vmatmul.f32.gmra.mxu0 %v1188
    %v1190 = vpop.f32.mrf.mxu0
    %v1191 = vadd.f32 0.0, %v1190
    %v1192 = vand.u32 %v1117, 4294901760
    %v1193 = vsub.f32 %v1117, %v1192
    %v1194 = vand.u32 %v1193, 4294901760
    %v1195 = vsub.f32 %v1193, %v1194
    %v1196 = vand.u32 %v1195, 4294901760
    %1197 = vmatmul.f32.gmra.mxu0 %v1196
    %v1198 = vpop.f32.mrf.mxu0
    %v1199 = vadd.f32 0.0, %v1198
    %v1200 = vand.u32 %v1120, 4294901760
    %v1201 = vsub.f32 %v1120, %v1200
    %v1202 = vand.u32 %v1201, 4294901760
    %v1203 = vsub.f32 %v1201, %v1202
    %v1204 = vand.u32 %v1203, 4294901760
    %1205 = vmatmul.f32.gmra.mxu0 %v1204
    %v1206 = vpop.f32.mrf.mxu0
    %v1207 = vadd.f32 0.0, %v1206
    %v1208 = vand.u32 %v1123, 4294901760
    %v1209 = vsub.f32 %v1123, %v1208
    %v1210 = vand.u32 %v1209, 4294901760
    %v1211 = vsub.f32 %v1209, %v1210
    %v1212 = vand.u32 %v1211, 4294901760
    %1213 = vmatmul.f32.gmra.mxu0 %v1212
    %v1214 = vpop.f32.mrf.mxu0
    %v1215 = vadd.f32 0.0, %v1214
    %v1216 = vand.u32 %v1126, 4294901760
    %v1217 = vsub.f32 %v1126, %v1216
    %v1218 = vand.u32 %v1217, 4294901760
    %v1219 = vsub.f32 %v1217, %v1218
    %v1220 = vand.u32 %v1219, 4294901760
    %1221 = vmatmul.f32.gmra.mxu0 %v1220
    %v1222 = vpop.f32.mrf.mxu0
    %v1223 = vadd.f32 0.0, %v1222
    %v1224 = vand.u32 %v1129, 4294901760
    %v1225 = vsub.f32 %v1129, %v1224
    %v1226 = vand.u32 %v1225, 4294901760
    %v1227 = vsub.f32 %v1225, %v1226
    %v1228 = vand.u32 %v1227, 4294901760
    %1229 = vmatmul.f32.gmra.mxu0 %v1228
    %v1230 = vpop.f32.mrf.mxu0
    %v1231 = vadd.f32 0.0, %v1230
    %v1232 = vand.u32 %v1132, 4294901760
    %v1233 = vsub.f32 %v1132, %v1232
    %v1234 = vand.u32 %v1233, 4294901760
    %v1235 = vsub.f32 %v1233, %v1234
    %v1236 = vand.u32 %v1235, 4294901760
    %1237 = vmatmul.f32.gmra.mxu0 %v1236
    %v1238 = vpop.f32.mrf.mxu0
    %v1239 = vadd.f32 0.0, %v1238
    %v1240 = vand.u32 %v1135, 4294901760
    %v1241 = vsub.f32 %v1135, %v1240
    %v1242 = vand.u32 %v1241, 4294901760
    %v1243 = vsub.f32 %v1241, %v1242
    %v1244 = vand.u32 %v1243, 4294901760
    %1245 = vmatmul.f32.gmra.mxu0 %v1244
    %v1246 = vpop.f32.mrf.mxu0
    %v1247 = vadd.f32 0.0, %v1246
    %v1248 = vand.u32 %v1138, 4294901760
    %v1249 = vsub.f32 %v1138, %v1248
    %v1250 = vand.u32 %v1249, 4294901760
    %v1251 = vsub.f32 %v1249, %v1250
    %v1252 = vand.u32 %v1251, 4294901760
    %1253 = vmatmul.f32.gmra.mxu0 %v1252
    %v1254 = vpop.f32.mrf.mxu0
    %v1255 = vadd.f32 0.0, %v1254
    %v1256 = vand.u32 %v1141, 4294901760
    %v1257 = vsub.f32 %v1141, %v1256
    %v1258 = vand.u32 %v1257, 4294901760
    %v1259 = vsub.f32 %v1257, %v1258
    %v1260 = vand.u32 %v1259, 4294901760
    %1261 = vmatmul.f32.gmra.mxu0 %v1260
    %v1262 = vpop.f32.mrf.mxu0
    %v1263 = vadd.f32 0.0, %v1262
    %v1264 = vand.u32 %v1144, 4294901760
    %v1265 = vsub.f32 %v1144, %v1264
    %v1266 = vand.u32 %v1265, 4294901760
    %v1267 = vsub.f32 %v1265, %v1266
    %v1268 = vand.u32 %v1267, 4294901760
    %1269 = vmatmul.f32.gmra.mxu0 %v1268
    %v1270 = vpop.f32.mrf.mxu0
    %v1271 = vadd.f32 0.0, %v1270
    %v1272 = vand.u32 %v1147, 4294901760
    %v1273 = vsub.f32 %v1147, %v1272
    %v1274 = vand.u32 %v1273, 4294901760
    %v1275 = vsub.f32 %v1273, %v1274
    %v1276 = vand.u32 %v1275, 4294901760
    %1277 = vmatmul.f32.gmra.mxu0 %v1276
    %v1278 = vpop.f32.mrf.mxu0
    %v1279 = vadd.f32 0.0, %v1278
    %v1280 = vand.u32 %v1150, 4294901760
    %v1281 = vsub.f32 %v1150, %v1280
    %v1282 = vand.u32 %v1281, 4294901760
    %v1283 = vsub.f32 %v1281, %v1282
    %v1284 = vand.u32 %v1283, 4294901760
    %1285 = vmatmul.f32.gmra.mxu0 %v1284
    %v1286 = vpop.f32.mrf.mxu0
    %v1287 = vadd.f32 0.0, %v1286
    %v1288 = vand.u32 %v1153, 4294901760
    %v1289 = vsub.f32 %v1153, %v1288
    %v1290 = vand.u32 %v1289, 4294901760
    %v1291 = vsub.f32 %v1289, %v1290
    %v1292 = vand.u32 %v1291, 4294901760
    %1293 = vmatmul.f32.gmra.mxu0 %v1292
    %v1294 = vpop.f32.mrf.mxu0
    %v1295 = vadd.f32 0.0, %v1294
    %v1296 = vand.u32 %v1156, 4294901760
    %v1297 = vsub.f32 %v1156, %v1296
    %v1298 = vand.u32 %v1297, 4294901760
    %v1299 = vsub.f32 %v1297, %v1298
    %v1300 = vand.u32 %v1299, 4294901760
    %1301 = vmatmul.f32.gmra.mxu0 %v1300
    %v1302 = vpop.f32.mrf.mxu0
    %v1303 = vadd.f32 0.0, %v1302
    %1304 = vdwg.mxu0
    %1305 = vmatpush.msra.mxu0 0.0
    %1306 = vmatpush.msra.mxu0 0.0
    %1307 = vmatpush.msra.mxu0 0.0
    %1308 = vmatpush.msra.mxu0 0.0
    %1309 = vmatpush.msra.mxu0 0.0
    %1310 = vmatpush.msra.mxu0 0.0
    %1311 = vmatpush.msra.mxu0 0.0
    %1312 = vmatpush.msra.mxu0 0.0
    %1313 = vmatpush.msra.mxu0 0.0
    %1314 = vmatpush.msra.mxu0 0.0
    %1315 = vmatpush.msra.mxu0 0.0
    %1316 = vmatpush.msra.mxu0 0.0
    %1317 = vmatpush.msra.mxu0 0.0
    %1318 = vmatpush.msra.mxu0 0.0
    %v1319 = vand.u32 %v82, 4294901760
    %v1320 = vsub.f32 %v82, %v1319
    %v1321 = vand.u32 %v1320, 4294901760
    %v1322 = vsub.f32 %v1320, %v1321
    %v1323 = vand.u32 %v1322, 4294901760
    %1324 = vmatpush.msra.mxu0 %v1323
    %v1325 = vand.u32 %v81, 4294901760
    %v1326 = vsub.f32 %v81, %v1325
    %v1327 = vand.u32 %v1326, 4294901760
    %v1328 = vsub.f32 %v1326, %v1327
    %v1329 = vand.u32 %v1328, 4294901760
    %1330 = vmatpush.msra.mxu0 %v1329
    %v1331 = vand.u32 %v1111, 4294901760
    %1332 = vmatmul.f32.gmra.mxu0 %v1331
    %v1333 = vpop.f32.mrf.mxu0
    %v1334 = vadd.f32 %v1183, %v1333
    %v1335 = vand.u32 %v1114, 4294901760
    %1336 = vmatmul.f32.gmra.mxu0 %v1335
    %v1337 = vpop.f32.mrf.mxu0
    %v1338 = vadd.f32 %v1191, %v1337
    %v1339 = vand.u32 %v1117, 4294901760
    %1340 = vmatmul.f32.gmra.mxu0 %v1339
    %v1341 = vpop.f32.mrf.mxu0
    %v1342 = vadd.f32 %v1199, %v1341
    %v1343 = vand.u32 %v1120, 4294901760
    %1344 = vmatmul.f32.gmra.mxu0 %v1343
    %v1345 = vpop.f32.mrf.mxu0
    %v1346 = vadd.f32 %v1207, %v1345
    %v1347 = vand.u32 %v1123, 4294901760
    %1348 = vmatmul.f32.gmra.mxu0 %v1347
    %v1349 = vpop.f32.mrf.mxu0
    %v1350 = vadd.f32 %v1215, %v1349
    %v1351 = vand.u32 %v1126, 4294901760
    %1352 = vmatmul.f32.gmra.mxu0 %v1351
    %v1353 = vpop.f32.mrf.mxu0
    %v1354 = vadd.f32 %v1223, %v1353
    %v1355 = vand.u32 %v1129, 4294901760
    %1356 = vmatmul.f32.gmra.mxu0 %v1355
    %v1357 = vpop.f32.mrf.mxu0
    %v1358 = vadd.f32 %v1231, %v1357
    %v1359 = vand.u32 %v1132, 4294901760
    %1360 = vmatmul.f32.gmra.mxu0 %v1359
    %v1361 = vpop.f32.mrf.mxu0
    %v1362 = vadd.f32 %v1239, %v1361
    %v1363 = vand.u32 %v1135, 4294901760
    %1364 = vmatmul.f32.gmra.mxu0 %v1363
    %v1365 = vpop.f32.mrf.mxu0
    %v1366 = vadd.f32 %v1247, %v1365
    %v1367 = vand.u32 %v1138, 4294901760
    %1368 = vmatmul.f32.gmra.mxu0 %v1367
    %v1369 = vpop.f32.mrf.mxu0
    %v1370 = vadd.f32 %v1255, %v1369
    %v1371 = vand.u32 %v1141, 4294901760
    %1372 = vmatmul.f32.gmra.mxu0 %v1371
    %v1373 = vpop.f32.mrf.mxu0
    %v1374 = vadd.f32 %v1263, %v1373
    %v1375 = vand.u32 %v1144, 4294901760
    %1376 = vmatmul.f32.gmra.mxu0 %v1375
    %v1377 = vpop.f32.mrf.mxu0
    %v1378 = vadd.f32 %v1271, %v1377
    %v1379 = vand.u32 %v1147, 4294901760
    %1380 = vmatmul.f32.gmra.mxu0 %v1379
    %v1381 = vpop.f32.mrf.mxu0
    %v1382 = vadd.f32 %v1279, %v1381
    %v1383 = vand.u32 %v1150, 4294901760
    %1384 = vmatmul.f32.gmra.mxu0 %v1383
    %v1385 = vpop.f32.mrf.mxu0
    %v1386 = vadd.f32 %v1287, %v1385
    %v1387 = vand.u32 %v1153, 4294901760
    %1388 = vmatmul.f32.gmra.mxu0 %v1387
    %v1389 = vpop.f32.mrf.mxu0
    %v1390 = vadd.f32 %v1295, %v1389
    %v1391 = vand.u32 %v1156, 4294901760
    %1392 = vmatmul.f32.gmra.mxu0 %v1391
    %v1393 = vpop.f32.mrf.mxu0
    %v1394 = vadd.f32 %v1303, %v1393
    %1395 = vdwg.mxu0
    %1396 = vmatpush.msra.mxu0 0.0
    %1397 = vmatpush.msra.mxu0 0.0
    %1398 = vmatpush.msra.mxu0 0.0
    %1399 = vmatpush.msra.mxu0 0.0
    %1400 = vmatpush.msra.mxu0 0.0
    %1401 = vmatpush.msra.mxu0 0.0
    %1402 = vmatpush.msra.mxu0 0.0
    %1403 = vmatpush.msra.mxu0 0.0
    %1404 = vmatpush.msra.mxu0 0.0
    %1405 = vmatpush.msra.mxu0 0.0
    %1406 = vmatpush.msra.mxu0 0.0
    %1407 = vmatpush.msra.mxu0 0.0
    %1408 = vmatpush.msra.mxu0 0.0
    %1409 = vmatpush.msra.mxu0 0.0
    %v1410 = vand.u32 %v82, 4294901760
    %v1411 = vsub.f32 %v82, %v1410
    %1412 = vmatpush.msra.mxu0 %v1411
    %v1413 = vand.u32 %v81, 4294901760
    %v1414 = vsub.f32 %v81, %v1413
    %1415 = vmatpush.msra.mxu0 %v1414
    %v1416 = vand.u32 %v1111, 4294901760
    %v1417 = vsub.f32 %v1111, %v1416
    %1418 = vmatmul.f32.gmra.mxu0 %v1417
    %v1419 = vpop.f32.mrf.mxu0
    %v1420 = vadd.f32 %v1334, %v1419
    %v1421 = vand.u32 %v1114, 4294901760
    %v1422 = vsub.f32 %v1114, %v1421
    %1423 = vmatmul.f32.gmra.mxu0 %v1422
    %v1424 = vpop.f32.mrf.mxu0
    %v1425 = vadd.f32 %v1338, %v1424
    %v1426 = vand.u32 %v1117, 4294901760
    %v1427 = vsub.f32 %v1117, %v1426
    %1428 = vmatmul.f32.gmra.mxu0 %v1427
    %v1429 = vpop.f32.mrf.mxu0
    %v1430 = vadd.f32 %v1342, %v1429
    %v1431 = vand.u32 %v1120, 4294901760
    %v1432 = vsub.f32 %v1120, %v1431
    %1433 = vmatmul.f32.gmra.mxu0 %v1432
    %v1434 = vpop.f32.mrf.mxu0
    %v1435 = vadd.f32 %v1346, %v1434
    %v1436 = vand.u32 %v1123, 4294901760
    %v1437 = vsub.f32 %v1123, %v1436
    %1438 = vmatmul.f32.gmra.mxu0 %v1437
    %v1439 = vpop.f32.mrf.mxu0
    %v1440 = vadd.f32 %v1350, %v1439
    %v1441 = vand.u32 %v1126, 4294901760
    %v1442 = vsub.f32 %v1126, %v1441
    %1443 = vmatmul.f32.gmra.mxu0 %v1442
    %v1444 = vpop.f32.mrf.mxu0
    %v1445 = vadd.f32 %v1354, %v1444
    %v1446 = vand.u32 %v1129, 4294901760
    %v1447 = vsub.f32 %v1129, %v1446
    %1448 = vmatmul.f32.gmra.mxu0 %v1447
    %v1449 = vpop.f32.mrf.mxu0
    %v1450 = vadd.f32 %v1358, %v1449
    %v1451 = vand.u32 %v1132, 4294901760
    %v1452 = vsub.f32 %v1132, %v1451
    %1453 = vmatmul.f32.gmra.mxu0 %v1452
    %v1454 = vpop.f32.mrf.mxu0
    %v1455 = vadd.f32 %v1362, %v1454
    %v1456 = vand.u32 %v1135, 4294901760
    %v1457 = vsub.f32 %v1135, %v1456
    %1458 = vmatmul.f32.gmra.mxu0 %v1457
    %v1459 = vpop.f32.mrf.mxu0
    %v1460 = vadd.f32 %v1366, %v1459
    %v1461 = vand.u32 %v1138, 4294901760
    %v1462 = vsub.f32 %v1138, %v1461
    %1463 = vmatmul.f32.gmra.mxu0 %v1462
    %v1464 = vpop.f32.mrf.mxu0
    %v1465 = vadd.f32 %v1370, %v1464
    %v1466 = vand.u32 %v1141, 4294901760
    %v1467 = vsub.f32 %v1141, %v1466
    %1468 = vmatmul.f32.gmra.mxu0 %v1467
    %v1469 = vpop.f32.mrf.mxu0
    %v1470 = vadd.f32 %v1374, %v1469
    %v1471 = vand.u32 %v1144, 4294901760
    %v1472 = vsub.f32 %v1144, %v1471
    %1473 = vmatmul.f32.gmra.mxu0 %v1472
    %v1474 = vpop.f32.mrf.mxu0
    %v1475 = vadd.f32 %v1378, %v1474
    %v1476 = vand.u32 %v1147, 4294901760
    %v1477 = vsub.f32 %v1147, %v1476
    %1478 = vmatmul.f32.gmra.mxu0 %v1477
    %v1479 = vpop.f32.mrf.mxu0
    %v1480 = vadd.f32 %v1382, %v1479
    %v1481 = vand.u32 %v1150, 4294901760
    %v1482 = vsub.f32 %v1150, %v1481
    %1483 = vmatmul.f32.gmra.mxu0 %v1482
    %v1484 = vpop.f32.mrf.mxu0
    %v1485 = vadd.f32 %v1386, %v1484
    %v1486 = vand.u32 %v1153, 4294901760
    %v1487 = vsub.f32 %v1153, %v1486
    %1488 = vmatmul.f32.gmra.mxu0 %v1487
    %v1489 = vpop.f32.mrf.mxu0
    %v1490 = vadd.f32 %v1390, %v1489
    %v1491 = vand.u32 %v1156, 4294901760
    %v1492 = vsub.f32 %v1156, %v1491
    %1493 = vmatmul.f32.gmra.mxu0 %v1492
    %v1494 = vpop.f32.mrf.mxu0
    %v1495 = vadd.f32 %v1394, %v1494
    %1496 = vdwg.mxu0
    %1497 = vmatpush.msra.mxu0 0.0
    %1498 = vmatpush.msra.mxu0 0.0
    %1499 = vmatpush.msra.mxu0 0.0
    %1500 = vmatpush.msra.mxu0 0.0
    %1501 = vmatpush.msra.mxu0 0.0
    %1502 = vmatpush.msra.mxu0 0.0
    %1503 = vmatpush.msra.mxu0 0.0
    %1504 = vmatpush.msra.mxu0 0.0
    %1505 = vmatpush.msra.mxu0 0.0
    %1506 = vmatpush.msra.mxu0 0.0
    %1507 = vmatpush.msra.mxu0 0.0
    %1508 = vmatpush.msra.mxu0 0.0
    %1509 = vmatpush.msra.mxu0 0.0
    %1510 = vmatpush.msra.mxu0 0.0
    %v1511 = vand.u32 %v82, 4294901760
    %1512 = vmatpush.msra.mxu0 %v1511
    %v1513 = vand.u32 %v81, 4294901760
    %1514 = vmatpush.msra.mxu0 %v1513
    %v1515 = vand.u32 %v1111, 4294901760
    %v1516 = vsub.f32 %v1111, %v1515
    %v1517 = vand.u32 %v1516, 4294901760
    %1518 = vmatmul.f32.gmra.mxu0 %v1517
    %v1519 = vpop.f32.mrf.mxu0
    %v1520 = vadd.f32 %v1420, %v1519
    %v1521 = vand.u32 %v1114, 4294901760
    %v1522 = vsub.f32 %v1114, %v1521
    %v1523 = vand.u32 %v1522, 4294901760
    %1524 = vmatmul.f32.gmra.mxu0 %v1523
    %v1525 = vpop.f32.mrf.mxu0
    %v1526 = vadd.f32 %v1425, %v1525
    %v1527 = vand.u32 %v1117, 4294901760
    %v1528 = vsub.f32 %v1117, %v1527
    %v1529 = vand.u32 %v1528, 4294901760
    %1530 = vmatmul.f32.gmra.mxu0 %v1529
    %v1531 = vpop.f32.mrf.mxu0
    %v1532 = vadd.f32 %v1430, %v1531
    %v1533 = vand.u32 %v1120, 4294901760
    %v1534 = vsub.f32 %v1120, %v1533
    %v1535 = vand.u32 %v1534, 4294901760
    %1536 = vmatmul.f32.gmra.mxu0 %v1535
    %v1537 = vpop.f32.mrf.mxu0
    %v1538 = vadd.f32 %v1435, %v1537
    %v1539 = vand.u32 %v1123, 4294901760
    %v1540 = vsub.f32 %v1123, %v1539
    %v1541 = vand.u32 %v1540, 4294901760
    %1542 = vmatmul.f32.gmra.mxu0 %v1541
    %v1543 = vpop.f32.mrf.mxu0
    %v1544 = vadd.f32 %v1440, %v1543
    %v1545 = vand.u32 %v1126, 4294901760
    %v1546 = vsub.f32 %v1126, %v1545
    %v1547 = vand.u32 %v1546, 4294901760
    %1548 = vmatmul.f32.gmra.mxu0 %v1547
    %v1549 = vpop.f32.mrf.mxu0
    %v1550 = vadd.f32 %v1445, %v1549
    %v1551 = vand.u32 %v1129, 4294901760
    %v1552 = vsub.f32 %v1129, %v1551
    %v1553 = vand.u32 %v1552, 4294901760
    %1554 = vmatmul.f32.gmra.mxu0 %v1553
    %v1555 = vpop.f32.mrf.mxu0
    %v1556 = vadd.f32 %v1450, %v1555
    %v1557 = vand.u32 %v1132, 4294901760
    %v1558 = vsub.f32 %v1132, %v1557
    %v1559 = vand.u32 %v1558, 4294901760
    %1560 = vmatmul.f32.gmra.mxu0 %v1559
    %v1561 = vpop.f32.mrf.mxu0
    %v1562 = vadd.f32 %v1455, %v1561
    %v1563 = vand.u32 %v1135, 4294901760
    %v1564 = vsub.f32 %v1135, %v1563
    %v1565 = vand.u32 %v1564, 4294901760
    %1566 = vmatmul.f32.gmra.mxu0 %v1565
    %v1567 = vpop.f32.mrf.mxu0
    %v1568 = vadd.f32 %v1460, %v1567
    %v1569 = vand.u32 %v1138, 4294901760
    %v1570 = vsub.f32 %v1138, %v1569
    %v1571 = vand.u32 %v1570, 4294901760
    %1572 = vmatmul.f32.gmra.mxu0 %v1571
    %v1573 = vpop.f32.mrf.mxu0
    %v1574 = vadd.f32 %v1465, %v1573
    %v1575 = vand.u32 %v1141, 4294901760
    %v1576 = vsub.f32 %v1141, %v1575
    %v1577 = vand.u32 %v1576, 4294901760
    %1578 = vmatmul.f32.gmra.mxu0 %v1577
    %v1579 = vpop.f32.mrf.mxu0
    %v1580 = vadd.f32 %v1470, %v1579
    %v1581 = vand.u32 %v1144, 4294901760
    %v1582 = vsub.f32 %v1144, %v1581
    %v1583 = vand.u32 %v1582, 4294901760
    %1584 = vmatmul.f32.gmra.mxu0 %v1583
    %v1585 = vpop.f32.mrf.mxu0
    %v1586 = vadd.f32 %v1475, %v1585
    %v1587 = vand.u32 %v1147, 4294901760
    %v1588 = vsub.f32 %v1147, %v1587
    %v1589 = vand.u32 %v1588, 4294901760
    %1590 = vmatmul.f32.gmra.mxu0 %v1589
    %v1591 = vpop.f32.mrf.mxu0
    %v1592 = vadd.f32 %v1480, %v1591
    %v1593 = vand.u32 %v1150, 4294901760
    %v1594 = vsub.f32 %v1150, %v1593
    %v1595 = vand.u32 %v1594, 4294901760
    %1596 = vmatmul.f32.gmra.mxu0 %v1595
    %v1597 = vpop.f32.mrf.mxu0
    %v1598 = vadd.f32 %v1485, %v1597
    %v1599 = vand.u32 %v1153, 4294901760
    %v1600 = vsub.f32 %v1153, %v1599
    %v1601 = vand.u32 %v1600, 4294901760
    %1602 = vmatmul.f32.gmra.mxu0 %v1601
    %v1603 = vpop.f32.mrf.mxu0
    %v1604 = vadd.f32 %v1490, %v1603
    %v1605 = vand.u32 %v1156, 4294901760
    %v1606 = vsub.f32 %v1156, %v1605
    %v1607 = vand.u32 %v1606, 4294901760
    %1608 = vmatmul.f32.gmra.mxu0 %v1607
    %v1609 = vpop.f32.mrf.mxu0
    %v1610 = vadd.f32 %v1495, %v1609
    %1611 = vdwg.mxu0
    %1612 = vmatpush.msra.mxu0 0.0
    %1613 = vmatpush.msra.mxu0 0.0
    %1614 = vmatpush.msra.mxu0 0.0
    %1615 = vmatpush.msra.mxu0 0.0
    %1616 = vmatpush.msra.mxu0 0.0
    %1617 = vmatpush.msra.mxu0 0.0
    %1618 = vmatpush.msra.mxu0 0.0
    %1619 = vmatpush.msra.mxu0 0.0
    %1620 = vmatpush.msra.mxu0 0.0
    %1621 = vmatpush.msra.mxu0 0.0
    %1622 = vmatpush.msra.mxu0 0.0
    %1623 = vmatpush.msra.mxu0 0.0
    %1624 = vmatpush.msra.mxu0 0.0
    %1625 = vmatpush.msra.mxu0 0.0
    %v1626 = vand.u32 %v82, 4294901760
    %v1627 = vsub.f32 %v82, %v1626
    %v1628 = vand.u32 %v1627, 4294901760
    %1629 = vmatpush.msra.mxu0 %v1628
    %v1630 = vand.u32 %v81, 4294901760
    %v1631 = vsub.f32 %v81, %v1630
    %v1632 = vand.u32 %v1631, 4294901760
    %1633 = vmatpush.msra.mxu0 %v1632
    %v1634 = vand.u32 %v1111, 4294901760
    %1635 = vmatmul.f32.gmra.mxu0 %v1634
    %v1636 = vpop.f32.mrf.mxu0
    %v1637 = vadd.f32 %v1520, %v1636
    %v1638 = vand.u32 %v1114, 4294901760
    %1639 = vmatmul.f32.gmra.mxu0 %v1638
    %v1640 = vpop.f32.mrf.mxu0
    %v1641 = vadd.f32 %v1526, %v1640
    %v1642 = vand.u32 %v1117, 4294901760
    %1643 = vmatmul.f32.gmra.mxu0 %v1642
    %v1644 = vpop.f32.mrf.mxu0
    %v1645 = vadd.f32 %v1532, %v1644
    %v1646 = vand.u32 %v1120, 4294901760
    %1647 = vmatmul.f32.gmra.mxu0 %v1646
    %v1648 = vpop.f32.mrf.mxu0
    %v1649 = vadd.f32 %v1538, %v1648
    %v1650 = vand.u32 %v1123, 4294901760
    %1651 = vmatmul.f32.gmra.mxu0 %v1650
    %v1652 = vpop.f32.mrf.mxu0
    %v1653 = vadd.f32 %v1544, %v1652
    %v1654 = vand.u32 %v1126, 4294901760
    %1655 = vmatmul.f32.gmra.mxu0 %v1654
    %v1656 = vpop.f32.mrf.mxu0
    %v1657 = vadd.f32 %v1550, %v1656
    %v1658 = vand.u32 %v1129, 4294901760
    %1659 = vmatmul.f32.gmra.mxu0 %v1658
    %v1660 = vpop.f32.mrf.mxu0
    %v1661 = vadd.f32 %v1556, %v1660
    %v1662 = vand.u32 %v1132, 4294901760
    %1663 = vmatmul.f32.gmra.mxu0 %v1662
    %v1664 = vpop.f32.mrf.mxu0
    %v1665 = vadd.f32 %v1562, %v1664
    %v1666 = vand.u32 %v1135, 4294901760
    %1667 = vmatmul.f32.gmra.mxu0 %v1666
    %v1668 = vpop.f32.mrf.mxu0
    %v1669 = vadd.f32 %v1568, %v1668
    %v1670 = vand.u32 %v1138, 4294901760
    %1671 = vmatmul.f32.gmra.mxu0 %v1670
    %v1672 = vpop.f32.mrf.mxu0
    %v1673 = vadd.f32 %v1574, %v1672
    %v1674 = vand.u32 %v1141, 4294901760
    %1675 = vmatmul.f32.gmra.mxu0 %v1674
    %v1676 = vpop.f32.mrf.mxu0
    %v1677 = vadd.f32 %v1580, %v1676
    %v1678 = vand.u32 %v1144, 4294901760
    %1679 = vmatmul.f32.gmra.mxu0 %v1678
    %v1680 = vpop.f32.mrf.mxu0
    %v1681 = vadd.f32 %v1586, %v1680
    %v1682 = vand.u32 %v1147, 4294901760
    %1683 = vmatmul.f32.gmra.mxu0 %v1682
    %v1684 = vpop.f32.mrf.mxu0
    %v1685 = vadd.f32 %v1592, %v1684
    %v1686 = vand.u32 %v1150, 4294901760
    %1687 = vmatmul.f32.gmra.mxu0 %v1686
    %v1688 = vpop.f32.mrf.mxu0
    %v1689 = vadd.f32 %v1598, %v1688
    %v1690 = vand.u32 %v1153, 4294901760
    %1691 = vmatmul.f32.gmra.mxu0 %v1690
    %v1692 = vpop.f32.mrf.mxu0
    %v1693 = vadd.f32 %v1604, %v1692
    %v1694 = vand.u32 %v1156, 4294901760
    %1695 = vmatmul.f32.gmra.mxu0 %v1694
    %v1696 = vpop.f32.mrf.mxu0
    %v1697 = vadd.f32 %v1610, %v1696
    %1698 = vdwg.mxu0
    %1699 = vmatpush.msra.mxu0 0.0
    %1700 = vmatpush.msra.mxu0 0.0
    %1701 = vmatpush.msra.mxu0 0.0
    %1702 = vmatpush.msra.mxu0 0.0
    %1703 = vmatpush.msra.mxu0 0.0
    %1704 = vmatpush.msra.mxu0 0.0
    %1705 = vmatpush.msra.mxu0 0.0
    %1706 = vmatpush.msra.mxu0 0.0
    %1707 = vmatpush.msra.mxu0 0.0
    %1708 = vmatpush.msra.mxu0 0.0
    %1709 = vmatpush.msra.mxu0 0.0
    %1710 = vmatpush.msra.mxu0 0.0
    %1711 = vmatpush.msra.mxu0 0.0
    %1712 = vmatpush.msra.mxu0 0.0
    %v1713 = vand.u32 %v82, 4294901760
    %1714 = vmatpush.msra.mxu0 %v1713
    %v1715 = vand.u32 %v81, 4294901760
    %1716 = vmatpush.msra.mxu0 %v1715
    %v1717 = vand.u32 %v1111, 4294901760
    %1718 = vmatmul.f32.gmra.mxu0 %v1717
    %v1719 = vpop.f32.mrf.mxu0
    %v1720 = vadd.f32 %v1637, %v1719
    %v1721 = vand.u32 %v1114, 4294901760
    %1722 = vmatmul.f32.gmra.mxu0 %v1721
    %v1723 = vpop.f32.mrf.mxu0
    %v1724 = vadd.f32 %v1641, %v1723
    %v1725 = vand.u32 %v1117, 4294901760
    %1726 = vmatmul.f32.gmra.mxu0 %v1725
    %v1727 = vpop.f32.mrf.mxu0
    %v1728 = vadd.f32 %v1645, %v1727
    %v1729 = vand.u32 %v1120, 4294901760
    %1730 = vmatmul.f32.gmra.mxu0 %v1729
    %v1731 = vpop.f32.mrf.mxu0
    %v1732 = vadd.f32 %v1649, %v1731
    %v1733 = vand.u32 %v1123, 4294901760
    %1734 = vmatmul.f32.gmra.mxu0 %v1733
    %v1735 = vpop.f32.mrf.mxu0
    %v1736 = vadd.f32 %v1653, %v1735
    %v1737 = vand.u32 %v1126, 4294901760
    %1738 = vmatmul.f32.gmra.mxu0 %v1737
    %v1739 = vpop.f32.mrf.mxu0
    %v1740 = vadd.f32 %v1657, %v1739
    %v1741 = vand.u32 %v1129, 4294901760
    %1742 = vmatmul.f32.gmra.mxu0 %v1741
    %v1743 = vpop.f32.mrf.mxu0
    %v1744 = vadd.f32 %v1661, %v1743
    %v1745 = vand.u32 %v1132, 4294901760
    %1746 = vmatmul.f32.gmra.mxu0 %v1745
    %v1747 = vpop.f32.mrf.mxu0
    %v1748 = vadd.f32 %v1665, %v1747
    %v1749 = vand.u32 %v1135, 4294901760
    %1750 = vmatmul.f32.gmra.mxu0 %v1749
    %v1751 = vpop.f32.mrf.mxu0
    %v1752 = vadd.f32 %v1669, %v1751
    %v1753 = vand.u32 %v1138, 4294901760
    %1754 = vmatmul.f32.gmra.mxu0 %v1753
    %v1755 = vpop.f32.mrf.mxu0
    %v1756 = vadd.f32 %v1673, %v1755
    %v1757 = vand.u32 %v1141, 4294901760
    %1758 = vmatmul.f32.gmra.mxu0 %v1757
    %v1759 = vpop.f32.mrf.mxu0
    %v1760 = vadd.f32 %v1677, %v1759
    %v1761 = vand.u32 %v1144, 4294901760
    %1762 = vmatmul.f32.gmra.mxu0 %v1761
    %v1763 = vpop.f32.mrf.mxu0
    %v1764 = vadd.f32 %v1681, %v1763
    %v1765 = vand.u32 %v1147, 4294901760
    %1766 = vmatmul.f32.gmra.mxu0 %v1765
    %v1767 = vpop.f32.mrf.mxu0
    %v1768 = vadd.f32 %v1685, %v1767
    %v1769 = vand.u32 %v1150, 4294901760
    %1770 = vmatmul.f32.gmra.mxu0 %v1769
    %v1771 = vpop.f32.mrf.mxu0
    %v1772 = vadd.f32 %v1689, %v1771
    %v1773 = vand.u32 %v1153, 4294901760
    %1774 = vmatmul.f32.gmra.mxu0 %v1773
    %v1775 = vpop.f32.mrf.mxu0
    %v1776 = vadd.f32 %v1693, %v1775
    %v1777 = vand.u32 %v1156, 4294901760
    %1778 = vmatmul.f32.gmra.mxu0 %v1777
    %v1779 = vpop.f32.mrf.mxu0
    %v1780 = vadd.f32 %v1697, %v1779
    %1781 = vdwg.mxu0
    %v1783 = vsel %vm181, %v165, 0
    %v1786 = vsel %vm181, %v166, 0
    %v1789 = vsel %vm181, %v167, 0
    %v1792 = vsel %vm181, %v168, 0
    %v1795 = vsel %vm181, %v169, 0
    %v1798 = vsel %vm181, %v170, 0
    %v1801 = vsel %vm181, %v171, 0
    %v1804 = vsel %vm181, %v172, 0
    %v1807 = vsel %vm181, %v173, 0
    %v1810 = vsel %vm181, %v174, 0
    %v1813 = vsel %vm181, %v175, 0
    %v1816 = vsel %vm181, %v176, 0
    %v1819 = vsel %vm181, %v177, 0
    %v1822 = vsel %vm181, %v178, 0
    %v1825 = vsel %vm181, %v179, 0
    %v1828 = vsel %vm181, %v180, 0
    %1830 = vmatpush.msra.mxu0 0.0
    %1831 = vmatpush.msra.mxu0 0.0
    %1832 = vmatpush.msra.mxu0 0.0
    %1833 = vmatpush.msra.mxu0 0.0
    %1834 = vmatpush.msra.mxu0 0.0
    %1835 = vmatpush.msra.mxu0 0.0
    %1836 = vmatpush.msra.mxu0 0.0
    %1837 = vmatpush.msra.mxu0 0.0
    %1838 = vmatpush.msra.mxu0 0.0
    %1839 = vmatpush.msra.mxu0 0.0
    %1840 = vmatpush.msra.mxu0 0.0
    %1841 = vmatpush.msra.mxu0 0.0
    %1842 = vmatpush.msra.mxu0 0.0
    %1843 = vmatpush.msra.mxu0 0.0
    %v1844 = vand.u32 %v84, 4294901760
    %1845 = vmatpush.msra.mxu0 %v1844
    %v1846 = vand.u32 %v83, 4294901760
    %1847 = vmatpush.msra.mxu0 %v1846
    %v1848 = vand.u32 %v1783, 4294901760
    %v1849 = vsub.f32 %v1783, %v1848
    %v1850 = vand.u32 %v1849, 4294901760
    %v1851 = vsub.f32 %v1849, %v1850
    %v1852 = vand.u32 %v1851, 4294901760
    %1853 = vmatmul.f32.gmra.mxu0 %v1852
    %v1854 = vpop.f32.mrf.mxu0
    %v1855 = vadd.f32 0.0, %v1854
    %v1856 = vand.u32 %v1786, 4294901760
    %v1857 = vsub.f32 %v1786, %v1856
    %v1858 = vand.u32 %v1857, 4294901760
    %v1859 = vsub.f32 %v1857, %v1858
    %v1860 = vand.u32 %v1859, 4294901760
    %1861 = vmatmul.f32.gmra.mxu0 %v1860
    %v1862 = vpop.f32.mrf.mxu0
    %v1863 = vadd.f32 0.0, %v1862
    %v1864 = vand.u32 %v1789, 4294901760
    %v1865 = vsub.f32 %v1789, %v1864
    %v1866 = vand.u32 %v1865, 4294901760
    %v1867 = vsub.f32 %v1865, %v1866
    %v1868 = vand.u32 %v1867, 4294901760
    %1869 = vmatmul.f32.gmra.mxu0 %v1868
    %v1870 = vpop.f32.mrf.mxu0
    %v1871 = vadd.f32 0.0, %v1870
    %v1872 = vand.u32 %v1792, 4294901760
    %v1873 = vsub.f32 %v1792, %v1872
    %v1874 = vand.u32 %v1873, 4294901760
    %v1875 = vsub.f32 %v1873, %v1874
    %v1876 = vand.u32 %v1875, 4294901760
    %1877 = vmatmul.f32.gmra.mxu0 %v1876
    %v1878 = vpop.f32.mrf.mxu0
    %v1879 = vadd.f32 0.0, %v1878
    %v1880 = vand.u32 %v1795, 4294901760
    %v1881 = vsub.f32 %v1795, %v1880
    %v1882 = vand.u32 %v1881, 4294901760
    %v1883 = vsub.f32 %v1881, %v1882
    %v1884 = vand.u32 %v1883, 4294901760
    %1885 = vmatmul.f32.gmra.mxu0 %v1884
    %v1886 = vpop.f32.mrf.mxu0
    %v1887 = vadd.f32 0.0, %v1886
    %v1888 = vand.u32 %v1798, 4294901760
    %v1889 = vsub.f32 %v1798, %v1888
    %v1890 = vand.u32 %v1889, 4294901760
    %v1891 = vsub.f32 %v1889, %v1890
    %v1892 = vand.u32 %v1891, 4294901760
    %1893 = vmatmul.f32.gmra.mxu0 %v1892
    %v1894 = vpop.f32.mrf.mxu0
    %v1895 = vadd.f32 0.0, %v1894
    %v1896 = vand.u32 %v1801, 4294901760
    %v1897 = vsub.f32 %v1801, %v1896
    %v1898 = vand.u32 %v1897, 4294901760
    %v1899 = vsub.f32 %v1897, %v1898
    %v1900 = vand.u32 %v1899, 4294901760
    %1901 = vmatmul.f32.gmra.mxu0 %v1900
    %v1902 = vpop.f32.mrf.mxu0
    %v1903 = vadd.f32 0.0, %v1902
    %v1904 = vand.u32 %v1804, 4294901760
    %v1905 = vsub.f32 %v1804, %v1904
    %v1906 = vand.u32 %v1905, 4294901760
    %v1907 = vsub.f32 %v1905, %v1906
    %v1908 = vand.u32 %v1907, 4294901760
    %1909 = vmatmul.f32.gmra.mxu0 %v1908
    %v1910 = vpop.f32.mrf.mxu0
    %v1911 = vadd.f32 0.0, %v1910
    %v1912 = vand.u32 %v1807, 4294901760
    %v1913 = vsub.f32 %v1807, %v1912
    %v1914 = vand.u32 %v1913, 4294901760
    %v1915 = vsub.f32 %v1913, %v1914
    %v1916 = vand.u32 %v1915, 4294901760
    %1917 = vmatmul.f32.gmra.mxu0 %v1916
    %v1918 = vpop.f32.mrf.mxu0
    %v1919 = vadd.f32 0.0, %v1918
    %v1920 = vand.u32 %v1810, 4294901760
    %v1921 = vsub.f32 %v1810, %v1920
    %v1922 = vand.u32 %v1921, 4294901760
    %v1923 = vsub.f32 %v1921, %v1922
    %v1924 = vand.u32 %v1923, 4294901760
    %1925 = vmatmul.f32.gmra.mxu0 %v1924
    %v1926 = vpop.f32.mrf.mxu0
    %v1927 = vadd.f32 0.0, %v1926
    %v1928 = vand.u32 %v1813, 4294901760
    %v1929 = vsub.f32 %v1813, %v1928
    %v1930 = vand.u32 %v1929, 4294901760
    %v1931 = vsub.f32 %v1929, %v1930
    %v1932 = vand.u32 %v1931, 4294901760
    %1933 = vmatmul.f32.gmra.mxu0 %v1932
    %v1934 = vpop.f32.mrf.mxu0
    %v1935 = vadd.f32 0.0, %v1934
    %v1936 = vand.u32 %v1816, 4294901760
    %v1937 = vsub.f32 %v1816, %v1936
    %v1938 = vand.u32 %v1937, 4294901760
    %v1939 = vsub.f32 %v1937, %v1938
    %v1940 = vand.u32 %v1939, 4294901760
    %1941 = vmatmul.f32.gmra.mxu0 %v1940
    %v1942 = vpop.f32.mrf.mxu0
    %v1943 = vadd.f32 0.0, %v1942
    %v1944 = vand.u32 %v1819, 4294901760
    %v1945 = vsub.f32 %v1819, %v1944
    %v1946 = vand.u32 %v1945, 4294901760
    %v1947 = vsub.f32 %v1945, %v1946
    %v1948 = vand.u32 %v1947, 4294901760
    %1949 = vmatmul.f32.gmra.mxu0 %v1948
    %v1950 = vpop.f32.mrf.mxu0
    %v1951 = vadd.f32 0.0, %v1950
    %v1952 = vand.u32 %v1822, 4294901760
    %v1953 = vsub.f32 %v1822, %v1952
    %v1954 = vand.u32 %v1953, 4294901760
    %v1955 = vsub.f32 %v1953, %v1954
    %v1956 = vand.u32 %v1955, 4294901760
    %1957 = vmatmul.f32.gmra.mxu0 %v1956
    %v1958 = vpop.f32.mrf.mxu0
    %v1959 = vadd.f32 0.0, %v1958
    %v1960 = vand.u32 %v1825, 4294901760
    %v1961 = vsub.f32 %v1825, %v1960
    %v1962 = vand.u32 %v1961, 4294901760
    %v1963 = vsub.f32 %v1961, %v1962
    %v1964 = vand.u32 %v1963, 4294901760
    %1965 = vmatmul.f32.gmra.mxu0 %v1964
    %v1966 = vpop.f32.mrf.mxu0
    %v1967 = vadd.f32 0.0, %v1966
    %v1968 = vand.u32 %v1828, 4294901760
    %v1969 = vsub.f32 %v1828, %v1968
    %v1970 = vand.u32 %v1969, 4294901760
    %v1971 = vsub.f32 %v1969, %v1970
    %v1972 = vand.u32 %v1971, 4294901760
    %1973 = vmatmul.f32.gmra.mxu0 %v1972
    %v1974 = vpop.f32.mrf.mxu0
    %v1975 = vadd.f32 0.0, %v1974
    %1976 = vdwg.mxu0
    %1977 = vmatpush.msra.mxu0 0.0
    %1978 = vmatpush.msra.mxu0 0.0
    %1979 = vmatpush.msra.mxu0 0.0
    %1980 = vmatpush.msra.mxu0 0.0
    %1981 = vmatpush.msra.mxu0 0.0
    %1982 = vmatpush.msra.mxu0 0.0
    %1983 = vmatpush.msra.mxu0 0.0
    %1984 = vmatpush.msra.mxu0 0.0
    %1985 = vmatpush.msra.mxu0 0.0
    %1986 = vmatpush.msra.mxu0 0.0
    %1987 = vmatpush.msra.mxu0 0.0
    %1988 = vmatpush.msra.mxu0 0.0
    %1989 = vmatpush.msra.mxu0 0.0
    %1990 = vmatpush.msra.mxu0 0.0
    %v1991 = vand.u32 %v84, 4294901760
    %v1992 = vsub.f32 %v84, %v1991
    %v1993 = vand.u32 %v1992, 4294901760
    %v1994 = vsub.f32 %v1992, %v1993
    %v1995 = vand.u32 %v1994, 4294901760
    %1996 = vmatpush.msra.mxu0 %v1995
    %v1997 = vand.u32 %v83, 4294901760
    %v1998 = vsub.f32 %v83, %v1997
    %v1999 = vand.u32 %v1998, 4294901760
    %v2000 = vsub.f32 %v1998, %v1999
    %v2001 = vand.u32 %v2000, 4294901760
    %2002 = vmatpush.msra.mxu0 %v2001
    %v2003 = vand.u32 %v1783, 4294901760
    %2004 = vmatmul.f32.gmra.mxu0 %v2003
    %v2005 = vpop.f32.mrf.mxu0
    %v2006 = vadd.f32 %v1855, %v2005
    %v2007 = vand.u32 %v1786, 4294901760
    %2008 = vmatmul.f32.gmra.mxu0 %v2007
    %v2009 = vpop.f32.mrf.mxu0
    %v2010 = vadd.f32 %v1863, %v2009
    %v2011 = vand.u32 %v1789, 4294901760
    %2012 = vmatmul.f32.gmra.mxu0 %v2011
    %v2013 = vpop.f32.mrf.mxu0
    %v2014 = vadd.f32 %v1871, %v2013
    %v2015 = vand.u32 %v1792, 4294901760
    %2016 = vmatmul.f32.gmra.mxu0 %v2015
    %v2017 = vpop.f32.mrf.mxu0
    %v2018 = vadd.f32 %v1879, %v2017
    %v2019 = vand.u32 %v1795, 4294901760
    %2020 = vmatmul.f32.gmra.mxu0 %v2019
    %v2021 = vpop.f32.mrf.mxu0
    %v2022 = vadd.f32 %v1887, %v2021
    %v2023 = vand.u32 %v1798, 4294901760
    %2024 = vmatmul.f32.gmra.mxu0 %v2023
    %v2025 = vpop.f32.mrf.mxu0
    %v2026 = vadd.f32 %v1895, %v2025
    %v2027 = vand.u32 %v1801, 4294901760
    %2028 = vmatmul.f32.gmra.mxu0 %v2027
    %v2029 = vpop.f32.mrf.mxu0
    %v2030 = vadd.f32 %v1903, %v2029
    %v2031 = vand.u32 %v1804, 4294901760
    %2032 = vmatmul.f32.gmra.mxu0 %v2031
    %v2033 = vpop.f32.mrf.mxu0
    %v2034 = vadd.f32 %v1911, %v2033
    %v2035 = vand.u32 %v1807, 4294901760
    %2036 = vmatmul.f32.gmra.mxu0 %v2035
    %v2037 = vpop.f32.mrf.mxu0
    %v2038 = vadd.f32 %v1919, %v2037
    %v2039 = vand.u32 %v1810, 4294901760
    %2040 = vmatmul.f32.gmra.mxu0 %v2039
    %v2041 = vpop.f32.mrf.mxu0
    %v2042 = vadd.f32 %v1927, %v2041
    %v2043 = vand.u32 %v1813, 4294901760
    %2044 = vmatmul.f32.gmra.mxu0 %v2043
    %v2045 = vpop.f32.mrf.mxu0
    %v2046 = vadd.f32 %v1935, %v2045
    %v2047 = vand.u32 %v1816, 4294901760
    %2048 = vmatmul.f32.gmra.mxu0 %v2047
    %v2049 = vpop.f32.mrf.mxu0
    %v2050 = vadd.f32 %v1943, %v2049
    %v2051 = vand.u32 %v1819, 4294901760
    %2052 = vmatmul.f32.gmra.mxu0 %v2051
    %v2053 = vpop.f32.mrf.mxu0
    %v2054 = vadd.f32 %v1951, %v2053
    %v2055 = vand.u32 %v1822, 4294901760
    %2056 = vmatmul.f32.gmra.mxu0 %v2055
    %v2057 = vpop.f32.mrf.mxu0
    %v2058 = vadd.f32 %v1959, %v2057
    %v2059 = vand.u32 %v1825, 4294901760
    %2060 = vmatmul.f32.gmra.mxu0 %v2059
    %v2061 = vpop.f32.mrf.mxu0
    %v2062 = vadd.f32 %v1967, %v2061
    %v2063 = vand.u32 %v1828, 4294901760
    %2064 = vmatmul.f32.gmra.mxu0 %v2063
    %v2065 = vpop.f32.mrf.mxu0
    %v2066 = vadd.f32 %v1975, %v2065
    %2067 = vdwg.mxu0
    %2068 = vmatpush.msra.mxu0 0.0
    %2069 = vmatpush.msra.mxu0 0.0
    %2070 = vmatpush.msra.mxu0 0.0
    %2071 = vmatpush.msra.mxu0 0.0
    %2072 = vmatpush.msra.mxu0 0.0
    %2073 = vmatpush.msra.mxu0 0.0
    %2074 = vmatpush.msra.mxu0 0.0
    %2075 = vmatpush.msra.mxu0 0.0
    %2076 = vmatpush.msra.mxu0 0.0
    %2077 = vmatpush.msra.mxu0 0.0
    %2078 = vmatpush.msra.mxu0 0.0
    %2079 = vmatpush.msra.mxu0 0.0
    %2080 = vmatpush.msra.mxu0 0.0
    %2081 = vmatpush.msra.mxu0 0.0
    %v2082 = vand.u32 %v84, 4294901760
    %v2083 = vsub.f32 %v84, %v2082
    %2084 = vmatpush.msra.mxu0 %v2083
    %v2085 = vand.u32 %v83, 4294901760
    %v2086 = vsub.f32 %v83, %v2085
    %2087 = vmatpush.msra.mxu0 %v2086
    %v2088 = vand.u32 %v1783, 4294901760
    %v2089 = vsub.f32 %v1783, %v2088
    %2090 = vmatmul.f32.gmra.mxu0 %v2089
    %v2091 = vpop.f32.mrf.mxu0
    %v2092 = vadd.f32 %v2006, %v2091
    %v2093 = vand.u32 %v1786, 4294901760
    %v2094 = vsub.f32 %v1786, %v2093
    %2095 = vmatmul.f32.gmra.mxu0 %v2094
    %v2096 = vpop.f32.mrf.mxu0
    %v2097 = vadd.f32 %v2010, %v2096
    %v2098 = vand.u32 %v1789, 4294901760
    %v2099 = vsub.f32 %v1789, %v2098
    %2100 = vmatmul.f32.gmra.mxu0 %v2099
    %v2101 = vpop.f32.mrf.mxu0
    %v2102 = vadd.f32 %v2014, %v2101
    %v2103 = vand.u32 %v1792, 4294901760
    %v2104 = vsub.f32 %v1792, %v2103
    %2105 = vmatmul.f32.gmra.mxu0 %v2104
    %v2106 = vpop.f32.mrf.mxu0
    %v2107 = vadd.f32 %v2018, %v2106
    %v2108 = vand.u32 %v1795, 4294901760
    %v2109 = vsub.f32 %v1795, %v2108
    %2110 = vmatmul.f32.gmra.mxu0 %v2109
    %v2111 = vpop.f32.mrf.mxu0
    %v2112 = vadd.f32 %v2022, %v2111
    %v2113 = vand.u32 %v1798, 4294901760
    %v2114 = vsub.f32 %v1798, %v2113
    %2115 = vmatmul.f32.gmra.mxu0 %v2114
    %v2116 = vpop.f32.mrf.mxu0
    %v2117 = vadd.f32 %v2026, %v2116
    %v2118 = vand.u32 %v1801, 4294901760
    %v2119 = vsub.f32 %v1801, %v2118
    %2120 = vmatmul.f32.gmra.mxu0 %v2119
    %v2121 = vpop.f32.mrf.mxu0
    %v2122 = vadd.f32 %v2030, %v2121
    %v2123 = vand.u32 %v1804, 4294901760
    %v2124 = vsub.f32 %v1804, %v2123
    %2125 = vmatmul.f32.gmra.mxu0 %v2124
    %v2126 = vpop.f32.mrf.mxu0
    %v2127 = vadd.f32 %v2034, %v2126
    %v2128 = vand.u32 %v1807, 4294901760
    %v2129 = vsub.f32 %v1807, %v2128
    %2130 = vmatmul.f32.gmra.mxu0 %v2129
    %v2131 = vpop.f32.mrf.mxu0
    %v2132 = vadd.f32 %v2038, %v2131
    %v2133 = vand.u32 %v1810, 4294901760
    %v2134 = vsub.f32 %v1810, %v2133
    %2135 = vmatmul.f32.gmra.mxu0 %v2134
    %v2136 = vpop.f32.mrf.mxu0
    %v2137 = vadd.f32 %v2042, %v2136
    %v2138 = vand.u32 %v1813, 4294901760
    %v2139 = vsub.f32 %v1813, %v2138
    %2140 = vmatmul.f32.gmra.mxu0 %v2139
    %v2141 = vpop.f32.mrf.mxu0
    %v2142 = vadd.f32 %v2046, %v2141
    %v2143 = vand.u32 %v1816, 4294901760
    %v2144 = vsub.f32 %v1816, %v2143
    %2145 = vmatmul.f32.gmra.mxu0 %v2144
    %v2146 = vpop.f32.mrf.mxu0
    %v2147 = vadd.f32 %v2050, %v2146
    %v2148 = vand.u32 %v1819, 4294901760
    %v2149 = vsub.f32 %v1819, %v2148
    %2150 = vmatmul.f32.gmra.mxu0 %v2149
    %v2151 = vpop.f32.mrf.mxu0
    %v2152 = vadd.f32 %v2054, %v2151
    %v2153 = vand.u32 %v1822, 4294901760
    %v2154 = vsub.f32 %v1822, %v2153
    %2155 = vmatmul.f32.gmra.mxu0 %v2154
    %v2156 = vpop.f32.mrf.mxu0
    %v2157 = vadd.f32 %v2058, %v2156
    %v2158 = vand.u32 %v1825, 4294901760
    %v2159 = vsub.f32 %v1825, %v2158
    %2160 = vmatmul.f32.gmra.mxu0 %v2159
    %v2161 = vpop.f32.mrf.mxu0
    %v2162 = vadd.f32 %v2062, %v2161
    %v2163 = vand.u32 %v1828, 4294901760
    %v2164 = vsub.f32 %v1828, %v2163
    %2165 = vmatmul.f32.gmra.mxu0 %v2164
    %v2166 = vpop.f32.mrf.mxu0
    %v2167 = vadd.f32 %v2066, %v2166
    %2168 = vdwg.mxu0
    %2169 = vmatpush.msra.mxu0 0.0
    %2170 = vmatpush.msra.mxu0 0.0
    %2171 = vmatpush.msra.mxu0 0.0
    %2172 = vmatpush.msra.mxu0 0.0
    %2173 = vmatpush.msra.mxu0 0.0
    %2174 = vmatpush.msra.mxu0 0.0
    %2175 = vmatpush.msra.mxu0 0.0
    %2176 = vmatpush.msra.mxu0 0.0
    %2177 = vmatpush.msra.mxu0 0.0
    %2178 = vmatpush.msra.mxu0 0.0
    %2179 = vmatpush.msra.mxu0 0.0
    %2180 = vmatpush.msra.mxu0 0.0
    %2181 = vmatpush.msra.mxu0 0.0
    %2182 = vmatpush.msra.mxu0 0.0
    %v2183 = vand.u32 %v84, 4294901760
    %2184 = vmatpush.msra.mxu0 %v2183
    %v2185 = vand.u32 %v83, 4294901760
    %2186 = vmatpush.msra.mxu0 %v2185
    %v2187 = vand.u32 %v1783, 4294901760
    %v2188 = vsub.f32 %v1783, %v2187
    %v2189 = vand.u32 %v2188, 4294901760
    %2190 = vmatmul.f32.gmra.mxu0 %v2189
    %v2191 = vpop.f32.mrf.mxu0
    %v2192 = vadd.f32 %v2092, %v2191
    %v2193 = vand.u32 %v1786, 4294901760
    %v2194 = vsub.f32 %v1786, %v2193
    %v2195 = vand.u32 %v2194, 4294901760
    %2196 = vmatmul.f32.gmra.mxu0 %v2195
    %v2197 = vpop.f32.mrf.mxu0
    %v2198 = vadd.f32 %v2097, %v2197
    %v2199 = vand.u32 %v1789, 4294901760
    %v2200 = vsub.f32 %v1789, %v2199
    %v2201 = vand.u32 %v2200, 4294901760
    %2202 = vmatmul.f32.gmra.mxu0 %v2201
    %v2203 = vpop.f32.mrf.mxu0
    %v2204 = vadd.f32 %v2102, %v2203
    %v2205 = vand.u32 %v1792, 4294901760
    %v2206 = vsub.f32 %v1792, %v2205
    %v2207 = vand.u32 %v2206, 4294901760
    %2208 = vmatmul.f32.gmra.mxu0 %v2207
    %v2209 = vpop.f32.mrf.mxu0
    %v2210 = vadd.f32 %v2107, %v2209
    %v2211 = vand.u32 %v1795, 4294901760
    %v2212 = vsub.f32 %v1795, %v2211
    %v2213 = vand.u32 %v2212, 4294901760
    %2214 = vmatmul.f32.gmra.mxu0 %v2213
    %v2215 = vpop.f32.mrf.mxu0
    %v2216 = vadd.f32 %v2112, %v2215
    %v2217 = vand.u32 %v1798, 4294901760
    %v2218 = vsub.f32 %v1798, %v2217
    %v2219 = vand.u32 %v2218, 4294901760
    %2220 = vmatmul.f32.gmra.mxu0 %v2219
    %v2221 = vpop.f32.mrf.mxu0
    %v2222 = vadd.f32 %v2117, %v2221
    %v2223 = vand.u32 %v1801, 4294901760
    %v2224 = vsub.f32 %v1801, %v2223
    %v2225 = vand.u32 %v2224, 4294901760
    %2226 = vmatmul.f32.gmra.mxu0 %v2225
    %v2227 = vpop.f32.mrf.mxu0
    %v2228 = vadd.f32 %v2122, %v2227
    %v2229 = vand.u32 %v1804, 4294901760
    %v2230 = vsub.f32 %v1804, %v2229
    %v2231 = vand.u32 %v2230, 4294901760
    %2232 = vmatmul.f32.gmra.mxu0 %v2231
    %v2233 = vpop.f32.mrf.mxu0
    %v2234 = vadd.f32 %v2127, %v2233
    %v2235 = vand.u32 %v1807, 4294901760
    %v2236 = vsub.f32 %v1807, %v2235
    %v2237 = vand.u32 %v2236, 4294901760
    %2238 = vmatmul.f32.gmra.mxu0 %v2237
    %v2239 = vpop.f32.mrf.mxu0
    %v2240 = vadd.f32 %v2132, %v2239
    %v2241 = vand.u32 %v1810, 4294901760
    %v2242 = vsub.f32 %v1810, %v2241
    %v2243 = vand.u32 %v2242, 4294901760
    %2244 = vmatmul.f32.gmra.mxu0 %v2243
    %v2245 = vpop.f32.mrf.mxu0
    %v2246 = vadd.f32 %v2137, %v2245
    %v2247 = vand.u32 %v1813, 4294901760
    %v2248 = vsub.f32 %v1813, %v2247
    %v2249 = vand.u32 %v2248, 4294901760
    %2250 = vmatmul.f32.gmra.mxu0 %v2249
    %v2251 = vpop.f32.mrf.mxu0
    %v2252 = vadd.f32 %v2142, %v2251
    %v2253 = vand.u32 %v1816, 4294901760
    %v2254 = vsub.f32 %v1816, %v2253
    %v2255 = vand.u32 %v2254, 4294901760
    %2256 = vmatmul.f32.gmra.mxu0 %v2255
    %v2257 = vpop.f32.mrf.mxu0
    %v2258 = vadd.f32 %v2147, %v2257
    %v2259 = vand.u32 %v1819, 4294901760
    %v2260 = vsub.f32 %v1819, %v2259
    %v2261 = vand.u32 %v2260, 4294901760
    %2262 = vmatmul.f32.gmra.mxu0 %v2261
    %v2263 = vpop.f32.mrf.mxu0
    %v2264 = vadd.f32 %v2152, %v2263
    %v2265 = vand.u32 %v1822, 4294901760
    %v2266 = vsub.f32 %v1822, %v2265
    %v2267 = vand.u32 %v2266, 4294901760
    %2268 = vmatmul.f32.gmra.mxu0 %v2267
    %v2269 = vpop.f32.mrf.mxu0
    %v2270 = vadd.f32 %v2157, %v2269
    %v2271 = vand.u32 %v1825, 4294901760
    %v2272 = vsub.f32 %v1825, %v2271
    %v2273 = vand.u32 %v2272, 4294901760
    %2274 = vmatmul.f32.gmra.mxu0 %v2273
    %v2275 = vpop.f32.mrf.mxu0
    %v2276 = vadd.f32 %v2162, %v2275
    %v2277 = vand.u32 %v1828, 4294901760
    %v2278 = vsub.f32 %v1828, %v2277
    %v2279 = vand.u32 %v2278, 4294901760
    %2280 = vmatmul.f32.gmra.mxu0 %v2279
    %v2281 = vpop.f32.mrf.mxu0
    %v2282 = vadd.f32 %v2167, %v2281
    %2283 = vdwg.mxu0
    %2284 = vmatpush.msra.mxu0 0.0
    %2285 = vmatpush.msra.mxu0 0.0
    %2286 = vmatpush.msra.mxu0 0.0
    %2287 = vmatpush.msra.mxu0 0.0
    %2288 = vmatpush.msra.mxu0 0.0
    %2289 = vmatpush.msra.mxu0 0.0
    %2290 = vmatpush.msra.mxu0 0.0
    %2291 = vmatpush.msra.mxu0 0.0
    %2292 = vmatpush.msra.mxu0 0.0
    %2293 = vmatpush.msra.mxu0 0.0
    %2294 = vmatpush.msra.mxu0 0.0
    %2295 = vmatpush.msra.mxu0 0.0
    %2296 = vmatpush.msra.mxu0 0.0
    %2297 = vmatpush.msra.mxu0 0.0
    %v2298 = vand.u32 %v84, 4294901760
    %v2299 = vsub.f32 %v84, %v2298
    %v2300 = vand.u32 %v2299, 4294901760
    %2301 = vmatpush.msra.mxu0 %v2300
    %v2302 = vand.u32 %v83, 4294901760
    %v2303 = vsub.f32 %v83, %v2302
    %v2304 = vand.u32 %v2303, 4294901760
    %2305 = vmatpush.msra.mxu0 %v2304
    %v2306 = vand.u32 %v1783, 4294901760
    %2307 = vmatmul.f32.gmra.mxu0 %v2306
    %v2308 = vpop.f32.mrf.mxu0
    %v2309 = vadd.f32 %v2192, %v2308
    %v2310 = vand.u32 %v1786, 4294901760
    %2311 = vmatmul.f32.gmra.mxu0 %v2310
    %v2312 = vpop.f32.mrf.mxu0
    %v2313 = vadd.f32 %v2198, %v2312
    %v2314 = vand.u32 %v1789, 4294901760
    %2315 = vmatmul.f32.gmra.mxu0 %v2314
    %v2316 = vpop.f32.mrf.mxu0
    %v2317 = vadd.f32 %v2204, %v2316
    %v2318 = vand.u32 %v1792, 4294901760
    %2319 = vmatmul.f32.gmra.mxu0 %v2318
    %v2320 = vpop.f32.mrf.mxu0
    %v2321 = vadd.f32 %v2210, %v2320
    %v2322 = vand.u32 %v1795, 4294901760
    %2323 = vmatmul.f32.gmra.mxu0 %v2322
    %v2324 = vpop.f32.mrf.mxu0
    %v2325 = vadd.f32 %v2216, %v2324
    %v2326 = vand.u32 %v1798, 4294901760
    %2327 = vmatmul.f32.gmra.mxu0 %v2326
    %v2328 = vpop.f32.mrf.mxu0
    %v2329 = vadd.f32 %v2222, %v2328
    %v2330 = vand.u32 %v1801, 4294901760
    %2331 = vmatmul.f32.gmra.mxu0 %v2330
    %v2332 = vpop.f32.mrf.mxu0
    %v2333 = vadd.f32 %v2228, %v2332
    %v2334 = vand.u32 %v1804, 4294901760
    %2335 = vmatmul.f32.gmra.mxu0 %v2334
    %v2336 = vpop.f32.mrf.mxu0
    %v2337 = vadd.f32 %v2234, %v2336
    %v2338 = vand.u32 %v1807, 4294901760
    %2339 = vmatmul.f32.gmra.mxu0 %v2338
    %v2340 = vpop.f32.mrf.mxu0
    %v2341 = vadd.f32 %v2240, %v2340
    %v2342 = vand.u32 %v1810, 4294901760
    %2343 = vmatmul.f32.gmra.mxu0 %v2342
    %v2344 = vpop.f32.mrf.mxu0
    %v2345 = vadd.f32 %v2246, %v2344
    %v2346 = vand.u32 %v1813, 4294901760
    %2347 = vmatmul.f32.gmra.mxu0 %v2346
    %v2348 = vpop.f32.mrf.mxu0
    %v2349 = vadd.f32 %v2252, %v2348
    %v2350 = vand.u32 %v1816, 4294901760
    %2351 = vmatmul.f32.gmra.mxu0 %v2350
    %v2352 = vpop.f32.mrf.mxu0
    %v2353 = vadd.f32 %v2258, %v2352
    %v2354 = vand.u32 %v1819, 4294901760
    %2355 = vmatmul.f32.gmra.mxu0 %v2354
    %v2356 = vpop.f32.mrf.mxu0
    %v2357 = vadd.f32 %v2264, %v2356
    %v2358 = vand.u32 %v1822, 4294901760
    %2359 = vmatmul.f32.gmra.mxu0 %v2358
    %v2360 = vpop.f32.mrf.mxu0
    %v2361 = vadd.f32 %v2270, %v2360
    %v2362 = vand.u32 %v1825, 4294901760
    %2363 = vmatmul.f32.gmra.mxu0 %v2362
    %v2364 = vpop.f32.mrf.mxu0
    %v2365 = vadd.f32 %v2276, %v2364
    %v2366 = vand.u32 %v1828, 4294901760
    %2367 = vmatmul.f32.gmra.mxu0 %v2366
    %v2368 = vpop.f32.mrf.mxu0
    %v2369 = vadd.f32 %v2282, %v2368
    %2370 = vdwg.mxu0
    %2371 = vmatpush.msra.mxu0 0.0
    %2372 = vmatpush.msra.mxu0 0.0
    %2373 = vmatpush.msra.mxu0 0.0
    %2374 = vmatpush.msra.mxu0 0.0
    %2375 = vmatpush.msra.mxu0 0.0
    %2376 = vmatpush.msra.mxu0 0.0
    %2377 = vmatpush.msra.mxu0 0.0
    %2378 = vmatpush.msra.mxu0 0.0
    %2379 = vmatpush.msra.mxu0 0.0
    %2380 = vmatpush.msra.mxu0 0.0
    %2381 = vmatpush.msra.mxu0 0.0
    %2382 = vmatpush.msra.mxu0 0.0
    %2383 = vmatpush.msra.mxu0 0.0
    %2384 = vmatpush.msra.mxu0 0.0
    %v2385 = vand.u32 %v84, 4294901760
    %2386 = vmatpush.msra.mxu0 %v2385
    %v2387 = vand.u32 %v83, 4294901760
    %2388 = vmatpush.msra.mxu0 %v2387
    %v2389 = vand.u32 %v1783, 4294901760
    %2390 = vmatmul.f32.gmra.mxu0 %v2389
    %v2391 = vpop.f32.mrf.mxu0
    %v2392 = vadd.f32 %v2309, %v2391
    %v2393 = vand.u32 %v1786, 4294901760
    %2394 = vmatmul.f32.gmra.mxu0 %v2393
    %v2395 = vpop.f32.mrf.mxu0
    %v2396 = vadd.f32 %v2313, %v2395
    %v2397 = vand.u32 %v1789, 4294901760
    %2398 = vmatmul.f32.gmra.mxu0 %v2397
    %v2399 = vpop.f32.mrf.mxu0
    %v2400 = vadd.f32 %v2317, %v2399
    %v2401 = vand.u32 %v1792, 4294901760
    %2402 = vmatmul.f32.gmra.mxu0 %v2401
    %v2403 = vpop.f32.mrf.mxu0
    %v2404 = vadd.f32 %v2321, %v2403
    %v2405 = vand.u32 %v1795, 4294901760
    %2406 = vmatmul.f32.gmra.mxu0 %v2405
    %v2407 = vpop.f32.mrf.mxu0
    %v2408 = vadd.f32 %v2325, %v2407
    %v2409 = vand.u32 %v1798, 4294901760
    %2410 = vmatmul.f32.gmra.mxu0 %v2409
    %v2411 = vpop.f32.mrf.mxu0
    %v2412 = vadd.f32 %v2329, %v2411
    %v2413 = vand.u32 %v1801, 4294901760
    %2414 = vmatmul.f32.gmra.mxu0 %v2413
    %v2415 = vpop.f32.mrf.mxu0
    %v2416 = vadd.f32 %v2333, %v2415
    %v2417 = vand.u32 %v1804, 4294901760
    %2418 = vmatmul.f32.gmra.mxu0 %v2417
    %v2419 = vpop.f32.mrf.mxu0
    %v2420 = vadd.f32 %v2337, %v2419
    %v2421 = vand.u32 %v1807, 4294901760
    %2422 = vmatmul.f32.gmra.mxu0 %v2421
    %v2423 = vpop.f32.mrf.mxu0
    %v2424 = vadd.f32 %v2341, %v2423
    %v2425 = vand.u32 %v1810, 4294901760
    %2426 = vmatmul.f32.gmra.mxu0 %v2425
    %v2427 = vpop.f32.mrf.mxu0
    %v2428 = vadd.f32 %v2345, %v2427
    %v2429 = vand.u32 %v1813, 4294901760
    %2430 = vmatmul.f32.gmra.mxu0 %v2429
    %v2431 = vpop.f32.mrf.mxu0
    %v2432 = vadd.f32 %v2349, %v2431
    %v2433 = vand.u32 %v1816, 4294901760
    %2434 = vmatmul.f32.gmra.mxu0 %v2433
    %v2435 = vpop.f32.mrf.mxu0
    %v2436 = vadd.f32 %v2353, %v2435
    %v2437 = vand.u32 %v1819, 4294901760
    %2438 = vmatmul.f32.gmra.mxu0 %v2437
    %v2439 = vpop.f32.mrf.mxu0
    %v2440 = vadd.f32 %v2357, %v2439
    %v2441 = vand.u32 %v1822, 4294901760
    %2442 = vmatmul.f32.gmra.mxu0 %v2441
    %v2443 = vpop.f32.mrf.mxu0
    %v2444 = vadd.f32 %v2361, %v2443
    %v2445 = vand.u32 %v1825, 4294901760
    %2446 = vmatmul.f32.gmra.mxu0 %v2445
    %v2447 = vpop.f32.mrf.mxu0
    %v2448 = vadd.f32 %v2365, %v2447
    %v2449 = vand.u32 %v1828, 4294901760
    %2450 = vmatmul.f32.gmra.mxu0 %v2449
    %v2451 = vpop.f32.mrf.mxu0
    %v2452 = vadd.f32 %v2369, %v2451
    %2453 = vdwg.mxu0
    %2454 = vxpose.xlu0.b32.start [1/16] %v2392, 128
    %2455 = vxpose.xlu0.b32.cont [2/16] %v2396, 128
    %2456 = vxpose.xlu0.b32.cont [3/16] 0.0, 128
    %2457 = vxpose.xlu0.b32.cont [4/16] 0.0, 128
    %2458 = vxpose.xlu0.b32.cont [5/16] 0.0, 128
    %2459 = vxpose.xlu0.b32.cont [6/16] 0.0, 128
    %2460 = vxpose.xlu0.b32.cont [7/16] 0.0, 128
    %2461 = vxpose.xlu0.b32.cont [8/16] 0.0, 128
    %2462 = vxpose.xlu0.b32.cont [9/16] 0.0, 128
    %2463 = vxpose.xlu0.b32.cont [10/16] 0.0, 128
    %2464 = vxpose.xlu0.b32.cont [11/16] 0.0, 128
    %2465 = vxpose.xlu0.b32.cont [12/16] 0.0, 128
    %2466 = vxpose.xlu0.b32.cont [13/16] 0.0, 128
    %2467 = vxpose.xlu0.b32.cont [14/16] 0.0, 128
    %2468 = vxpose.xlu0.b32.cont [15/16] 0.0, 128
    %2469 = vxpose.xlu0.b32.end [16/16] 0.0, 128
    %v2470 = vpop.trf.xlu0
    %v2471 = vpop.trf.xlu0
    %v2472 = vpop.trf.xlu0
    %v2473 = vpop.trf.xlu0
    %v2474 = vpop.trf.xlu0
    %v2475 = vpop.trf.xlu0
    %v2476 = vpop.trf.xlu0
    %v2477 = vpop.trf.xlu0
    %v2478 = vpop.trf.xlu0
    %v2479 = vpop.trf.xlu0
    %v2480 = vpop.trf.xlu0
    %v2481 = vpop.trf.xlu0
    %v2482 = vpop.trf.xlu0
    %v2483 = vpop.trf.xlu0
    %v2484 = vpop.trf.xlu0
    %v2485 = vpop.trf.xlu0
    %2486 = vxpose.xlu0.b32.start [1/16] %v2400, 128
    %2487 = vxpose.xlu0.b32.cont [2/16] %v2404, 128
    %2488 = vxpose.xlu0.b32.cont [3/16] 0.0, 128
    %2489 = vxpose.xlu0.b32.cont [4/16] 0.0, 128
    %2490 = vxpose.xlu0.b32.cont [5/16] 0.0, 128
    %2491 = vxpose.xlu0.b32.cont [6/16] 0.0, 128
    %2492 = vxpose.xlu0.b32.cont [7/16] 0.0, 128
    %2493 = vxpose.xlu0.b32.cont [8/16] 0.0, 128
    %2494 = vxpose.xlu0.b32.cont [9/16] 0.0, 128
    %2495 = vxpose.xlu0.b32.cont [10/16] 0.0, 128
    %2496 = vxpose.xlu0.b32.cont [11/16] 0.0, 128
    %2497 = vxpose.xlu0.b32.cont [12/16] 0.0, 128
    %2498 = vxpose.xlu0.b32.cont [13/16] 0.0, 128
    %2499 = vxpose.xlu0.b32.cont [14/16] 0.0, 128
    %2500 = vxpose.xlu0.b32.cont [15/16] 0.0, 128
    %2501 = vxpose.xlu0.b32.end [16/16] 0.0, 128
    %v2502 = vpop.trf.xlu0
    %v2503 = vpop.trf.xlu0
    %v2504 = vpop.trf.xlu0
    %v2505 = vpop.trf.xlu0
    %v2506 = vpop.trf.xlu0
    %v2507 = vpop.trf.xlu0
    %v2508 = vpop.trf.xlu0
    %v2509 = vpop.trf.xlu0
    %v2510 = vpop.trf.xlu0
    %v2511 = vpop.trf.xlu0
    %v2512 = vpop.trf.xlu0
    %v2513 = vpop.trf.xlu0
    %v2514 = vpop.trf.xlu0
    %v2515 = vpop.trf.xlu0
    %v2516 = vpop.trf.xlu0
    %v2517 = vpop.trf.xlu0
    %2518 = vxpose.xlu0.b32.start [1/16] %v2408, 128
    %2519 = vxpose.xlu0.b32.cont [2/16] %v2412, 128
    %2520 = vxpose.xlu0.b32.cont [3/16] 0.0, 128
    %2521 = vxpose.xlu0.b32.cont [4/16] 0.0, 128
    %2522 = vxpose.xlu0.b32.cont [5/16] 0.0, 128
    %2523 = vxpose.xlu0.b32.cont [6/16] 0.0, 128
    %2524 = vxpose.xlu0.b32.cont [7/16] 0.0, 128
    %2525 = vxpose.xlu0.b32.cont [8/16] 0.0, 128
    %2526 = vxpose.xlu0.b32.cont [9/16] 0.0, 128
    %2527 = vxpose.xlu0.b32.cont [10/16] 0.0, 128
    %2528 = vxpose.xlu0.b32.cont [11/16] 0.0, 128
    %2529 = vxpose.xlu0.b32.cont [12/16] 0.0, 128
    %2530 = vxpose.xlu0.b32.cont [13/16] 0.0, 128
    %2531 = vxpose.xlu0.b32.cont [14/16] 0.0, 128
    %2532 = vxpose.xlu0.b32.cont [15/16] 0.0, 128
    %2533 = vxpose.xlu0.b32.end [16/16] 0.0, 128
    %v2534 = vpop.trf.xlu0
    %v2535 = vpop.trf.xlu0
    %v2536 = vpop.trf.xlu0
    %v2537 = vpop.trf.xlu0
    %v2538 = vpop.trf.xlu0
    %v2539 = vpop.trf.xlu0
    %v2540 = vpop.trf.xlu0
    %v2541 = vpop.trf.xlu0
    %v2542 = vpop.trf.xlu0
    %v2543 = vpop.trf.xlu0
    %v2544 = vpop.trf.xlu0
    %v2545 = vpop.trf.xlu0
    %v2546 = vpop.trf.xlu0
    %v2547 = vpop.trf.xlu0
    %v2548 = vpop.trf.xlu0
    %v2549 = vpop.trf.xlu0
    %2550 = vxpose.xlu0.b32.start [1/16] %v2416, 128
    %2551 = vxpose.xlu0.b32.cont [2/16] %v2420, 128
    %2552 = vxpose.xlu0.b32.cont [3/16] 0.0, 128
    %2553 = vxpose.xlu0.b32.cont [4/16] 0.0, 128
    %2554 = vxpose.xlu0.b32.cont [5/16] 0.0, 128
    %2555 = vxpose.xlu0.b32.cont [6/16] 0.0, 128
    %2556 = vxpose.xlu0.b32.cont [7/16] 0.0, 128
    %2557 = vxpose.xlu0.b32.cont [8/16] 0.0, 128
    %2558 = vxpose.xlu0.b32.cont [9/16] 0.0, 128
    %2559 = vxpose.xlu0.b32.cont [10/16] 0.0, 128
    %2560 = vxpose.xlu0.b32.cont [11/16] 0.0, 128
    %2561 = vxpose.xlu0.b32.cont [12/16] 0.0, 128
    %2562 = vxpose.xlu0.b32.cont [13/16] 0.0, 128
    %2563 = vxpose.xlu0.b32.cont [14/16] 0.0, 128
    %2564 = vxpose.xlu0.b32.cont [15/16] 0.0, 128
    %2565 = vxpose.xlu0.b32.end [16/16] 0.0, 128
    %v2566 = vpop.trf.xlu0
    %v2567 = vpop.trf.xlu0
    %v2568 = vpop.trf.xlu0
    %v2569 = vpop.trf.xlu0
    %v2570 = vpop.trf.xlu0
    %v2571 = vpop.trf.xlu0
    %v2572 = vpop.trf.xlu0
    %v2573 = vpop.trf.xlu0
    %v2574 = vpop.trf.xlu0
    %v2575 = vpop.trf.xlu0
    %v2576 = vpop.trf.xlu0
    %v2577 = vpop.trf.xlu0
    %v2578 = vpop.trf.xlu0
    %v2579 = vpop.trf.xlu0
    %v2580 = vpop.trf.xlu0
    %v2581 = vpop.trf.xlu0
    %2582 = vxpose.xlu0.b32.start [1/16] %v2424, 128
    %2583 = vxpose.xlu0.b32.cont [2/16] %v2428, 128
    %2584 = vxpose.xlu0.b32.cont [3/16] 0.0, 128
    %2585 = vxpose.xlu0.b32.cont [4/16] 0.0, 128
    %2586 = vxpose.xlu0.b32.cont [5/16] 0.0, 128
    %2587 = vxpose.xlu0.b32.cont [6/16] 0.0, 128
    %2588 = vxpose.xlu0.b32.cont [7/16] 0.0, 128
    %2589 = vxpose.xlu0.b32.cont [8/16] 0.0, 128
    %2590 = vxpose.xlu0.b32.cont [9/16] 0.0, 128
    %2591 = vxpose.xlu0.b32.cont [10/16] 0.0, 128
    %2592 = vxpose.xlu0.b32.cont [11/16] 0.0, 128
    %2593 = vxpose.xlu0.b32.cont [12/16] 0.0, 128
    %2594 = vxpose.xlu0.b32.cont [13/16] 0.0, 128
    %2595 = vxpose.xlu0.b32.cont [14/16] 0.0, 128
    %2596 = vxpose.xlu0.b32.cont [15/16] 0.0, 128
    %2597 = vxpose.xlu0.b32.end [16/16] 0.0, 128
    %v2598 = vpop.trf.xlu0
    %v2599 = vpop.trf.xlu0
    %v2600 = vpop.trf.xlu0
    %v2601 = vpop.trf.xlu0
    %v2602 = vpop.trf.xlu0
    %v2603 = vpop.trf.xlu0
    %v2604 = vpop.trf.xlu0
    %v2605 = vpop.trf.xlu0
    %v2606 = vpop.trf.xlu0
    %v2607 = vpop.trf.xlu0
    %v2608 = vpop.trf.xlu0
    %v2609 = vpop.trf.xlu0
    %v2610 = vpop.trf.xlu0
    %v2611 = vpop.trf.xlu0
    %v2612 = vpop.trf.xlu0
    %v2613 = vpop.trf.xlu0
    %2614 = vxpose.xlu0.b32.start [1/16] %v2432, 128
    %2615 = vxpose.xlu0.b32.cont [2/16] %v2436, 128
    %2616 = vxpose.xlu0.b32.cont [3/16] 0.0, 128
    %2617 = vxpose.xlu0.b32.cont [4/16] 0.0, 128
    %2618 = vxpose.xlu0.b32.cont [5/16] 0.0, 128
    %2619 = vxpose.xlu0.b32.cont [6/16] 0.0, 128
    %2620 = vxpose.xlu0.b32.cont [7/16] 0.0, 128
    %2621 = vxpose.xlu0.b32.cont [8/16] 0.0, 128
    %2622 = vxpose.xlu0.b32.cont [9/16] 0.0, 128
    %2623 = vxpose.xlu0.b32.cont [10/16] 0.0, 128
    %2624 = vxpose.xlu0.b32.cont [11/16] 0.0, 128
    %2625 = vxpose.xlu0.b32.cont [12/16] 0.0, 128
    %2626 = vxpose.xlu0.b32.cont [13/16] 0.0, 128
    %2627 = vxpose.xlu0.b32.cont [14/16] 0.0, 128
    %2628 = vxpose.xlu0.b32.cont [15/16] 0.0, 128
    %2629 = vxpose.xlu0.b32.end [16/16] 0.0, 128
    %v2630 = vpop.trf.xlu0
    %v2631 = vpop.trf.xlu0
    %v2632 = vpop.trf.xlu0
    %v2633 = vpop.trf.xlu0
    %v2634 = vpop.trf.xlu0
    %v2635 = vpop.trf.xlu0
    %v2636 = vpop.trf.xlu0
    %v2637 = vpop.trf.xlu0
    %v2638 = vpop.trf.xlu0
    %v2639 = vpop.trf.xlu0
    %v2640 = vpop.trf.xlu0
    %v2641 = vpop.trf.xlu0
    %v2642 = vpop.trf.xlu0
    %v2643 = vpop.trf.xlu0
    %v2644 = vpop.trf.xlu0
    %v2645 = vpop.trf.xlu0
    %2646 = vxpose.xlu0.b32.start [1/16] %v2440, 128
    %2647 = vxpose.xlu0.b32.cont [2/16] %v2444, 128
    %2648 = vxpose.xlu0.b32.cont [3/16] 0.0, 128
    %2649 = vxpose.xlu0.b32.cont [4/16] 0.0, 128
    %2650 = vxpose.xlu0.b32.cont [5/16] 0.0, 128
    %2651 = vxpose.xlu0.b32.cont [6/16] 0.0, 128
    %2652 = vxpose.xlu0.b32.cont [7/16] 0.0, 128
    %2653 = vxpose.xlu0.b32.cont [8/16] 0.0, 128
    %2654 = vxpose.xlu0.b32.cont [9/16] 0.0, 128
    %2655 = vxpose.xlu0.b32.cont [10/16] 0.0, 128
    %2656 = vxpose.xlu0.b32.cont [11/16] 0.0, 128
    %2657 = vxpose.xlu0.b32.cont [12/16] 0.0, 128
    %2658 = vxpose.xlu0.b32.cont [13/16] 0.0, 128
    %2659 = vxpose.xlu0.b32.cont [14/16] 0.0, 128
    %2660 = vxpose.xlu0.b32.cont [15/16] 0.0, 128
    %2661 = vxpose.xlu0.b32.end [16/16] 0.0, 128
    %v2662 = vpop.trf.xlu0
    %v2663 = vpop.trf.xlu0
    %v2664 = vpop.trf.xlu0
    %v2665 = vpop.trf.xlu0
    %v2666 = vpop.trf.xlu0
    %v2667 = vpop.trf.xlu0
    %v2668 = vpop.trf.xlu0
    %v2669 = vpop.trf.xlu0
    %v2670 = vpop.trf.xlu0
    %v2671 = vpop.trf.xlu0
    %v2672 = vpop.trf.xlu0
    %v2673 = vpop.trf.xlu0
    %v2674 = vpop.trf.xlu0
    %v2675 = vpop.trf.xlu0
    %v2676 = vpop.trf.xlu0
    %v2677 = vpop.trf.xlu0
    %2678 = vxpose.xlu0.b32.start [1/16] %v2448, 128
    %2679 = vxpose.xlu0.b32.cont [2/16] %v2452, 128
    %2680 = vxpose.xlu0.b32.cont [3/16] 0.0, 128
    %2681 = vxpose.xlu0.b32.cont [4/16] 0.0, 128
    %2682 = vxpose.xlu0.b32.cont [5/16] 0.0, 128
    %2683 = vxpose.xlu0.b32.cont [6/16] 0.0, 128
    %2684 = vxpose.xlu0.b32.cont [7/16] 0.0, 128
    %2685 = vxpose.xlu0.b32.cont [8/16] 0.0, 128
    %2686 = vxpose.xlu0.b32.cont [9/16] 0.0, 128
    %2687 = vxpose.xlu0.b32.cont [10/16] 0.0, 128
    %2688 = vxpose.xlu0.b32.cont [11/16] 0.0, 128
    %2689 = vxpose.xlu0.b32.cont [12/16] 0.0, 128
    %2690 = vxpose.xlu0.b32.cont [13/16] 0.0, 128
    %2691 = vxpose.xlu0.b32.cont [14/16] 0.0, 128
    %2692 = vxpose.xlu0.b32.cont [15/16] 0.0, 128
    %2693 = vxpose.xlu0.b32.end [16/16] 0.0, 128
    %v2694 = vpop.trf.xlu0
    %v2695 = vpop.trf.xlu0
    %v2696 = vpop.trf.xlu0
    %v2697 = vpop.trf.xlu0
    %v2698 = vpop.trf.xlu0
    %v2699 = vpop.trf.xlu0
    %v2700 = vpop.trf.xlu0
    %v2701 = vpop.trf.xlu0
    %v2702 = vpop.trf.xlu0
    %v2703 = vpop.trf.xlu0
    %v2704 = vpop.trf.xlu0
    %v2705 = vpop.trf.xlu0
    %v2706 = vpop.trf.xlu0
    %v2707 = vpop.trf.xlu0
    %v2708 = vpop.trf.xlu0
    %v2709 = vpop.trf.xlu0
    %v2711 = vsel %vm181, %v2470, 0
    %v2714 = vsel %vm181, %v2471, 0
    %v2717 = vsel %vm181, %v2502, 0
    %v2720 = vsel %vm181, %v2503, 0
    %v2723 = vsel %vm181, %v2534, 0
    %v2726 = vsel %vm181, %v2535, 0
    %v2729 = vsel %vm181, %v2566, 0
    %v2732 = vsel %vm181, %v2567, 0
    %v2735 = vsel %vm181, %v2598, 0
    %v2738 = vsel %vm181, %v2599, 0
    %v2741 = vsel %vm181, %v2630, 0
    %v2744 = vsel %vm181, %v2631, 0
    %v2747 = vsel %vm181, %v2662, 0
    %v2750 = vsel %vm181, %v2663, 0
    %v2753 = vsel %vm181, %v2694, 0
    %v2756 = vsel %vm181, %v2695, 0
    %2758 = vmatpush.msra.mxu0 0.0
    %2759 = vmatpush.msra.mxu0 0.0
    %2760 = vmatpush.msra.mxu0 0.0
    %2761 = vmatpush.msra.mxu0 0.0
    %2762 = vmatpush.msra.mxu0 0.0
    %2763 = vmatpush.msra.mxu0 0.0
    %2764 = vmatpush.msra.mxu0 0.0
    %2765 = vmatpush.msra.mxu0 0.0
    %2766 = vmatpush.msra.mxu0 0.0
    %2767 = vmatpush.msra.mxu0 0.0
    %2768 = vmatpush.msra.mxu0 0.0
    %2769 = vmatpush.msra.mxu0 0.0
    %2770 = vmatpush.msra.mxu0 0.0
    %2771 = vmatpush.msra.mxu0 0.0
    %v2772 = vand.u32 %v82, 4294901760
    %2773 = vmatpush.msra.mxu0 %v2772
    %v2774 = vand.u32 %v81, 4294901760
    %2775 = vmatpush.msra.mxu0 %v2774
    %v2776 = vand.u32 %v2711, 4294901760
    %v2777 = vsub.f32 %v2711, %v2776
    %v2778 = vand.u32 %v2777, 4294901760
    %v2779 = vsub.f32 %v2777, %v2778
    %v2780 = vand.u32 %v2779, 4294901760
    %2781 = vmatmul.f32.gmra.mxu0 %v2780
    %v2782 = vpop.f32.mrf.mxu0
    %v2783 = vadd.f32 0.0, %v2782
    %v2784 = vand.u32 %v2714, 4294901760
    %v2785 = vsub.f32 %v2714, %v2784
    %v2786 = vand.u32 %v2785, 4294901760
    %v2787 = vsub.f32 %v2785, %v2786
    %v2788 = vand.u32 %v2787, 4294901760
    %2789 = vmatmul.f32.gmra.mxu0 %v2788
    %v2790 = vpop.f32.mrf.mxu0
    %v2791 = vadd.f32 0.0, %v2790
    %v2792 = vand.u32 %v2717, 4294901760
    %v2793 = vsub.f32 %v2717, %v2792
    %v2794 = vand.u32 %v2793, 4294901760
    %v2795 = vsub.f32 %v2793, %v2794
    %v2796 = vand.u32 %v2795, 4294901760
    %2797 = vmatmul.f32.gmra.mxu0 %v2796
    %v2798 = vpop.f32.mrf.mxu0
    %v2799 = vadd.f32 0.0, %v2798
    %v2800 = vand.u32 %v2720, 4294901760
    %v2801 = vsub.f32 %v2720, %v2800
    %v2802 = vand.u32 %v2801, 4294901760
    %v2803 = vsub.f32 %v2801, %v2802
    %v2804 = vand.u32 %v2803, 4294901760
    %2805 = vmatmul.f32.gmra.mxu0 %v2804
    %v2806 = vpop.f32.mrf.mxu0
    %v2807 = vadd.f32 0.0, %v2806
    %v2808 = vand.u32 %v2723, 4294901760
    %v2809 = vsub.f32 %v2723, %v2808
    %v2810 = vand.u32 %v2809, 4294901760
    %v2811 = vsub.f32 %v2809, %v2810
    %v2812 = vand.u32 %v2811, 4294901760
    %2813 = vmatmul.f32.gmra.mxu0 %v2812
    %v2814 = vpop.f32.mrf.mxu0
    %v2815 = vadd.f32 0.0, %v2814
    %v2816 = vand.u32 %v2726, 4294901760
    %v2817 = vsub.f32 %v2726, %v2816
    %v2818 = vand.u32 %v2817, 4294901760
    %v2819 = vsub.f32 %v2817, %v2818
    %v2820 = vand.u32 %v2819, 4294901760
    %2821 = vmatmul.f32.gmra.mxu0 %v2820
    %v2822 = vpop.f32.mrf.mxu0
    %v2823 = vadd.f32 0.0, %v2822
    %v2824 = vand.u32 %v2729, 4294901760
    %v2825 = vsub.f32 %v2729, %v2824
    %v2826 = vand.u32 %v2825, 4294901760
    %v2827 = vsub.f32 %v2825, %v2826
    %v2828 = vand.u32 %v2827, 4294901760
    %2829 = vmatmul.f32.gmra.mxu0 %v2828
    %v2830 = vpop.f32.mrf.mxu0
    %v2831 = vadd.f32 0.0, %v2830
    %v2832 = vand.u32 %v2732, 4294901760
    %v2833 = vsub.f32 %v2732, %v2832
    %v2834 = vand.u32 %v2833, 4294901760
    %v2835 = vsub.f32 %v2833, %v2834
    %v2836 = vand.u32 %v2835, 4294901760
    %2837 = vmatmul.f32.gmra.mxu0 %v2836
    %v2838 = vpop.f32.mrf.mxu0
    %v2839 = vadd.f32 0.0, %v2838
    %v2840 = vand.u32 %v2735, 4294901760
    %v2841 = vsub.f32 %v2735, %v2840
    %v2842 = vand.u32 %v2841, 4294901760
    %v2843 = vsub.f32 %v2841, %v2842
    %v2844 = vand.u32 %v2843, 4294901760
    %2845 = vmatmul.f32.gmra.mxu0 %v2844
    %v2846 = vpop.f32.mrf.mxu0
    %v2847 = vadd.f32 0.0, %v2846
    %v2848 = vand.u32 %v2738, 4294901760
    %v2849 = vsub.f32 %v2738, %v2848
    %v2850 = vand.u32 %v2849, 4294901760
    %v2851 = vsub.f32 %v2849, %v2850
    %v2852 = vand.u32 %v2851, 4294901760
    %2853 = vmatmul.f32.gmra.mxu0 %v2852
    %v2854 = vpop.f32.mrf.mxu0
    %v2855 = vadd.f32 0.0, %v2854
    %v2856 = vand.u32 %v2741, 4294901760
    %v2857 = vsub.f32 %v2741, %v2856
    %v2858 = vand.u32 %v2857, 4294901760
    %v2859 = vsub.f32 %v2857, %v2858
    %v2860 = vand.u32 %v2859, 4294901760
    %2861 = vmatmul.f32.gmra.mxu0 %v2860
    %v2862 = vpop.f32.mrf.mxu0
    %v2863 = vadd.f32 0.0, %v2862
    %v2864 = vand.u32 %v2744, 4294901760
    %v2865 = vsub.f32 %v2744, %v2864
    %v2866 = vand.u32 %v2865, 4294901760
    %v2867 = vsub.f32 %v2865, %v2866
    %v2868 = vand.u32 %v2867, 4294901760
    %2869 = vmatmul.f32.gmra.mxu0 %v2868
    %v2870 = vpop.f32.mrf.mxu0
    %v2871 = vadd.f32 0.0, %v2870
    %v2872 = vand.u32 %v2747, 4294901760
    %v2873 = vsub.f32 %v2747, %v2872
    %v2874 = vand.u32 %v2873, 4294901760
    %v2875 = vsub.f32 %v2873, %v2874
    %v2876 = vand.u32 %v2875, 4294901760
    %2877 = vmatmul.f32.gmra.mxu0 %v2876
    %v2878 = vpop.f32.mrf.mxu0
    %v2879 = vadd.f32 0.0, %v2878
    %v2880 = vand.u32 %v2750, 4294901760
    %v2881 = vsub.f32 %v2750, %v2880
    %v2882 = vand.u32 %v2881, 4294901760
    %v2883 = vsub.f32 %v2881, %v2882
    %v2884 = vand.u32 %v2883, 4294901760
    %2885 = vmatmul.f32.gmra.mxu0 %v2884
    %v2886 = vpop.f32.mrf.mxu0
    %v2887 = vadd.f32 0.0, %v2886
    %v2888 = vand.u32 %v2753, 4294901760
    %v2889 = vsub.f32 %v2753, %v2888
    %v2890 = vand.u32 %v2889, 4294901760
    %v2891 = vsub.f32 %v2889, %v2890
    %v2892 = vand.u32 %v2891, 4294901760
    %2893 = vmatmul.f32.gmra.mxu0 %v2892
    %v2894 = vpop.f32.mrf.mxu0
    %v2895 = vadd.f32 0.0, %v2894
    %v2896 = vand.u32 %v2756, 4294901760
    %v2897 = vsub.f32 %v2756, %v2896
    %v2898 = vand.u32 %v2897, 4294901760
    %v2899 = vsub.f32 %v2897, %v2898
    %v2900 = vand.u32 %v2899, 4294901760
    %2901 = vmatmul.f32.gmra.mxu0 %v2900
    %v2902 = vpop.f32.mrf.mxu0
    %v2903 = vadd.f32 0.0, %v2902
    %2904 = vdwg.mxu0
    %2905 = vmatpush.msra.mxu0 0.0
    %2906 = vmatpush.msra.mxu0 0.0
    %2907 = vmatpush.msra.mxu0 0.0
    %2908 = vmatpush.msra.mxu0 0.0
    %2909 = vmatpush.msra.mxu0 0.0
    %2910 = vmatpush.msra.mxu0 0.0
    %2911 = vmatpush.msra.mxu0 0.0
    %2912 = vmatpush.msra.mxu0 0.0
    %2913 = vmatpush.msra.mxu0 0.0
    %2914 = vmatpush.msra.mxu0 0.0
    %2915 = vmatpush.msra.mxu0 0.0
    %2916 = vmatpush.msra.mxu0 0.0
    %2917 = vmatpush.msra.mxu0 0.0
    %2918 = vmatpush.msra.mxu0 0.0
    %v2919 = vand.u32 %v82, 4294901760
    %v2920 = vsub.f32 %v82, %v2919
    %v2921 = vand.u32 %v2920, 4294901760
    %v2922 = vsub.f32 %v2920, %v2921
    %v2923 = vand.u32 %v2922, 4294901760
    %2924 = vmatpush.msra.mxu0 %v2923
    %v2925 = vand.u32 %v81, 4294901760
    %v2926 = vsub.f32 %v81, %v2925
    %v2927 = vand.u32 %v2926, 4294901760
    %v2928 = vsub.f32 %v2926, %v2927
    %v2929 = vand.u32 %v2928, 4294901760
    %2930 = vmatpush.msra.mxu0 %v2929
    %v2931 = vand.u32 %v2711, 4294901760
    %2932 = vmatmul.f32.gmra.mxu0 %v2931
    %v2933 = vpop.f32.mrf.mxu0
    %v2934 = vadd.f32 %v2783, %v2933
    %v2935 = vand.u32 %v2714, 4294901760
    %2936 = vmatmul.f32.gmra.mxu0 %v2935
    %v2937 = vpop.f32.mrf.mxu0
    %v2938 = vadd.f32 %v2791, %v2937
    %v2939 = vand.u32 %v2717, 4294901760
    %2940 = vmatmul.f32.gmra.mxu0 %v2939
    %v2941 = vpop.f32.mrf.mxu0
    %v2942 = vadd.f32 %v2799, %v2941
    %v2943 = vand.u32 %v2720, 4294901760
    %2944 = vmatmul.f32.gmra.mxu0 %v2943
    %v2945 = vpop.f32.mrf.mxu0
    %v2946 = vadd.f32 %v2807, %v2945
    %v2947 = vand.u32 %v2723, 4294901760
    %2948 = vmatmul.f32.gmra.mxu0 %v2947
    %v2949 = vpop.f32.mrf.mxu0
    %v2950 = vadd.f32 %v2815, %v2949
    %v2951 = vand.u32 %v2726, 4294901760
    %2952 = vmatmul.f32.gmra.mxu0 %v2951
    %v2953 = vpop.f32.mrf.mxu0
    %v2954 = vadd.f32 %v2823, %v2953
    %v2955 = vand.u32 %v2729, 4294901760
    %2956 = vmatmul.f32.gmra.mxu0 %v2955
    %v2957 = vpop.f32.mrf.mxu0
    %v2958 = vadd.f32 %v2831, %v2957
    %v2959 = vand.u32 %v2732, 4294901760
    %2960 = vmatmul.f32.gmra.mxu0 %v2959
    %v2961 = vpop.f32.mrf.mxu0
    %v2962 = vadd.f32 %v2839, %v2961
    %v2963 = vand.u32 %v2735, 4294901760
    %2964 = vmatmul.f32.gmra.mxu0 %v2963
    %v2965 = vpop.f32.mrf.mxu0
    %v2966 = vadd.f32 %v2847, %v2965
    %v2967 = vand.u32 %v2738, 4294901760
    %2968 = vmatmul.f32.gmra.mxu0 %v2967
    %v2969 = vpop.f32.mrf.mxu0
    %v2970 = vadd.f32 %v2855, %v2969
    %v2971 = vand.u32 %v2741, 4294901760
    %2972 = vmatmul.f32.gmra.mxu0 %v2971
    %v2973 = vpop.f32.mrf.mxu0
    %v2974 = vadd.f32 %v2863, %v2973
    %v2975 = vand.u32 %v2744, 4294901760
    %2976 = vmatmul.f32.gmra.mxu0 %v2975
    %v2977 = vpop.f32.mrf.mxu0
    %v2978 = vadd.f32 %v2871, %v2977
    %v2979 = vand.u32 %v2747, 4294901760
    %2980 = vmatmul.f32.gmra.mxu0 %v2979
    %v2981 = vpop.f32.mrf.mxu0
    %v2982 = vadd.f32 %v2879, %v2981
    %v2983 = vand.u32 %v2750, 4294901760
    %2984 = vmatmul.f32.gmra.mxu0 %v2983
    %v2985 = vpop.f32.mrf.mxu0
    %v2986 = vadd.f32 %v2887, %v2985
    %v2987 = vand.u32 %v2753, 4294901760
    %2988 = vmatmul.f32.gmra.mxu0 %v2987
    %v2989 = vpop.f32.mrf.mxu0
    %v2990 = vadd.f32 %v2895, %v2989
    %v2991 = vand.u32 %v2756, 4294901760
    %2992 = vmatmul.f32.gmra.mxu0 %v2991
    %v2993 = vpop.f32.mrf.mxu0
    %v2994 = vadd.f32 %v2903, %v2993
    %2995 = vdwg.mxu0
    %2996 = vmatpush.msra.mxu0 0.0
    %2997 = vmatpush.msra.mxu0 0.0
    %2998 = vmatpush.msra.mxu0 0.0
    %2999 = vmatpush.msra.mxu0 0.0
    %3000 = vmatpush.msra.mxu0 0.0
    %3001 = vmatpush.msra.mxu0 0.0
    %3002 = vmatpush.msra.mxu0 0.0
    %3003 = vmatpush.msra.mxu0 0.0
    %3004 = vmatpush.msra.mxu0 0.0
    %3005 = vmatpush.msra.mxu0 0.0
    %3006 = vmatpush.msra.mxu0 0.0
    %3007 = vmatpush.msra.mxu0 0.0
    %3008 = vmatpush.msra.mxu0 0.0
    %3009 = vmatpush.msra.mxu0 0.0
    %v3010 = vand.u32 %v82, 4294901760
    %v3011 = vsub.f32 %v82, %v3010
    %3012 = vmatpush.msra.mxu0 %v3011
    %v3013 = vand.u32 %v81, 4294901760
    %v3014 = vsub.f32 %v81, %v3013
    %3015 = vmatpush.msra.mxu0 %v3014
    %v3016 = vand.u32 %v2711, 4294901760
    %v3017 = vsub.f32 %v2711, %v3016
    %3018 = vmatmul.f32.gmra.mxu0 %v3017
    %v3019 = vpop.f32.mrf.mxu0
    %v3020 = vadd.f32 %v2934, %v3019
    %v3021 = vand.u32 %v2714, 4294901760
    %v3022 = vsub.f32 %v2714, %v3021
    %3023 = vmatmul.f32.gmra.mxu0 %v3022
    %v3024 = vpop.f32.mrf.mxu0
    %v3025 = vadd.f32 %v2938, %v3024
    %v3026 = vand.u32 %v2717, 4294901760
    %v3027 = vsub.f32 %v2717, %v3026
    %3028 = vmatmul.f32.gmra.mxu0 %v3027
    %v3029 = vpop.f32.mrf.mxu0
    %v3030 = vadd.f32 %v2942, %v3029
    %v3031 = vand.u32 %v2720, 4294901760
    %v3032 = vsub.f32 %v2720, %v3031
    %3033 = vmatmul.f32.gmra.mxu0 %v3032
    %v3034 = vpop.f32.mrf.mxu0
    %v3035 = vadd.f32 %v2946, %v3034
    %v3036 = vand.u32 %v2723, 4294901760
    %v3037 = vsub.f32 %v2723, %v3036
    %3038 = vmatmul.f32.gmra.mxu0 %v3037
    %v3039 = vpop.f32.mrf.mxu0
    %v3040 = vadd.f32 %v2950, %v3039
    %v3041 = vand.u32 %v2726, 4294901760
    %v3042 = vsub.f32 %v2726, %v3041
    %3043 = vmatmul.f32.gmra.mxu0 %v3042
    %v3044 = vpop.f32.mrf.mxu0
    %v3045 = vadd.f32 %v2954, %v3044
    %v3046 = vand.u32 %v2729, 4294901760
    %v3047 = vsub.f32 %v2729, %v3046
    %3048 = vmatmul.f32.gmra.mxu0 %v3047
    %v3049 = vpop.f32.mrf.mxu0
    %v3050 = vadd.f32 %v2958, %v3049
    %v3051 = vand.u32 %v2732, 4294901760
    %v3052 = vsub.f32 %v2732, %v3051
    %3053 = vmatmul.f32.gmra.mxu0 %v3052
    %v3054 = vpop.f32.mrf.mxu0
    %v3055 = vadd.f32 %v2962, %v3054
    %v3056 = vand.u32 %v2735, 4294901760
    %v3057 = vsub.f32 %v2735, %v3056
    %3058 = vmatmul.f32.gmra.mxu0 %v3057
    %v3059 = vpop.f32.mrf.mxu0
    %v3060 = vadd.f32 %v2966, %v3059
    %v3061 = vand.u32 %v2738, 4294901760
    %v3062 = vsub.f32 %v2738, %v3061
    %3063 = vmatmul.f32.gmra.mxu0 %v3062
    %v3064 = vpop.f32.mrf.mxu0
    %v3065 = vadd.f32 %v2970, %v3064
    %v3066 = vand.u32 %v2741, 4294901760
    %v3067 = vsub.f32 %v2741, %v3066
    %3068 = vmatmul.f32.gmra.mxu0 %v3067
    %v3069 = vpop.f32.mrf.mxu0
    %v3070 = vadd.f32 %v2974, %v3069
    %v3071 = vand.u32 %v2744, 4294901760
    %v3072 = vsub.f32 %v2744, %v3071
    %3073 = vmatmul.f32.gmra.mxu0 %v3072
    %v3074 = vpop.f32.mrf.mxu0
    %v3075 = vadd.f32 %v2978, %v3074
    %v3076 = vand.u32 %v2747, 4294901760
    %v3077 = vsub.f32 %v2747, %v3076
    %3078 = vmatmul.f32.gmra.mxu0 %v3077
    %v3079 = vpop.f32.mrf.mxu0
    %v3080 = vadd.f32 %v2982, %v3079
    %v3081 = vand.u32 %v2750, 4294901760
    %v3082 = vsub.f32 %v2750, %v3081
    %3083 = vmatmul.f32.gmra.mxu0 %v3082
    %v3084 = vpop.f32.mrf.mxu0
    %v3085 = vadd.f32 %v2986, %v3084
    %v3086 = vand.u32 %v2753, 4294901760
    %v3087 = vsub.f32 %v2753, %v3086
    %3088 = vmatmul.f32.gmra.mxu0 %v3087
    %v3089 = vpop.f32.mrf.mxu0
    %v3090 = vadd.f32 %v2990, %v3089
    %v3091 = vand.u32 %v2756, 4294901760
    %v3092 = vsub.f32 %v2756, %v3091
    %3093 = vmatmul.f32.gmra.mxu0 %v3092
    %v3094 = vpop.f32.mrf.mxu0
    %v3095 = vadd.f32 %v2994, %v3094
    %3096 = vdwg.mxu0
    %3097 = vmatpush.msra.mxu0 0.0
    %3098 = vmatpush.msra.mxu0 0.0
    %3099 = vmatpush.msra.mxu0 0.0
    %3100 = vmatpush.msra.mxu0 0.0
    %3101 = vmatpush.msra.mxu0 0.0
    %3102 = vmatpush.msra.mxu0 0.0
    %3103 = vmatpush.msra.mxu0 0.0
    %3104 = vmatpush.msra.mxu0 0.0
    %3105 = vmatpush.msra.mxu0 0.0
    %3106 = vmatpush.msra.mxu0 0.0
    %3107 = vmatpush.msra.mxu0 0.0
    %3108 = vmatpush.msra.mxu0 0.0
    %3109 = vmatpush.msra.mxu0 0.0
    %3110 = vmatpush.msra.mxu0 0.0
    %v3111 = vand.u32 %v82, 4294901760
    %3112 = vmatpush.msra.mxu0 %v3111
    %v3113 = vand.u32 %v81, 4294901760
    %3114 = vmatpush.msra.mxu0 %v3113
    %v3115 = vand.u32 %v2711, 4294901760
    %v3116 = vsub.f32 %v2711, %v3115
    %v3117 = vand.u32 %v3116, 4294901760
    %3118 = vmatmul.f32.gmra.mxu0 %v3117
    %v3119 = vpop.f32.mrf.mxu0
    %v3120 = vadd.f32 %v3020, %v3119
    %v3121 = vand.u32 %v2714, 4294901760
    %v3122 = vsub.f32 %v2714, %v3121
    %v3123 = vand.u32 %v3122, 4294901760
    %3124 = vmatmul.f32.gmra.mxu0 %v3123
    %v3125 = vpop.f32.mrf.mxu0
    %v3126 = vadd.f32 %v3025, %v3125
    %v3127 = vand.u32 %v2717, 4294901760
    %v3128 = vsub.f32 %v2717, %v3127
    %v3129 = vand.u32 %v3128, 4294901760
    %3130 = vmatmul.f32.gmra.mxu0 %v3129
    %v3131 = vpop.f32.mrf.mxu0
    %v3132 = vadd.f32 %v3030, %v3131
    %v3133 = vand.u32 %v2720, 4294901760
    %v3134 = vsub.f32 %v2720, %v3133
    %v3135 = vand.u32 %v3134, 4294901760
    %3136 = vmatmul.f32.gmra.mxu0 %v3135
    %v3137 = vpop.f32.mrf.mxu0
    %v3138 = vadd.f32 %v3035, %v3137
    %v3139 = vand.u32 %v2723, 4294901760
    %v3140 = vsub.f32 %v2723, %v3139
    %v3141 = vand.u32 %v3140, 4294901760
    %3142 = vmatmul.f32.gmra.mxu0 %v3141
    %v3143 = vpop.f32.mrf.mxu0
    %v3144 = vadd.f32 %v3040, %v3143
    %v3145 = vand.u32 %v2726, 4294901760
    %v3146 = vsub.f32 %v2726, %v3145
    %v3147 = vand.u32 %v3146, 4294901760
    %3148 = vmatmul.f32.gmra.mxu0 %v3147
    %v3149 = vpop.f32.mrf.mxu0
    %v3150 = vadd.f32 %v3045, %v3149
    %v3151 = vand.u32 %v2729, 4294901760
    %v3152 = vsub.f32 %v2729, %v3151
    %v3153 = vand.u32 %v3152, 4294901760
    %3154 = vmatmul.f32.gmra.mxu0 %v3153
    %v3155 = vpop.f32.mrf.mxu0
    %v3156 = vadd.f32 %v3050, %v3155
    %v3157 = vand.u32 %v2732, 4294901760
    %v3158 = vsub.f32 %v2732, %v3157
    %v3159 = vand.u32 %v3158, 4294901760
    %3160 = vmatmul.f32.gmra.mxu0 %v3159
    %v3161 = vpop.f32.mrf.mxu0
    %v3162 = vadd.f32 %v3055, %v3161
    %v3163 = vand.u32 %v2735, 4294901760
    %v3164 = vsub.f32 %v2735, %v3163
    %v3165 = vand.u32 %v3164, 4294901760
    %3166 = vmatmul.f32.gmra.mxu0 %v3165
    %v3167 = vpop.f32.mrf.mxu0
    %v3168 = vadd.f32 %v3060, %v3167
    %v3169 = vand.u32 %v2738, 4294901760
    %v3170 = vsub.f32 %v2738, %v3169
    %v3171 = vand.u32 %v3170, 4294901760
    %3172 = vmatmul.f32.gmra.mxu0 %v3171
    %v3173 = vpop.f32.mrf.mxu0
    %v3174 = vadd.f32 %v3065, %v3173
    %v3175 = vand.u32 %v2741, 4294901760
    %v3176 = vsub.f32 %v2741, %v3175
    %v3177 = vand.u32 %v3176, 4294901760
    %3178 = vmatmul.f32.gmra.mxu0 %v3177
    %v3179 = vpop.f32.mrf.mxu0
    %v3180 = vadd.f32 %v3070, %v3179
    %v3181 = vand.u32 %v2744, 4294901760
    %v3182 = vsub.f32 %v2744, %v3181
    %v3183 = vand.u32 %v3182, 4294901760
    %3184 = vmatmul.f32.gmra.mxu0 %v3183
    %v3185 = vpop.f32.mrf.mxu0
    %v3186 = vadd.f32 %v3075, %v3185
    %v3187 = vand.u32 %v2747, 4294901760
    %v3188 = vsub.f32 %v2747, %v3187
    %v3189 = vand.u32 %v3188, 4294901760
    %3190 = vmatmul.f32.gmra.mxu0 %v3189
    %v3191 = vpop.f32.mrf.mxu0
    %v3192 = vadd.f32 %v3080, %v3191
    %v3193 = vand.u32 %v2750, 4294901760
    %v3194 = vsub.f32 %v2750, %v3193
    %v3195 = vand.u32 %v3194, 4294901760
    %3196 = vmatmul.f32.gmra.mxu0 %v3195
    %v3197 = vpop.f32.mrf.mxu0
    %v3198 = vadd.f32 %v3085, %v3197
    %v3199 = vand.u32 %v2753, 4294901760
    %v3200 = vsub.f32 %v2753, %v3199
    %v3201 = vand.u32 %v3200, 4294901760
    %3202 = vmatmul.f32.gmra.mxu0 %v3201
    %v3203 = vpop.f32.mrf.mxu0
    %v3204 = vadd.f32 %v3090, %v3203
    %v3205 = vand.u32 %v2756, 4294901760
    %v3206 = vsub.f32 %v2756, %v3205
    %v3207 = vand.u32 %v3206, 4294901760
    %3208 = vmatmul.f32.gmra.mxu0 %v3207
    %v3209 = vpop.f32.mrf.mxu0
    %v3210 = vadd.f32 %v3095, %v3209
    %3211 = vdwg.mxu0
    %3212 = vmatpush.msra.mxu0 0.0
    %3213 = vmatpush.msra.mxu0 0.0
    %3214 = vmatpush.msra.mxu0 0.0
    %3215 = vmatpush.msra.mxu0 0.0
    %3216 = vmatpush.msra.mxu0 0.0
    %3217 = vmatpush.msra.mxu0 0.0
    %3218 = vmatpush.msra.mxu0 0.0
    %3219 = vmatpush.msra.mxu0 0.0
    %3220 = vmatpush.msra.mxu0 0.0
    %3221 = vmatpush.msra.mxu0 0.0
    %3222 = vmatpush.msra.mxu0 0.0
    %3223 = vmatpush.msra.mxu0 0.0
    %3224 = vmatpush.msra.mxu0 0.0
    %3225 = vmatpush.msra.mxu0 0.0
    %v3226 = vand.u32 %v82, 4294901760
    %v3227 = vsub.f32 %v82, %v3226
    %v3228 = vand.u32 %v3227, 4294901760
    %3229 = vmatpush.msra.mxu0 %v3228
    %v3230 = vand.u32 %v81, 4294901760
    %v3231 = vsub.f32 %v81, %v3230
    %v3232 = vand.u32 %v3231, 4294901760
    %3233 = vmatpush.msra.mxu0 %v3232
    %v3234 = vand.u32 %v2711, 4294901760
    %3235 = vmatmul.f32.gmra.mxu0 %v3234
    %v3236 = vpop.f32.mrf.mxu0
    %v3237 = vadd.f32 %v3120, %v3236
    %v3238 = vand.u32 %v2714, 4294901760
    %3239 = vmatmul.f32.gmra.mxu0 %v3238
    %v3240 = vpop.f32.mrf.mxu0
    %v3241 = vadd.f32 %v3126, %v3240
    %v3242 = vand.u32 %v2717, 4294901760
    %3243 = vmatmul.f32.gmra.mxu0 %v3242
    %v3244 = vpop.f32.mrf.mxu0
    %v3245 = vadd.f32 %v3132, %v3244
    %v3246 = vand.u32 %v2720, 4294901760
    %3247 = vmatmul.f32.gmra.mxu0 %v3246
    %v3248 = vpop.f32.mrf.mxu0
    %v3249 = vadd.f32 %v3138, %v3248
    %v3250 = vand.u32 %v2723, 4294901760
    %3251 = vmatmul.f32.gmra.mxu0 %v3250
    %v3252 = vpop.f32.mrf.mxu0
    %v3253 = vadd.f32 %v3144, %v3252
    %v3254 = vand.u32 %v2726, 4294901760
    %3255 = vmatmul.f32.gmra.mxu0 %v3254
    %v3256 = vpop.f32.mrf.mxu0
    %v3257 = vadd.f32 %v3150, %v3256
    %v3258 = vand.u32 %v2729, 4294901760
    %3259 = vmatmul.f32.gmra.mxu0 %v3258
    %v3260 = vpop.f32.mrf.mxu0
    %v3261 = vadd.f32 %v3156, %v3260
    %v3262 = vand.u32 %v2732, 4294901760
    %3263 = vmatmul.f32.gmra.mxu0 %v3262
    %v3264 = vpop.f32.mrf.mxu0
    %v3265 = vadd.f32 %v3162, %v3264
    %v3266 = vand.u32 %v2735, 4294901760
    %3267 = vmatmul.f32.gmra.mxu0 %v3266
    %v3268 = vpop.f32.mrf.mxu0
    %v3269 = vadd.f32 %v3168, %v3268
    %v3270 = vand.u32 %v2738, 4294901760
    %3271 = vmatmul.f32.gmra.mxu0 %v3270
    %v3272 = vpop.f32.mrf.mxu0
    %v3273 = vadd.f32 %v3174, %v3272
    %v3274 = vand.u32 %v2741, 4294901760
    %3275 = vmatmul.f32.gmra.mxu0 %v3274
    %v3276 = vpop.f32.mrf.mxu0
    %v3277 = vadd.f32 %v3180, %v3276
    %v3278 = vand.u32 %v2744, 4294901760
    %3279 = vmatmul.f32.gmra.mxu0 %v3278
    %v3280 = vpop.f32.mrf.mxu0
    %v3281 = vadd.f32 %v3186, %v3280
    %v3282 = vand.u32 %v2747, 4294901760
    %3283 = vmatmul.f32.gmra.mxu0 %v3282
    %v3284 = vpop.f32.mrf.mxu0
    %v3285 = vadd.f32 %v3192, %v3284
    %v3286 = vand.u32 %v2750, 4294901760
    %3287 = vmatmul.f32.gmra.mxu0 %v3286
    %v3288 = vpop.f32.mrf.mxu0
    %v3289 = vadd.f32 %v3198, %v3288
    %v3290 = vand.u32 %v2753, 4294901760
    %3291 = vmatmul.f32.gmra.mxu0 %v3290
    %v3292 = vpop.f32.mrf.mxu0
    %v3293 = vadd.f32 %v3204, %v3292
    %v3294 = vand.u32 %v2756, 4294901760
    %3295 = vmatmul.f32.gmra.mxu0 %v3294
    %v3296 = vpop.f32.mrf.mxu0
    %v3297 = vadd.f32 %v3210, %v3296
    %3298 = vdwg.mxu0
    %3299 = vmatpush.msra.mxu0 0.0
    %3300 = vmatpush.msra.mxu0 0.0
    %3301 = vmatpush.msra.mxu0 0.0
    %3302 = vmatpush.msra.mxu0 0.0
    %3303 = vmatpush.msra.mxu0 0.0
    %3304 = vmatpush.msra.mxu0 0.0
    %3305 = vmatpush.msra.mxu0 0.0
    %3306 = vmatpush.msra.mxu0 0.0
    %3307 = vmatpush.msra.mxu0 0.0
    %3308 = vmatpush.msra.mxu0 0.0
    %3309 = vmatpush.msra.mxu0 0.0
    %3310 = vmatpush.msra.mxu0 0.0
    %3311 = vmatpush.msra.mxu0 0.0
    %3312 = vmatpush.msra.mxu0 0.0
    %v3313 = vand.u32 %v82, 4294901760
    %3314 = vmatpush.msra.mxu0 %v3313
    %v3315 = vand.u32 %v81, 4294901760
    %3316 = vmatpush.msra.mxu0 %v3315
    %v3317 = vand.u32 %v2711, 4294901760
    %3318 = vmatmul.f32.gmra.mxu0 %v3317
    %v3319 = vpop.f32.mrf.mxu0
    %v3320 = vadd.f32 %v3237, %v3319
    %v3321 = vand.u32 %v2714, 4294901760
    %3322 = vmatmul.f32.gmra.mxu0 %v3321
    %v3323 = vpop.f32.mrf.mxu0
    %v3324 = vadd.f32 %v3241, %v3323
    %v3325 = vand.u32 %v2717, 4294901760
    %3326 = vmatmul.f32.gmra.mxu0 %v3325
    %v3327 = vpop.f32.mrf.mxu0
    %v3328 = vadd.f32 %v3245, %v3327
    %v3329 = vand.u32 %v2720, 4294901760
    %3330 = vmatmul.f32.gmra.mxu0 %v3329
    %v3331 = vpop.f32.mrf.mxu0
    %v3332 = vadd.f32 %v3249, %v3331
    %v3333 = vand.u32 %v2723, 4294901760
    %3334 = vmatmul.f32.gmra.mxu0 %v3333
    %v3335 = vpop.f32.mrf.mxu0
    %v3336 = vadd.f32 %v3253, %v3335
    %v3337 = vand.u32 %v2726, 4294901760
    %3338 = vmatmul.f32.gmra.mxu0 %v3337
    %v3339 = vpop.f32.mrf.mxu0
    %v3340 = vadd.f32 %v3257, %v3339
    %v3341 = vand.u32 %v2729, 4294901760
    %3342 = vmatmul.f32.gmra.mxu0 %v3341
    %v3343 = vpop.f32.mrf.mxu0
    %v3344 = vadd.f32 %v3261, %v3343
    %v3345 = vand.u32 %v2732, 4294901760
    %3346 = vmatmul.f32.gmra.mxu0 %v3345
    %v3347 = vpop.f32.mrf.mxu0
    %v3348 = vadd.f32 %v3265, %v3347
    %v3349 = vand.u32 %v2735, 4294901760
    %3350 = vmatmul.f32.gmra.mxu0 %v3349
    %v3351 = vpop.f32.mrf.mxu0
    %v3352 = vadd.f32 %v3269, %v3351
    %v3353 = vand.u32 %v2738, 4294901760
    %3354 = vmatmul.f32.gmra.mxu0 %v3353
    %v3355 = vpop.f32.mrf.mxu0
    %v3356 = vadd.f32 %v3273, %v3355
    %v3357 = vand.u32 %v2741, 4294901760
    %3358 = vmatmul.f32.gmra.mxu0 %v3357
    %v3359 = vpop.f32.mrf.mxu0
    %v3360 = vadd.f32 %v3277, %v3359
    %v3361 = vand.u32 %v2744, 4294901760
    %3362 = vmatmul.f32.gmra.mxu0 %v3361
    %v3363 = vpop.f32.mrf.mxu0
    %v3364 = vadd.f32 %v3281, %v3363
    %v3365 = vand.u32 %v2747, 4294901760
    %3366 = vmatmul.f32.gmra.mxu0 %v3365
    %v3367 = vpop.f32.mrf.mxu0
    %v3368 = vadd.f32 %v3285, %v3367
    %v3369 = vand.u32 %v2750, 4294901760
    %3370 = vmatmul.f32.gmra.mxu0 %v3369
    %v3371 = vpop.f32.mrf.mxu0
    %v3372 = vadd.f32 %v3289, %v3371
    %v3373 = vand.u32 %v2753, 4294901760
    %3374 = vmatmul.f32.gmra.mxu0 %v3373
    %v3375 = vpop.f32.mrf.mxu0
    %v3376 = vadd.f32 %v3293, %v3375
    %v3377 = vand.u32 %v2756, 4294901760
    %3378 = vmatmul.f32.gmra.mxu0 %v3377
    %v3379 = vpop.f32.mrf.mxu0
    %v3380 = vadd.f32 %v3297, %v3379
    %3381 = vdwg.mxu0
    %v3382 = vmul.f32 %v117, %v117
    %v3383 = vmul.f32 %v118, %v118
    %v3384 = vmul.f32 %v119, %v119
    %v3385 = vmul.f32 %v120, %v120
    %v3386 = vmul.f32 %v121, %v121
    %v3387 = vmul.f32 %v122, %v122
    %v3388 = vmul.f32 %v123, %v123
    %v3389 = vmul.f32 %v124, %v124
    %v3390 = vmul.f32 %v125, %v125
    %v3391 = vmul.f32 %v126, %v126
    %v3392 = vmul.f32 %v127, %v127
    %v3393 = vmul.f32 %v128, %v128
    %v3394 = vmul.f32 %v129, %v129
    %v3395 = vmul.f32 %v130, %v130
    %v3396 = vmul.f32 %v131, %v131
    %v3397 = vmul.f32 %v132, %v132
    %v3399 = vsel %vm181, %v3382, 0
    %v3402 = vsel %vm181, %v3383, 0
    %v3405 = vsel %vm181, %v3384, 0
    %v3408 = vsel %vm181, %v3385, 0
    %v3411 = vsel %vm181, %v3386, 0
    %v3414 = vsel %vm181, %v3387, 0
    %v3417 = vsel %vm181, %v3388, 0
    %v3420 = vsel %vm181, %v3389, 0
    %v3423 = vsel %vm181, %v3390, 0
    %v3426 = vsel %vm181, %v3391, 0
    %v3429 = vsel %vm181, %v3392, 0
    %v3432 = vsel %vm181, %v3393, 0
    %v3435 = vsel %vm181, %v3394, 0
    %v3438 = vsel %vm181, %v3395, 0
    %v3441 = vsel %vm181, %v3396, 0
    %v3444 = vsel %vm181, %v3397, 0
    %3446 = vmatpush.msra.mxu0 0.0
    %3447 = vmatpush.msra.mxu0 0.0
    %3448 = vmatpush.msra.mxu0 0.0
    %3449 = vmatpush.msra.mxu0 0.0
    %3450 = vmatpush.msra.mxu0 0.0
    %3451 = vmatpush.msra.mxu0 0.0
    %3452 = vmatpush.msra.mxu0 0.0
    %3453 = vmatpush.msra.mxu0 0.0
    %3454 = vmatpush.msra.mxu0 0.0
    %3455 = vmatpush.msra.mxu0 0.0
    %3456 = vmatpush.msra.mxu0 0.0
    %3457 = vmatpush.msra.mxu0 0.0
    %3458 = vmatpush.msra.mxu0 0.0
    %3459 = vmatpush.msra.mxu0 0.0
    %v3460 = vand.u32 %v84, 4294901760
    %3461 = vmatpush.msra.mxu0 %v3460
    %v3462 = vand.u32 %v83, 4294901760
    %3463 = vmatpush.msra.mxu0 %v3462
    %v3464 = vand.u32 %v3399, 4294901760
    %v3465 = vsub.f32 %v3399, %v3464
    %v3466 = vand.u32 %v3465, 4294901760
    %v3467 = vsub.f32 %v3465, %v3466
    %v3468 = vand.u32 %v3467, 4294901760
    %3469 = vmatmul.f32.gmra.mxu0 %v3468
    %v3470 = vpop.f32.mrf.mxu0
    %v3471 = vadd.f32 0.0, %v3470
    %v3472 = vand.u32 %v3402, 4294901760
    %v3473 = vsub.f32 %v3402, %v3472
    %v3474 = vand.u32 %v3473, 4294901760
    %v3475 = vsub.f32 %v3473, %v3474
    %v3476 = vand.u32 %v3475, 4294901760
    %3477 = vmatmul.f32.gmra.mxu0 %v3476
    %v3478 = vpop.f32.mrf.mxu0
    %v3479 = vadd.f32 0.0, %v3478
    %v3480 = vand.u32 %v3405, 4294901760
    %v3481 = vsub.f32 %v3405, %v3480
    %v3482 = vand.u32 %v3481, 4294901760
    %v3483 = vsub.f32 %v3481, %v3482
    %v3484 = vand.u32 %v3483, 4294901760
    %3485 = vmatmul.f32.gmra.mxu0 %v3484
    %v3486 = vpop.f32.mrf.mxu0
    %v3487 = vadd.f32 0.0, %v3486
    %v3488 = vand.u32 %v3408, 4294901760
    %v3489 = vsub.f32 %v3408, %v3488
    %v3490 = vand.u32 %v3489, 4294901760
    %v3491 = vsub.f32 %v3489, %v3490
    %v3492 = vand.u32 %v3491, 4294901760
    %3493 = vmatmul.f32.gmra.mxu0 %v3492
    %v3494 = vpop.f32.mrf.mxu0
    %v3495 = vadd.f32 0.0, %v3494
    %v3496 = vand.u32 %v3411, 4294901760
    %v3497 = vsub.f32 %v3411, %v3496
    %v3498 = vand.u32 %v3497, 4294901760
    %v3499 = vsub.f32 %v3497, %v3498
    %v3500 = vand.u32 %v3499, 4294901760
    %3501 = vmatmul.f32.gmra.mxu0 %v3500
    %v3502 = vpop.f32.mrf.mxu0
    %v3503 = vadd.f32 0.0, %v3502
    %v3504 = vand.u32 %v3414, 4294901760
    %v3505 = vsub.f32 %v3414, %v3504
    %v3506 = vand.u32 %v3505, 4294901760
    %v3507 = vsub.f32 %v3505, %v3506
    %v3508 = vand.u32 %v3507, 4294901760
    %3509 = vmatmul.f32.gmra.mxu0 %v3508
    %v3510 = vpop.f32.mrf.mxu0
    %v3511 = vadd.f32 0.0, %v3510
    %v3512 = vand.u32 %v3417, 4294901760
    %v3513 = vsub.f32 %v3417, %v3512
    %v3514 = vand.u32 %v3513, 4294901760
    %v3515 = vsub.f32 %v3513, %v3514
    %v3516 = vand.u32 %v3515, 4294901760
    %3517 = vmatmul.f32.gmra.mxu0 %v3516
    %v3518 = vpop.f32.mrf.mxu0
    %v3519 = vadd.f32 0.0, %v3518
    %v3520 = vand.u32 %v3420, 4294901760
    %v3521 = vsub.f32 %v3420, %v3520
    %v3522 = vand.u32 %v3521, 4294901760
    %v3523 = vsub.f32 %v3521, %v3522
    %v3524 = vand.u32 %v3523, 4294901760
    %3525 = vmatmul.f32.gmra.mxu0 %v3524
    %v3526 = vpop.f32.mrf.mxu0
    %v3527 = vadd.f32 0.0, %v3526
    %v3528 = vand.u32 %v3423, 4294901760
    %v3529 = vsub.f32 %v3423, %v3528
    %v3530 = vand.u32 %v3529, 4294901760
    %v3531 = vsub.f32 %v3529, %v3530
    %v3532 = vand.u32 %v3531, 4294901760
    %3533 = vmatmul.f32.gmra.mxu0 %v3532
    %v3534 = vpop.f32.mrf.mxu0
    %v3535 = vadd.f32 0.0, %v3534
    %v3536 = vand.u32 %v3426, 4294901760
    %v3537 = vsub.f32 %v3426, %v3536
    %v3538 = vand.u32 %v3537, 4294901760
    %v3539 = vsub.f32 %v3537, %v3538
    %v3540 = vand.u32 %v3539, 4294901760
    %3541 = vmatmul.f32.gmra.mxu0 %v3540
    %v3542 = vpop.f32.mrf.mxu0
    %v3543 = vadd.f32 0.0, %v3542
    %v3544 = vand.u32 %v3429, 4294901760
    %v3545 = vsub.f32 %v3429, %v3544
    %v3546 = vand.u32 %v3545, 4294901760
    %v3547 = vsub.f32 %v3545, %v3546
    %v3548 = vand.u32 %v3547, 4294901760
    %3549 = vmatmul.f32.gmra.mxu0 %v3548
    %v3550 = vpop.f32.mrf.mxu0
    %v3551 = vadd.f32 0.0, %v3550
    %v3552 = vand.u32 %v3432, 4294901760
    %v3553 = vsub.f32 %v3432, %v3552
    %v3554 = vand.u32 %v3553, 4294901760
    %v3555 = vsub.f32 %v3553, %v3554
    %v3556 = vand.u32 %v3555, 4294901760
    %3557 = vmatmul.f32.gmra.mxu0 %v3556
    %v3558 = vpop.f32.mrf.mxu0
    %v3559 = vadd.f32 0.0, %v3558
    %v3560 = vand.u32 %v3435, 4294901760
    %v3561 = vsub.f32 %v3435, %v3560
    %v3562 = vand.u32 %v3561, 4294901760
    %v3563 = vsub.f32 %v3561, %v3562
    %v3564 = vand.u32 %v3563, 4294901760
    %3565 = vmatmul.f32.gmra.mxu0 %v3564
    %v3566 = vpop.f32.mrf.mxu0
    %v3567 = vadd.f32 0.0, %v3566
    %v3568 = vand.u32 %v3438, 4294901760
    %v3569 = vsub.f32 %v3438, %v3568
    %v3570 = vand.u32 %v3569, 4294901760
    %v3571 = vsub.f32 %v3569, %v3570
    %v3572 = vand.u32 %v3571, 4294901760
    %3573 = vmatmul.f32.gmra.mxu0 %v3572
    %v3574 = vpop.f32.mrf.mxu0
    %v3575 = vadd.f32 0.0, %v3574
    %v3576 = vand.u32 %v3441, 4294901760
    %v3577 = vsub.f32 %v3441, %v3576
    %v3578 = vand.u32 %v3577, 4294901760
    %v3579 = vsub.f32 %v3577, %v3578
    %v3580 = vand.u32 %v3579, 4294901760
    %3581 = vmatmul.f32.gmra.mxu0 %v3580
    %v3582 = vpop.f32.mrf.mxu0
    %v3583 = vadd.f32 0.0, %v3582
    %v3584 = vand.u32 %v3444, 4294901760
    %v3585 = vsub.f32 %v3444, %v3584
    %v3586 = vand.u32 %v3585, 4294901760
    %v3587 = vsub.f32 %v3585, %v3586
    %v3588 = vand.u32 %v3587, 4294901760
    %3589 = vmatmul.f32.gmra.mxu0 %v3588
    %v3590 = vpop.f32.mrf.mxu0
    %v3591 = vadd.f32 0.0, %v3590
    %3592 = vdwg.mxu0
    %3593 = vmatpush.msra.mxu0 0.0
    %3594 = vmatpush.msra.mxu0 0.0
    %3595 = vmatpush.msra.mxu0 0.0
    %3596 = vmatpush.msra.mxu0 0.0
    %3597 = vmatpush.msra.mxu0 0.0
    %3598 = vmatpush.msra.mxu0 0.0
    %3599 = vmatpush.msra.mxu0 0.0
    %3600 = vmatpush.msra.mxu0 0.0
    %3601 = vmatpush.msra.mxu0 0.0
    %3602 = vmatpush.msra.mxu0 0.0
    %3603 = vmatpush.msra.mxu0 0.0
    %3604 = vmatpush.msra.mxu0 0.0
    %3605 = vmatpush.msra.mxu0 0.0
    %3606 = vmatpush.msra.mxu0 0.0
    %v3607 = vand.u32 %v84, 4294901760
    %v3608 = vsub.f32 %v84, %v3607
    %v3609 = vand.u32 %v3608, 4294901760
    %v3610 = vsub.f32 %v3608, %v3609
    %v3611 = vand.u32 %v3610, 4294901760
    %3612 = vmatpush.msra.mxu0 %v3611
    %v3613 = vand.u32 %v83, 4294901760
    %v3614 = vsub.f32 %v83, %v3613
    %v3615 = vand.u32 %v3614, 4294901760
    %v3616 = vsub.f32 %v3614, %v3615
    %v3617 = vand.u32 %v3616, 4294901760
    %3618 = vmatpush.msra.mxu0 %v3617
    %v3619 = vand.u32 %v3399, 4294901760
    %3620 = vmatmul.f32.gmra.mxu0 %v3619
    %v3621 = vpop.f32.mrf.mxu0
    %v3622 = vadd.f32 %v3471, %v3621
    %v3623 = vand.u32 %v3402, 4294901760
    %3624 = vmatmul.f32.gmra.mxu0 %v3623
    %v3625 = vpop.f32.mrf.mxu0
    %v3626 = vadd.f32 %v3479, %v3625
    %v3627 = vand.u32 %v3405, 4294901760
    %3628 = vmatmul.f32.gmra.mxu0 %v3627
    %v3629 = vpop.f32.mrf.mxu0
    %v3630 = vadd.f32 %v3487, %v3629
    %v3631 = vand.u32 %v3408, 4294901760
    %3632 = vmatmul.f32.gmra.mxu0 %v3631
    %v3633 = vpop.f32.mrf.mxu0
    %v3634 = vadd.f32 %v3495, %v3633
    %v3635 = vand.u32 %v3411, 4294901760
    %3636 = vmatmul.f32.gmra.mxu0 %v3635
    %v3637 = vpop.f32.mrf.mxu0
    %v3638 = vadd.f32 %v3503, %v3637
    %v3639 = vand.u32 %v3414, 4294901760
    %3640 = vmatmul.f32.gmra.mxu0 %v3639
    %v3641 = vpop.f32.mrf.mxu0
    %v3642 = vadd.f32 %v3511, %v3641
    %v3643 = vand.u32 %v3417, 4294901760
    %3644 = vmatmul.f32.gmra.mxu0 %v3643
    %v3645 = vpop.f32.mrf.mxu0
    %v3646 = vadd.f32 %v3519, %v3645
    %v3647 = vand.u32 %v3420, 4294901760
    %3648 = vmatmul.f32.gmra.mxu0 %v3647
    %v3649 = vpop.f32.mrf.mxu0
    %v3650 = vadd.f32 %v3527, %v3649
    %v3651 = vand.u32 %v3423, 4294901760
    %3652 = vmatmul.f32.gmra.mxu0 %v3651
    %v3653 = vpop.f32.mrf.mxu0
    %v3654 = vadd.f32 %v3535, %v3653
    %v3655 = vand.u32 %v3426, 4294901760
    %3656 = vmatmul.f32.gmra.mxu0 %v3655
    %v3657 = vpop.f32.mrf.mxu0
    %v3658 = vadd.f32 %v3543, %v3657
    %v3659 = vand.u32 %v3429, 4294901760
    %3660 = vmatmul.f32.gmra.mxu0 %v3659
    %v3661 = vpop.f32.mrf.mxu0
    %v3662 = vadd.f32 %v3551, %v3661
    %v3663 = vand.u32 %v3432, 4294901760
    %3664 = vmatmul.f32.gmra.mxu0 %v3663
    %v3665 = vpop.f32.mrf.mxu0
    %v3666 = vadd.f32 %v3559, %v3665
    %v3667 = vand.u32 %v3435, 4294901760
    %3668 = vmatmul.f32.gmra.mxu0 %v3667
    %v3669 = vpop.f32.mrf.mxu0
    %v3670 = vadd.f32 %v3567, %v3669
    %v3671 = vand.u32 %v3438, 4294901760
    %3672 = vmatmul.f32.gmra.mxu0 %v3671
    %v3673 = vpop.f32.mrf.mxu0
    %v3674 = vadd.f32 %v3575, %v3673
    %v3675 = vand.u32 %v3441, 4294901760
    %3676 = vmatmul.f32.gmra.mxu0 %v3675
    %v3677 = vpop.f32.mrf.mxu0
    %v3678 = vadd.f32 %v3583, %v3677
    %v3679 = vand.u32 %v3444, 4294901760
    %3680 = vmatmul.f32.gmra.mxu0 %v3679
    %v3681 = vpop.f32.mrf.mxu0
    %v3682 = vadd.f32 %v3591, %v3681
    %3683 = vdwg.mxu0
    %3684 = vmatpush.msra.mxu0 0.0
    %3685 = vmatpush.msra.mxu0 0.0
    %3686 = vmatpush.msra.mxu0 0.0
    %3687 = vmatpush.msra.mxu0 0.0
    %3688 = vmatpush.msra.mxu0 0.0
    %3689 = vmatpush.msra.mxu0 0.0
    %3690 = vmatpush.msra.mxu0 0.0
    %3691 = vmatpush.msra.mxu0 0.0
    %3692 = vmatpush.msra.mxu0 0.0
    %3693 = vmatpush.msra.mxu0 0.0
    %3694 = vmatpush.msra.mxu0 0.0
    %3695 = vmatpush.msra.mxu0 0.0
    %3696 = vmatpush.msra.mxu0 0.0
    %3697 = vmatpush.msra.mxu0 0.0
    %v3698 = vand.u32 %v84, 4294901760
    %v3699 = vsub.f32 %v84, %v3698
    %3700 = vmatpush.msra.mxu0 %v3699
    %v3701 = vand.u32 %v83, 4294901760
    %v3702 = vsub.f32 %v83, %v3701
    %3703 = vmatpush.msra.mxu0 %v3702
    %v3704 = vand.u32 %v3399, 4294901760
    %v3705 = vsub.f32 %v3399, %v3704
    %3706 = vmatmul.f32.gmra.mxu0 %v3705
    %v3707 = vpop.f32.mrf.mxu0
    %v3708 = vadd.f32 %v3622, %v3707
    %v3709 = vand.u32 %v3402, 4294901760
    %v3710 = vsub.f32 %v3402, %v3709
    %3711 = vmatmul.f32.gmra.mxu0 %v3710
    %v3712 = vpop.f32.mrf.mxu0
    %v3713 = vadd.f32 %v3626, %v3712
    %v3714 = vand.u32 %v3405, 4294901760
    %v3715 = vsub.f32 %v3405, %v3714
    %3716 = vmatmul.f32.gmra.mxu0 %v3715
    %v3717 = vpop.f32.mrf.mxu0
    %v3718 = vadd.f32 %v3630, %v3717
    %v3719 = vand.u32 %v3408, 4294901760
    %v3720 = vsub.f32 %v3408, %v3719
    %3721 = vmatmul.f32.gmra.mxu0 %v3720
    %v3722 = vpop.f32.mrf.mxu0
    %v3723 = vadd.f32 %v3634, %v3722
    %v3724 = vand.u32 %v3411, 4294901760
    %v3725 = vsub.f32 %v3411, %v3724
    %3726 = vmatmul.f32.gmra.mxu0 %v3725
    %v3727 = vpop.f32.mrf.mxu0
    %v3728 = vadd.f32 %v3638, %v3727
    %v3729 = vand.u32 %v3414, 4294901760
    %v3730 = vsub.f32 %v3414, %v3729
    %3731 = vmatmul.f32.gmra.mxu0 %v3730
    %v3732 = vpop.f32.mrf.mxu0
    %v3733 = vadd.f32 %v3642, %v3732
    %v3734 = vand.u32 %v3417, 4294901760
    %v3735 = vsub.f32 %v3417, %v3734
    %3736 = vmatmul.f32.gmra.mxu0 %v3735
    %v3737 = vpop.f32.mrf.mxu0
    %v3738 = vadd.f32 %v3646, %v3737
    %v3739 = vand.u32 %v3420, 4294901760
    %v3740 = vsub.f32 %v3420, %v3739
    %3741 = vmatmul.f32.gmra.mxu0 %v3740
    %v3742 = vpop.f32.mrf.mxu0
    %v3743 = vadd.f32 %v3650, %v3742
    %v3744 = vand.u32 %v3423, 4294901760
    %v3745 = vsub.f32 %v3423, %v3744
    %3746 = vmatmul.f32.gmra.mxu0 %v3745
    %v3747 = vpop.f32.mrf.mxu0
    %v3748 = vadd.f32 %v3654, %v3747
    %v3749 = vand.u32 %v3426, 4294901760
    %v3750 = vsub.f32 %v3426, %v3749
    %3751 = vmatmul.f32.gmra.mxu0 %v3750
    %v3752 = vpop.f32.mrf.mxu0
    %v3753 = vadd.f32 %v3658, %v3752
    %v3754 = vand.u32 %v3429, 4294901760
    %v3755 = vsub.f32 %v3429, %v3754
    %3756 = vmatmul.f32.gmra.mxu0 %v3755
    %v3757 = vpop.f32.mrf.mxu0
    %v3758 = vadd.f32 %v3662, %v3757
    %v3759 = vand.u32 %v3432, 4294901760
    %v3760 = vsub.f32 %v3432, %v3759
    %3761 = vmatmul.f32.gmra.mxu0 %v3760
    %v3762 = vpop.f32.mrf.mxu0
    %v3763 = vadd.f32 %v3666, %v3762
    %v3764 = vand.u32 %v3435, 4294901760
    %v3765 = vsub.f32 %v3435, %v3764
    %3766 = vmatmul.f32.gmra.mxu0 %v3765
    %v3767 = vpop.f32.mrf.mxu0
    %v3768 = vadd.f32 %v3670, %v3767
    %v3769 = vand.u32 %v3438, 4294901760
    %v3770 = vsub.f32 %v3438, %v3769
    %3771 = vmatmul.f32.gmra.mxu0 %v3770
    %v3772 = vpop.f32.mrf.mxu0
    %v3773 = vadd.f32 %v3674, %v3772
    %v3774 = vand.u32 %v3441, 4294901760
    %v3775 = vsub.f32 %v3441, %v3774
    %3776 = vmatmul.f32.gmra.mxu0 %v3775
    %v3777 = vpop.f32.mrf.mxu0
    %v3778 = vadd.f32 %v3678, %v3777
    %v3779 = vand.u32 %v3444, 4294901760
    %v3780 = vsub.f32 %v3444, %v3779
    %3781 = vmatmul.f32.gmra.mxu0 %v3780
    %v3782 = vpop.f32.mrf.mxu0
    %v3783 = vadd.f32 %v3682, %v3782
    %3784 = vdwg.mxu0
    %3785 = vmatpush.msra.mxu0 0.0
    %3786 = vmatpush.msra.mxu0 0.0
    %3787 = vmatpush.msra.mxu0 0.0
    %3788 = vmatpush.msra.mxu0 0.0
    %3789 = vmatpush.msra.mxu0 0.0
    %3790 = vmatpush.msra.mxu0 0.0
    %3791 = vmatpush.msra.mxu0 0.0
    %3792 = vmatpush.msra.mxu0 0.0
    %3793 = vmatpush.msra.mxu0 0.0
    %3794 = vmatpush.msra.mxu0 0.0
    %3795 = vmatpush.msra.mxu0 0.0
    %3796 = vmatpush.msra.mxu0 0.0
    %3797 = vmatpush.msra.mxu0 0.0
    %3798 = vmatpush.msra.mxu0 0.0
    %v3799 = vand.u32 %v84, 4294901760
    %3800 = vmatpush.msra.mxu0 %v3799
    %v3801 = vand.u32 %v83, 4294901760
    %3802 = vmatpush.msra.mxu0 %v3801
    %v3803 = vand.u32 %v3399, 4294901760
    %v3804 = vsub.f32 %v3399, %v3803
    %v3805 = vand.u32 %v3804, 4294901760
    %3806 = vmatmul.f32.gmra.mxu0 %v3805
    %v3807 = vpop.f32.mrf.mxu0
    %v3808 = vadd.f32 %v3708, %v3807
    %v3809 = vand.u32 %v3402, 4294901760
    %v3810 = vsub.f32 %v3402, %v3809
    %v3811 = vand.u32 %v3810, 4294901760
    %3812 = vmatmul.f32.gmra.mxu0 %v3811
    %v3813 = vpop.f32.mrf.mxu0
    %v3814 = vadd.f32 %v3713, %v3813
    %v3815 = vand.u32 %v3405, 4294901760
    %v3816 = vsub.f32 %v3405, %v3815
    %v3817 = vand.u32 %v3816, 4294901760
    %3818 = vmatmul.f32.gmra.mxu0 %v3817
    %v3819 = vpop.f32.mrf.mxu0
    %v3820 = vadd.f32 %v3718, %v3819
    %v3821 = vand.u32 %v3408, 4294901760
    %v3822 = vsub.f32 %v3408, %v3821
    %v3823 = vand.u32 %v3822, 4294901760
    %3824 = vmatmul.f32.gmra.mxu0 %v3823
    %v3825 = vpop.f32.mrf.mxu0
    %v3826 = vadd.f32 %v3723, %v3825
    %v3827 = vand.u32 %v3411, 4294901760
    %v3828 = vsub.f32 %v3411, %v3827
    %v3829 = vand.u32 %v3828, 4294901760
    %3830 = vmatmul.f32.gmra.mxu0 %v3829
    %v3831 = vpop.f32.mrf.mxu0
    %v3832 = vadd.f32 %v3728, %v3831
    %v3833 = vand.u32 %v3414, 4294901760
    %v3834 = vsub.f32 %v3414, %v3833
    %v3835 = vand.u32 %v3834, 4294901760
    %3836 = vmatmul.f32.gmra.mxu0 %v3835
    %v3837 = vpop.f32.mrf.mxu0
    %v3838 = vadd.f32 %v3733, %v3837
    %v3839 = vand.u32 %v3417, 4294901760
    %v3840 = vsub.f32 %v3417, %v3839
    %v3841 = vand.u32 %v3840, 4294901760
    %3842 = vmatmul.f32.gmra.mxu0 %v3841
    %v3843 = vpop.f32.mrf.mxu0
    %v3844 = vadd.f32 %v3738, %v3843
    %v3845 = vand.u32 %v3420, 4294901760
    %v3846 = vsub.f32 %v3420, %v3845
    %v3847 = vand.u32 %v3846, 4294901760
    %3848 = vmatmul.f32.gmra.mxu0 %v3847
    %v3849 = vpop.f32.mrf.mxu0
    %v3850 = vadd.f32 %v3743, %v3849
    %v3851 = vand.u32 %v3423, 4294901760
    %v3852 = vsub.f32 %v3423, %v3851
    %v3853 = vand.u32 %v3852, 4294901760
    %3854 = vmatmul.f32.gmra.mxu0 %v3853
    %v3855 = vpop.f32.mrf.mxu0
    %v3856 = vadd.f32 %v3748, %v3855
    %v3857 = vand.u32 %v3426, 4294901760
    %v3858 = vsub.f32 %v3426, %v3857
    %v3859 = vand.u32 %v3858, 4294901760
    %3860 = vmatmul.f32.gmra.mxu0 %v3859
    %v3861 = vpop.f32.mrf.mxu0
    %v3862 = vadd.f32 %v3753, %v3861
    %v3863 = vand.u32 %v3429, 4294901760
    %v3864 = vsub.f32 %v3429, %v3863
    %v3865 = vand.u32 %v3864, 4294901760
    %3866 = vmatmul.f32.gmra.mxu0 %v3865
    %v3867 = vpop.f32.mrf.mxu0
    %v3868 = vadd.f32 %v3758, %v3867
    %v3869 = vand.u32 %v3432, 4294901760
    %v3870 = vsub.f32 %v3432, %v3869
    %v3871 = vand.u32 %v3870, 4294901760
    %3872 = vmatmul.f32.gmra.mxu0 %v3871
    %v3873 = vpop.f32.mrf.mxu0
    %v3874 = vadd.f32 %v3763, %v3873
    %v3875 = vand.u32 %v3435, 4294901760
    %v3876 = vsub.f32 %v3435, %v3875
    %v3877 = vand.u32 %v3876, 4294901760
    %3878 = vmatmul.f32.gmra.mxu0 %v3877
    %v3879 = vpop.f32.mrf.mxu0
    %v3880 = vadd.f32 %v3768, %v3879
    %v3881 = vand.u32 %v3438, 4294901760
    %v3882 = vsub.f32 %v3438, %v3881
    %v3883 = vand.u32 %v3882, 4294901760
    %3884 = vmatmul.f32.gmra.mxu0 %v3883
    %v3885 = vpop.f32.mrf.mxu0
    %v3886 = vadd.f32 %v3773, %v3885
    %v3887 = vand.u32 %v3441, 4294901760
    %v3888 = vsub.f32 %v3441, %v3887
    %v3889 = vand.u32 %v3888, 4294901760
    %3890 = vmatmul.f32.gmra.mxu0 %v3889
    %v3891 = vpop.f32.mrf.mxu0
    %v3892 = vadd.f32 %v3778, %v3891
    %v3893 = vand.u32 %v3444, 4294901760
    %v3894 = vsub.f32 %v3444, %v3893
    %v3895 = vand.u32 %v3894, 4294901760
    %3896 = vmatmul.f32.gmra.mxu0 %v3895
    %v3897 = vpop.f32.mrf.mxu0
    %v3898 = vadd.f32 %v3783, %v3897
    %3899 = vdwg.mxu0
    %3900 = vmatpush.msra.mxu0 0.0
    %3901 = vmatpush.msra.mxu0 0.0
    %3902 = vmatpush.msra.mxu0 0.0
    %3903 = vmatpush.msra.mxu0 0.0
    %3904 = vmatpush.msra.mxu0 0.0
    %3905 = vmatpush.msra.mxu0 0.0
    %3906 = vmatpush.msra.mxu0 0.0
    %3907 = vmatpush.msra.mxu0 0.0
    %3908 = vmatpush.msra.mxu0 0.0
    %3909 = vmatpush.msra.mxu0 0.0
    %3910 = vmatpush.msra.mxu0 0.0
    %3911 = vmatpush.msra.mxu0 0.0
    %3912 = vmatpush.msra.mxu0 0.0
    %3913 = vmatpush.msra.mxu0 0.0
    %v3914 = vand.u32 %v84, 4294901760
    %v3915 = vsub.f32 %v84, %v3914
    %v3916 = vand.u32 %v3915, 4294901760
    %3917 = vmatpush.msra.mxu0 %v3916
    %v3918 = vand.u32 %v83, 4294901760
    %v3919 = vsub.f32 %v83, %v3918
    %v3920 = vand.u32 %v3919, 4294901760
    %3921 = vmatpush.msra.mxu0 %v3920
    %v3922 = vand.u32 %v3399, 4294901760
    %3923 = vmatmul.f32.gmra.mxu0 %v3922
    %v3924 = vpop.f32.mrf.mxu0
    %v3925 = vadd.f32 %v3808, %v3924
    %v3926 = vand.u32 %v3402, 4294901760
    %3927 = vmatmul.f32.gmra.mxu0 %v3926
    %v3928 = vpop.f32.mrf.mxu0
    %v3929 = vadd.f32 %v3814, %v3928
    %v3930 = vand.u32 %v3405, 4294901760
    %3931 = vmatmul.f32.gmra.mxu0 %v3930
    %v3932 = vpop.f32.mrf.mxu0
    %v3933 = vadd.f32 %v3820, %v3932
    %v3934 = vand.u32 %v3408, 4294901760
    %3935 = vmatmul.f32.gmra.mxu0 %v3934
    %v3936 = vpop.f32.mrf.mxu0
    %v3937 = vadd.f32 %v3826, %v3936
    %v3938 = vand.u32 %v3411, 4294901760
    %3939 = vmatmul.f32.gmra.mxu0 %v3938
    %v3940 = vpop.f32.mrf.mxu0
    %v3941 = vadd.f32 %v3832, %v3940
    %v3942 = vand.u32 %v3414, 4294901760
    %3943 = vmatmul.f32.gmra.mxu0 %v3942
    %v3944 = vpop.f32.mrf.mxu0
    %v3945 = vadd.f32 %v3838, %v3944
    %v3946 = vand.u32 %v3417, 4294901760
    %3947 = vmatmul.f32.gmra.mxu0 %v3946
    %v3948 = vpop.f32.mrf.mxu0
    %v3949 = vadd.f32 %v3844, %v3948
    %v3950 = vand.u32 %v3420, 4294901760
    %3951 = vmatmul.f32.gmra.mxu0 %v3950
    %v3952 = vpop.f32.mrf.mxu0
    %v3953 = vadd.f32 %v3850, %v3952
    %v3954 = vand.u32 %v3423, 4294901760
    %3955 = vmatmul.f32.gmra.mxu0 %v3954
    %v3956 = vpop.f32.mrf.mxu0
    %v3957 = vadd.f32 %v3856, %v3956
    %v3958 = vand.u32 %v3426, 4294901760
    %3959 = vmatmul.f32.gmra.mxu0 %v3958
    %v3960 = vpop.f32.mrf.mxu0
    %v3961 = vadd.f32 %v3862, %v3960
    %v3962 = vand.u32 %v3429, 4294901760
    %3963 = vmatmul.f32.gmra.mxu0 %v3962
    %v3964 = vpop.f32.mrf.mxu0
    %v3965 = vadd.f32 %v3868, %v3964
    %v3966 = vand.u32 %v3432, 4294901760
    %3967 = vmatmul.f32.gmra.mxu0 %v3966
    %v3968 = vpop.f32.mrf.mxu0
    %v3969 = vadd.f32 %v3874, %v3968
    %v3970 = vand.u32 %v3435, 4294901760
    %3971 = vmatmul.f32.gmra.mxu0 %v3970
    %v3972 = vpop.f32.mrf.mxu0
    %v3973 = vadd.f32 %v3880, %v3972
    %v3974 = vand.u32 %v3438, 4294901760
    %3975 = vmatmul.f32.gmra.mxu0 %v3974
    %v3976 = vpop.f32.mrf.mxu0
    %v3977 = vadd.f32 %v3886, %v3976
    %v3978 = vand.u32 %v3441, 4294901760
    %3979 = vmatmul.f32.gmra.mxu0 %v3978
    %v3980 = vpop.f32.mrf.mxu0
    %v3981 = vadd.f32 %v3892, %v3980
    %v3982 = vand.u32 %v3444, 4294901760
    %3983 = vmatmul.f32.gmra.mxu0 %v3982
    %v3984 = vpop.f32.mrf.mxu0
    %v3985 = vadd.f32 %v3898, %v3984
    %3986 = vdwg.mxu0
    %3987 = vmatpush.msra.mxu0 0.0
    %3988 = vmatpush.msra.mxu0 0.0
    %3989 = vmatpush.msra.mxu0 0.0
    %3990 = vmatpush.msra.mxu0 0.0
    %3991 = vmatpush.msra.mxu0 0.0
    %3992 = vmatpush.msra.mxu0 0.0
    %3993 = vmatpush.msra.mxu0 0.0
    %3994 = vmatpush.msra.mxu0 0.0
    %3995 = vmatpush.msra.mxu0 0.0
    %3996 = vmatpush.msra.mxu0 0.0
    %3997 = vmatpush.msra.mxu0 0.0
    %3998 = vmatpush.msra.mxu0 0.0
    %3999 = vmatpush.msra.mxu0 0.0
    %4000 = vmatpush.msra.mxu0 0.0
    %v4001 = vand.u32 %v84, 4294901760
    %4002 = vmatpush.msra.mxu0 %v4001
    %v4003 = vand.u32 %v83, 4294901760
    %4004 = vmatpush.msra.mxu0 %v4003
    %v4005 = vand.u32 %v3399, 4294901760
    %4006 = vmatmul.f32.gmra.mxu0 %v4005
    %v4007 = vpop.f32.mrf.mxu0
    %v4008 = vadd.f32 %v3925, %v4007
    %v4009 = vand.u32 %v3402, 4294901760
    %4010 = vmatmul.f32.gmra.mxu0 %v4009
    %v4011 = vpop.f32.mrf.mxu0
    %v4012 = vadd.f32 %v3929, %v4011
    %v4013 = vand.u32 %v3405, 4294901760
    %4014 = vmatmul.f32.gmra.mxu0 %v4013
    %v4015 = vpop.f32.mrf.mxu0
    %v4016 = vadd.f32 %v3933, %v4015
    %v4017 = vand.u32 %v3408, 4294901760
    %4018 = vmatmul.f32.gmra.mxu0 %v4017
    %v4019 = vpop.f32.mrf.mxu0
    %v4020 = vadd.f32 %v3937, %v4019
    %v4021 = vand.u32 %v3411, 4294901760
    %4022 = vmatmul.f32.gmra.mxu0 %v4021
    %v4023 = vpop.f32.mrf.mxu0
    %v4024 = vadd.f32 %v3941, %v4023
    %v4025 = vand.u32 %v3414, 4294901760
    %4026 = vmatmul.f32.gmra.mxu0 %v4025
    %v4027 = vpop.f32.mrf.mxu0
    %v4028 = vadd.f32 %v3945, %v4027
    %v4029 = vand.u32 %v3417, 4294901760
    %4030 = vmatmul.f32.gmra.mxu0 %v4029
    %v4031 = vpop.f32.mrf.mxu0
    %v4032 = vadd.f32 %v3949, %v4031
    %v4033 = vand.u32 %v3420, 4294901760
    %4034 = vmatmul.f32.gmra.mxu0 %v4033
    %v4035 = vpop.f32.mrf.mxu0
    %v4036 = vadd.f32 %v3953, %v4035
    %v4037 = vand.u32 %v3423, 4294901760
    %4038 = vmatmul.f32.gmra.mxu0 %v4037
    %v4039 = vpop.f32.mrf.mxu0
    %v4040 = vadd.f32 %v3957, %v4039
    %v4041 = vand.u32 %v3426, 4294901760
    %4042 = vmatmul.f32.gmra.mxu0 %v4041
    %v4043 = vpop.f32.mrf.mxu0
    %v4044 = vadd.f32 %v3961, %v4043
    %v4045 = vand.u32 %v3429, 4294901760
    %4046 = vmatmul.f32.gmra.mxu0 %v4045
    %v4047 = vpop.f32.mrf.mxu0
    %v4048 = vadd.f32 %v3965, %v4047
    %v4049 = vand.u32 %v3432, 4294901760
    %4050 = vmatmul.f32.gmra.mxu0 %v4049
    %v4051 = vpop.f32.mrf.mxu0
    %v4052 = vadd.f32 %v3969, %v4051
    %v4053 = vand.u32 %v3435, 4294901760
    %4054 = vmatmul.f32.gmra.mxu0 %v4053
    %v4055 = vpop.f32.mrf.mxu0
    %v4056 = vadd.f32 %v3973, %v4055
    %v4057 = vand.u32 %v3438, 4294901760
    %4058 = vmatmul.f32.gmra.mxu0 %v4057
    %v4059 = vpop.f32.mrf.mxu0
    %v4060 = vadd.f32 %v3977, %v4059
    %v4061 = vand.u32 %v3441, 4294901760
    %4062 = vmatmul.f32.gmra.mxu0 %v4061
    %v4063 = vpop.f32.mrf.mxu0
    %v4064 = vadd.f32 %v3981, %v4063
    %v4065 = vand.u32 %v3444, 4294901760
    %4066 = vmatmul.f32.gmra.mxu0 %v4065
    %v4067 = vpop.f32.mrf.mxu0
    %v4068 = vadd.f32 %v3985, %v4067
    %4069 = vdwg.mxu0
    %4070 = vxpose.xlu0.b32.start [1/16] %v4008, 128
    %4071 = vxpose.xlu0.b32.cont [2/16] %v4012, 128
    %4072 = vxpose.xlu0.b32.cont [3/16] 0.0, 128
    %4073 = vxpose.xlu0.b32.cont [4/16] 0.0, 128
    %4074 = vxpose.xlu0.b32.cont [5/16] 0.0, 128
    %4075 = vxpose.xlu0.b32.cont [6/16] 0.0, 128
    %4076 = vxpose.xlu0.b32.cont [7/16] 0.0, 128
    %4077 = vxpose.xlu0.b32.cont [8/16] 0.0, 128
    %4078 = vxpose.xlu0.b32.cont [9/16] 0.0, 128
    %4079 = vxpose.xlu0.b32.cont [10/16] 0.0, 128
    %4080 = vxpose.xlu0.b32.cont [11/16] 0.0, 128
    %4081 = vxpose.xlu0.b32.cont [12/16] 0.0, 128
    %4082 = vxpose.xlu0.b32.cont [13/16] 0.0, 128
    %4083 = vxpose.xlu0.b32.cont [14/16] 0.0, 128
    %4084 = vxpose.xlu0.b32.cont [15/16] 0.0, 128
    %4085 = vxpose.xlu0.b32.end [16/16] 0.0, 128
    %v4086 = vpop.trf.xlu0
    %v4087 = vpop.trf.xlu0
    %v4088 = vpop.trf.xlu0
    %v4089 = vpop.trf.xlu0
    %v4090 = vpop.trf.xlu0
    %v4091 = vpop.trf.xlu0
    %v4092 = vpop.trf.xlu0
    %v4093 = vpop.trf.xlu0
    %v4094 = vpop.trf.xlu0
    %v4095 = vpop.trf.xlu0
    %v4096 = vpop.trf.xlu0
    %v4097 = vpop.trf.xlu0
    %v4098 = vpop.trf.xlu0
    %v4099 = vpop.trf.xlu0
    %v4100 = vpop.trf.xlu0
    %v4101 = vpop.trf.xlu0
    %4102 = vxpose.xlu0.b32.start [1/16] %v4016, 128
    %4103 = vxpose.xlu0.b32.cont [2/16] %v4020, 128
    %4104 = vxpose.xlu0.b32.cont [3/16] 0.0, 128
    %4105 = vxpose.xlu0.b32.cont [4/16] 0.0, 128
    %4106 = vxpose.xlu0.b32.cont [5/16] 0.0, 128
    %4107 = vxpose.xlu0.b32.cont [6/16] 0.0, 128
    %4108 = vxpose.xlu0.b32.cont [7/16] 0.0, 128
    %4109 = vxpose.xlu0.b32.cont [8/16] 0.0, 128
    %4110 = vxpose.xlu0.b32.cont [9/16] 0.0, 128
    %4111 = vxpose.xlu0.b32.cont [10/16] 0.0, 128
    %4112 = vxpose.xlu0.b32.cont [11/16] 0.0, 128
    %4113 = vxpose.xlu0.b32.cont [12/16] 0.0, 128
    %4114 = vxpose.xlu0.b32.cont [13/16] 0.0, 128
    %4115 = vxpose.xlu0.b32.cont [14/16] 0.0, 128
    %4116 = vxpose.xlu0.b32.cont [15/16] 0.0, 128
    %4117 = vxpose.xlu0.b32.end [16/16] 0.0, 128
    %v4118 = vpop.trf.xlu0
    %v4119 = vpop.trf.xlu0
    %v4120 = vpop.trf.xlu0
    %v4121 = vpop.trf.xlu0
    %v4122 = vpop.trf.xlu0
    %v4123 = vpop.trf.xlu0
    %v4124 = vpop.trf.xlu0
    %v4125 = vpop.trf.xlu0
    %v4126 = vpop.trf.xlu0
    %v4127 = vpop.trf.xlu0
    %v4128 = vpop.trf.xlu0
    %v4129 = vpop.trf.xlu0
    %v4130 = vpop.trf.xlu0
    %v4131 = vpop.trf.xlu0
    %v4132 = vpop.trf.xlu0
    %v4133 = vpop.trf.xlu0
    %4134 = vxpose.xlu0.b32.start [1/16] %v4024, 128
    %4135 = vxpose.xlu0.b32.cont [2/16] %v4028, 128
    %4136 = vxpose.xlu0.b32.cont [3/16] 0.0, 128
    %4137 = vxpose.xlu0.b32.cont [4/16] 0.0, 128
    %4138 = vxpose.xlu0.b32.cont [5/16] 0.0, 128
    %4139 = vxpose.xlu0.b32.cont [6/16] 0.0, 128
    %4140 = vxpose.xlu0.b32.cont [7/16] 0.0, 128
    %4141 = vxpose.xlu0.b32.cont [8/16] 0.0, 128
    %4142 = vxpose.xlu0.b32.cont [9/16] 0.0, 128
    %4143 = vxpose.xlu0.b32.cont [10/16] 0.0, 128
    %4144 = vxpose.xlu0.b32.cont [11/16] 0.0, 128
    %4145 = vxpose.xlu0.b32.cont [12/16] 0.0, 128
    %4146 = vxpose.xlu0.b32.cont [13/16] 0.0, 128
    %4147 = vxpose.xlu0.b32.cont [14/16] 0.0, 128
    %4148 = vxpose.xlu0.b32.cont [15/16] 0.0, 128
    %4149 = vxpose.xlu0.b32.end [16/16] 0.0, 128
    %v4150 = vpop.trf.xlu0
    %v4151 = vpop.trf.xlu0
    %v4152 = vpop.trf.xlu0
    %v4153 = vpop.trf.xlu0
    %v4154 = vpop.trf.xlu0
    %v4155 = vpop.trf.xlu0
    %v4156 = vpop.trf.xlu0
    %v4157 = vpop.trf.xlu0
    %v4158 = vpop.trf.xlu0
    %v4159 = vpop.trf.xlu0
    %v4160 = vpop.trf.xlu0
    %v4161 = vpop.trf.xlu0
    %v4162 = vpop.trf.xlu0
    %v4163 = vpop.trf.xlu0
    %v4164 = vpop.trf.xlu0
    %v4165 = vpop.trf.xlu0
    %4166 = vxpose.xlu0.b32.start [1/16] %v4032, 128
    %4167 = vxpose.xlu0.b32.cont [2/16] %v4036, 128
    %4168 = vxpose.xlu0.b32.cont [3/16] 0.0, 128
    %4169 = vxpose.xlu0.b32.cont [4/16] 0.0, 128
    %4170 = vxpose.xlu0.b32.cont [5/16] 0.0, 128
    %4171 = vxpose.xlu0.b32.cont [6/16] 0.0, 128
    %4172 = vxpose.xlu0.b32.cont [7/16] 0.0, 128
    %4173 = vxpose.xlu0.b32.cont [8/16] 0.0, 128
    %4174 = vxpose.xlu0.b32.cont [9/16] 0.0, 128
    %4175 = vxpose.xlu0.b32.cont [10/16] 0.0, 128
    %4176 = vxpose.xlu0.b32.cont [11/16] 0.0, 128
    %4177 = vxpose.xlu0.b32.cont [12/16] 0.0, 128
    %4178 = vxpose.xlu0.b32.cont [13/16] 0.0, 128
    %4179 = vxpose.xlu0.b32.cont [14/16] 0.0, 128
    %4180 = vxpose.xlu0.b32.cont [15/16] 0.0, 128
    %4181 = vxpose.xlu0.b32.end [16/16] 0.0, 128
    %v4182 = vpop.trf.xlu0
    %v4183 = vpop.trf.xlu0
    %v4184 = vpop.trf.xlu0
    %v4185 = vpop.trf.xlu0
    %v4186 = vpop.trf.xlu0
    %v4187 = vpop.trf.xlu0
    %v4188 = vpop.trf.xlu0
    %v4189 = vpop.trf.xlu0
    %v4190 = vpop.trf.xlu0
    %v4191 = vpop.trf.xlu0
    %v4192 = vpop.trf.xlu0
    %v4193 = vpop.trf.xlu0
    %v4194 = vpop.trf.xlu0
    %v4195 = vpop.trf.xlu0
    %v4196 = vpop.trf.xlu0
    %v4197 = vpop.trf.xlu0
    %4198 = vxpose.xlu0.b32.start [1/16] %v4040, 128
    %4199 = vxpose.xlu0.b32.cont [2/16] %v4044, 128
    %4200 = vxpose.xlu0.b32.cont [3/16] 0.0, 128
    %4201 = vxpose.xlu0.b32.cont [4/16] 0.0, 128
    %4202 = vxpose.xlu0.b32.cont [5/16] 0.0, 128
    %4203 = vxpose.xlu0.b32.cont [6/16] 0.0, 128
    %4204 = vxpose.xlu0.b32.cont [7/16] 0.0, 128
    %4205 = vxpose.xlu0.b32.cont [8/16] 0.0, 128
    %4206 = vxpose.xlu0.b32.cont [9/16] 0.0, 128
    %4207 = vxpose.xlu0.b32.cont [10/16] 0.0, 128
    %4208 = vxpose.xlu0.b32.cont [11/16] 0.0, 128
    %4209 = vxpose.xlu0.b32.cont [12/16] 0.0, 128
    %4210 = vxpose.xlu0.b32.cont [13/16] 0.0, 128
    %4211 = vxpose.xlu0.b32.cont [14/16] 0.0, 128
    %4212 = vxpose.xlu0.b32.cont [15/16] 0.0, 128
    %4213 = vxpose.xlu0.b32.end [16/16] 0.0, 128
    %v4214 = vpop.trf.xlu0
    %v4215 = vpop.trf.xlu0
    %v4216 = vpop.trf.xlu0
    %v4217 = vpop.trf.xlu0
    %v4218 = vpop.trf.xlu0
    %v4219 = vpop.trf.xlu0
    %v4220 = vpop.trf.xlu0
    %v4221 = vpop.trf.xlu0
    %v4222 = vpop.trf.xlu0
    %v4223 = vpop.trf.xlu0
    %v4224 = vpop.trf.xlu0
    %v4225 = vpop.trf.xlu0
    %v4226 = vpop.trf.xlu0
    %v4227 = vpop.trf.xlu0
    %v4228 = vpop.trf.xlu0
    %v4229 = vpop.trf.xlu0
    %4230 = vxpose.xlu0.b32.start [1/16] %v4048, 128
    %4231 = vxpose.xlu0.b32.cont [2/16] %v4052, 128
    %4232 = vxpose.xlu0.b32.cont [3/16] 0.0, 128
    %4233 = vxpose.xlu0.b32.cont [4/16] 0.0, 128
    %4234 = vxpose.xlu0.b32.cont [5/16] 0.0, 128
    %4235 = vxpose.xlu0.b32.cont [6/16] 0.0, 128
    %4236 = vxpose.xlu0.b32.cont [7/16] 0.0, 128
    %4237 = vxpose.xlu0.b32.cont [8/16] 0.0, 128
    %4238 = vxpose.xlu0.b32.cont [9/16] 0.0, 128
    %4239 = vxpose.xlu0.b32.cont [10/16] 0.0, 128
    %4240 = vxpose.xlu0.b32.cont [11/16] 0.0, 128
    %4241 = vxpose.xlu0.b32.cont [12/16] 0.0, 128
    %4242 = vxpose.xlu0.b32.cont [13/16] 0.0, 128
    %4243 = vxpose.xlu0.b32.cont [14/16] 0.0, 128
    %4244 = vxpose.xlu0.b32.cont [15/16] 0.0, 128
    %4245 = vxpose.xlu0.b32.end [16/16] 0.0, 128
    %v4246 = vpop.trf.xlu0
    %v4247 = vpop.trf.xlu0
    %v4248 = vpop.trf.xlu0
    %v4249 = vpop.trf.xlu0
    %v4250 = vpop.trf.xlu0
    %v4251 = vpop.trf.xlu0
    %v4252 = vpop.trf.xlu0
    %v4253 = vpop.trf.xlu0
    %v4254 = vpop.trf.xlu0
    %v4255 = vpop.trf.xlu0
    %v4256 = vpop.trf.xlu0
    %v4257 = vpop.trf.xlu0
    %v4258 = vpop.trf.xlu0
    %v4259 = vpop.trf.xlu0
    %v4260 = vpop.trf.xlu0
    %v4261 = vpop.trf.xlu0
    %4262 = vxpose.xlu0.b32.start [1/16] %v4056, 128
    %4263 = vxpose.xlu0.b32.cont [2/16] %v4060, 128
    %4264 = vxpose.xlu0.b32.cont [3/16] 0.0, 128
    %4265 = vxpose.xlu0.b32.cont [4/16] 0.0, 128
    %4266 = vxpose.xlu0.b32.cont [5/16] 0.0, 128
    %4267 = vxpose.xlu0.b32.cont [6/16] 0.0, 128
    %4268 = vxpose.xlu0.b32.cont [7/16] 0.0, 128
    %4269 = vxpose.xlu0.b32.cont [8/16] 0.0, 128
    %4270 = vxpose.xlu0.b32.cont [9/16] 0.0, 128
    %4271 = vxpose.xlu0.b32.cont [10/16] 0.0, 128
    %4272 = vxpose.xlu0.b32.cont [11/16] 0.0, 128
    %4273 = vxpose.xlu0.b32.cont [12/16] 0.0, 128
    %4274 = vxpose.xlu0.b32.cont [13/16] 0.0, 128
    %4275 = vxpose.xlu0.b32.cont [14/16] 0.0, 128
    %4276 = vxpose.xlu0.b32.cont [15/16] 0.0, 128
    %4277 = vxpose.xlu0.b32.end [16/16] 0.0, 128
    %v4278 = vpop.trf.xlu0
    %v4279 = vpop.trf.xlu0
    %v4280 = vpop.trf.xlu0
    %v4281 = vpop.trf.xlu0
    %v4282 = vpop.trf.xlu0
    %v4283 = vpop.trf.xlu0
    %v4284 = vpop.trf.xlu0
    %v4285 = vpop.trf.xlu0
    %v4286 = vpop.trf.xlu0
    %v4287 = vpop.trf.xlu0
    %v4288 = vpop.trf.xlu0
    %v4289 = vpop.trf.xlu0
    %v4290 = vpop.trf.xlu0
    %v4291 = vpop.trf.xlu0
    %v4292 = vpop.trf.xlu0
    %v4293 = vpop.trf.xlu0
    %4294 = vxpose.xlu0.b32.start [1/16] %v4064, 128
    %4295 = vxpose.xlu0.b32.cont [2/16] %v4068, 128
    %4296 = vxpose.xlu0.b32.cont [3/16] 0.0, 128
    %4297 = vxpose.xlu0.b32.cont [4/16] 0.0, 128
    %4298 = vxpose.xlu0.b32.cont [5/16] 0.0, 128
    %4299 = vxpose.xlu0.b32.cont [6/16] 0.0, 128
    %4300 = vxpose.xlu0.b32.cont [7/16] 0.0, 128
    %4301 = vxpose.xlu0.b32.cont [8/16] 0.0, 128
    %4302 = vxpose.xlu0.b32.cont [9/16] 0.0, 128
    %4303 = vxpose.xlu0.b32.cont [10/16] 0.0, 128
    %4304 = vxpose.xlu0.b32.cont [11/16] 0.0, 128
    %4305 = vxpose.xlu0.b32.cont [12/16] 0.0, 128
    %4306 = vxpose.xlu0.b32.cont [13/16] 0.0, 128
    %4307 = vxpose.xlu0.b32.cont [14/16] 0.0, 128
    %4308 = vxpose.xlu0.b32.cont [15/16] 0.0, 128
    %4309 = vxpose.xlu0.b32.end [16/16] 0.0, 128
    %v4310 = vpop.trf.xlu0
    %v4311 = vpop.trf.xlu0
    %v4312 = vpop.trf.xlu0
    %v4313 = vpop.trf.xlu0
    %v4314 = vpop.trf.xlu0
    %v4315 = vpop.trf.xlu0
    %v4316 = vpop.trf.xlu0
    %v4317 = vpop.trf.xlu0
    %v4318 = vpop.trf.xlu0
    %v4319 = vpop.trf.xlu0
    %v4320 = vpop.trf.xlu0
    %v4321 = vpop.trf.xlu0
    %v4322 = vpop.trf.xlu0
    %v4323 = vpop.trf.xlu0
    %v4324 = vpop.trf.xlu0
    %v4325 = vpop.trf.xlu0
    %v4327 = vsel %vm181, %v4086, 0
    %v4330 = vsel %vm181, %v4087, 0
    %v4333 = vsel %vm181, %v4118, 0
    %v4336 = vsel %vm181, %v4119, 0
    %v4339 = vsel %vm181, %v4150, 0
    %v4342 = vsel %vm181, %v4151, 0
    %v4345 = vsel %vm181, %v4182, 0
    %v4348 = vsel %vm181, %v4183, 0
    %v4351 = vsel %vm181, %v4214, 0
    %v4354 = vsel %vm181, %v4215, 0
    %v4357 = vsel %vm181, %v4246, 0
    %v4360 = vsel %vm181, %v4247, 0
    %v4363 = vsel %vm181, %v4278, 0
    %v4366 = vsel %vm181, %v4279, 0
    %v4369 = vsel %vm181, %v4310, 0
    %v4372 = vsel %vm181, %v4311, 0
    %4374 = vmatpush.msra.mxu0 0.0
    %4375 = vmatpush.msra.mxu0 0.0
    %4376 = vmatpush.msra.mxu0 0.0
    %4377 = vmatpush.msra.mxu0 0.0
    %4378 = vmatpush.msra.mxu0 0.0
    %4379 = vmatpush.msra.mxu0 0.0
    %4380 = vmatpush.msra.mxu0 0.0
    %4381 = vmatpush.msra.mxu0 0.0
    %4382 = vmatpush.msra.mxu0 0.0
    %4383 = vmatpush.msra.mxu0 0.0
    %4384 = vmatpush.msra.mxu0 0.0
    %4385 = vmatpush.msra.mxu0 0.0
    %4386 = vmatpush.msra.mxu0 0.0
    %4387 = vmatpush.msra.mxu0 0.0
    %v4388 = vand.u32 %v82, 4294901760
    %4389 = vmatpush.msra.mxu0 %v4388
    %v4390 = vand.u32 %v81, 4294901760
    %4391 = vmatpush.msra.mxu0 %v4390
    %v4392 = vand.u32 %v4327, 4294901760
    %v4393 = vsub.f32 %v4327, %v4392
    %v4394 = vand.u32 %v4393, 4294901760
    %v4395 = vsub.f32 %v4393, %v4394
    %v4396 = vand.u32 %v4395, 4294901760
    %4397 = vmatmul.f32.gmra.mxu0 %v4396
    %v4398 = vpop.f32.mrf.mxu0
    %v4399 = vadd.f32 0.0, %v4398
    %v4400 = vand.u32 %v4330, 4294901760
    %v4401 = vsub.f32 %v4330, %v4400
    %v4402 = vand.u32 %v4401, 4294901760
    %v4403 = vsub.f32 %v4401, %v4402
    %v4404 = vand.u32 %v4403, 4294901760
    %4405 = vmatmul.f32.gmra.mxu0 %v4404
    %v4406 = vpop.f32.mrf.mxu0
    %v4407 = vadd.f32 0.0, %v4406
    %v4408 = vand.u32 %v4333, 4294901760
    %v4409 = vsub.f32 %v4333, %v4408
    %v4410 = vand.u32 %v4409, 4294901760
    %v4411 = vsub.f32 %v4409, %v4410
    %v4412 = vand.u32 %v4411, 4294901760
    %4413 = vmatmul.f32.gmra.mxu0 %v4412
    %v4414 = vpop.f32.mrf.mxu0
    %v4415 = vadd.f32 0.0, %v4414
    %v4416 = vand.u32 %v4336, 4294901760
    %v4417 = vsub.f32 %v4336, %v4416
    %v4418 = vand.u32 %v4417, 4294901760
    %v4419 = vsub.f32 %v4417, %v4418
    %v4420 = vand.u32 %v4419, 4294901760
    %4421 = vmatmul.f32.gmra.mxu0 %v4420
    %v4422 = vpop.f32.mrf.mxu0
    %v4423 = vadd.f32 0.0, %v4422
    %v4424 = vand.u32 %v4339, 4294901760
    %v4425 = vsub.f32 %v4339, %v4424
    %v4426 = vand.u32 %v4425, 4294901760
    %v4427 = vsub.f32 %v4425, %v4426
    %v4428 = vand.u32 %v4427, 4294901760
    %4429 = vmatmul.f32.gmra.mxu0 %v4428
    %v4430 = vpop.f32.mrf.mxu0
    %v4431 = vadd.f32 0.0, %v4430
    %v4432 = vand.u32 %v4342, 4294901760
    %v4433 = vsub.f32 %v4342, %v4432
    %v4434 = vand.u32 %v4433, 4294901760
    %v4435 = vsub.f32 %v4433, %v4434
    %v4436 = vand.u32 %v4435, 4294901760
    %4437 = vmatmul.f32.gmra.mxu0 %v4436
    %v4438 = vpop.f32.mrf.mxu0
    %v4439 = vadd.f32 0.0, %v4438
    %v4440 = vand.u32 %v4345, 4294901760
    %v4441 = vsub.f32 %v4345, %v4440
    %v4442 = vand.u32 %v4441, 4294901760
    %v4443 = vsub.f32 %v4441, %v4442
    %v4444 = vand.u32 %v4443, 4294901760
    %4445 = vmatmul.f32.gmra.mxu0 %v4444
    %v4446 = vpop.f32.mrf.mxu0
    %v4447 = vadd.f32 0.0, %v4446
    %v4448 = vand.u32 %v4348, 4294901760
    %v4449 = vsub.f32 %v4348, %v4448
    %v4450 = vand.u32 %v4449, 4294901760
    %v4451 = vsub.f32 %v4449, %v4450
    %v4452 = vand.u32 %v4451, 4294901760
    %4453 = vmatmul.f32.gmra.mxu0 %v4452
    %v4454 = vpop.f32.mrf.mxu0
    %v4455 = vadd.f32 0.0, %v4454
    %v4456 = vand.u32 %v4351, 4294901760
    %v4457 = vsub.f32 %v4351, %v4456
    %v4458 = vand.u32 %v4457, 4294901760
    %v4459 = vsub.f32 %v4457, %v4458
    %v4460 = vand.u32 %v4459, 4294901760
    %4461 = vmatmul.f32.gmra.mxu0 %v4460
    %v4462 = vpop.f32.mrf.mxu0
    %v4463 = vadd.f32 0.0, %v4462
    %v4464 = vand.u32 %v4354, 4294901760
    %v4465 = vsub.f32 %v4354, %v4464
    %v4466 = vand.u32 %v4465, 4294901760
    %v4467 = vsub.f32 %v4465, %v4466
    %v4468 = vand.u32 %v4467, 4294901760
    %4469 = vmatmul.f32.gmra.mxu0 %v4468
    %v4470 = vpop.f32.mrf.mxu0
    %v4471 = vadd.f32 0.0, %v4470
    %v4472 = vand.u32 %v4357, 4294901760
    %v4473 = vsub.f32 %v4357, %v4472
    %v4474 = vand.u32 %v4473, 4294901760
    %v4475 = vsub.f32 %v4473, %v4474
    %v4476 = vand.u32 %v4475, 4294901760
    %4477 = vmatmul.f32.gmra.mxu0 %v4476
    %v4478 = vpop.f32.mrf.mxu0
    %v4479 = vadd.f32 0.0, %v4478
    %v4480 = vand.u32 %v4360, 4294901760
    %v4481 = vsub.f32 %v4360, %v4480
    %v4482 = vand.u32 %v4481, 4294901760
    %v4483 = vsub.f32 %v4481, %v4482
    %v4484 = vand.u32 %v4483, 4294901760
    %4485 = vmatmul.f32.gmra.mxu0 %v4484
    %v4486 = vpop.f32.mrf.mxu0
    %v4487 = vadd.f32 0.0, %v4486
    %v4488 = vand.u32 %v4363, 4294901760
    %v4489 = vsub.f32 %v4363, %v4488
    %v4490 = vand.u32 %v4489, 4294901760
    %v4491 = vsub.f32 %v4489, %v4490
    %v4492 = vand.u32 %v4491, 4294901760
    %4493 = vmatmul.f32.gmra.mxu0 %v4492
    %v4494 = vpop.f32.mrf.mxu0
    %v4495 = vadd.f32 0.0, %v4494
    %v4496 = vand.u32 %v4366, 4294901760
    %v4497 = vsub.f32 %v4366, %v4496
    %v4498 = vand.u32 %v4497, 4294901760
    %v4499 = vsub.f32 %v4497, %v4498
    %v4500 = vand.u32 %v4499, 4294901760
    %4501 = vmatmul.f32.gmra.mxu0 %v4500
    %v4502 = vpop.f32.mrf.mxu0
    %v4503 = vadd.f32 0.0, %v4502
    %v4504 = vand.u32 %v4369, 4294901760
    %v4505 = vsub.f32 %v4369, %v4504
    %v4506 = vand.u32 %v4505, 4294901760
    %v4507 = vsub.f32 %v4505, %v4506
    %v4508 = vand.u32 %v4507, 4294901760
    %4509 = vmatmul.f32.gmra.mxu0 %v4508
    %v4510 = vpop.f32.mrf.mxu0
    %v4511 = vadd.f32 0.0, %v4510
    %v4512 = vand.u32 %v4372, 4294901760
    %v4513 = vsub.f32 %v4372, %v4512
    %v4514 = vand.u32 %v4513, 4294901760
    %v4515 = vsub.f32 %v4513, %v4514
    %v4516 = vand.u32 %v4515, 4294901760
    %4517 = vmatmul.f32.gmra.mxu0 %v4516
    %v4518 = vpop.f32.mrf.mxu0
    %v4519 = vadd.f32 0.0, %v4518
    %4520 = vdwg.mxu0
    %4521 = vmatpush.msra.mxu0 0.0
    %4522 = vmatpush.msra.mxu0 0.0
    %4523 = vmatpush.msra.mxu0 0.0
    %4524 = vmatpush.msra.mxu0 0.0
    %4525 = vmatpush.msra.mxu0 0.0
    %4526 = vmatpush.msra.mxu0 0.0
    %4527 = vmatpush.msra.mxu0 0.0
    %4528 = vmatpush.msra.mxu0 0.0
    %4529 = vmatpush.msra.mxu0 0.0
    %4530 = vmatpush.msra.mxu0 0.0
    %4531 = vmatpush.msra.mxu0 0.0
    %4532 = vmatpush.msra.mxu0 0.0
    %4533 = vmatpush.msra.mxu0 0.0
    %4534 = vmatpush.msra.mxu0 0.0
    %v4535 = vand.u32 %v82, 4294901760
    %v4536 = vsub.f32 %v82, %v4535
    %v4537 = vand.u32 %v4536, 4294901760
    %v4538 = vsub.f32 %v4536, %v4537
    %v4539 = vand.u32 %v4538, 4294901760
    %4540 = vmatpush.msra.mxu0 %v4539
    %v4541 = vand.u32 %v81, 4294901760
    %v4542 = vsub.f32 %v81, %v4541
    %v4543 = vand.u32 %v4542, 4294901760
    %v4544 = vsub.f32 %v4542, %v4543
    %v4545 = vand.u32 %v4544, 4294901760
    %4546 = vmatpush.msra.mxu0 %v4545
    %v4547 = vand.u32 %v4327, 4294901760
    %4548 = vmatmul.f32.gmra.mxu0 %v4547
    %v4549 = vpop.f32.mrf.mxu0
    %v4550 = vadd.f32 %v4399, %v4549
    %v4551 = vand.u32 %v4330, 4294901760
    %4552 = vmatmul.f32.gmra.mxu0 %v4551
    %v4553 = vpop.f32.mrf.mxu0
    %v4554 = vadd.f32 %v4407, %v4553
    %v4555 = vand.u32 %v4333, 4294901760
    %4556 = vmatmul.f32.gmra.mxu0 %v4555
    %v4557 = vpop.f32.mrf.mxu0
    %v4558 = vadd.f32 %v4415, %v4557
    %v4559 = vand.u32 %v4336, 4294901760
    %4560 = vmatmul.f32.gmra.mxu0 %v4559
    %v4561 = vpop.f32.mrf.mxu0
    %v4562 = vadd.f32 %v4423, %v4561
    %v4563 = vand.u32 %v4339, 4294901760
    %4564 = vmatmul.f32.gmra.mxu0 %v4563
    %v4565 = vpop.f32.mrf.mxu0
    %v4566 = vadd.f32 %v4431, %v4565
    %v4567 = vand.u32 %v4342, 4294901760
    %4568 = vmatmul.f32.gmra.mxu0 %v4567
    %v4569 = vpop.f32.mrf.mxu0
    %v4570 = vadd.f32 %v4439, %v4569
    %v4571 = vand.u32 %v4345, 4294901760
    %4572 = vmatmul.f32.gmra.mxu0 %v4571
    %v4573 = vpop.f32.mrf.mxu0
    %v4574 = vadd.f32 %v4447, %v4573
    %v4575 = vand.u32 %v4348, 4294901760
    %4576 = vmatmul.f32.gmra.mxu0 %v4575
    %v4577 = vpop.f32.mrf.mxu0
    %v4578 = vadd.f32 %v4455, %v4577
    %v4579 = vand.u32 %v4351, 4294901760
    %4580 = vmatmul.f32.gmra.mxu0 %v4579
    %v4581 = vpop.f32.mrf.mxu0
    %v4582 = vadd.f32 %v4463, %v4581
    %v4583 = vand.u32 %v4354, 4294901760
    %4584 = vmatmul.f32.gmra.mxu0 %v4583
    %v4585 = vpop.f32.mrf.mxu0
    %v4586 = vadd.f32 %v4471, %v4585
    %v4587 = vand.u32 %v4357, 4294901760
    %4588 = vmatmul.f32.gmra.mxu0 %v4587
    %v4589 = vpop.f32.mrf.mxu0
    %v4590 = vadd.f32 %v4479, %v4589
    %v4591 = vand.u32 %v4360, 4294901760
    %4592 = vmatmul.f32.gmra.mxu0 %v4591
    %v4593 = vpop.f32.mrf.mxu0
    %v4594 = vadd.f32 %v4487, %v4593
    %v4595 = vand.u32 %v4363, 4294901760
    %4596 = vmatmul.f32.gmra.mxu0 %v4595
    %v4597 = vpop.f32.mrf.mxu0
    %v4598 = vadd.f32 %v4495, %v4597
    %v4599 = vand.u32 %v4366, 4294901760
    %4600 = vmatmul.f32.gmra.mxu0 %v4599
    %v4601 = vpop.f32.mrf.mxu0
    %v4602 = vadd.f32 %v4503, %v4601
    %v4603 = vand.u32 %v4369, 4294901760
    %4604 = vmatmul.f32.gmra.mxu0 %v4603
    %v4605 = vpop.f32.mrf.mxu0
    %v4606 = vadd.f32 %v4511, %v4605
    %v4607 = vand.u32 %v4372, 4294901760
    %4608 = vmatmul.f32.gmra.mxu0 %v4607
    %v4609 = vpop.f32.mrf.mxu0
    %v4610 = vadd.f32 %v4519, %v4609
    %4611 = vdwg.mxu0
    %4612 = vmatpush.msra.mxu0 0.0
    %4613 = vmatpush.msra.mxu0 0.0
    %4614 = vmatpush.msra.mxu0 0.0
    %4615 = vmatpush.msra.mxu0 0.0
    %4616 = vmatpush.msra.mxu0 0.0
    %4617 = vmatpush.msra.mxu0 0.0
    %4618 = vmatpush.msra.mxu0 0.0
    %4619 = vmatpush.msra.mxu0 0.0
    %4620 = vmatpush.msra.mxu0 0.0
    %4621 = vmatpush.msra.mxu0 0.0
    %4622 = vmatpush.msra.mxu0 0.0
    %4623 = vmatpush.msra.mxu0 0.0
    %4624 = vmatpush.msra.mxu0 0.0
    %4625 = vmatpush.msra.mxu0 0.0
    %v4626 = vand.u32 %v82, 4294901760
    %v4627 = vsub.f32 %v82, %v4626
    %4628 = vmatpush.msra.mxu0 %v4627
    %v4629 = vand.u32 %v81, 4294901760
    %v4630 = vsub.f32 %v81, %v4629
    %4631 = vmatpush.msra.mxu0 %v4630
    %v4632 = vand.u32 %v4327, 4294901760
    %v4633 = vsub.f32 %v4327, %v4632
    %4634 = vmatmul.f32.gmra.mxu0 %v4633
    %v4635 = vpop.f32.mrf.mxu0
    %v4636 = vadd.f32 %v4550, %v4635
    %v4637 = vand.u32 %v4330, 4294901760
    %v4638 = vsub.f32 %v4330, %v4637
    %4639 = vmatmul.f32.gmra.mxu0 %v4638
    %v4640 = vpop.f32.mrf.mxu0
    %v4641 = vadd.f32 %v4554, %v4640
    %v4642 = vand.u32 %v4333, 4294901760
    %v4643 = vsub.f32 %v4333, %v4642
    %4644 = vmatmul.f32.gmra.mxu0 %v4643
    %v4645 = vpop.f32.mrf.mxu0
    %v4646 = vadd.f32 %v4558, %v4645
    %v4647 = vand.u32 %v4336, 4294901760
    %v4648 = vsub.f32 %v4336, %v4647
    %4649 = vmatmul.f32.gmra.mxu0 %v4648
    %v4650 = vpop.f32.mrf.mxu0
    %v4651 = vadd.f32 %v4562, %v4650
    %v4652 = vand.u32 %v4339, 4294901760
    %v4653 = vsub.f32 %v4339, %v4652
    %4654 = vmatmul.f32.gmra.mxu0 %v4653
    %v4655 = vpop.f32.mrf.mxu0
    %v4656 = vadd.f32 %v4566, %v4655
    %v4657 = vand.u32 %v4342, 4294901760
    %v4658 = vsub.f32 %v4342, %v4657
    %4659 = vmatmul.f32.gmra.mxu0 %v4658
    %v4660 = vpop.f32.mrf.mxu0
    %v4661 = vadd.f32 %v4570, %v4660
    %v4662 = vand.u32 %v4345, 4294901760
    %v4663 = vsub.f32 %v4345, %v4662
    %4664 = vmatmul.f32.gmra.mxu0 %v4663
    %v4665 = vpop.f32.mrf.mxu0
    %v4666 = vadd.f32 %v4574, %v4665
    %v4667 = vand.u32 %v4348, 4294901760
    %v4668 = vsub.f32 %v4348, %v4667
    %4669 = vmatmul.f32.gmra.mxu0 %v4668
    %v4670 = vpop.f32.mrf.mxu0
    %v4671 = vadd.f32 %v4578, %v4670
    %v4672 = vand.u32 %v4351, 4294901760
    %v4673 = vsub.f32 %v4351, %v4672
    %4674 = vmatmul.f32.gmra.mxu0 %v4673
    %v4675 = vpop.f32.mrf.mxu0
    %v4676 = vadd.f32 %v4582, %v4675
    %v4677 = vand.u32 %v4354, 4294901760
    %v4678 = vsub.f32 %v4354, %v4677
    %4679 = vmatmul.f32.gmra.mxu0 %v4678
    %v4680 = vpop.f32.mrf.mxu0
    %v4681 = vadd.f32 %v4586, %v4680
    %v4682 = vand.u32 %v4357, 4294901760
    %v4683 = vsub.f32 %v4357, %v4682
    %4684 = vmatmul.f32.gmra.mxu0 %v4683
    %v4685 = vpop.f32.mrf.mxu0
    %v4686 = vadd.f32 %v4590, %v4685
    %v4687 = vand.u32 %v4360, 4294901760
    %v4688 = vsub.f32 %v4360, %v4687
    %4689 = vmatmul.f32.gmra.mxu0 %v4688
    %v4690 = vpop.f32.mrf.mxu0
    %v4691 = vadd.f32 %v4594, %v4690
    %v4692 = vand.u32 %v4363, 4294901760
    %v4693 = vsub.f32 %v4363, %v4692
    %4694 = vmatmul.f32.gmra.mxu0 %v4693
    %v4695 = vpop.f32.mrf.mxu0
    %v4696 = vadd.f32 %v4598, %v4695
    %v4697 = vand.u32 %v4366, 4294901760
    %v4698 = vsub.f32 %v4366, %v4697
    %4699 = vmatmul.f32.gmra.mxu0 %v4698
    %v4700 = vpop.f32.mrf.mxu0
    %v4701 = vadd.f32 %v4602, %v4700
    %v4702 = vand.u32 %v4369, 4294901760
    %v4703 = vsub.f32 %v4369, %v4702
    %4704 = vmatmul.f32.gmra.mxu0 %v4703
    %v4705 = vpop.f32.mrf.mxu0
    %v4706 = vadd.f32 %v4606, %v4705
    %v4707 = vand.u32 %v4372, 4294901760
    %v4708 = vsub.f32 %v4372, %v4707
    %4709 = vmatmul.f32.gmra.mxu0 %v4708
    %v4710 = vpop.f32.mrf.mxu0
    %v4711 = vadd.f32 %v4610, %v4710
    %4712 = vdwg.mxu0
    %4713 = vmatpush.msra.mxu0 0.0
    %4714 = vmatpush.msra.mxu0 0.0
    %4715 = vmatpush.msra.mxu0 0.0
    %4716 = vmatpush.msra.mxu0 0.0
    %4717 = vmatpush.msra.mxu0 0.0
    %4718 = vmatpush.msra.mxu0 0.0
    %4719 = vmatpush.msra.mxu0 0.0
    %4720 = vmatpush.msra.mxu0 0.0
    %4721 = vmatpush.msra.mxu0 0.0
    %4722 = vmatpush.msra.mxu0 0.0
    %4723 = vmatpush.msra.mxu0 0.0
    %4724 = vmatpush.msra.mxu0 0.0
    %4725 = vmatpush.msra.mxu0 0.0
    %4726 = vmatpush.msra.mxu0 0.0
    %v4727 = vand.u32 %v82, 4294901760
    %4728 = vmatpush.msra.mxu0 %v4727
    %v4729 = vand.u32 %v81, 4294901760
    %4730 = vmatpush.msra.mxu0 %v4729
    %v4731 = vand.u32 %v4327, 4294901760
    %v4732 = vsub.f32 %v4327, %v4731
    %v4733 = vand.u32 %v4732, 4294901760
    %4734 = vmatmul.f32.gmra.mxu0 %v4733
    %v4735 = vpop.f32.mrf.mxu0
    %v4736 = vadd.f32 %v4636, %v4735
    %v4737 = vand.u32 %v4330, 4294901760
    %v4738 = vsub.f32 %v4330, %v4737
    %v4739 = vand.u32 %v4738, 4294901760
    %4740 = vmatmul.f32.gmra.mxu0 %v4739
    %v4741 = vpop.f32.mrf.mxu0
    %v4742 = vadd.f32 %v4641, %v4741
    %v4743 = vand.u32 %v4333, 4294901760
    %v4744 = vsub.f32 %v4333, %v4743
    %v4745 = vand.u32 %v4744, 4294901760
    %4746 = vmatmul.f32.gmra.mxu0 %v4745
    %v4747 = vpop.f32.mrf.mxu0
    %v4748 = vadd.f32 %v4646, %v4747
    %v4749 = vand.u32 %v4336, 4294901760
    %v4750 = vsub.f32 %v4336, %v4749
    %v4751 = vand.u32 %v4750, 4294901760
    %4752 = vmatmul.f32.gmra.mxu0 %v4751
    %v4753 = vpop.f32.mrf.mxu0
    %v4754 = vadd.f32 %v4651, %v4753
    %v4755 = vand.u32 %v4339, 4294901760
    %v4756 = vsub.f32 %v4339, %v4755
    %v4757 = vand.u32 %v4756, 4294901760
    %4758 = vmatmul.f32.gmra.mxu0 %v4757
    %v4759 = vpop.f32.mrf.mxu0
    %v4760 = vadd.f32 %v4656, %v4759
    %v4761 = vand.u32 %v4342, 4294901760
    %v4762 = vsub.f32 %v4342, %v4761
    %v4763 = vand.u32 %v4762, 4294901760
    %4764 = vmatmul.f32.gmra.mxu0 %v4763
    %v4765 = vpop.f32.mrf.mxu0
    %v4766 = vadd.f32 %v4661, %v4765
    %v4767 = vand.u32 %v4345, 4294901760
    %v4768 = vsub.f32 %v4345, %v4767
    %v4769 = vand.u32 %v4768, 4294901760
    %4770 = vmatmul.f32.gmra.mxu0 %v4769
    %v4771 = vpop.f32.mrf.mxu0
    %v4772 = vadd.f32 %v4666, %v4771
    %v4773 = vand.u32 %v4348, 4294901760
    %v4774 = vsub.f32 %v4348, %v4773
    %v4775 = vand.u32 %v4774, 4294901760
    %4776 = vmatmul.f32.gmra.mxu0 %v4775
    %v4777 = vpop.f32.mrf.mxu0
    %v4778 = vadd.f32 %v4671, %v4777
    %v4779 = vand.u32 %v4351, 4294901760
    %v4780 = vsub.f32 %v4351, %v4779
    %v4781 = vand.u32 %v4780, 4294901760
    %4782 = vmatmul.f32.gmra.mxu0 %v4781
    %v4783 = vpop.f32.mrf.mxu0
    %v4784 = vadd.f32 %v4676, %v4783
    %v4785 = vand.u32 %v4354, 4294901760
    %v4786 = vsub.f32 %v4354, %v4785
    %v4787 = vand.u32 %v4786, 4294901760
    %4788 = vmatmul.f32.gmra.mxu0 %v4787
    %v4789 = vpop.f32.mrf.mxu0
    %v4790 = vadd.f32 %v4681, %v4789
    %v4791 = vand.u32 %v4357, 4294901760
    %v4792 = vsub.f32 %v4357, %v4791
    %v4793 = vand.u32 %v4792, 4294901760
    %4794 = vmatmul.f32.gmra.mxu0 %v4793
    %v4795 = vpop.f32.mrf.mxu0
    %v4796 = vadd.f32 %v4686, %v4795
    %v4797 = vand.u32 %v4360, 4294901760
    %v4798 = vsub.f32 %v4360, %v4797
    %v4799 = vand.u32 %v4798, 4294901760
    %4800 = vmatmul.f32.gmra.mxu0 %v4799
    %v4801 = vpop.f32.mrf.mxu0
    %v4802 = vadd.f32 %v4691, %v4801
    %v4803 = vand.u32 %v4363, 4294901760
    %v4804 = vsub.f32 %v4363, %v4803
    %v4805 = vand.u32 %v4804, 4294901760
    %4806 = vmatmul.f32.gmra.mxu0 %v4805
    %v4807 = vpop.f32.mrf.mxu0
    %v4808 = vadd.f32 %v4696, %v4807
    %v4809 = vand.u32 %v4366, 4294901760
    %v4810 = vsub.f32 %v4366, %v4809
    %v4811 = vand.u32 %v4810, 4294901760
    %4812 = vmatmul.f32.gmra.mxu0 %v4811
    %v4813 = vpop.f32.mrf.mxu0
    %v4814 = vadd.f32 %v4701, %v4813
    %v4815 = vand.u32 %v4369, 4294901760
    %v4816 = vsub.f32 %v4369, %v4815
    %v4817 = vand.u32 %v4816, 4294901760
    %4818 = vmatmul.f32.gmra.mxu0 %v4817
    %v4819 = vpop.f32.mrf.mxu0
    %v4820 = vadd.f32 %v4706, %v4819
    %v4821 = vand.u32 %v4372, 4294901760
    %v4822 = vsub.f32 %v4372, %v4821
    %v4823 = vand.u32 %v4822, 4294901760
    %4824 = vmatmul.f32.gmra.mxu0 %v4823
    %v4825 = vpop.f32.mrf.mxu0
    %v4826 = vadd.f32 %v4711, %v4825
    %4827 = vdwg.mxu0
    %4828 = vmatpush.msra.mxu0 0.0
    %4829 = vmatpush.msra.mxu0 0.0
    %4830 = vmatpush.msra.mxu0 0.0
    %4831 = vmatpush.msra.mxu0 0.0
    %4832 = vmatpush.msra.mxu0 0.0
    %4833 = vmatpush.msra.mxu0 0.0
    %4834 = vmatpush.msra.mxu0 0.0
    %4835 = vmatpush.msra.mxu0 0.0
    %4836 = vmatpush.msra.mxu0 0.0
    %4837 = vmatpush.msra.mxu0 0.0
    %4838 = vmatpush.msra.mxu0 0.0
    %4839 = vmatpush.msra.mxu0 0.0
    %4840 = vmatpush.msra.mxu0 0.0
    %4841 = vmatpush.msra.mxu0 0.0
    %v4842 = vand.u32 %v82, 4294901760
    %v4843 = vsub.f32 %v82, %v4842
    %v4844 = vand.u32 %v4843, 4294901760
    %4845 = vmatpush.msra.mxu0 %v4844
    %v4846 = vand.u32 %v81, 4294901760
    %v4847 = vsub.f32 %v81, %v4846
    %v4848 = vand.u32 %v4847, 4294901760
    %4849 = vmatpush.msra.mxu0 %v4848
    %v4850 = vand.u32 %v4327, 4294901760
    %4851 = vmatmul.f32.gmra.mxu0 %v4850
    %v4852 = vpop.f32.mrf.mxu0
    %v4853 = vadd.f32 %v4736, %v4852
    %v4854 = vand.u32 %v4330, 4294901760
    %4855 = vmatmul.f32.gmra.mxu0 %v4854
    %v4856 = vpop.f32.mrf.mxu0
    %v4857 = vadd.f32 %v4742, %v4856
    %v4858 = vand.u32 %v4333, 4294901760
    %4859 = vmatmul.f32.gmra.mxu0 %v4858
    %v4860 = vpop.f32.mrf.mxu0
    %v4861 = vadd.f32 %v4748, %v4860
    %v4862 = vand.u32 %v4336, 4294901760
    %4863 = vmatmul.f32.gmra.mxu0 %v4862
    %v4864 = vpop.f32.mrf.mxu0
    %v4865 = vadd.f32 %v4754, %v4864
    %v4866 = vand.u32 %v4339, 4294901760
    %4867 = vmatmul.f32.gmra.mxu0 %v4866
    %v4868 = vpop.f32.mrf.mxu0
    %v4869 = vadd.f32 %v4760, %v4868
    %v4870 = vand.u32 %v4342, 4294901760
    %4871 = vmatmul.f32.gmra.mxu0 %v4870
    %v4872 = vpop.f32.mrf.mxu0
    %v4873 = vadd.f32 %v4766, %v4872
    %v4874 = vand.u32 %v4345, 4294901760
    %4875 = vmatmul.f32.gmra.mxu0 %v4874
    %v4876 = vpop.f32.mrf.mxu0
    %v4877 = vadd.f32 %v4772, %v4876
    %v4878 = vand.u32 %v4348, 4294901760
    %4879 = vmatmul.f32.gmra.mxu0 %v4878
    %v4880 = vpop.f32.mrf.mxu0
    %v4881 = vadd.f32 %v4778, %v4880
    %v4882 = vand.u32 %v4351, 4294901760
    %4883 = vmatmul.f32.gmra.mxu0 %v4882
    %v4884 = vpop.f32.mrf.mxu0
    %v4885 = vadd.f32 %v4784, %v4884
    %v4886 = vand.u32 %v4354, 4294901760
    %4887 = vmatmul.f32.gmra.mxu0 %v4886
    %v4888 = vpop.f32.mrf.mxu0
    %v4889 = vadd.f32 %v4790, %v4888
    %v4890 = vand.u32 %v4357, 4294901760
    %4891 = vmatmul.f32.gmra.mxu0 %v4890
    %v4892 = vpop.f32.mrf.mxu0
    %v4893 = vadd.f32 %v4796, %v4892
    %v4894 = vand.u32 %v4360, 4294901760
    %4895 = vmatmul.f32.gmra.mxu0 %v4894
    %v4896 = vpop.f32.mrf.mxu0
    %v4897 = vadd.f32 %v4802, %v4896
    %v4898 = vand.u32 %v4363, 4294901760
    %4899 = vmatmul.f32.gmra.mxu0 %v4898
    %v4900 = vpop.f32.mrf.mxu0
    %v4901 = vadd.f32 %v4808, %v4900
    %v4902 = vand.u32 %v4366, 4294901760
    %4903 = vmatmul.f32.gmra.mxu0 %v4902
    %v4904 = vpop.f32.mrf.mxu0
    %v4905 = vadd.f32 %v4814, %v4904
    %v4906 = vand.u32 %v4369, 4294901760
    %4907 = vmatmul.f32.gmra.mxu0 %v4906
    %v4908 = vpop.f32.mrf.mxu0
    %v4909 = vadd.f32 %v4820, %v4908
    %v4910 = vand.u32 %v4372, 4294901760
    %4911 = vmatmul.f32.gmra.mxu0 %v4910
    %v4912 = vpop.f32.mrf.mxu0
    %v4913 = vadd.f32 %v4826, %v4912
    %4914 = vdwg.mxu0
    %4915 = vmatpush.msra.mxu0 0.0
    %4916 = vmatpush.msra.mxu0 0.0
    %4917 = vmatpush.msra.mxu0 0.0
    %4918 = vmatpush.msra.mxu0 0.0
    %4919 = vmatpush.msra.mxu0 0.0
    %4920 = vmatpush.msra.mxu0 0.0
    %4921 = vmatpush.msra.mxu0 0.0
    %4922 = vmatpush.msra.mxu0 0.0
    %4923 = vmatpush.msra.mxu0 0.0
    %4924 = vmatpush.msra.mxu0 0.0
    %4925 = vmatpush.msra.mxu0 0.0
    %4926 = vmatpush.msra.mxu0 0.0
    %4927 = vmatpush.msra.mxu0 0.0
    %4928 = vmatpush.msra.mxu0 0.0
    %v4929 = vand.u32 %v82, 4294901760
    %4930 = vmatpush.msra.mxu0 %v4929
    %v4931 = vand.u32 %v81, 4294901760
    %4932 = vmatpush.msra.mxu0 %v4931
    %v4933 = vand.u32 %v4327, 4294901760
    %4934 = vmatmul.f32.gmra.mxu0 %v4933
    %v4935 = vpop.f32.mrf.mxu0
    %v4936 = vadd.f32 %v4853, %v4935
    %v4937 = vand.u32 %v4330, 4294901760
    %4938 = vmatmul.f32.gmra.mxu0 %v4937
    %v4939 = vpop.f32.mrf.mxu0
    %v4940 = vadd.f32 %v4857, %v4939
    %v4941 = vand.u32 %v4333, 4294901760
    %4942 = vmatmul.f32.gmra.mxu0 %v4941
    %v4943 = vpop.f32.mrf.mxu0
    %v4944 = vadd.f32 %v4861, %v4943
    %v4945 = vand.u32 %v4336, 4294901760
    %4946 = vmatmul.f32.gmra.mxu0 %v4945
    %v4947 = vpop.f32.mrf.mxu0
    %v4948 = vadd.f32 %v4865, %v4947
    %v4949 = vand.u32 %v4339, 4294901760
    %4950 = vmatmul.f32.gmra.mxu0 %v4949
    %v4951 = vpop.f32.mrf.mxu0
    %v4952 = vadd.f32 %v4869, %v4951
    %v4953 = vand.u32 %v4342, 4294901760
    %4954 = vmatmul.f32.gmra.mxu0 %v4953
    %v4955 = vpop.f32.mrf.mxu0
    %v4956 = vadd.f32 %v4873, %v4955
    %v4957 = vand.u32 %v4345, 4294901760
    %4958 = vmatmul.f32.gmra.mxu0 %v4957
    %v4959 = vpop.f32.mrf.mxu0
    %v4960 = vadd.f32 %v4877, %v4959
    %v4961 = vand.u32 %v4348, 4294901760
    %4962 = vmatmul.f32.gmra.mxu0 %v4961
    %v4963 = vpop.f32.mrf.mxu0
    %v4964 = vadd.f32 %v4881, %v4963
    %v4965 = vand.u32 %v4351, 4294901760
    %4966 = vmatmul.f32.gmra.mxu0 %v4965
    %v4967 = vpop.f32.mrf.mxu0
    %v4968 = vadd.f32 %v4885, %v4967
    %v4969 = vand.u32 %v4354, 4294901760
    %4970 = vmatmul.f32.gmra.mxu0 %v4969
    %v4971 = vpop.f32.mrf.mxu0
    %v4972 = vadd.f32 %v4889, %v4971
    %v4973 = vand.u32 %v4357, 4294901760
    %4974 = vmatmul.f32.gmra.mxu0 %v4973
    %v4975 = vpop.f32.mrf.mxu0
    %v4976 = vadd.f32 %v4893, %v4975
    %v4977 = vand.u32 %v4360, 4294901760
    %4978 = vmatmul.f32.gmra.mxu0 %v4977
    %v4979 = vpop.f32.mrf.mxu0
    %v4980 = vadd.f32 %v4897, %v4979
    %v4981 = vand.u32 %v4363, 4294901760
    %4982 = vmatmul.f32.gmra.mxu0 %v4981
    %v4983 = vpop.f32.mrf.mxu0
    %v4984 = vadd.f32 %v4901, %v4983
    %v4985 = vand.u32 %v4366, 4294901760
    %4986 = vmatmul.f32.gmra.mxu0 %v4985
    %v4987 = vpop.f32.mrf.mxu0
    %v4988 = vadd.f32 %v4905, %v4987
    %v4989 = vand.u32 %v4369, 4294901760
    %4990 = vmatmul.f32.gmra.mxu0 %v4989
    %v4991 = vpop.f32.mrf.mxu0
    %v4992 = vadd.f32 %v4909, %v4991
    %v4993 = vand.u32 %v4372, 4294901760
    %4994 = vmatmul.f32.gmra.mxu0 %v4993
    %v4995 = vpop.f32.mrf.mxu0
    %v4996 = vadd.f32 %v4913, %v4995
    %4997 = vdwg.mxu0
    %v4998 = vmul.f32 %v165, %v165
    %v4999 = vmul.f32 %v166, %v166
    %v5000 = vmul.f32 %v167, %v167
    %v5001 = vmul.f32 %v168, %v168
    %v5002 = vmul.f32 %v169, %v169
    %v5003 = vmul.f32 %v170, %v170
    %v5004 = vmul.f32 %v171, %v171
    %v5005 = vmul.f32 %v172, %v172
    %v5006 = vmul.f32 %v173, %v173
    %v5007 = vmul.f32 %v174, %v174
    %v5008 = vmul.f32 %v175, %v175
    %v5009 = vmul.f32 %v176, %v176
    %v5010 = vmul.f32 %v177, %v177
    %v5011 = vmul.f32 %v178, %v178
    %v5012 = vmul.f32 %v179, %v179
    %v5013 = vmul.f32 %v180, %v180
    %v5015 = vsel %vm181, %v4998, 0
    %v5018 = vsel %vm181, %v4999, 0
    %v5021 = vsel %vm181, %v5000, 0
    %v5024 = vsel %vm181, %v5001, 0
    %v5027 = vsel %vm181, %v5002, 0
    %v5030 = vsel %vm181, %v5003, 0
    %v5033 = vsel %vm181, %v5004, 0
    %v5036 = vsel %vm181, %v5005, 0
    %v5039 = vsel %vm181, %v5006, 0
    %v5042 = vsel %vm181, %v5007, 0
    %v5045 = vsel %vm181, %v5008, 0
    %v5048 = vsel %vm181, %v5009, 0
    %v5051 = vsel %vm181, %v5010, 0
    %v5054 = vsel %vm181, %v5011, 0
    %v5057 = vsel %vm181, %v5012, 0
    %v5060 = vsel %vm181, %v5013, 0
    %5062 = vmatpush.msra.mxu0 0.0
    %5063 = vmatpush.msra.mxu0 0.0
    %5064 = vmatpush.msra.mxu0 0.0
    %5065 = vmatpush.msra.mxu0 0.0
    %5066 = vmatpush.msra.mxu0 0.0
    %5067 = vmatpush.msra.mxu0 0.0
    %5068 = vmatpush.msra.mxu0 0.0
    %5069 = vmatpush.msra.mxu0 0.0
    %5070 = vmatpush.msra.mxu0 0.0
    %5071 = vmatpush.msra.mxu0 0.0
    %5072 = vmatpush.msra.mxu0 0.0
    %5073 = vmatpush.msra.mxu0 0.0
    %5074 = vmatpush.msra.mxu0 0.0
    %5075 = vmatpush.msra.mxu0 0.0
    %v5076 = vand.u32 %v84, 4294901760
    %5077 = vmatpush.msra.mxu0 %v5076
    %v5078 = vand.u32 %v83, 4294901760
    %5079 = vmatpush.msra.mxu0 %v5078
    %v5080 = vand.u32 %v5015, 4294901760
    %v5081 = vsub.f32 %v5015, %v5080
    %v5082 = vand.u32 %v5081, 4294901760
    %v5083 = vsub.f32 %v5081, %v5082
    %v5084 = vand.u32 %v5083, 4294901760
    %5085 = vmatmul.f32.gmra.mxu0 %v5084
    %v5086 = vpop.f32.mrf.mxu0
    %v5087 = vadd.f32 0.0, %v5086
    %v5088 = vand.u32 %v5018, 4294901760
    %v5089 = vsub.f32 %v5018, %v5088
    %v5090 = vand.u32 %v5089, 4294901760
    %v5091 = vsub.f32 %v5089, %v5090
    %v5092 = vand.u32 %v5091, 4294901760
    %5093 = vmatmul.f32.gmra.mxu0 %v5092
    %v5094 = vpop.f32.mrf.mxu0
    %v5095 = vadd.f32 0.0, %v5094
    %v5096 = vand.u32 %v5021, 4294901760
    %v5097 = vsub.f32 %v5021, %v5096
    %v5098 = vand.u32 %v5097, 4294901760
    %v5099 = vsub.f32 %v5097, %v5098
    %v5100 = vand.u32 %v5099, 4294901760
    %5101 = vmatmul.f32.gmra.mxu0 %v5100
    %v5102 = vpop.f32.mrf.mxu0
    %v5103 = vadd.f32 0.0, %v5102
    %v5104 = vand.u32 %v5024, 4294901760
    %v5105 = vsub.f32 %v5024, %v5104
    %v5106 = vand.u32 %v5105, 4294901760
    %v5107 = vsub.f32 %v5105, %v5106
    %v5108 = vand.u32 %v5107, 4294901760
    %5109 = vmatmul.f32.gmra.mxu0 %v5108
    %v5110 = vpop.f32.mrf.mxu0
    %v5111 = vadd.f32 0.0, %v5110
    %v5112 = vand.u32 %v5027, 4294901760
    %v5113 = vsub.f32 %v5027, %v5112
    %v5114 = vand.u32 %v5113, 4294901760
    %v5115 = vsub.f32 %v5113, %v5114
    %v5116 = vand.u32 %v5115, 4294901760
    %5117 = vmatmul.f32.gmra.mxu0 %v5116
    %v5118 = vpop.f32.mrf.mxu0
    %v5119 = vadd.f32 0.0, %v5118
    %v5120 = vand.u32 %v5030, 4294901760
    %v5121 = vsub.f32 %v5030, %v5120
    %v5122 = vand.u32 %v5121, 4294901760
    %v5123 = vsub.f32 %v5121, %v5122
    %v5124 = vand.u32 %v5123, 4294901760
    %5125 = vmatmul.f32.gmra.mxu0 %v5124
    %v5126 = vpop.f32.mrf.mxu0
    %v5127 = vadd.f32 0.0, %v5126
    %v5128 = vand.u32 %v5033, 4294901760
    %v5129 = vsub.f32 %v5033, %v5128
    %v5130 = vand.u32 %v5129, 4294901760
    %v5131 = vsub.f32 %v5129, %v5130
    %v5132 = vand.u32 %v5131, 4294901760
    %5133 = vmatmul.f32.gmra.mxu0 %v5132
    %v5134 = vpop.f32.mrf.mxu0
    %v5135 = vadd.f32 0.0, %v5134
    %v5136 = vand.u32 %v5036, 4294901760
    %v5137 = vsub.f32 %v5036, %v5136
    %v5138 = vand.u32 %v5137, 4294901760
    %v5139 = vsub.f32 %v5137, %v5138
    %v5140 = vand.u32 %v5139, 4294901760
    %5141 = vmatmul.f32.gmra.mxu0 %v5140
    %v5142 = vpop.f32.mrf.mxu0
    %v5143 = vadd.f32 0.0, %v5142
    %v5144 = vand.u32 %v5039, 4294901760
    %v5145 = vsub.f32 %v5039, %v5144
    %v5146 = vand.u32 %v5145, 4294901760
    %v5147 = vsub.f32 %v5145, %v5146
    %v5148 = vand.u32 %v5147, 4294901760
    %5149 = vmatmul.f32.gmra.mxu0 %v5148
    %v5150 = vpop.f32.mrf.mxu0
    %v5151 = vadd.f32 0.0, %v5150
    %v5152 = vand.u32 %v5042, 4294901760
    %v5153 = vsub.f32 %v5042, %v5152
    %v5154 = vand.u32 %v5153, 4294901760
    %v5155 = vsub.f32 %v5153, %v5154
    %v5156 = vand.u32 %v5155, 4294901760
    %5157 = vmatmul.f32.gmra.mxu0 %v5156
    %v5158 = vpop.f32.mrf.mxu0
    %v5159 = vadd.f32 0.0, %v5158
    %v5160 = vand.u32 %v5045, 4294901760
    %v5161 = vsub.f32 %v5045, %v5160
    %v5162 = vand.u32 %v5161, 4294901760
    %v5163 = vsub.f32 %v5161, %v5162
    %v5164 = vand.u32 %v5163, 4294901760
    %5165 = vmatmul.f32.gmra.mxu0 %v5164
    %v5166 = vpop.f32.mrf.mxu0
    %v5167 = vadd.f32 0.0, %v5166
    %v5168 = vand.u32 %v5048, 4294901760
    %v5169 = vsub.f32 %v5048, %v5168
    %v5170 = vand.u32 %v5169, 4294901760
    %v5171 = vsub.f32 %v5169, %v5170
    %v5172 = vand.u32 %v5171, 4294901760
    %5173 = vmatmul.f32.gmra.mxu0 %v5172
    %v5174 = vpop.f32.mrf.mxu0
    %v5175 = vadd.f32 0.0, %v5174
    %v5176 = vand.u32 %v5051, 4294901760
    %v5177 = vsub.f32 %v5051, %v5176
    %v5178 = vand.u32 %v5177, 4294901760
    %v5179 = vsub.f32 %v5177, %v5178
    %v5180 = vand.u32 %v5179, 4294901760
    %5181 = vmatmul.f32.gmra.mxu0 %v5180
    %v5182 = vpop.f32.mrf.mxu0
    %v5183 = vadd.f32 0.0, %v5182
    %v5184 = vand.u32 %v5054, 4294901760
    %v5185 = vsub.f32 %v5054, %v5184
    %v5186 = vand.u32 %v5185, 4294901760
    %v5187 = vsub.f32 %v5185, %v5186
    %v5188 = vand.u32 %v5187, 4294901760
    %5189 = vmatmul.f32.gmra.mxu0 %v5188
    %v5190 = vpop.f32.mrf.mxu0
    %v5191 = vadd.f32 0.0, %v5190
    %v5192 = vand.u32 %v5057, 4294901760
    %v5193 = vsub.f32 %v5057, %v5192
    %v5194 = vand.u32 %v5193, 4294901760
    %v5195 = vsub.f32 %v5193, %v5194
    %v5196 = vand.u32 %v5195, 4294901760
    %5197 = vmatmul.f32.gmra.mxu0 %v5196
    %v5198 = vpop.f32.mrf.mxu0
    %v5199 = vadd.f32 0.0, %v5198
    %v5200 = vand.u32 %v5060, 4294901760
    %v5201 = vsub.f32 %v5060, %v5200
    %v5202 = vand.u32 %v5201, 4294901760
    %v5203 = vsub.f32 %v5201, %v5202
    %v5204 = vand.u32 %v5203, 4294901760
    %5205 = vmatmul.f32.gmra.mxu0 %v5204
    %v5206 = vpop.f32.mrf.mxu0
    %v5207 = vadd.f32 0.0, %v5206
    %5208 = vdwg.mxu0
    %5209 = vmatpush.msra.mxu0 0.0
    %5210 = vmatpush.msra.mxu0 0.0
    %5211 = vmatpush.msra.mxu0 0.0
    %5212 = vmatpush.msra.mxu0 0.0
    %5213 = vmatpush.msra.mxu0 0.0
    %5214 = vmatpush.msra.mxu0 0.0
    %5215 = vmatpush.msra.mxu0 0.0
    %5216 = vmatpush.msra.mxu0 0.0
    %5217 = vmatpush.msra.mxu0 0.0
    %5218 = vmatpush.msra.mxu0 0.0
    %5219 = vmatpush.msra.mxu0 0.0
    %5220 = vmatpush.msra.mxu0 0.0
    %5221 = vmatpush.msra.mxu0 0.0
    %5222 = vmatpush.msra.mxu0 0.0
    %v5223 = vand.u32 %v84, 4294901760
    %v5224 = vsub.f32 %v84, %v5223
    %v5225 = vand.u32 %v5224, 4294901760
    %v5226 = vsub.f32 %v5224, %v5225
    %v5227 = vand.u32 %v5226, 4294901760
    %5228 = vmatpush.msra.mxu0 %v5227
    %v5229 = vand.u32 %v83, 4294901760
    %v5230 = vsub.f32 %v83, %v5229
    %v5231 = vand.u32 %v5230, 4294901760
    %v5232 = vsub.f32 %v5230, %v5231
    %v5233 = vand.u32 %v5232, 4294901760
    %5234 = vmatpush.msra.mxu0 %v5233
    %v5235 = vand.u32 %v5015, 4294901760
    %5236 = vmatmul.f32.gmra.mxu0 %v5235
    %v5237 = vpop.f32.mrf.mxu0
    %v5238 = vadd.f32 %v5087, %v5237
    %v5239 = vand.u32 %v5018, 4294901760
    %5240 = vmatmul.f32.gmra.mxu0 %v5239
    %v5241 = vpop.f32.mrf.mxu0
    %v5242 = vadd.f32 %v5095, %v5241
    %v5243 = vand.u32 %v5021, 4294901760
    %5244 = vmatmul.f32.gmra.mxu0 %v5243
    %v5245 = vpop.f32.mrf.mxu0
    %v5246 = vadd.f32 %v5103, %v5245
    %v5247 = vand.u32 %v5024, 4294901760
    %5248 = vmatmul.f32.gmra.mxu0 %v5247
    %v5249 = vpop.f32.mrf.mxu0
    %v5250 = vadd.f32 %v5111, %v5249
    %v5251 = vand.u32 %v5027, 4294901760
    %5252 = vmatmul.f32.gmra.mxu0 %v5251
    %v5253 = vpop.f32.mrf.mxu0
    %v5254 = vadd.f32 %v5119, %v5253
    %v5255 = vand.u32 %v5030, 4294901760
    %5256 = vmatmul.f32.gmra.mxu0 %v5255
    %v5257 = vpop.f32.mrf.mxu0
    %v5258 = vadd.f32 %v5127, %v5257
    %v5259 = vand.u32 %v5033, 4294901760
    %5260 = vmatmul.f32.gmra.mxu0 %v5259
    %v5261 = vpop.f32.mrf.mxu0
    %v5262 = vadd.f32 %v5135, %v5261
    %v5263 = vand.u32 %v5036, 4294901760
    %5264 = vmatmul.f32.gmra.mxu0 %v5263
    %v5265 = vpop.f32.mrf.mxu0
    %v5266 = vadd.f32 %v5143, %v5265
    %v5267 = vand.u32 %v5039, 4294901760
    %5268 = vmatmul.f32.gmra.mxu0 %v5267
    %v5269 = vpop.f32.mrf.mxu0
    %v5270 = vadd.f32 %v5151, %v5269
    %v5271 = vand.u32 %v5042, 4294901760
    %5272 = vmatmul.f32.gmra.mxu0 %v5271
    %v5273 = vpop.f32.mrf.mxu0
    %v5274 = vadd.f32 %v5159, %v5273
    %v5275 = vand.u32 %v5045, 4294901760
    %5276 = vmatmul.f32.gmra.mxu0 %v5275
    %v5277 = vpop.f32.mrf.mxu0
    %v5278 = vadd.f32 %v5167, %v5277
    %v5279 = vand.u32 %v5048, 4294901760
    %5280 = vmatmul.f32.gmra.mxu0 %v5279
    %v5281 = vpop.f32.mrf.mxu0
    %v5282 = vadd.f32 %v5175, %v5281
    %v5283 = vand.u32 %v5051, 4294901760
    %5284 = vmatmul.f32.gmra.mxu0 %v5283
    %v5285 = vpop.f32.mrf.mxu0
    %v5286 = vadd.f32 %v5183, %v5285
    %v5287 = vand.u32 %v5054, 4294901760
    %5288 = vmatmul.f32.gmra.mxu0 %v5287
    %v5289 = vpop.f32.mrf.mxu0
    %v5290 = vadd.f32 %v5191, %v5289
    %v5291 = vand.u32 %v5057, 4294901760
    %5292 = vmatmul.f32.gmra.mxu0 %v5291
    %v5293 = vpop.f32.mrf.mxu0
    %v5294 = vadd.f32 %v5199, %v5293
    %v5295 = vand.u32 %v5060, 4294901760
    %5296 = vmatmul.f32.gmra.mxu0 %v5295
    %v5297 = vpop.f32.mrf.mxu0
    %v5298 = vadd.f32 %v5207, %v5297
    %5299 = vdwg.mxu0
    %5300 = vmatpush.msra.mxu0 0.0
    %5301 = vmatpush.msra.mxu0 0.0
    %5302 = vmatpush.msra.mxu0 0.0
    %5303 = vmatpush.msra.mxu0 0.0
    %5304 = vmatpush.msra.mxu0 0.0
    %5305 = vmatpush.msra.mxu0 0.0
    %5306 = vmatpush.msra.mxu0 0.0
    %5307 = vmatpush.msra.mxu0 0.0
    %5308 = vmatpush.msra.mxu0 0.0
    %5309 = vmatpush.msra.mxu0 0.0
    %5310 = vmatpush.msra.mxu0 0.0
    %5311 = vmatpush.msra.mxu0 0.0
    %5312 = vmatpush.msra.mxu0 0.0
    %5313 = vmatpush.msra.mxu0 0.0
    %v5314 = vand.u32 %v84, 4294901760
    %v5315 = vsub.f32 %v84, %v5314
    %5316 = vmatpush.msra.mxu0 %v5315
    %v5317 = vand.u32 %v83, 4294901760
    %v5318 = vsub.f32 %v83, %v5317
    %5319 = vmatpush.msra.mxu0 %v5318
    %v5320 = vand.u32 %v5015, 4294901760
    %v5321 = vsub.f32 %v5015, %v5320
    %5322 = vmatmul.f32.gmra.mxu0 %v5321
    %v5323 = vpop.f32.mrf.mxu0
    %v5324 = vadd.f32 %v5238, %v5323
    %v5325 = vand.u32 %v5018, 4294901760
    %v5326 = vsub.f32 %v5018, %v5325
    %5327 = vmatmul.f32.gmra.mxu0 %v5326
    %v5328 = vpop.f32.mrf.mxu0
    %v5329 = vadd.f32 %v5242, %v5328
    %v5330 = vand.u32 %v5021, 4294901760
    %v5331 = vsub.f32 %v5021, %v5330
    %5332 = vmatmul.f32.gmra.mxu0 %v5331
    %v5333 = vpop.f32.mrf.mxu0
    %v5334 = vadd.f32 %v5246, %v5333
    %v5335 = vand.u32 %v5024, 4294901760
    %v5336 = vsub.f32 %v5024, %v5335
    %5337 = vmatmul.f32.gmra.mxu0 %v5336
    %v5338 = vpop.f32.mrf.mxu0
    %v5339 = vadd.f32 %v5250, %v5338
    %v5340 = vand.u32 %v5027, 4294901760
    %v5341 = vsub.f32 %v5027, %v5340
    %5342 = vmatmul.f32.gmra.mxu0 %v5341
    %v5343 = vpop.f32.mrf.mxu0
    %v5344 = vadd.f32 %v5254, %v5343
    %v5345 = vand.u32 %v5030, 4294901760
    %v5346 = vsub.f32 %v5030, %v5345
    %5347 = vmatmul.f32.gmra.mxu0 %v5346
    %v5348 = vpop.f32.mrf.mxu0
    %v5349 = vadd.f32 %v5258, %v5348
    %v5350 = vand.u32 %v5033, 4294901760
    %v5351 = vsub.f32 %v5033, %v5350
    %5352 = vmatmul.f32.gmra.mxu0 %v5351
    %v5353 = vpop.f32.mrf.mxu0
    %v5354 = vadd.f32 %v5262, %v5353
    %v5355 = vand.u32 %v5036, 4294901760
    %v5356 = vsub.f32 %v5036, %v5355
    %5357 = vmatmul.f32.gmra.mxu0 %v5356
    %v5358 = vpop.f32.mrf.mxu0
    %v5359 = vadd.f32 %v5266, %v5358
    %v5360 = vand.u32 %v5039, 4294901760
    %v5361 = vsub.f32 %v5039, %v5360
    %5362 = vmatmul.f32.gmra.mxu0 %v5361
    %v5363 = vpop.f32.mrf.mxu0
    %v5364 = vadd.f32 %v5270, %v5363
    %v5365 = vand.u32 %v5042, 4294901760
    %v5366 = vsub.f32 %v5042, %v5365
    %5367 = vmatmul.f32.gmra.mxu0 %v5366
    %v5368 = vpop.f32.mrf.mxu0
    %v5369 = vadd.f32 %v5274, %v5368
    %v5370 = vand.u32 %v5045, 4294901760
    %v5371 = vsub.f32 %v5045, %v5370
    %5372 = vmatmul.f32.gmra.mxu0 %v5371
    %v5373 = vpop.f32.mrf.mxu0
    %v5374 = vadd.f32 %v5278, %v5373
    %v5375 = vand.u32 %v5048, 4294901760
    %v5376 = vsub.f32 %v5048, %v5375
    %5377 = vmatmul.f32.gmra.mxu0 %v5376
    %v5378 = vpop.f32.mrf.mxu0
    %v5379 = vadd.f32 %v5282, %v5378
    %v5380 = vand.u32 %v5051, 4294901760
    %v5381 = vsub.f32 %v5051, %v5380
    %5382 = vmatmul.f32.gmra.mxu0 %v5381
    %v5383 = vpop.f32.mrf.mxu0
    %v5384 = vadd.f32 %v5286, %v5383
    %v5385 = vand.u32 %v5054, 4294901760
    %v5386 = vsub.f32 %v5054, %v5385
    %5387 = vmatmul.f32.gmra.mxu0 %v5386
    %v5388 = vpop.f32.mrf.mxu0
    %v5389 = vadd.f32 %v5290, %v5388
    %v5390 = vand.u32 %v5057, 4294901760
    %v5391 = vsub.f32 %v5057, %v5390
    %5392 = vmatmul.f32.gmra.mxu0 %v5391
    %v5393 = vpop.f32.mrf.mxu0
    %v5394 = vadd.f32 %v5294, %v5393
    %v5395 = vand.u32 %v5060, 4294901760
    %v5396 = vsub.f32 %v5060, %v5395
    %5397 = vmatmul.f32.gmra.mxu0 %v5396
    %v5398 = vpop.f32.mrf.mxu0
    %v5399 = vadd.f32 %v5298, %v5398
    %5400 = vdwg.mxu0
    %5401 = vmatpush.msra.mxu0 0.0
    %5402 = vmatpush.msra.mxu0 0.0
    %5403 = vmatpush.msra.mxu0 0.0
    %5404 = vmatpush.msra.mxu0 0.0
    %5405 = vmatpush.msra.mxu0 0.0
    %5406 = vmatpush.msra.mxu0 0.0
    %5407 = vmatpush.msra.mxu0 0.0
    %5408 = vmatpush.msra.mxu0 0.0
    %5409 = vmatpush.msra.mxu0 0.0
    %5410 = vmatpush.msra.mxu0 0.0
    %5411 = vmatpush.msra.mxu0 0.0
    %5412 = vmatpush.msra.mxu0 0.0
    %5413 = vmatpush.msra.mxu0 0.0
    %5414 = vmatpush.msra.mxu0 0.0
    %v5415 = vand.u32 %v84, 4294901760
    %5416 = vmatpush.msra.mxu0 %v5415
    %v5417 = vand.u32 %v83, 4294901760
    %5418 = vmatpush.msra.mxu0 %v5417
    %v5419 = vand.u32 %v5015, 4294901760
    %v5420 = vsub.f32 %v5015, %v5419
    %v5421 = vand.u32 %v5420, 4294901760
    %5422 = vmatmul.f32.gmra.mxu0 %v5421
    %v5423 = vpop.f32.mrf.mxu0
    %v5424 = vadd.f32 %v5324, %v5423
    %v5425 = vand.u32 %v5018, 4294901760
    %v5426 = vsub.f32 %v5018, %v5425
    %v5427 = vand.u32 %v5426, 4294901760
    %5428 = vmatmul.f32.gmra.mxu0 %v5427
    %v5429 = vpop.f32.mrf.mxu0
    %v5430 = vadd.f32 %v5329, %v5429
    %v5431 = vand.u32 %v5021, 4294901760
    %v5432 = vsub.f32 %v5021, %v5431
    %v5433 = vand.u32 %v5432, 4294901760
    %5434 = vmatmul.f32.gmra.mxu0 %v5433
    %v5435 = vpop.f32.mrf.mxu0
    %v5436 = vadd.f32 %v5334, %v5435
    %v5437 = vand.u32 %v5024, 4294901760
    %v5438 = vsub.f32 %v5024, %v5437
    %v5439 = vand.u32 %v5438, 4294901760
    %5440 = vmatmul.f32.gmra.mxu0 %v5439
    %v5441 = vpop.f32.mrf.mxu0
    %v5442 = vadd.f32 %v5339, %v5441
    %v5443 = vand.u32 %v5027, 4294901760
    %v5444 = vsub.f32 %v5027, %v5443
    %v5445 = vand.u32 %v5444, 4294901760
    %5446 = vmatmul.f32.gmra.mxu0 %v5445
    %v5447 = vpop.f32.mrf.mxu0
    %v5448 = vadd.f32 %v5344, %v5447
    %v5449 = vand.u32 %v5030, 4294901760
    %v5450 = vsub.f32 %v5030, %v5449
    %v5451 = vand.u32 %v5450, 4294901760
    %5452 = vmatmul.f32.gmra.mxu0 %v5451
    %v5453 = vpop.f32.mrf.mxu0
    %v5454 = vadd.f32 %v5349, %v5453
    %v5455 = vand.u32 %v5033, 4294901760
    %v5456 = vsub.f32 %v5033, %v5455
    %v5457 = vand.u32 %v5456, 4294901760
    %5458 = vmatmul.f32.gmra.mxu0 %v5457
    %v5459 = vpop.f32.mrf.mxu0
    %v5460 = vadd.f32 %v5354, %v5459
    %v5461 = vand.u32 %v5036, 4294901760
    %v5462 = vsub.f32 %v5036, %v5461
    %v5463 = vand.u32 %v5462, 4294901760
    %5464 = vmatmul.f32.gmra.mxu0 %v5463
    %v5465 = vpop.f32.mrf.mxu0
    %v5466 = vadd.f32 %v5359, %v5465
    %v5467 = vand.u32 %v5039, 4294901760
    %v5468 = vsub.f32 %v5039, %v5467
    %v5469 = vand.u32 %v5468, 4294901760
    %5470 = vmatmul.f32.gmra.mxu0 %v5469
    %v5471 = vpop.f32.mrf.mxu0
    %v5472 = vadd.f32 %v5364, %v5471
    %v5473 = vand.u32 %v5042, 4294901760
    %v5474 = vsub.f32 %v5042, %v5473
    %v5475 = vand.u32 %v5474, 4294901760
    %5476 = vmatmul.f32.gmra.mxu0 %v5475
    %v5477 = vpop.f32.mrf.mxu0
    %v5478 = vadd.f32 %v5369, %v5477
    %v5479 = vand.u32 %v5045, 4294901760
    %v5480 = vsub.f32 %v5045, %v5479
    %v5481 = vand.u32 %v5480, 4294901760
    %5482 = vmatmul.f32.gmra.mxu0 %v5481
    %v5483 = vpop.f32.mrf.mxu0
    %v5484 = vadd.f32 %v5374, %v5483
    %v5485 = vand.u32 %v5048, 4294901760
    %v5486 = vsub.f32 %v5048, %v5485
    %v5487 = vand.u32 %v5486, 4294901760
    %5488 = vmatmul.f32.gmra.mxu0 %v5487
    %v5489 = vpop.f32.mrf.mxu0
    %v5490 = vadd.f32 %v5379, %v5489
    %v5491 = vand.u32 %v5051, 4294901760
    %v5492 = vsub.f32 %v5051, %v5491
    %v5493 = vand.u32 %v5492, 4294901760
    %5494 = vmatmul.f32.gmra.mxu0 %v5493
    %v5495 = vpop.f32.mrf.mxu0
    %v5496 = vadd.f32 %v5384, %v5495
    %v5497 = vand.u32 %v5054, 4294901760
    %v5498 = vsub.f32 %v5054, %v5497
    %v5499 = vand.u32 %v5498, 4294901760
    %5500 = vmatmul.f32.gmra.mxu0 %v5499
    %v5501 = vpop.f32.mrf.mxu0
    %v5502 = vadd.f32 %v5389, %v5501
    %v5503 = vand.u32 %v5057, 4294901760
    %v5504 = vsub.f32 %v5057, %v5503
    %v5505 = vand.u32 %v5504, 4294901760
    %5506 = vmatmul.f32.gmra.mxu0 %v5505
    %v5507 = vpop.f32.mrf.mxu0
    %v5508 = vadd.f32 %v5394, %v5507
    %v5509 = vand.u32 %v5060, 4294901760
    %v5510 = vsub.f32 %v5060, %v5509
    %v5511 = vand.u32 %v5510, 4294901760
    %5512 = vmatmul.f32.gmra.mxu0 %v5511
    %v5513 = vpop.f32.mrf.mxu0
    %v5514 = vadd.f32 %v5399, %v5513
    %5515 = vdwg.mxu0
    %5516 = vmatpush.msra.mxu0 0.0
    %5517 = vmatpush.msra.mxu0 0.0
    %5518 = vmatpush.msra.mxu0 0.0
    %5519 = vmatpush.msra.mxu0 0.0
    %5520 = vmatpush.msra.mxu0 0.0
    %5521 = vmatpush.msra.mxu0 0.0
    %5522 = vmatpush.msra.mxu0 0.0
    %5523 = vmatpush.msra.mxu0 0.0
    %5524 = vmatpush.msra.mxu0 0.0
    %5525 = vmatpush.msra.mxu0 0.0
    %5526 = vmatpush.msra.mxu0 0.0
    %5527 = vmatpush.msra.mxu0 0.0
    %5528 = vmatpush.msra.mxu0 0.0
    %5529 = vmatpush.msra.mxu0 0.0
    %v5530 = vand.u32 %v84, 4294901760
    %v5531 = vsub.f32 %v84, %v5530
    %v5532 = vand.u32 %v5531, 4294901760
    %5533 = vmatpush.msra.mxu0 %v5532
    %v5534 = vand.u32 %v83, 4294901760
    %v5535 = vsub.f32 %v83, %v5534
    %v5536 = vand.u32 %v5535, 4294901760
    %5537 = vmatpush.msra.mxu0 %v5536
    %v5538 = vand.u32 %v5015, 4294901760
    %5539 = vmatmul.f32.gmra.mxu0 %v5538
    %v5540 = vpop.f32.mrf.mxu0
    %v5541 = vadd.f32 %v5424, %v5540
    %v5542 = vand.u32 %v5018, 4294901760
    %5543 = vmatmul.f32.gmra.mxu0 %v5542
    %v5544 = vpop.f32.mrf.mxu0
    %v5545 = vadd.f32 %v5430, %v5544
    %v5546 = vand.u32 %v5021, 4294901760
    %5547 = vmatmul.f32.gmra.mxu0 %v5546
    %v5548 = vpop.f32.mrf.mxu0
    %v5549 = vadd.f32 %v5436, %v5548
    %v5550 = vand.u32 %v5024, 4294901760
    %5551 = vmatmul.f32.gmra.mxu0 %v5550
    %v5552 = vpop.f32.mrf.mxu0
    %v5553 = vadd.f32 %v5442, %v5552
    %v5554 = vand.u32 %v5027, 4294901760
    %5555 = vmatmul.f32.gmra.mxu0 %v5554
    %v5556 = vpop.f32.mrf.mxu0
    %v5557 = vadd.f32 %v5448, %v5556
    %v5558 = vand.u32 %v5030, 4294901760
    %5559 = vmatmul.f32.gmra.mxu0 %v5558
    %v5560 = vpop.f32.mrf.mxu0
    %v5561 = vadd.f32 %v5454, %v5560
    %v5562 = vand.u32 %v5033, 4294901760
    %5563 = vmatmul.f32.gmra.mxu0 %v5562
    %v5564 = vpop.f32.mrf.mxu0
    %v5565 = vadd.f32 %v5460, %v5564
    %v5566 = vand.u32 %v5036, 4294901760
    %5567 = vmatmul.f32.gmra.mxu0 %v5566
    %v5568 = vpop.f32.mrf.mxu0
    %v5569 = vadd.f32 %v5466, %v5568
    %v5570 = vand.u32 %v5039, 4294901760
    %5571 = vmatmul.f32.gmra.mxu0 %v5570
    %v5572 = vpop.f32.mrf.mxu0
    %v5573 = vadd.f32 %v5472, %v5572
    %v5574 = vand.u32 %v5042, 4294901760
    %5575 = vmatmul.f32.gmra.mxu0 %v5574
    %v5576 = vpop.f32.mrf.mxu0
    %v5577 = vadd.f32 %v5478, %v5576
    %v5578 = vand.u32 %v5045, 4294901760
    %5579 = vmatmul.f32.gmra.mxu0 %v5578
    %v5580 = vpop.f32.mrf.mxu0
    %v5581 = vadd.f32 %v5484, %v5580
    %v5582 = vand.u32 %v5048, 4294901760
    %5583 = vmatmul.f32.gmra.mxu0 %v5582
    %v5584 = vpop.f32.mrf.mxu0
    %v5585 = vadd.f32 %v5490, %v5584
    %v5586 = vand.u32 %v5051, 4294901760
    %5587 = vmatmul.f32.gmra.mxu0 %v5586
    %v5588 = vpop.f32.mrf.mxu0
    %v5589 = vadd.f32 %v5496, %v5588
    %v5590 = vand.u32 %v5054, 4294901760
    %5591 = vmatmul.f32.gmra.mxu0 %v5590
    %v5592 = vpop.f32.mrf.mxu0
    %v5593 = vadd.f32 %v5502, %v5592
    %v5594 = vand.u32 %v5057, 4294901760
    %5595 = vmatmul.f32.gmra.mxu0 %v5594
    %v5596 = vpop.f32.mrf.mxu0
    %v5597 = vadd.f32 %v5508, %v5596
    %v5598 = vand.u32 %v5060, 4294901760
    %5599 = vmatmul.f32.gmra.mxu0 %v5598
    %v5600 = vpop.f32.mrf.mxu0
    %v5601 = vadd.f32 %v5514, %v5600
    %5602 = vdwg.mxu0
    %5603 = vmatpush.msra.mxu0 0.0
    %5604 = vmatpush.msra.mxu0 0.0
    %5605 = vmatpush.msra.mxu0 0.0
    %5606 = vmatpush.msra.mxu0 0.0
    %5607 = vmatpush.msra.mxu0 0.0
    %5608 = vmatpush.msra.mxu0 0.0
    %5609 = vmatpush.msra.mxu0 0.0
    %5610 = vmatpush.msra.mxu0 0.0
    %5611 = vmatpush.msra.mxu0 0.0
    %5612 = vmatpush.msra.mxu0 0.0
    %5613 = vmatpush.msra.mxu0 0.0
    %5614 = vmatpush.msra.mxu0 0.0
    %5615 = vmatpush.msra.mxu0 0.0
    %5616 = vmatpush.msra.mxu0 0.0
    %v5617 = vand.u32 %v84, 4294901760
    %5618 = vmatpush.msra.mxu0 %v5617
    %v5619 = vand.u32 %v83, 4294901760
    %5620 = vmatpush.msra.mxu0 %v5619
    %v5621 = vand.u32 %v5015, 4294901760
    %5622 = vmatmul.f32.gmra.mxu0 %v5621
    %v5623 = vpop.f32.mrf.mxu0
    %v5624 = vadd.f32 %v5541, %v5623
    %v5625 = vand.u32 %v5018, 4294901760
    %5626 = vmatmul.f32.gmra.mxu0 %v5625
    %v5627 = vpop.f32.mrf.mxu0
    %v5628 = vadd.f32 %v5545, %v5627
    %v5629 = vand.u32 %v5021, 4294901760
    %5630 = vmatmul.f32.gmra.mxu0 %v5629
    %v5631 = vpop.f32.mrf.mxu0
    %v5632 = vadd.f32 %v5549, %v5631
    %v5633 = vand.u32 %v5024, 4294901760
    %5634 = vmatmul.f32.gmra.mxu0 %v5633
    %v5635 = vpop.f32.mrf.mxu0
    %v5636 = vadd.f32 %v5553, %v5635
    %v5637 = vand.u32 %v5027, 4294901760
    %5638 = vmatmul.f32.gmra.mxu0 %v5637
    %v5639 = vpop.f32.mrf.mxu0
    %v5640 = vadd.f32 %v5557, %v5639
    %v5641 = vand.u32 %v5030, 4294901760
    %5642 = vmatmul.f32.gmra.mxu0 %v5641
    %v5643 = vpop.f32.mrf.mxu0
    %v5644 = vadd.f32 %v5561, %v5643
    %v5645 = vand.u32 %v5033, 4294901760
    %5646 = vmatmul.f32.gmra.mxu0 %v5645
    %v5647 = vpop.f32.mrf.mxu0
    %v5648 = vadd.f32 %v5565, %v5647
    %v5649 = vand.u32 %v5036, 4294901760
    %5650 = vmatmul.f32.gmra.mxu0 %v5649
    %v5651 = vpop.f32.mrf.mxu0
    %v5652 = vadd.f32 %v5569, %v5651
    %v5653 = vand.u32 %v5039, 4294901760
    %5654 = vmatmul.f32.gmra.mxu0 %v5653
    %v5655 = vpop.f32.mrf.mxu0
    %v5656 = vadd.f32 %v5573, %v5655
    %v5657 = vand.u32 %v5042, 4294901760
    %5658 = vmatmul.f32.gmra.mxu0 %v5657
    %v5659 = vpop.f32.mrf.mxu0
    %v5660 = vadd.f32 %v5577, %v5659
    %v5661 = vand.u32 %v5045, 4294901760
    %5662 = vmatmul.f32.gmra.mxu0 %v5661
    %v5663 = vpop.f32.mrf.mxu0
    %v5664 = vadd.f32 %v5581, %v5663
    %v5665 = vand.u32 %v5048, 4294901760
    %5666 = vmatmul.f32.gmra.mxu0 %v5665
    %v5667 = vpop.f32.mrf.mxu0
    %v5668 = vadd.f32 %v5585, %v5667
    %v5669 = vand.u32 %v5051, 4294901760
    %5670 = vmatmul.f32.gmra.mxu0 %v5669
    %v5671 = vpop.f32.mrf.mxu0
    %v5672 = vadd.f32 %v5589, %v5671
    %v5673 = vand.u32 %v5054, 4294901760
    %5674 = vmatmul.f32.gmra.mxu0 %v5673
    %v5675 = vpop.f32.mrf.mxu0
    %v5676 = vadd.f32 %v5593, %v5675
    %v5677 = vand.u32 %v5057, 4294901760
    %5678 = vmatmul.f32.gmra.mxu0 %v5677
    %v5679 = vpop.f32.mrf.mxu0
    %v5680 = vadd.f32 %v5597, %v5679
    %v5681 = vand.u32 %v5060, 4294901760
    %5682 = vmatmul.f32.gmra.mxu0 %v5681
    %v5683 = vpop.f32.mrf.mxu0
    %v5684 = vadd.f32 %v5601, %v5683
    %5685 = vdwg.mxu0
    %5686 = vxpose.xlu0.b32.start [1/16] %v5624, 128
    %5687 = vxpose.xlu0.b32.cont [2/16] %v5628, 128
    %5688 = vxpose.xlu0.b32.cont [3/16] 0.0, 128
    %5689 = vxpose.xlu0.b32.cont [4/16] 0.0, 128
    %5690 = vxpose.xlu0.b32.cont [5/16] 0.0, 128
    %5691 = vxpose.xlu0.b32.cont [6/16] 0.0, 128
    %5692 = vxpose.xlu0.b32.cont [7/16] 0.0, 128
    %5693 = vxpose.xlu0.b32.cont [8/16] 0.0, 128
    %5694 = vxpose.xlu0.b32.cont [9/16] 0.0, 128
    %5695 = vxpose.xlu0.b32.cont [10/16] 0.0, 128
    %5696 = vxpose.xlu0.b32.cont [11/16] 0.0, 128
    %5697 = vxpose.xlu0.b32.cont [12/16] 0.0, 128
    %5698 = vxpose.xlu0.b32.cont [13/16] 0.0, 128
    %5699 = vxpose.xlu0.b32.cont [14/16] 0.0, 128
    %5700 = vxpose.xlu0.b32.cont [15/16] 0.0, 128
    %5701 = vxpose.xlu0.b32.end [16/16] 0.0, 128
    %v5702 = vpop.trf.xlu0
    %v5703 = vpop.trf.xlu0
    %v5704 = vpop.trf.xlu0
    %v5705 = vpop.trf.xlu0
    %v5706 = vpop.trf.xlu0
    %v5707 = vpop.trf.xlu0
    %v5708 = vpop.trf.xlu0
    %v5709 = vpop.trf.xlu0
    %v5710 = vpop.trf.xlu0
    %v5711 = vpop.trf.xlu0
    %v5712 = vpop.trf.xlu0
    %v5713 = vpop.trf.xlu0
    %v5714 = vpop.trf.xlu0
    %v5715 = vpop.trf.xlu0
    %v5716 = vpop.trf.xlu0
    %v5717 = vpop.trf.xlu0
    %5718 = vxpose.xlu0.b32.start [1/16] %v5632, 128
    %5719 = vxpose.xlu0.b32.cont [2/16] %v5636, 128
    %5720 = vxpose.xlu0.b32.cont [3/16] 0.0, 128
    %5721 = vxpose.xlu0.b32.cont [4/16] 0.0, 128
    %5722 = vxpose.xlu0.b32.cont [5/16] 0.0, 128
    %5723 = vxpose.xlu0.b32.cont [6/16] 0.0, 128
    %5724 = vxpose.xlu0.b32.cont [7/16] 0.0, 128
    %5725 = vxpose.xlu0.b32.cont [8/16] 0.0, 128
    %5726 = vxpose.xlu0.b32.cont [9/16] 0.0, 128
    %5727 = vxpose.xlu0.b32.cont [10/16] 0.0, 128
    %5728 = vxpose.xlu0.b32.cont [11/16] 0.0, 128
    %5729 = vxpose.xlu0.b32.cont [12/16] 0.0, 128
    %5730 = vxpose.xlu0.b32.cont [13/16] 0.0, 128
    %5731 = vxpose.xlu0.b32.cont [14/16] 0.0, 128
    %5732 = vxpose.xlu0.b32.cont [15/16] 0.0, 128
    %5733 = vxpose.xlu0.b32.end [16/16] 0.0, 128
    %v5734 = vpop.trf.xlu0
    %v5735 = vpop.trf.xlu0
    %v5736 = vpop.trf.xlu0
    %v5737 = vpop.trf.xlu0
    %v5738 = vpop.trf.xlu0
    %v5739 = vpop.trf.xlu0
    %v5740 = vpop.trf.xlu0
    %v5741 = vpop.trf.xlu0
    %v5742 = vpop.trf.xlu0
    %v5743 = vpop.trf.xlu0
    %v5744 = vpop.trf.xlu0
    %v5745 = vpop.trf.xlu0
    %v5746 = vpop.trf.xlu0
    %v5747 = vpop.trf.xlu0
    %v5748 = vpop.trf.xlu0
    %v5749 = vpop.trf.xlu0
    %5750 = vxpose.xlu0.b32.start [1/16] %v5640, 128
    %5751 = vxpose.xlu0.b32.cont [2/16] %v5644, 128
    %5752 = vxpose.xlu0.b32.cont [3/16] 0.0, 128
    %5753 = vxpose.xlu0.b32.cont [4/16] 0.0, 128
    %5754 = vxpose.xlu0.b32.cont [5/16] 0.0, 128
    %5755 = vxpose.xlu0.b32.cont [6/16] 0.0, 128
    %5756 = vxpose.xlu0.b32.cont [7/16] 0.0, 128
    %5757 = vxpose.xlu0.b32.cont [8/16] 0.0, 128
    %5758 = vxpose.xlu0.b32.cont [9/16] 0.0, 128
    %5759 = vxpose.xlu0.b32.cont [10/16] 0.0, 128
    %5760 = vxpose.xlu0.b32.cont [11/16] 0.0, 128
    %5761 = vxpose.xlu0.b32.cont [12/16] 0.0, 128
    %5762 = vxpose.xlu0.b32.cont [13/16] 0.0, 128
    %5763 = vxpose.xlu0.b32.cont [14/16] 0.0, 128
    %5764 = vxpose.xlu0.b32.cont [15/16] 0.0, 128
    %5765 = vxpose.xlu0.b32.end [16/16] 0.0, 128
    %v5766 = vpop.trf.xlu0
    %v5767 = vpop.trf.xlu0
    %v5768 = vpop.trf.xlu0
    %v5769 = vpop.trf.xlu0
    %v5770 = vpop.trf.xlu0
    %v5771 = vpop.trf.xlu0
    %v5772 = vpop.trf.xlu0
    %v5773 = vpop.trf.xlu0
    %v5774 = vpop.trf.xlu0
    %v5775 = vpop.trf.xlu0
    %v5776 = vpop.trf.xlu0
    %v5777 = vpop.trf.xlu0
    %v5778 = vpop.trf.xlu0
    %v5779 = vpop.trf.xlu0
    %v5780 = vpop.trf.xlu0
    %v5781 = vpop.trf.xlu0
    %5782 = vxpose.xlu0.b32.start [1/16] %v5648, 128
    %5783 = vxpose.xlu0.b32.cont [2/16] %v5652, 128
    %5784 = vxpose.xlu0.b32.cont [3/16] 0.0, 128
    %5785 = vxpose.xlu0.b32.cont [4/16] 0.0, 128
    %5786 = vxpose.xlu0.b32.cont [5/16] 0.0, 128
    %5787 = vxpose.xlu0.b32.cont [6/16] 0.0, 128
    %5788 = vxpose.xlu0.b32.cont [7/16] 0.0, 128
    %5789 = vxpose.xlu0.b32.cont [8/16] 0.0, 128
    %5790 = vxpose.xlu0.b32.cont [9/16] 0.0, 128
    %5791 = vxpose.xlu0.b32.cont [10/16] 0.0, 128
    %5792 = vxpose.xlu0.b32.cont [11/16] 0.0, 128
    %5793 = vxpose.xlu0.b32.cont [12/16] 0.0, 128
    %5794 = vxpose.xlu0.b32.cont [13/16] 0.0, 128
    %5795 = vxpose.xlu0.b32.cont [14/16] 0.0, 128
    %5796 = vxpose.xlu0.b32.cont [15/16] 0.0, 128
    %5797 = vxpose.xlu0.b32.end [16/16] 0.0, 128
    %v5798 = vpop.trf.xlu0
    %v5799 = vpop.trf.xlu0
    %v5800 = vpop.trf.xlu0
    %v5801 = vpop.trf.xlu0
    %v5802 = vpop.trf.xlu0
    %v5803 = vpop.trf.xlu0
    %v5804 = vpop.trf.xlu0
    %v5805 = vpop.trf.xlu0
    %v5806 = vpop.trf.xlu0
    %v5807 = vpop.trf.xlu0
    %v5808 = vpop.trf.xlu0
    %v5809 = vpop.trf.xlu0
    %v5810 = vpop.trf.xlu0
    %v5811 = vpop.trf.xlu0
    %v5812 = vpop.trf.xlu0
    %v5813 = vpop.trf.xlu0
    %5814 = vxpose.xlu0.b32.start [1/16] %v5656, 128
    %5815 = vxpose.xlu0.b32.cont [2/16] %v5660, 128
    %5816 = vxpose.xlu0.b32.cont [3/16] 0.0, 128
    %5817 = vxpose.xlu0.b32.cont [4/16] 0.0, 128
    %5818 = vxpose.xlu0.b32.cont [5/16] 0.0, 128
    %5819 = vxpose.xlu0.b32.cont [6/16] 0.0, 128
    %5820 = vxpose.xlu0.b32.cont [7/16] 0.0, 128
    %5821 = vxpose.xlu0.b32.cont [8/16] 0.0, 128
    %5822 = vxpose.xlu0.b32.cont [9/16] 0.0, 128
    %5823 = vxpose.xlu0.b32.cont [10/16] 0.0, 128
    %5824 = vxpose.xlu0.b32.cont [11/16] 0.0, 128
    %5825 = vxpose.xlu0.b32.cont [12/16] 0.0, 128
    %5826 = vxpose.xlu0.b32.cont [13/16] 0.0, 128
    %5827 = vxpose.xlu0.b32.cont [14/16] 0.0, 128
    %5828 = vxpose.xlu0.b32.cont [15/16] 0.0, 128
    %5829 = vxpose.xlu0.b32.end [16/16] 0.0, 128
    %v5830 = vpop.trf.xlu0
    %v5831 = vpop.trf.xlu0
    %v5832 = vpop.trf.xlu0
    %v5833 = vpop.trf.xlu0
    %v5834 = vpop.trf.xlu0
    %v5835 = vpop.trf.xlu0
    %v5836 = vpop.trf.xlu0
    %v5837 = vpop.trf.xlu0
    %v5838 = vpop.trf.xlu0
    %v5839 = vpop.trf.xlu0
    %v5840 = vpop.trf.xlu0
    %v5841 = vpop.trf.xlu0
    %v5842 = vpop.trf.xlu0
    %v5843 = vpop.trf.xlu0
    %v5844 = vpop.trf.xlu0
    %v5845 = vpop.trf.xlu0
    %5846 = vxpose.xlu0.b32.start [1/16] %v5664, 128
    %5847 = vxpose.xlu0.b32.cont [2/16] %v5668, 128
    %5848 = vxpose.xlu0.b32.cont [3/16] 0.0, 128
    %5849 = vxpose.xlu0.b32.cont [4/16] 0.0, 128
    %5850 = vxpose.xlu0.b32.cont [5/16] 0.0, 128
    %5851 = vxpose.xlu0.b32.cont [6/16] 0.0, 128
    %5852 = vxpose.xlu0.b32.cont [7/16] 0.0, 128
    %5853 = vxpose.xlu0.b32.cont [8/16] 0.0, 128
    %5854 = vxpose.xlu0.b32.cont [9/16] 0.0, 128
    %5855 = vxpose.xlu0.b32.cont [10/16] 0.0, 128
    %5856 = vxpose.xlu0.b32.cont [11/16] 0.0, 128
    %5857 = vxpose.xlu0.b32.cont [12/16] 0.0, 128
    %5858 = vxpose.xlu0.b32.cont [13/16] 0.0, 128
    %5859 = vxpose.xlu0.b32.cont [14/16] 0.0, 128
    %5860 = vxpose.xlu0.b32.cont [15/16] 0.0, 128
    %5861 = vxpose.xlu0.b32.end [16/16] 0.0, 128
    %v5862 = vpop.trf.xlu0
    %v5863 = vpop.trf.xlu0
    %v5864 = vpop.trf.xlu0
    %v5865 = vpop.trf.xlu0
    %v5866 = vpop.trf.xlu0
    %v5867 = vpop.trf.xlu0
    %v5868 = vpop.trf.xlu0
    %v5869 = vpop.trf.xlu0
    %v5870 = vpop.trf.xlu0
    %v5871 = vpop.trf.xlu0
    %v5872 = vpop.trf.xlu0
    %v5873 = vpop.trf.xlu0
    %v5874 = vpop.trf.xlu0
    %v5875 = vpop.trf.xlu0
    %v5876 = vpop.trf.xlu0
    %v5877 = vpop.trf.xlu0
    %5878 = vxpose.xlu0.b32.start [1/16] %v5672, 128
    %5879 = vxpose.xlu0.b32.cont [2/16] %v5676, 128
    %5880 = vxpose.xlu0.b32.cont [3/16] 0.0, 128
    %5881 = vxpose.xlu0.b32.cont [4/16] 0.0, 128
    %5882 = vxpose.xlu0.b32.cont [5/16] 0.0, 128
    %5883 = vxpose.xlu0.b32.cont [6/16] 0.0, 128
    %5884 = vxpose.xlu0.b32.cont [7/16] 0.0, 128
    %5885 = vxpose.xlu0.b32.cont [8/16] 0.0, 128
    %5886 = vxpose.xlu0.b32.cont [9/16] 0.0, 128
    %5887 = vxpose.xlu0.b32.cont [10/16] 0.0, 128
    %5888 = vxpose.xlu0.b32.cont [11/16] 0.0, 128
    %5889 = vxpose.xlu0.b32.cont [12/16] 0.0, 128
    %5890 = vxpose.xlu0.b32.cont [13/16] 0.0, 128
    %5891 = vxpose.xlu0.b32.cont [14/16] 0.0, 128
    %5892 = vxpose.xlu0.b32.cont [15/16] 0.0, 128
    %5893 = vxpose.xlu0.b32.end [16/16] 0.0, 128
    %v5894 = vpop.trf.xlu0
    %v5895 = vpop.trf.xlu0
    %v5896 = vpop.trf.xlu0
    %v5897 = vpop.trf.xlu0
    %v5898 = vpop.trf.xlu0
    %v5899 = vpop.trf.xlu0
    %v5900 = vpop.trf.xlu0
    %v5901 = vpop.trf.xlu0
    %v5902 = vpop.trf.xlu0
    %v5903 = vpop.trf.xlu0
    %v5904 = vpop.trf.xlu0
    %v5905 = vpop.trf.xlu0
    %v5906 = vpop.trf.xlu0
    %v5907 = vpop.trf.xlu0
    %v5908 = vpop.trf.xlu0
    %v5909 = vpop.trf.xlu0
    %5910 = vxpose.xlu0.b32.start [1/16] %v5680, 128
    %5911 = vxpose.xlu0.b32.cont [2/16] %v5684, 128
    %5912 = vxpose.xlu0.b32.cont [3/16] 0.0, 128
    %5913 = vxpose.xlu0.b32.cont [4/16] 0.0, 128
    %5914 = vxpose.xlu0.b32.cont [5/16] 0.0, 128
    %5915 = vxpose.xlu0.b32.cont [6/16] 0.0, 128
    %5916 = vxpose.xlu0.b32.cont [7/16] 0.0, 128
    %5917 = vxpose.xlu0.b32.cont [8/16] 0.0, 128
    %5918 = vxpose.xlu0.b32.cont [9/16] 0.0, 128
    %5919 = vxpose.xlu0.b32.cont [10/16] 0.0, 128
    %5920 = vxpose.xlu0.b32.cont [11/16] 0.0, 128
    %5921 = vxpose.xlu0.b32.cont [12/16] 0.0, 128
    %5922 = vxpose.xlu0.b32.cont [13/16] 0.0, 128
    %5923 = vxpose.xlu0.b32.cont [14/16] 0.0, 128
    %5924 = vxpose.xlu0.b32.cont [15/16] 0.0, 128
    %5925 = vxpose.xlu0.b32.end [16/16] 0.0, 128
    %v5926 = vpop.trf.xlu0
    %v5927 = vpop.trf.xlu0
    %v5928 = vpop.trf.xlu0
    %v5929 = vpop.trf.xlu0
    %v5930 = vpop.trf.xlu0
    %v5931 = vpop.trf.xlu0
    %v5932 = vpop.trf.xlu0
    %v5933 = vpop.trf.xlu0
    %v5934 = vpop.trf.xlu0
    %v5935 = vpop.trf.xlu0
    %v5936 = vpop.trf.xlu0
    %v5937 = vpop.trf.xlu0
    %v5938 = vpop.trf.xlu0
    %v5939 = vpop.trf.xlu0
    %v5940 = vpop.trf.xlu0
    %v5941 = vpop.trf.xlu0
    %v5943 = vsel %vm181, %v5702, 0
    %v5946 = vsel %vm181, %v5703, 0
    %v5949 = vsel %vm181, %v5734, 0
    %v5952 = vsel %vm181, %v5735, 0
    %v5955 = vsel %vm181, %v5766, 0
    %v5958 = vsel %vm181, %v5767, 0
    %v5961 = vsel %vm181, %v5798, 0
    %v5964 = vsel %vm181, %v5799, 0
    %v5967 = vsel %vm181, %v5830, 0
    %v5970 = vsel %vm181, %v5831, 0
    %v5973 = vsel %vm181, %v5862, 0
    %v5976 = vsel %vm181, %v5863, 0
    %v5979 = vsel %vm181, %v5894, 0
    %v5982 = vsel %vm181, %v5895, 0
    %v5985 = vsel %vm181, %v5926, 0
    %v5988 = vsel %vm181, %v5927, 0
    %5990 = vmatpush.msra.mxu0 0.0
    %5991 = vmatpush.msra.mxu0 0.0
    %5992 = vmatpush.msra.mxu0 0.0
    %5993 = vmatpush.msra.mxu0 0.0
    %5994 = vmatpush.msra.mxu0 0.0
    %5995 = vmatpush.msra.mxu0 0.0
    %5996 = vmatpush.msra.mxu0 0.0
    %5997 = vmatpush.msra.mxu0 0.0
    %5998 = vmatpush.msra.mxu0 0.0
    %5999 = vmatpush.msra.mxu0 0.0
    %6000 = vmatpush.msra.mxu0 0.0
    %6001 = vmatpush.msra.mxu0 0.0
    %6002 = vmatpush.msra.mxu0 0.0
    %6003 = vmatpush.msra.mxu0 0.0
    %v6004 = vand.u32 %v82, 4294901760
    %6005 = vmatpush.msra.mxu0 %v6004
    %v6006 = vand.u32 %v81, 4294901760
    %6007 = vmatpush.msra.mxu0 %v6006
    %v6008 = vand.u32 %v5943, 4294901760
    %v6009 = vsub.f32 %v5943, %v6008
    %v6010 = vand.u32 %v6009, 4294901760
    %v6011 = vsub.f32 %v6009, %v6010
    %v6012 = vand.u32 %v6011, 4294901760
    %6013 = vmatmul.f32.gmra.mxu0 %v6012
    %v6014 = vpop.f32.mrf.mxu0
    %v6015 = vadd.f32 0.0, %v6014
    %v6016 = vand.u32 %v5946, 4294901760
    %v6017 = vsub.f32 %v5946, %v6016
    %v6018 = vand.u32 %v6017, 4294901760
    %v6019 = vsub.f32 %v6017, %v6018
    %v6020 = vand.u32 %v6019, 4294901760
    %6021 = vmatmul.f32.gmra.mxu0 %v6020
    %v6022 = vpop.f32.mrf.mxu0
    %v6023 = vadd.f32 0.0, %v6022
    %v6024 = vand.u32 %v5949, 4294901760
    %v6025 = vsub.f32 %v5949, %v6024
    %v6026 = vand.u32 %v6025, 4294901760
    %v6027 = vsub.f32 %v6025, %v6026
    %v6028 = vand.u32 %v6027, 4294901760
    %6029 = vmatmul.f32.gmra.mxu0 %v6028
    %v6030 = vpop.f32.mrf.mxu0
    %v6031 = vadd.f32 0.0, %v6030
    %v6032 = vand.u32 %v5952, 4294901760
    %v6033 = vsub.f32 %v5952, %v6032
    %v6034 = vand.u32 %v6033, 4294901760
    %v6035 = vsub.f32 %v6033, %v6034
    %v6036 = vand.u32 %v6035, 4294901760
    %6037 = vmatmul.f32.gmra.mxu0 %v6036
    %v6038 = vpop.f32.mrf.mxu0
    %v6039 = vadd.f32 0.0, %v6038
    %v6040 = vand.u32 %v5955, 4294901760
    %v6041 = vsub.f32 %v5955, %v6040
    %v6042 = vand.u32 %v6041, 4294901760
    %v6043 = vsub.f32 %v6041, %v6042
    %v6044 = vand.u32 %v6043, 4294901760
    %6045 = vmatmul.f32.gmra.mxu0 %v6044
    %v6046 = vpop.f32.mrf.mxu0
    %v6047 = vadd.f32 0.0, %v6046
    %v6048 = vand.u32 %v5958, 4294901760
    %v6049 = vsub.f32 %v5958, %v6048
    %v6050 = vand.u32 %v6049, 4294901760
    %v6051 = vsub.f32 %v6049, %v6050
    %v6052 = vand.u32 %v6051, 4294901760
    %6053 = vmatmul.f32.gmra.mxu0 %v6052
    %v6054 = vpop.f32.mrf.mxu0
    %v6055 = vadd.f32 0.0, %v6054
    %v6056 = vand.u32 %v5961, 4294901760
    %v6057 = vsub.f32 %v5961, %v6056
    %v6058 = vand.u32 %v6057, 4294901760
    %v6059 = vsub.f32 %v6057, %v6058
    %v6060 = vand.u32 %v6059, 4294901760
    %6061 = vmatmul.f32.gmra.mxu0 %v6060
    %v6062 = vpop.f32.mrf.mxu0
    %v6063 = vadd.f32 0.0, %v6062
    %v6064 = vand.u32 %v5964, 4294901760
    %v6065 = vsub.f32 %v5964, %v6064
    %v6066 = vand.u32 %v6065, 4294901760
    %v6067 = vsub.f32 %v6065, %v6066
    %v6068 = vand.u32 %v6067, 4294901760
    %6069 = vmatmul.f32.gmra.mxu0 %v6068
    %v6070 = vpop.f32.mrf.mxu0
    %v6071 = vadd.f32 0.0, %v6070
    %v6072 = vand.u32 %v5967, 4294901760
    %v6073 = vsub.f32 %v5967, %v6072
    %v6074 = vand.u32 %v6073, 4294901760
    %v6075 = vsub.f32 %v6073, %v6074
    %v6076 = vand.u32 %v6075, 4294901760
    %6077 = vmatmul.f32.gmra.mxu0 %v6076
    %v6078 = vpop.f32.mrf.mxu0
    %v6079 = vadd.f32 0.0, %v6078
    %v6080 = vand.u32 %v5970, 4294901760
    %v6081 = vsub.f32 %v5970, %v6080
    %v6082 = vand.u32 %v6081, 4294901760
    %v6083 = vsub.f32 %v6081, %v6082
    %v6084 = vand.u32 %v6083, 4294901760
    %6085 = vmatmul.f32.gmra.mxu0 %v6084
    %v6086 = vpop.f32.mrf.mxu0
    %v6087 = vadd.f32 0.0, %v6086
    %v6088 = vand.u32 %v5973, 4294901760
    %v6089 = vsub.f32 %v5973, %v6088
    %v6090 = vand.u32 %v6089, 4294901760
    %v6091 = vsub.f32 %v6089, %v6090
    %v6092 = vand.u32 %v6091, 4294901760
    %6093 = vmatmul.f32.gmra.mxu0 %v6092
    %v6094 = vpop.f32.mrf.mxu0
    %v6095 = vadd.f32 0.0, %v6094
    %v6096 = vand.u32 %v5976, 4294901760
    %v6097 = vsub.f32 %v5976, %v6096
    %v6098 = vand.u32 %v6097, 4294901760
    %v6099 = vsub.f32 %v6097, %v6098
    %v6100 = vand.u32 %v6099, 4294901760
    %6101 = vmatmul.f32.gmra.mxu0 %v6100
    %v6102 = vpop.f32.mrf.mxu0
    %v6103 = vadd.f32 0.0, %v6102
    %v6104 = vand.u32 %v5979, 4294901760
    %v6105 = vsub.f32 %v5979, %v6104
    %v6106 = vand.u32 %v6105, 4294901760
    %v6107 = vsub.f32 %v6105, %v6106
    %v6108 = vand.u32 %v6107, 4294901760
    %6109 = vmatmul.f32.gmra.mxu0 %v6108
    %v6110 = vpop.f32.mrf.mxu0
    %v6111 = vadd.f32 0.0, %v6110
    %v6112 = vand.u32 %v5982, 4294901760
    %v6113 = vsub.f32 %v5982, %v6112
    %v6114 = vand.u32 %v6113, 4294901760
    %v6115 = vsub.f32 %v6113, %v6114
    %v6116 = vand.u32 %v6115, 4294901760
    %6117 = vmatmul.f32.gmra.mxu0 %v6116
    %v6118 = vpop.f32.mrf.mxu0
    %v6119 = vadd.f32 0.0, %v6118
    %v6120 = vand.u32 %v5985, 4294901760
    %v6121 = vsub.f32 %v5985, %v6120
    %v6122 = vand.u32 %v6121, 4294901760
    %v6123 = vsub.f32 %v6121, %v6122
    %v6124 = vand.u32 %v6123, 4294901760
    %6125 = vmatmul.f32.gmra.mxu0 %v6124
    %v6126 = vpop.f32.mrf.mxu0
    %v6127 = vadd.f32 0.0, %v6126
    %v6128 = vand.u32 %v5988, 4294901760
    %v6129 = vsub.f32 %v5988, %v6128
    %v6130 = vand.u32 %v6129, 4294901760
    %v6131 = vsub.f32 %v6129, %v6130
    %v6132 = vand.u32 %v6131, 4294901760
    %6133 = vmatmul.f32.gmra.mxu0 %v6132
    %v6134 = vpop.f32.mrf.mxu0
    %v6135 = vadd.f32 0.0, %v6134
    %6136 = vdwg.mxu0
    %6137 = vmatpush.msra.mxu0 0.0
    %6138 = vmatpush.msra.mxu0 0.0
    %6139 = vmatpush.msra.mxu0 0.0
    %6140 = vmatpush.msra.mxu0 0.0
    %6141 = vmatpush.msra.mxu0 0.0
    %6142 = vmatpush.msra.mxu0 0.0
    %6143 = vmatpush.msra.mxu0 0.0
    %6144 = vmatpush.msra.mxu0 0.0
    %6145 = vmatpush.msra.mxu0 0.0
    %6146 = vmatpush.msra.mxu0 0.0
    %6147 = vmatpush.msra.mxu0 0.0
    %6148 = vmatpush.msra.mxu0 0.0
    %6149 = vmatpush.msra.mxu0 0.0
    %6150 = vmatpush.msra.mxu0 0.0
    %v6151 = vand.u32 %v82, 4294901760
    %v6152 = vsub.f32 %v82, %v6151
    %v6153 = vand.u32 %v6152, 4294901760
    %v6154 = vsub.f32 %v6152, %v6153
    %v6155 = vand.u32 %v6154, 4294901760
    %6156 = vmatpush.msra.mxu0 %v6155
    %v6157 = vand.u32 %v81, 4294901760
    %v6158 = vsub.f32 %v81, %v6157
    %v6159 = vand.u32 %v6158, 4294901760
    %v6160 = vsub.f32 %v6158, %v6159
    %v6161 = vand.u32 %v6160, 4294901760
    %6162 = vmatpush.msra.mxu0 %v6161
    %v6163 = vand.u32 %v5943, 4294901760
    %6164 = vmatmul.f32.gmra.mxu0 %v6163
    %v6165 = vpop.f32.mrf.mxu0
    %v6166 = vadd.f32 %v6015, %v6165
    %v6167 = vand.u32 %v5946, 4294901760
    %6168 = vmatmul.f32.gmra.mxu0 %v6167
    %v6169 = vpop.f32.mrf.mxu0
    %v6170 = vadd.f32 %v6023, %v6169
    %v6171 = vand.u32 %v5949, 4294901760
    %6172 = vmatmul.f32.gmra.mxu0 %v6171
    %v6173 = vpop.f32.mrf.mxu0
    %v6174 = vadd.f32 %v6031, %v6173
    %v6175 = vand.u32 %v5952, 4294901760
    %6176 = vmatmul.f32.gmra.mxu0 %v6175
    %v6177 = vpop.f32.mrf.mxu0
    %v6178 = vadd.f32 %v6039, %v6177
    %v6179 = vand.u32 %v5955, 4294901760
    %6180 = vmatmul.f32.gmra.mxu0 %v6179
    %v6181 = vpop.f32.mrf.mxu0
    %v6182 = vadd.f32 %v6047, %v6181
    %v6183 = vand.u32 %v5958, 4294901760
    %6184 = vmatmul.f32.gmra.mxu0 %v6183
    %v6185 = vpop.f32.mrf.mxu0
    %v6186 = vadd.f32 %v6055, %v6185
    %v6187 = vand.u32 %v5961, 4294901760
    %6188 = vmatmul.f32.gmra.mxu0 %v6187
    %v6189 = vpop.f32.mrf.mxu0
    %v6190 = vadd.f32 %v6063, %v6189
    %v6191 = vand.u32 %v5964, 4294901760
    %6192 = vmatmul.f32.gmra.mxu0 %v6191
    %v6193 = vpop.f32.mrf.mxu0
    %v6194 = vadd.f32 %v6071, %v6193
    %v6195 = vand.u32 %v5967, 4294901760
    %6196 = vmatmul.f32.gmra.mxu0 %v6195
    %v6197 = vpop.f32.mrf.mxu0
    %v6198 = vadd.f32 %v6079, %v6197
    %v6199 = vand.u32 %v5970, 4294901760
    %6200 = vmatmul.f32.gmra.mxu0 %v6199
    %v6201 = vpop.f32.mrf.mxu0
    %v6202 = vadd.f32 %v6087, %v6201
    %v6203 = vand.u32 %v5973, 4294901760
    %6204 = vmatmul.f32.gmra.mxu0 %v6203
    %v6205 = vpop.f32.mrf.mxu0
    %v6206 = vadd.f32 %v6095, %v6205
    %v6207 = vand.u32 %v5976, 4294901760
    %6208 = vmatmul.f32.gmra.mxu0 %v6207
    %v6209 = vpop.f32.mrf.mxu0
    %v6210 = vadd.f32 %v6103, %v6209
    %v6211 = vand.u32 %v5979, 4294901760
    %6212 = vmatmul.f32.gmra.mxu0 %v6211
    %v6213 = vpop.f32.mrf.mxu0
    %v6214 = vadd.f32 %v6111, %v6213
    %v6215 = vand.u32 %v5982, 4294901760
    %6216 = vmatmul.f32.gmra.mxu0 %v6215
    %v6217 = vpop.f32.mrf.mxu0
    %v6218 = vadd.f32 %v6119, %v6217
    %v6219 = vand.u32 %v5985, 4294901760
    %6220 = vmatmul.f32.gmra.mxu0 %v6219
    %v6221 = vpop.f32.mrf.mxu0
    %v6222 = vadd.f32 %v6127, %v6221
    %v6223 = vand.u32 %v5988, 4294901760
    %6224 = vmatmul.f32.gmra.mxu0 %v6223
    %v6225 = vpop.f32.mrf.mxu0
    %v6226 = vadd.f32 %v6135, %v6225
    %6227 = vdwg.mxu0
    %6228 = vmatpush.msra.mxu0 0.0
    %6229 = vmatpush.msra.mxu0 0.0
    %6230 = vmatpush.msra.mxu0 0.0
    %6231 = vmatpush.msra.mxu0 0.0
    %6232 = vmatpush.msra.mxu0 0.0
    %6233 = vmatpush.msra.mxu0 0.0
    %6234 = vmatpush.msra.mxu0 0.0
    %6235 = vmatpush.msra.mxu0 0.0
    %6236 = vmatpush.msra.mxu0 0.0
    %6237 = vmatpush.msra.mxu0 0.0
    %6238 = vmatpush.msra.mxu0 0.0
    %6239 = vmatpush.msra.mxu0 0.0
    %6240 = vmatpush.msra.mxu0 0.0
    %6241 = vmatpush.msra.mxu0 0.0
    %v6242 = vand.u32 %v82, 4294901760
    %v6243 = vsub.f32 %v82, %v6242
    %6244 = vmatpush.msra.mxu0 %v6243
    %v6245 = vand.u32 %v81, 4294901760
    %v6246 = vsub.f32 %v81, %v6245
    %6247 = vmatpush.msra.mxu0 %v6246
    %v6248 = vand.u32 %v5943, 4294901760
    %v6249 = vsub.f32 %v5943, %v6248
    %6250 = vmatmul.f32.gmra.mxu0 %v6249
    %v6251 = vpop.f32.mrf.mxu0
    %v6252 = vadd.f32 %v6166, %v6251
    %v6253 = vand.u32 %v5946, 4294901760
    %v6254 = vsub.f32 %v5946, %v6253
    %6255 = vmatmul.f32.gmra.mxu0 %v6254
    %v6256 = vpop.f32.mrf.mxu0
    %v6257 = vadd.f32 %v6170, %v6256
    %v6258 = vand.u32 %v5949, 4294901760
    %v6259 = vsub.f32 %v5949, %v6258
    %6260 = vmatmul.f32.gmra.mxu0 %v6259
    %v6261 = vpop.f32.mrf.mxu0
    %v6262 = vadd.f32 %v6174, %v6261
    %v6263 = vand.u32 %v5952, 4294901760
    %v6264 = vsub.f32 %v5952, %v6263
    %6265 = vmatmul.f32.gmra.mxu0 %v6264
    %v6266 = vpop.f32.mrf.mxu0
    %v6267 = vadd.f32 %v6178, %v6266
    %v6268 = vand.u32 %v5955, 4294901760
    %v6269 = vsub.f32 %v5955, %v6268
    %6270 = vmatmul.f32.gmra.mxu0 %v6269
    %v6271 = vpop.f32.mrf.mxu0
    %v6272 = vadd.f32 %v6182, %v6271
    %v6273 = vand.u32 %v5958, 4294901760
    %v6274 = vsub.f32 %v5958, %v6273
    %6275 = vmatmul.f32.gmra.mxu0 %v6274
    %v6276 = vpop.f32.mrf.mxu0
    %v6277 = vadd.f32 %v6186, %v6276
    %v6278 = vand.u32 %v5961, 4294901760
    %v6279 = vsub.f32 %v5961, %v6278
    %6280 = vmatmul.f32.gmra.mxu0 %v6279
    %v6281 = vpop.f32.mrf.mxu0
    %v6282 = vadd.f32 %v6190, %v6281
    %v6283 = vand.u32 %v5964, 4294901760
    %v6284 = vsub.f32 %v5964, %v6283
    %6285 = vmatmul.f32.gmra.mxu0 %v6284
    %v6286 = vpop.f32.mrf.mxu0
    %v6287 = vadd.f32 %v6194, %v6286
    %v6288 = vand.u32 %v5967, 4294901760
    %v6289 = vsub.f32 %v5967, %v6288
    %6290 = vmatmul.f32.gmra.mxu0 %v6289
    %v6291 = vpop.f32.mrf.mxu0
    %v6292 = vadd.f32 %v6198, %v6291
    %v6293 = vand.u32 %v5970, 4294901760
    %v6294 = vsub.f32 %v5970, %v6293
    %6295 = vmatmul.f32.gmra.mxu0 %v6294
    %v6296 = vpop.f32.mrf.mxu0
    %v6297 = vadd.f32 %v6202, %v6296
    %v6298 = vand.u32 %v5973, 4294901760
    %v6299 = vsub.f32 %v5973, %v6298
    %6300 = vmatmul.f32.gmra.mxu0 %v6299
    %v6301 = vpop.f32.mrf.mxu0
    %v6302 = vadd.f32 %v6206, %v6301
    %v6303 = vand.u32 %v5976, 4294901760
    %v6304 = vsub.f32 %v5976, %v6303
    %6305 = vmatmul.f32.gmra.mxu0 %v6304
    %v6306 = vpop.f32.mrf.mxu0
    %v6307 = vadd.f32 %v6210, %v6306
    %v6308 = vand.u32 %v5979, 4294901760
    %v6309 = vsub.f32 %v5979, %v6308
    %6310 = vmatmul.f32.gmra.mxu0 %v6309
    %v6311 = vpop.f32.mrf.mxu0
    %v6312 = vadd.f32 %v6214, %v6311
    %v6313 = vand.u32 %v5982, 4294901760
    %v6314 = vsub.f32 %v5982, %v6313
    %6315 = vmatmul.f32.gmra.mxu0 %v6314
    %v6316 = vpop.f32.mrf.mxu0
    %v6317 = vadd.f32 %v6218, %v6316
    %v6318 = vand.u32 %v5985, 4294901760
    %v6319 = vsub.f32 %v5985, %v6318
    %6320 = vmatmul.f32.gmra.mxu0 %v6319
    %v6321 = vpop.f32.mrf.mxu0
    %v6322 = vadd.f32 %v6222, %v6321
    %v6323 = vand.u32 %v5988, 4294901760
    %v6324 = vsub.f32 %v5988, %v6323
    %6325 = vmatmul.f32.gmra.mxu0 %v6324
    %v6326 = vpop.f32.mrf.mxu0
    %v6327 = vadd.f32 %v6226, %v6326
    %6328 = vdwg.mxu0
    %6329 = vmatpush.msra.mxu0 0.0
    %6330 = vmatpush.msra.mxu0 0.0
    %6331 = vmatpush.msra.mxu0 0.0
    %6332 = vmatpush.msra.mxu0 0.0
    %6333 = vmatpush.msra.mxu0 0.0
    %6334 = vmatpush.msra.mxu0 0.0
    %6335 = vmatpush.msra.mxu0 0.0
    %6336 = vmatpush.msra.mxu0 0.0
    %6337 = vmatpush.msra.mxu0 0.0
    %6338 = vmatpush.msra.mxu0 0.0
    %6339 = vmatpush.msra.mxu0 0.0
    %6340 = vmatpush.msra.mxu0 0.0
    %6341 = vmatpush.msra.mxu0 0.0
    %6342 = vmatpush.msra.mxu0 0.0
    %v6343 = vand.u32 %v82, 4294901760
    %6344 = vmatpush.msra.mxu0 %v6343
    %v6345 = vand.u32 %v81, 4294901760
    %6346 = vmatpush.msra.mxu0 %v6345
    %v6347 = vand.u32 %v5943, 4294901760
    %v6348 = vsub.f32 %v5943, %v6347
    %v6349 = vand.u32 %v6348, 4294901760
    %6350 = vmatmul.f32.gmra.mxu0 %v6349
    %v6351 = vpop.f32.mrf.mxu0
    %v6352 = vadd.f32 %v6252, %v6351
    %v6353 = vand.u32 %v5946, 4294901760
    %v6354 = vsub.f32 %v5946, %v6353
    %v6355 = vand.u32 %v6354, 4294901760
    %6356 = vmatmul.f32.gmra.mxu0 %v6355
    %v6357 = vpop.f32.mrf.mxu0
    %v6358 = vadd.f32 %v6257, %v6357
    %v6359 = vand.u32 %v5949, 4294901760
    %v6360 = vsub.f32 %v5949, %v6359
    %v6361 = vand.u32 %v6360, 4294901760
    %6362 = vmatmul.f32.gmra.mxu0 %v6361
    %v6363 = vpop.f32.mrf.mxu0
    %v6364 = vadd.f32 %v6262, %v6363
    %v6365 = vand.u32 %v5952, 4294901760
    %v6366 = vsub.f32 %v5952, %v6365
    %v6367 = vand.u32 %v6366, 4294901760
    %6368 = vmatmul.f32.gmra.mxu0 %v6367
    %v6369 = vpop.f32.mrf.mxu0
    %v6370 = vadd.f32 %v6267, %v6369
    %v6371 = vand.u32 %v5955, 4294901760
    %v6372 = vsub.f32 %v5955, %v6371
    %v6373 = vand.u32 %v6372, 4294901760
    %6374 = vmatmul.f32.gmra.mxu0 %v6373
    %v6375 = vpop.f32.mrf.mxu0
    %v6376 = vadd.f32 %v6272, %v6375
    %v6377 = vand.u32 %v5958, 4294901760
    %v6378 = vsub.f32 %v5958, %v6377
    %v6379 = vand.u32 %v6378, 4294901760
    %6380 = vmatmul.f32.gmra.mxu0 %v6379
    %v6381 = vpop.f32.mrf.mxu0
    %v6382 = vadd.f32 %v6277, %v6381
    %v6383 = vand.u32 %v5961, 4294901760
    %v6384 = vsub.f32 %v5961, %v6383
    %v6385 = vand.u32 %v6384, 4294901760
    %6386 = vmatmul.f32.gmra.mxu0 %v6385
    %v6387 = vpop.f32.mrf.mxu0
    %v6388 = vadd.f32 %v6282, %v6387
    %v6389 = vand.u32 %v5964, 4294901760
    %v6390 = vsub.f32 %v5964, %v6389
    %v6391 = vand.u32 %v6390, 4294901760
    %6392 = vmatmul.f32.gmra.mxu0 %v6391
    %v6393 = vpop.f32.mrf.mxu0
    %v6394 = vadd.f32 %v6287, %v6393
    %v6395 = vand.u32 %v5967, 4294901760
    %v6396 = vsub.f32 %v5967, %v6395
    %v6397 = vand.u32 %v6396, 4294901760
    %6398 = vmatmul.f32.gmra.mxu0 %v6397
    %v6399 = vpop.f32.mrf.mxu0
    %v6400 = vadd.f32 %v6292, %v6399
    %v6401 = vand.u32 %v5970, 4294901760
    %v6402 = vsub.f32 %v5970, %v6401
    %v6403 = vand.u32 %v6402, 4294901760
    %6404 = vmatmul.f32.gmra.mxu0 %v6403
    %v6405 = vpop.f32.mrf.mxu0
    %v6406 = vadd.f32 %v6297, %v6405
    %v6407 = vand.u32 %v5973, 4294901760
    %v6408 = vsub.f32 %v5973, %v6407
    %v6409 = vand.u32 %v6408, 4294901760
    %6410 = vmatmul.f32.gmra.mxu0 %v6409
    %v6411 = vpop.f32.mrf.mxu0
    %v6412 = vadd.f32 %v6302, %v6411
    %v6413 = vand.u32 %v5976, 4294901760
    %v6414 = vsub.f32 %v5976, %v6413
    %v6415 = vand.u32 %v6414, 4294901760
    %6416 = vmatmul.f32.gmra.mxu0 %v6415
    %v6417 = vpop.f32.mrf.mxu0
    %v6418 = vadd.f32 %v6307, %v6417
    %v6419 = vand.u32 %v5979, 4294901760
    %v6420 = vsub.f32 %v5979, %v6419
    %v6421 = vand.u32 %v6420, 4294901760
    %6422 = vmatmul.f32.gmra.mxu0 %v6421
    %v6423 = vpop.f32.mrf.mxu0
    %v6424 = vadd.f32 %v6312, %v6423
    %v6425 = vand.u32 %v5982, 4294901760
    %v6426 = vsub.f32 %v5982, %v6425
    %v6427 = vand.u32 %v6426, 4294901760
    %6428 = vmatmul.f32.gmra.mxu0 %v6427
    %v6429 = vpop.f32.mrf.mxu0
    %v6430 = vadd.f32 %v6317, %v6429
    %v6431 = vand.u32 %v5985, 4294901760
    %v6432 = vsub.f32 %v5985, %v6431
    %v6433 = vand.u32 %v6432, 4294901760
    %6434 = vmatmul.f32.gmra.mxu0 %v6433
    %v6435 = vpop.f32.mrf.mxu0
    %v6436 = vadd.f32 %v6322, %v6435
    %v6437 = vand.u32 %v5988, 4294901760
    %v6438 = vsub.f32 %v5988, %v6437
    %v6439 = vand.u32 %v6438, 4294901760
    %6440 = vmatmul.f32.gmra.mxu0 %v6439
    %v6441 = vpop.f32.mrf.mxu0
    %v6442 = vadd.f32 %v6327, %v6441
    %6443 = vdwg.mxu0
    %6444 = vmatpush.msra.mxu0 0.0
    %6445 = vmatpush.msra.mxu0 0.0
    %6446 = vmatpush.msra.mxu0 0.0
    %6447 = vmatpush.msra.mxu0 0.0
    %6448 = vmatpush.msra.mxu0 0.0
    %6449 = vmatpush.msra.mxu0 0.0
    %6450 = vmatpush.msra.mxu0 0.0
    %6451 = vmatpush.msra.mxu0 0.0
    %6452 = vmatpush.msra.mxu0 0.0
    %6453 = vmatpush.msra.mxu0 0.0
    %6454 = vmatpush.msra.mxu0 0.0
    %6455 = vmatpush.msra.mxu0 0.0
    %6456 = vmatpush.msra.mxu0 0.0
    %6457 = vmatpush.msra.mxu0 0.0
    %v6458 = vand.u32 %v82, 4294901760
    %v6459 = vsub.f32 %v82, %v6458
    %v6460 = vand.u32 %v6459, 4294901760
    %6461 = vmatpush.msra.mxu0 %v6460
    %v6462 = vand.u32 %v81, 4294901760
    %v6463 = vsub.f32 %v81, %v6462
    %v6464 = vand.u32 %v6463, 4294901760
    %6465 = vmatpush.msra.mxu0 %v6464
    %v6466 = vand.u32 %v5943, 4294901760
    %6467 = vmatmul.f32.gmra.mxu0 %v6466
    %v6468 = vpop.f32.mrf.mxu0
    %v6469 = vadd.f32 %v6352, %v6468
    %v6470 = vand.u32 %v5946, 4294901760
    %6471 = vmatmul.f32.gmra.mxu0 %v6470
    %v6472 = vpop.f32.mrf.mxu0
    %v6473 = vadd.f32 %v6358, %v6472
    %v6474 = vand.u32 %v5949, 4294901760
    %6475 = vmatmul.f32.gmra.mxu0 %v6474
    %v6476 = vpop.f32.mrf.mxu0
    %v6477 = vadd.f32 %v6364, %v6476
    %v6478 = vand.u32 %v5952, 4294901760
    %6479 = vmatmul.f32.gmra.mxu0 %v6478
    %v6480 = vpop.f32.mrf.mxu0
    %v6481 = vadd.f32 %v6370, %v6480
    %v6482 = vand.u32 %v5955, 4294901760
    %6483 = vmatmul.f32.gmra.mxu0 %v6482
    %v6484 = vpop.f32.mrf.mxu0
    %v6485 = vadd.f32 %v6376, %v6484
    %v6486 = vand.u32 %v5958, 4294901760
    %6487 = vmatmul.f32.gmra.mxu0 %v6486
    %v6488 = vpop.f32.mrf.mxu0
    %v6489 = vadd.f32 %v6382, %v6488
    %v6490 = vand.u32 %v5961, 4294901760
    %6491 = vmatmul.f32.gmra.mxu0 %v6490
    %v6492 = vpop.f32.mrf.mxu0
    %v6493 = vadd.f32 %v6388, %v6492
    %v6494 = vand.u32 %v5964, 4294901760
    %6495 = vmatmul.f32.gmra.mxu0 %v6494
    %v6496 = vpop.f32.mrf.mxu0
    %v6497 = vadd.f32 %v6394, %v6496
    %v6498 = vand.u32 %v5967, 4294901760
    %6499 = vmatmul.f32.gmra.mxu0 %v6498
    %v6500 = vpop.f32.mrf.mxu0
    %v6501 = vadd.f32 %v6400, %v6500
    %v6502 = vand.u32 %v5970, 4294901760
    %6503 = vmatmul.f32.gmra.mxu0 %v6502
    %v6504 = vpop.f32.mrf.mxu0
    %v6505 = vadd.f32 %v6406, %v6504
    %v6506 = vand.u32 %v5973, 4294901760
    %6507 = vmatmul.f32.gmra.mxu0 %v6506
    %v6508 = vpop.f32.mrf.mxu0
    %v6509 = vadd.f32 %v6412, %v6508
    %v6510 = vand.u32 %v5976, 4294901760
    %6511 = vmatmul.f32.gmra.mxu0 %v6510
    %v6512 = vpop.f32.mrf.mxu0
    %v6513 = vadd.f32 %v6418, %v6512
    %v6514 = vand.u32 %v5979, 4294901760
    %6515 = vmatmul.f32.gmra.mxu0 %v6514
    %v6516 = vpop.f32.mrf.mxu0
    %v6517 = vadd.f32 %v6424, %v6516
    %v6518 = vand.u32 %v5982, 4294901760
    %6519 = vmatmul.f32.gmra.mxu0 %v6518
    %v6520 = vpop.f32.mrf.mxu0
    %v6521 = vadd.f32 %v6430, %v6520
    %v6522 = vand.u32 %v5985, 4294901760
    %6523 = vmatmul.f32.gmra.mxu0 %v6522
    %v6524 = vpop.f32.mrf.mxu0
    %v6525 = vadd.f32 %v6436, %v6524
    %v6526 = vand.u32 %v5988, 4294901760
    %6527 = vmatmul.f32.gmra.mxu0 %v6526
    %v6528 = vpop.f32.mrf.mxu0
    %v6529 = vadd.f32 %v6442, %v6528
    %6530 = vdwg.mxu0
    %6531 = vmatpush.msra.mxu0 0.0
    %6532 = vmatpush.msra.mxu0 0.0
    %6533 = vmatpush.msra.mxu0 0.0
    %6534 = vmatpush.msra.mxu0 0.0
    %6535 = vmatpush.msra.mxu0 0.0
    %6536 = vmatpush.msra.mxu0 0.0
    %6537 = vmatpush.msra.mxu0 0.0
    %6538 = vmatpush.msra.mxu0 0.0
    %6539 = vmatpush.msra.mxu0 0.0
    %6540 = vmatpush.msra.mxu0 0.0
    %6541 = vmatpush.msra.mxu0 0.0
    %6542 = vmatpush.msra.mxu0 0.0
    %6543 = vmatpush.msra.mxu0 0.0
    %6544 = vmatpush.msra.mxu0 0.0
    %v6545 = vand.u32 %v82, 4294901760
    %6546 = vmatpush.msra.mxu0 %v6545
    %v6547 = vand.u32 %v81, 4294901760
    %6548 = vmatpush.msra.mxu0 %v6547
    %v6549 = vand.u32 %v5943, 4294901760
    %6550 = vmatmul.f32.gmra.mxu0 %v6549
    %v6551 = vpop.f32.mrf.mxu0
    %v6552 = vadd.f32 %v6469, %v6551
    %v6553 = vand.u32 %v5946, 4294901760
    %6554 = vmatmul.f32.gmra.mxu0 %v6553
    %v6555 = vpop.f32.mrf.mxu0
    %v6556 = vadd.f32 %v6473, %v6555
    %v6557 = vand.u32 %v5949, 4294901760
    %6558 = vmatmul.f32.gmra.mxu0 %v6557
    %v6559 = vpop.f32.mrf.mxu0
    %v6560 = vadd.f32 %v6477, %v6559
    %v6561 = vand.u32 %v5952, 4294901760
    %6562 = vmatmul.f32.gmra.mxu0 %v6561
    %v6563 = vpop.f32.mrf.mxu0
    %v6564 = vadd.f32 %v6481, %v6563
    %v6565 = vand.u32 %v5955, 4294901760
    %6566 = vmatmul.f32.gmra.mxu0 %v6565
    %v6567 = vpop.f32.mrf.mxu0
    %v6568 = vadd.f32 %v6485, %v6567
    %v6569 = vand.u32 %v5958, 4294901760
    %6570 = vmatmul.f32.gmra.mxu0 %v6569
    %v6571 = vpop.f32.mrf.mxu0
    %v6572 = vadd.f32 %v6489, %v6571
    %v6573 = vand.u32 %v5961, 4294901760
    %6574 = vmatmul.f32.gmra.mxu0 %v6573
    %v6575 = vpop.f32.mrf.mxu0
    %v6576 = vadd.f32 %v6493, %v6575
    %v6577 = vand.u32 %v5964, 4294901760
    %6578 = vmatmul.f32.gmra.mxu0 %v6577
    %v6579 = vpop.f32.mrf.mxu0
    %v6580 = vadd.f32 %v6497, %v6579
    %v6581 = vand.u32 %v5967, 4294901760
    %6582 = vmatmul.f32.gmra.mxu0 %v6581
    %v6583 = vpop.f32.mrf.mxu0
    %v6584 = vadd.f32 %v6501, %v6583
    %v6585 = vand.u32 %v5970, 4294901760
    %6586 = vmatmul.f32.gmra.mxu0 %v6585
    %v6587 = vpop.f32.mrf.mxu0
    %v6588 = vadd.f32 %v6505, %v6587
    %v6589 = vand.u32 %v5973, 4294901760
    %6590 = vmatmul.f32.gmra.mxu0 %v6589
    %v6591 = vpop.f32.mrf.mxu0
    %v6592 = vadd.f32 %v6509, %v6591
    %v6593 = vand.u32 %v5976, 4294901760
    %6594 = vmatmul.f32.gmra.mxu0 %v6593
    %v6595 = vpop.f32.mrf.mxu0
    %v6596 = vadd.f32 %v6513, %v6595
    %v6597 = vand.u32 %v5979, 4294901760
    %6598 = vmatmul.f32.gmra.mxu0 %v6597
    %v6599 = vpop.f32.mrf.mxu0
    %v6600 = vadd.f32 %v6517, %v6599
    %v6601 = vand.u32 %v5982, 4294901760
    %6602 = vmatmul.f32.gmra.mxu0 %v6601
    %v6603 = vpop.f32.mrf.mxu0
    %v6604 = vadd.f32 %v6521, %v6603
    %v6605 = vand.u32 %v5985, 4294901760
    %6606 = vmatmul.f32.gmra.mxu0 %v6605
    %v6607 = vpop.f32.mrf.mxu0
    %v6608 = vadd.f32 %v6525, %v6607
    %v6609 = vand.u32 %v5988, 4294901760
    %6610 = vmatmul.f32.gmra.mxu0 %v6609
    %v6611 = vpop.f32.mrf.mxu0
    %v6612 = vadd.f32 %v6529, %v6611
    %6613 = vdwg.mxu0
    %v6614 = vmul.f32 %v117, %v165
    %v6615 = vmul.f32 %v118, %v166
    %v6616 = vmul.f32 %v119, %v167
    %v6617 = vmul.f32 %v120, %v168
    %v6618 = vmul.f32 %v121, %v169
    %v6619 = vmul.f32 %v122, %v170
    %v6620 = vmul.f32 %v123, %v171
    %v6621 = vmul.f32 %v124, %v172
    %v6622 = vmul.f32 %v125, %v173
    %v6623 = vmul.f32 %v126, %v174
    %v6624 = vmul.f32 %v127, %v175
    %v6625 = vmul.f32 %v128, %v176
    %v6626 = vmul.f32 %v129, %v177
    %v6627 = vmul.f32 %v130, %v178
    %v6628 = vmul.f32 %v131, %v179
    %v6629 = vmul.f32 %v132, %v180
    %v6631 = vsel %vm181, %v6614, 0
    %v6634 = vsel %vm181, %v6615, 0
    %v6637 = vsel %vm181, %v6616, 0
    %v6640 = vsel %vm181, %v6617, 0
    %v6643 = vsel %vm181, %v6618, 0
    %v6646 = vsel %vm181, %v6619, 0
    %v6649 = vsel %vm181, %v6620, 0
    %v6652 = vsel %vm181, %v6621, 0
    %v6655 = vsel %vm181, %v6622, 0
    %v6658 = vsel %vm181, %v6623, 0
    %v6661 = vsel %vm181, %v6624, 0
    %v6664 = vsel %vm181, %v6625, 0
    %v6667 = vsel %vm181, %v6626, 0
    %v6670 = vsel %vm181, %v6627, 0
    %v6673 = vsel %vm181, %v6628, 0
    %v6676 = vsel %vm181, %v6629, 0
    %6678 = vmatpush.msra.mxu0 0.0
    %6679 = vmatpush.msra.mxu0 0.0
    %6680 = vmatpush.msra.mxu0 0.0
    %6681 = vmatpush.msra.mxu0 0.0
    %6682 = vmatpush.msra.mxu0 0.0
    %6683 = vmatpush.msra.mxu0 0.0
    %6684 = vmatpush.msra.mxu0 0.0
    %6685 = vmatpush.msra.mxu0 0.0
    %6686 = vmatpush.msra.mxu0 0.0
    %6687 = vmatpush.msra.mxu0 0.0
    %6688 = vmatpush.msra.mxu0 0.0
    %6689 = vmatpush.msra.mxu0 0.0
    %6690 = vmatpush.msra.mxu0 0.0
    %6691 = vmatpush.msra.mxu0 0.0
    %v6692 = vand.u32 %v84, 4294901760
    %6693 = vmatpush.msra.mxu0 %v6692
    %v6694 = vand.u32 %v83, 4294901760
    %6695 = vmatpush.msra.mxu0 %v6694
    %v6696 = vand.u32 %v6631, 4294901760
    %v6697 = vsub.f32 %v6631, %v6696
    %v6698 = vand.u32 %v6697, 4294901760
    %v6699 = vsub.f32 %v6697, %v6698
    %v6700 = vand.u32 %v6699, 4294901760
    %6701 = vmatmul.f32.gmra.mxu0 %v6700
    %v6702 = vpop.f32.mrf.mxu0
    %v6703 = vadd.f32 0.0, %v6702
    %v6704 = vand.u32 %v6634, 4294901760
    %v6705 = vsub.f32 %v6634, %v6704
    %v6706 = vand.u32 %v6705, 4294901760
    %v6707 = vsub.f32 %v6705, %v6706
    %v6708 = vand.u32 %v6707, 4294901760
    %6709 = vmatmul.f32.gmra.mxu0 %v6708
    %v6710 = vpop.f32.mrf.mxu0
    %v6711 = vadd.f32 0.0, %v6710
    %v6712 = vand.u32 %v6637, 4294901760
    %v6713 = vsub.f32 %v6637, %v6712
    %v6714 = vand.u32 %v6713, 4294901760
    %v6715 = vsub.f32 %v6713, %v6714
    %v6716 = vand.u32 %v6715, 4294901760
    %6717 = vmatmul.f32.gmra.mxu0 %v6716
    %v6718 = vpop.f32.mrf.mxu0
    %v6719 = vadd.f32 0.0, %v6718
    %v6720 = vand.u32 %v6640, 4294901760
    %v6721 = vsub.f32 %v6640, %v6720
    %v6722 = vand.u32 %v6721, 4294901760
    %v6723 = vsub.f32 %v6721, %v6722
    %v6724 = vand.u32 %v6723, 4294901760
    %6725 = vmatmul.f32.gmra.mxu0 %v6724
    %v6726 = vpop.f32.mrf.mxu0
    %v6727 = vadd.f32 0.0, %v6726
    %v6728 = vand.u32 %v6643, 4294901760
    %v6729 = vsub.f32 %v6643, %v6728
    %v6730 = vand.u32 %v6729, 4294901760
    %v6731 = vsub.f32 %v6729, %v6730
    %v6732 = vand.u32 %v6731, 4294901760
    %6733 = vmatmul.f32.gmra.mxu0 %v6732
    %v6734 = vpop.f32.mrf.mxu0
    %v6735 = vadd.f32 0.0, %v6734
    %v6736 = vand.u32 %v6646, 4294901760
    %v6737 = vsub.f32 %v6646, %v6736
    %v6738 = vand.u32 %v6737, 4294901760
    %v6739 = vsub.f32 %v6737, %v6738
    %v6740 = vand.u32 %v6739, 4294901760
    %6741 = vmatmul.f32.gmra.mxu0 %v6740
    %v6742 = vpop.f32.mrf.mxu0
    %v6743 = vadd.f32 0.0, %v6742
    %v6744 = vand.u32 %v6649, 4294901760
    %v6745 = vsub.f32 %v6649, %v6744
    %v6746 = vand.u32 %v6745, 4294901760
    %v6747 = vsub.f32 %v6745, %v6746
    %v6748 = vand.u32 %v6747, 4294901760
    %6749 = vmatmul.f32.gmra.mxu0 %v6748
    %v6750 = vpop.f32.mrf.mxu0
    %v6751 = vadd.f32 0.0, %v6750
    %v6752 = vand.u32 %v6652, 4294901760
    %v6753 = vsub.f32 %v6652, %v6752
    %v6754 = vand.u32 %v6753, 4294901760
    %v6755 = vsub.f32 %v6753, %v6754
    %v6756 = vand.u32 %v6755, 4294901760
    %6757 = vmatmul.f32.gmra.mxu0 %v6756
    %v6758 = vpop.f32.mrf.mxu0
    %v6759 = vadd.f32 0.0, %v6758
    %v6760 = vand.u32 %v6655, 4294901760
    %v6761 = vsub.f32 %v6655, %v6760
    %v6762 = vand.u32 %v6761, 4294901760
    %v6763 = vsub.f32 %v6761, %v6762
    %v6764 = vand.u32 %v6763, 4294901760
    %6765 = vmatmul.f32.gmra.mxu0 %v6764
    %v6766 = vpop.f32.mrf.mxu0
    %v6767 = vadd.f32 0.0, %v6766
    %v6768 = vand.u32 %v6658, 4294901760
    %v6769 = vsub.f32 %v6658, %v6768
    %v6770 = vand.u32 %v6769, 4294901760
    %v6771 = vsub.f32 %v6769, %v6770
    %v6772 = vand.u32 %v6771, 4294901760
    %6773 = vmatmul.f32.gmra.mxu0 %v6772
    %v6774 = vpop.f32.mrf.mxu0
    %v6775 = vadd.f32 0.0, %v6774
    %v6776 = vand.u32 %v6661, 4294901760
    %v6777 = vsub.f32 %v6661, %v6776
    %v6778 = vand.u32 %v6777, 4294901760
    %v6779 = vsub.f32 %v6777, %v6778
    %v6780 = vand.u32 %v6779, 4294901760
    %6781 = vmatmul.f32.gmra.mxu0 %v6780
    %v6782 = vpop.f32.mrf.mxu0
    %v6783 = vadd.f32 0.0, %v6782
    %v6784 = vand.u32 %v6664, 4294901760
    %v6785 = vsub.f32 %v6664, %v6784
    %v6786 = vand.u32 %v6785, 4294901760
    %v6787 = vsub.f32 %v6785, %v6786
    %v6788 = vand.u32 %v6787, 4294901760
    %6789 = vmatmul.f32.gmra.mxu0 %v6788
    %v6790 = vpop.f32.mrf.mxu0
    %v6791 = vadd.f32 0.0, %v6790
    %v6792 = vand.u32 %v6667, 4294901760
    %v6793 = vsub.f32 %v6667, %v6792
    %v6794 = vand.u32 %v6793, 4294901760
    %v6795 = vsub.f32 %v6793, %v6794
    %v6796 = vand.u32 %v6795, 4294901760
    %6797 = vmatmul.f32.gmra.mxu0 %v6796
    %v6798 = vpop.f32.mrf.mxu0
    %v6799 = vadd.f32 0.0, %v6798
    %v6800 = vand.u32 %v6670, 4294901760
    %v6801 = vsub.f32 %v6670, %v6800
    %v6802 = vand.u32 %v6801, 4294901760
    %v6803 = vsub.f32 %v6801, %v6802
    %v6804 = vand.u32 %v6803, 4294901760
    %6805 = vmatmul.f32.gmra.mxu0 %v6804
    %v6806 = vpop.f32.mrf.mxu0
    %v6807 = vadd.f32 0.0, %v6806
    %v6808 = vand.u32 %v6673, 4294901760
    %v6809 = vsub.f32 %v6673, %v6808
    %v6810 = vand.u32 %v6809, 4294901760
    %v6811 = vsub.f32 %v6809, %v6810
    %v6812 = vand.u32 %v6811, 4294901760
    %6813 = vmatmul.f32.gmra.mxu0 %v6812
    %v6814 = vpop.f32.mrf.mxu0
    %v6815 = vadd.f32 0.0, %v6814
    %v6816 = vand.u32 %v6676, 4294901760
    %v6817 = vsub.f32 %v6676, %v6816
    %v6818 = vand.u32 %v6817, 4294901760
    %v6819 = vsub.f32 %v6817, %v6818
    %v6820 = vand.u32 %v6819, 4294901760
    %6821 = vmatmul.f32.gmra.mxu0 %v6820
    %v6822 = vpop.f32.mrf.mxu0
    %v6823 = vadd.f32 0.0, %v6822
    %6824 = vdwg.mxu0
    %6825 = vmatpush.msra.mxu0 0.0
    %6826 = vmatpush.msra.mxu0 0.0
    %6827 = vmatpush.msra.mxu0 0.0
    %6828 = vmatpush.msra.mxu0 0.0
    %6829 = vmatpush.msra.mxu0 0.0
    %6830 = vmatpush.msra.mxu0 0.0
    %6831 = vmatpush.msra.mxu0 0.0
    %6832 = vmatpush.msra.mxu0 0.0
    %6833 = vmatpush.msra.mxu0 0.0
    %6834 = vmatpush.msra.mxu0 0.0
    %6835 = vmatpush.msra.mxu0 0.0
    %6836 = vmatpush.msra.mxu0 0.0
    %6837 = vmatpush.msra.mxu0 0.0
    %6838 = vmatpush.msra.mxu0 0.0
    %v6839 = vand.u32 %v84, 4294901760
    %v6840 = vsub.f32 %v84, %v6839
    %v6841 = vand.u32 %v6840, 4294901760
    %v6842 = vsub.f32 %v6840, %v6841
    %v6843 = vand.u32 %v6842, 4294901760
    %6844 = vmatpush.msra.mxu0 %v6843
    %v6845 = vand.u32 %v83, 4294901760
    %v6846 = vsub.f32 %v83, %v6845
    %v6847 = vand.u32 %v6846, 4294901760
    %v6848 = vsub.f32 %v6846, %v6847
    %v6849 = vand.u32 %v6848, 4294901760
    %6850 = vmatpush.msra.mxu0 %v6849
    %v6851 = vand.u32 %v6631, 4294901760
    %6852 = vmatmul.f32.gmra.mxu0 %v6851
    %v6853 = vpop.f32.mrf.mxu0
    %v6854 = vadd.f32 %v6703, %v6853
    %v6855 = vand.u32 %v6634, 4294901760
    %6856 = vmatmul.f32.gmra.mxu0 %v6855
    %v6857 = vpop.f32.mrf.mxu0
    %v6858 = vadd.f32 %v6711, %v6857
    %v6859 = vand.u32 %v6637, 4294901760
    %6860 = vmatmul.f32.gmra.mxu0 %v6859
    %v6861 = vpop.f32.mrf.mxu0
    %v6862 = vadd.f32 %v6719, %v6861
    %v6863 = vand.u32 %v6640, 4294901760
    %6864 = vmatmul.f32.gmra.mxu0 %v6863
    %v6865 = vpop.f32.mrf.mxu0
    %v6866 = vadd.f32 %v6727, %v6865
    %v6867 = vand.u32 %v6643, 4294901760
    %6868 = vmatmul.f32.gmra.mxu0 %v6867
    %v6869 = vpop.f32.mrf.mxu0
    %v6870 = vadd.f32 %v6735, %v6869
    %v6871 = vand.u32 %v6646, 4294901760
    %6872 = vmatmul.f32.gmra.mxu0 %v6871
    %v6873 = vpop.f32.mrf.mxu0
    %v6874 = vadd.f32 %v6743, %v6873
    %v6875 = vand.u32 %v6649, 4294901760
    %6876 = vmatmul.f32.gmra.mxu0 %v6875
    %v6877 = vpop.f32.mrf.mxu0
    %v6878 = vadd.f32 %v6751, %v6877
    %v6879 = vand.u32 %v6652, 4294901760
    %6880 = vmatmul.f32.gmra.mxu0 %v6879
    %v6881 = vpop.f32.mrf.mxu0
    %v6882 = vadd.f32 %v6759, %v6881
    %v6883 = vand.u32 %v6655, 4294901760
    %6884 = vmatmul.f32.gmra.mxu0 %v6883
    %v6885 = vpop.f32.mrf.mxu0
    %v6886 = vadd.f32 %v6767, %v6885
    %v6887 = vand.u32 %v6658, 4294901760
    %6888 = vmatmul.f32.gmra.mxu0 %v6887
    %v6889 = vpop.f32.mrf.mxu0
    %v6890 = vadd.f32 %v6775, %v6889
    %v6891 = vand.u32 %v6661, 4294901760
    %6892 = vmatmul.f32.gmra.mxu0 %v6891
    %v6893 = vpop.f32.mrf.mxu0
    %v6894 = vadd.f32 %v6783, %v6893
    %v6895 = vand.u32 %v6664, 4294901760
    %6896 = vmatmul.f32.gmra.mxu0 %v6895
    %v6897 = vpop.f32.mrf.mxu0
    %v6898 = vadd.f32 %v6791, %v6897
    %v6899 = vand.u32 %v6667, 4294901760
    %6900 = vmatmul.f32.gmra.mxu0 %v6899
    %v6901 = vpop.f32.mrf.mxu0
    %v6902 = vadd.f32 %v6799, %v6901
    %v6903 = vand.u32 %v6670, 4294901760
    %6904 = vmatmul.f32.gmra.mxu0 %v6903
    %v6905 = vpop.f32.mrf.mxu0
    %v6906 = vadd.f32 %v6807, %v6905
    %v6907 = vand.u32 %v6673, 4294901760
    %6908 = vmatmul.f32.gmra.mxu0 %v6907
    %v6909 = vpop.f32.mrf.mxu0
    %v6910 = vadd.f32 %v6815, %v6909
    %v6911 = vand.u32 %v6676, 4294901760
    %6912 = vmatmul.f32.gmra.mxu0 %v6911
    %v6913 = vpop.f32.mrf.mxu0
    %v6914 = vadd.f32 %v6823, %v6913
    %6915 = vdwg.mxu0
    %6916 = vmatpush.msra.mxu0 0.0
    %6917 = vmatpush.msra.mxu0 0.0
    %6918 = vmatpush.msra.mxu0 0.0
    %6919 = vmatpush.msra.mxu0 0.0
    %6920 = vmatpush.msra.mxu0 0.0
    %6921 = vmatpush.msra.mxu0 0.0
    %6922 = vmatpush.msra.mxu0 0.0
    %6923 = vmatpush.msra.mxu0 0.0
    %6924 = vmatpush.msra.mxu0 0.0
    %6925 = vmatpush.msra.mxu0 0.0
    %6926 = vmatpush.msra.mxu0 0.0
    %6927 = vmatpush.msra.mxu0 0.0
    %6928 = vmatpush.msra.mxu0 0.0
    %6929 = vmatpush.msra.mxu0 0.0
    %v6930 = vand.u32 %v84, 4294901760
    %v6931 = vsub.f32 %v84, %v6930
    %6932 = vmatpush.msra.mxu0 %v6931
    %v6933 = vand.u32 %v83, 4294901760
    %v6934 = vsub.f32 %v83, %v6933
    %6935 = vmatpush.msra.mxu0 %v6934
    %v6936 = vand.u32 %v6631, 4294901760
    %v6937 = vsub.f32 %v6631, %v6936
    %6938 = vmatmul.f32.gmra.mxu0 %v6937
    %v6939 = vpop.f32.mrf.mxu0
    %v6940 = vadd.f32 %v6854, %v6939
    %v6941 = vand.u32 %v6634, 4294901760
    %v6942 = vsub.f32 %v6634, %v6941
    %6943 = vmatmul.f32.gmra.mxu0 %v6942
    %v6944 = vpop.f32.mrf.mxu0
    %v6945 = vadd.f32 %v6858, %v6944
    %v6946 = vand.u32 %v6637, 4294901760
    %v6947 = vsub.f32 %v6637, %v6946
    %6948 = vmatmul.f32.gmra.mxu0 %v6947
    %v6949 = vpop.f32.mrf.mxu0
    %v6950 = vadd.f32 %v6862, %v6949
    %v6951 = vand.u32 %v6640, 4294901760
    %v6952 = vsub.f32 %v6640, %v6951
    %6953 = vmatmul.f32.gmra.mxu0 %v6952
    %v6954 = vpop.f32.mrf.mxu0
    %v6955 = vadd.f32 %v6866, %v6954
    %v6956 = vand.u32 %v6643, 4294901760
    %v6957 = vsub.f32 %v6643, %v6956
    %6958 = vmatmul.f32.gmra.mxu0 %v6957
    %v6959 = vpop.f32.mrf.mxu0
    %v6960 = vadd.f32 %v6870, %v6959
    %v6961 = vand.u32 %v6646, 4294901760
    %v6962 = vsub.f32 %v6646, %v6961
    %6963 = vmatmul.f32.gmra.mxu0 %v6962
    %v6964 = vpop.f32.mrf.mxu0
    %v6965 = vadd.f32 %v6874, %v6964
    %v6966 = vand.u32 %v6649, 4294901760
    %v6967 = vsub.f32 %v6649, %v6966
    %6968 = vmatmul.f32.gmra.mxu0 %v6967
    %v6969 = vpop.f32.mrf.mxu0
    %v6970 = vadd.f32 %v6878, %v6969
    %v6971 = vand.u32 %v6652, 4294901760
    %v6972 = vsub.f32 %v6652, %v6971
    %6973 = vmatmul.f32.gmra.mxu0 %v6972
    %v6974 = vpop.f32.mrf.mxu0
    %v6975 = vadd.f32 %v6882, %v6974
    %v6976 = vand.u32 %v6655, 4294901760
    %v6977 = vsub.f32 %v6655, %v6976
    %6978 = vmatmul.f32.gmra.mxu0 %v6977
    %v6979 = vpop.f32.mrf.mxu0
    %v6980 = vadd.f32 %v6886, %v6979
    %v6981 = vand.u32 %v6658, 4294901760
    %v6982 = vsub.f32 %v6658, %v6981
    %6983 = vmatmul.f32.gmra.mxu0 %v6982
    %v6984 = vpop.f32.mrf.mxu0
    %v6985 = vadd.f32 %v6890, %v6984
    %v6986 = vand.u32 %v6661, 4294901760
    %v6987 = vsub.f32 %v6661, %v6986
    %6988 = vmatmul.f32.gmra.mxu0 %v6987
    %v6989 = vpop.f32.mrf.mxu0
    %v6990 = vadd.f32 %v6894, %v6989
    %v6991 = vand.u32 %v6664, 4294901760
    %v6992 = vsub.f32 %v6664, %v6991
    %6993 = vmatmul.f32.gmra.mxu0 %v6992
    %v6994 = vpop.f32.mrf.mxu0
    %v6995 = vadd.f32 %v6898, %v6994
    %v6996 = vand.u32 %v6667, 4294901760
    %v6997 = vsub.f32 %v6667, %v6996
    %6998 = vmatmul.f32.gmra.mxu0 %v6997
    %v6999 = vpop.f32.mrf.mxu0
    %v7000 = vadd.f32 %v6902, %v6999
    %v7001 = vand.u32 %v6670, 4294901760
    %v7002 = vsub.f32 %v6670, %v7001
    %7003 = vmatmul.f32.gmra.mxu0 %v7002
    %v7004 = vpop.f32.mrf.mxu0
    %v7005 = vadd.f32 %v6906, %v7004
    %v7006 = vand.u32 %v6673, 4294901760
    %v7007 = vsub.f32 %v6673, %v7006
    %7008 = vmatmul.f32.gmra.mxu0 %v7007
    %v7009 = vpop.f32.mrf.mxu0
    %v7010 = vadd.f32 %v6910, %v7009
    %v7011 = vand.u32 %v6676, 4294901760
    %v7012 = vsub.f32 %v6676, %v7011
    %7013 = vmatmul.f32.gmra.mxu0 %v7012
    %v7014 = vpop.f32.mrf.mxu0
    %v7015 = vadd.f32 %v6914, %v7014
    %7016 = vdwg.mxu0
    %7017 = vmatpush.msra.mxu0 0.0
    %7018 = vmatpush.msra.mxu0 0.0
    %7019 = vmatpush.msra.mxu0 0.0
    %7020 = vmatpush.msra.mxu0 0.0
    %7021 = vmatpush.msra.mxu0 0.0
    %7022 = vmatpush.msra.mxu0 0.0
    %7023 = vmatpush.msra.mxu0 0.0
    %7024 = vmatpush.msra.mxu0 0.0
    %7025 = vmatpush.msra.mxu0 0.0
    %7026 = vmatpush.msra.mxu0 0.0
    %7027 = vmatpush.msra.mxu0 0.0
    %7028 = vmatpush.msra.mxu0 0.0
    %7029 = vmatpush.msra.mxu0 0.0
    %7030 = vmatpush.msra.mxu0 0.0
    %v7031 = vand.u32 %v84, 4294901760
    %7032 = vmatpush.msra.mxu0 %v7031
    %v7033 = vand.u32 %v83, 4294901760
    %7034 = vmatpush.msra.mxu0 %v7033
    %v7035 = vand.u32 %v6631, 4294901760
    %v7036 = vsub.f32 %v6631, %v7035
    %v7037 = vand.u32 %v7036, 4294901760
    %7038 = vmatmul.f32.gmra.mxu0 %v7037
    %v7039 = vpop.f32.mrf.mxu0
    %v7040 = vadd.f32 %v6940, %v7039
    %v7041 = vand.u32 %v6634, 4294901760
    %v7042 = vsub.f32 %v6634, %v7041
    %v7043 = vand.u32 %v7042, 4294901760
    %7044 = vmatmul.f32.gmra.mxu0 %v7043
    %v7045 = vpop.f32.mrf.mxu0
    %v7046 = vadd.f32 %v6945, %v7045
    %v7047 = vand.u32 %v6637, 4294901760
    %v7048 = vsub.f32 %v6637, %v7047
    %v7049 = vand.u32 %v7048, 4294901760
    %7050 = vmatmul.f32.gmra.mxu0 %v7049
    %v7051 = vpop.f32.mrf.mxu0
    %v7052 = vadd.f32 %v6950, %v7051
    %v7053 = vand.u32 %v6640, 4294901760
    %v7054 = vsub.f32 %v6640, %v7053
    %v7055 = vand.u32 %v7054, 4294901760
    %7056 = vmatmul.f32.gmra.mxu0 %v7055
    %v7057 = vpop.f32.mrf.mxu0
    %v7058 = vadd.f32 %v6955, %v7057
    %v7059 = vand.u32 %v6643, 4294901760
    %v7060 = vsub.f32 %v6643, %v7059
    %v7061 = vand.u32 %v7060, 4294901760
    %7062 = vmatmul.f32.gmra.mxu0 %v7061
    %v7063 = vpop.f32.mrf.mxu0
    %v7064 = vadd.f32 %v6960, %v7063
    %v7065 = vand.u32 %v6646, 4294901760
    %v7066 = vsub.f32 %v6646, %v7065
    %v7067 = vand.u32 %v7066, 4294901760
    %7068 = vmatmul.f32.gmra.mxu0 %v7067
    %v7069 = vpop.f32.mrf.mxu0
    %v7070 = vadd.f32 %v6965, %v7069
    %v7071 = vand.u32 %v6649, 4294901760
    %v7072 = vsub.f32 %v6649, %v7071
    %v7073 = vand.u32 %v7072, 4294901760
    %7074 = vmatmul.f32.gmra.mxu0 %v7073
    %v7075 = vpop.f32.mrf.mxu0
    %v7076 = vadd.f32 %v6970, %v7075
    %v7077 = vand.u32 %v6652, 4294901760
    %v7078 = vsub.f32 %v6652, %v7077
    %v7079 = vand.u32 %v7078, 4294901760
    %7080 = vmatmul.f32.gmra.mxu0 %v7079
    %v7081 = vpop.f32.mrf.mxu0
    %v7082 = vadd.f32 %v6975, %v7081
    %v7083 = vand.u32 %v6655, 4294901760
    %v7084 = vsub.f32 %v6655, %v7083
    %v7085 = vand.u32 %v7084, 4294901760
    %7086 = vmatmul.f32.gmra.mxu0 %v7085
    %v7087 = vpop.f32.mrf.mxu0
    %v7088 = vadd.f32 %v6980, %v7087
    %v7089 = vand.u32 %v6658, 4294901760
    %v7090 = vsub.f32 %v6658, %v7089
    %v7091 = vand.u32 %v7090, 4294901760
    %7092 = vmatmul.f32.gmra.mxu0 %v7091
    %v7093 = vpop.f32.mrf.mxu0
    %v7094 = vadd.f32 %v6985, %v7093
    %v7095 = vand.u32 %v6661, 4294901760
    %v7096 = vsub.f32 %v6661, %v7095
    %v7097 = vand.u32 %v7096, 4294901760
    %7098 = vmatmul.f32.gmra.mxu0 %v7097
    %v7099 = vpop.f32.mrf.mxu0
    %v7100 = vadd.f32 %v6990, %v7099
    %v7101 = vand.u32 %v6664, 4294901760
    %v7102 = vsub.f32 %v6664, %v7101
    %v7103 = vand.u32 %v7102, 4294901760
    %7104 = vmatmul.f32.gmra.mxu0 %v7103
    %v7105 = vpop.f32.mrf.mxu0
    %v7106 = vadd.f32 %v6995, %v7105
    %v7107 = vand.u32 %v6667, 4294901760
    %v7108 = vsub.f32 %v6667, %v7107
    %v7109 = vand.u32 %v7108, 4294901760
    %7110 = vmatmul.f32.gmra.mxu0 %v7109
    %v7111 = vpop.f32.mrf.mxu0
    %v7112 = vadd.f32 %v7000, %v7111
    %v7113 = vand.u32 %v6670, 4294901760
    %v7114 = vsub.f32 %v6670, %v7113
    %v7115 = vand.u32 %v7114, 4294901760
    %7116 = vmatmul.f32.gmra.mxu0 %v7115
    %v7117 = vpop.f32.mrf.mxu0
    %v7118 = vadd.f32 %v7005, %v7117
    %v7119 = vand.u32 %v6673, 4294901760
    %v7120 = vsub.f32 %v6673, %v7119
    %v7121 = vand.u32 %v7120, 4294901760
    %7122 = vmatmul.f32.gmra.mxu0 %v7121
    %v7123 = vpop.f32.mrf.mxu0
    %v7124 = vadd.f32 %v7010, %v7123
    %v7125 = vand.u32 %v6676, 4294901760
    %v7126 = vsub.f32 %v6676, %v7125
    %v7127 = vand.u32 %v7126, 4294901760
    %7128 = vmatmul.f32.gmra.mxu0 %v7127
    %v7129 = vpop.f32.mrf.mxu0
    %v7130 = vadd.f32 %v7015, %v7129
    %7131 = vdwg.mxu0
    %7132 = vmatpush.msra.mxu0 0.0
    %7133 = vmatpush.msra.mxu0 0.0
    %7134 = vmatpush.msra.mxu0 0.0
    %7135 = vmatpush.msra.mxu0 0.0
    %7136 = vmatpush.msra.mxu0 0.0
    %7137 = vmatpush.msra.mxu0 0.0
    %7138 = vmatpush.msra.mxu0 0.0
    %7139 = vmatpush.msra.mxu0 0.0
    %7140 = vmatpush.msra.mxu0 0.0
    %7141 = vmatpush.msra.mxu0 0.0
    %7142 = vmatpush.msra.mxu0 0.0
    %7143 = vmatpush.msra.mxu0 0.0
    %7144 = vmatpush.msra.mxu0 0.0
    %7145 = vmatpush.msra.mxu0 0.0
    %v7146 = vand.u32 %v84, 4294901760
    %v7147 = vsub.f32 %v84, %v7146
    %v7148 = vand.u32 %v7147, 4294901760
    %7149 = vmatpush.msra.mxu0 %v7148
    %v7150 = vand.u32 %v83, 4294901760
    %v7151 = vsub.f32 %v83, %v7150
    %v7152 = vand.u32 %v7151, 4294901760
    %7153 = vmatpush.msra.mxu0 %v7152
    %v7154 = vand.u32 %v6631, 4294901760
    %7155 = vmatmul.f32.gmra.mxu0 %v7154
    %v7156 = vpop.f32.mrf.mxu0
    %v7157 = vadd.f32 %v7040, %v7156
    %v7158 = vand.u32 %v6634, 4294901760
    %7159 = vmatmul.f32.gmra.mxu0 %v7158
    %v7160 = vpop.f32.mrf.mxu0
    %v7161 = vadd.f32 %v7046, %v7160
    %v7162 = vand.u32 %v6637, 4294901760
    %7163 = vmatmul.f32.gmra.mxu0 %v7162
    %v7164 = vpop.f32.mrf.mxu0
    %v7165 = vadd.f32 %v7052, %v7164
    %v7166 = vand.u32 %v6640, 4294901760
    %7167 = vmatmul.f32.gmra.mxu0 %v7166
    %v7168 = vpop.f32.mrf.mxu0
    %v7169 = vadd.f32 %v7058, %v7168
    %v7170 = vand.u32 %v6643, 4294901760
    %7171 = vmatmul.f32.gmra.mxu0 %v7170
    %v7172 = vpop.f32.mrf.mxu0
    %v7173 = vadd.f32 %v7064, %v7172
    %v7174 = vand.u32 %v6646, 4294901760
    %7175 = vmatmul.f32.gmra.mxu0 %v7174
    %v7176 = vpop.f32.mrf.mxu0
    %v7177 = vadd.f32 %v7070, %v7176
    %v7178 = vand.u32 %v6649, 4294901760
    %7179 = vmatmul.f32.gmra.mxu0 %v7178
    %v7180 = vpop.f32.mrf.mxu0
    %v7181 = vadd.f32 %v7076, %v7180
    %v7182 = vand.u32 %v6652, 4294901760
    %7183 = vmatmul.f32.gmra.mxu0 %v7182
    %v7184 = vpop.f32.mrf.mxu0
    %v7185 = vadd.f32 %v7082, %v7184
    %v7186 = vand.u32 %v6655, 4294901760
    %7187 = vmatmul.f32.gmra.mxu0 %v7186
    %v7188 = vpop.f32.mrf.mxu0
    %v7189 = vadd.f32 %v7088, %v7188
    %v7190 = vand.u32 %v6658, 4294901760
    %7191 = vmatmul.f32.gmra.mxu0 %v7190
    %v7192 = vpop.f32.mrf.mxu0
    %v7193 = vadd.f32 %v7094, %v7192
    %v7194 = vand.u32 %v6661, 4294901760
    %7195 = vmatmul.f32.gmra.mxu0 %v7194
    %v7196 = vpop.f32.mrf.mxu0
    %v7197 = vadd.f32 %v7100, %v7196
    %v7198 = vand.u32 %v6664, 4294901760
    %7199 = vmatmul.f32.gmra.mxu0 %v7198
    %v7200 = vpop.f32.mrf.mxu0
    %v7201 = vadd.f32 %v7106, %v7200
    %v7202 = vand.u32 %v6667, 4294901760
    %7203 = vmatmul.f32.gmra.mxu0 %v7202
    %v7204 = vpop.f32.mrf.mxu0
    %v7205 = vadd.f32 %v7112, %v7204
    %v7206 = vand.u32 %v6670, 4294901760
    %7207 = vmatmul.f32.gmra.mxu0 %v7206
    %v7208 = vpop.f32.mrf.mxu0
    %v7209 = vadd.f32 %v7118, %v7208
    %v7210 = vand.u32 %v6673, 4294901760
    %7211 = vmatmul.f32.gmra.mxu0 %v7210
    %v7212 = vpop.f32.mrf.mxu0
    %v7213 = vadd.f32 %v7124, %v7212
    %v7214 = vand.u32 %v6676, 4294901760
    %7215 = vmatmul.f32.gmra.mxu0 %v7214
    %v7216 = vpop.f32.mrf.mxu0
    %v7217 = vadd.f32 %v7130, %v7216
    %7218 = vdwg.mxu0
    %7219 = vmatpush.msra.mxu0 0.0
    %7220 = vmatpush.msra.mxu0 0.0
    %7221 = vmatpush.msra.mxu0 0.0
    %7222 = vmatpush.msra.mxu0 0.0
    %7223 = vmatpush.msra.mxu0 0.0
    %7224 = vmatpush.msra.mxu0 0.0
    %7225 = vmatpush.msra.mxu0 0.0
    %7226 = vmatpush.msra.mxu0 0.0
    %7227 = vmatpush.msra.mxu0 0.0
    %7228 = vmatpush.msra.mxu0 0.0
    %7229 = vmatpush.msra.mxu0 0.0
    %7230 = vmatpush.msra.mxu0 0.0
    %7231 = vmatpush.msra.mxu0 0.0
    %7232 = vmatpush.msra.mxu0 0.0
    %v7233 = vand.u32 %v84, 4294901760
    %7234 = vmatpush.msra.mxu0 %v7233
    %v7235 = vand.u32 %v83, 4294901760
    %7236 = vmatpush.msra.mxu0 %v7235
    %v7237 = vand.u32 %v6631, 4294901760
    %7238 = vmatmul.f32.gmra.mxu0 %v7237
    %v7239 = vpop.f32.mrf.mxu0
    %v7240 = vadd.f32 %v7157, %v7239
    %v7241 = vand.u32 %v6634, 4294901760
    %7242 = vmatmul.f32.gmra.mxu0 %v7241
    %v7243 = vpop.f32.mrf.mxu0
    %v7244 = vadd.f32 %v7161, %v7243
    %v7245 = vand.u32 %v6637, 4294901760
    %7246 = vmatmul.f32.gmra.mxu0 %v7245
    %v7247 = vpop.f32.mrf.mxu0
    %v7248 = vadd.f32 %v7165, %v7247
    %v7249 = vand.u32 %v6640, 4294901760
    %7250 = vmatmul.f32.gmra.mxu0 %v7249
    %v7251 = vpop.f32.mrf.mxu0
    %v7252 = vadd.f32 %v7169, %v7251
    %v7253 = vand.u32 %v6643, 4294901760
    %7254 = vmatmul.f32.gmra.mxu0 %v7253
    %v7255 = vpop.f32.mrf.mxu0
    %v7256 = vadd.f32 %v7173, %v7255
    %v7257 = vand.u32 %v6646, 4294901760
    %7258 = vmatmul.f32.gmra.mxu0 %v7257
    %v7259 = vpop.f32.mrf.mxu0
    %v7260 = vadd.f32 %v7177, %v7259
    %v7261 = vand.u32 %v6649, 4294901760
    %7262 = vmatmul.f32.gmra.mxu0 %v7261
    %v7263 = vpop.f32.mrf.mxu0
    %v7264 = vadd.f32 %v7181, %v7263
    %v7265 = vand.u32 %v6652, 4294901760
    %7266 = vmatmul.f32.gmra.mxu0 %v7265
    %v7267 = vpop.f32.mrf.mxu0
    %v7268 = vadd.f32 %v7185, %v7267
    %v7269 = vand.u32 %v6655, 4294901760
    %7270 = vmatmul.f32.gmra.mxu0 %v7269
    %v7271 = vpop.f32.mrf.mxu0
    %v7272 = vadd.f32 %v7189, %v7271
    %v7273 = vand.u32 %v6658, 4294901760
    %7274 = vmatmul.f32.gmra.mxu0 %v7273
    %v7275 = vpop.f32.mrf.mxu0
    %v7276 = vadd.f32 %v7193, %v7275
    %v7277 = vand.u32 %v6661, 4294901760
    %7278 = vmatmul.f32.gmra.mxu0 %v7277
    %v7279 = vpop.f32.mrf.mxu0
    %v7280 = vadd.f32 %v7197, %v7279
    %v7281 = vand.u32 %v6664, 4294901760
    %7282 = vmatmul.f32.gmra.mxu0 %v7281
    %v7283 = vpop.f32.mrf.mxu0
    %v7284 = vadd.f32 %v7201, %v7283
    %v7285 = vand.u32 %v6667, 4294901760
    %7286 = vmatmul.f32.gmra.mxu0 %v7285
    %v7287 = vpop.f32.mrf.mxu0
    %v7288 = vadd.f32 %v7205, %v7287
    %v7289 = vand.u32 %v6670, 4294901760
    %7290 = vmatmul.f32.gmra.mxu0 %v7289
    %v7291 = vpop.f32.mrf.mxu0
    %v7292 = vadd.f32 %v7209, %v7291
    %v7293 = vand.u32 %v6673, 4294901760
    %7294 = vmatmul.f32.gmra.mxu0 %v7293
    %v7295 = vpop.f32.mrf.mxu0
    %v7296 = vadd.f32 %v7213, %v7295
    %v7297 = vand.u32 %v6676, 4294901760
    %7298 = vmatmul.f32.gmra.mxu0 %v7297
    %v7299 = vpop.f32.mrf.mxu0
    %v7300 = vadd.f32 %v7217, %v7299
    %7301 = vdwg.mxu0
    %7302 = vxpose.xlu0.b32.start [1/16] %v7240, 128
    %7303 = vxpose.xlu0.b32.cont [2/16] %v7244, 128
    %7304 = vxpose.xlu0.b32.cont [3/16] 0.0, 128
    %7305 = vxpose.xlu0.b32.cont [4/16] 0.0, 128
    %7306 = vxpose.xlu0.b32.cont [5/16] 0.0, 128
    %7307 = vxpose.xlu0.b32.cont [6/16] 0.0, 128
    %7308 = vxpose.xlu0.b32.cont [7/16] 0.0, 128
    %7309 = vxpose.xlu0.b32.cont [8/16] 0.0, 128
    %7310 = vxpose.xlu0.b32.cont [9/16] 0.0, 128
    %7311 = vxpose.xlu0.b32.cont [10/16] 0.0, 128
    %7312 = vxpose.xlu0.b32.cont [11/16] 0.0, 128
    %7313 = vxpose.xlu0.b32.cont [12/16] 0.0, 128
    %7314 = vxpose.xlu0.b32.cont [13/16] 0.0, 128
    %7315 = vxpose.xlu0.b32.cont [14/16] 0.0, 128
    %7316 = vxpose.xlu0.b32.cont [15/16] 0.0, 128
    %7317 = vxpose.xlu0.b32.end [16/16] 0.0, 128
    %v7318 = vpop.trf.xlu0
    %v7319 = vpop.trf.xlu0
    %v7320 = vpop.trf.xlu0
    %v7321 = vpop.trf.xlu0
    %v7322 = vpop.trf.xlu0
    %v7323 = vpop.trf.xlu0
    %v7324 = vpop.trf.xlu0
    %v7325 = vpop.trf.xlu0
    %v7326 = vpop.trf.xlu0
    %v7327 = vpop.trf.xlu0
    %v7328 = vpop.trf.xlu0
    %v7329 = vpop.trf.xlu0
    %v7330 = vpop.trf.xlu0
    %v7331 = vpop.trf.xlu0
    %v7332 = vpop.trf.xlu0
    %v7333 = vpop.trf.xlu0
    %7334 = vxpose.xlu0.b32.start [1/16] %v7248, 128
    %7335 = vxpose.xlu0.b32.cont [2/16] %v7252, 128
    %7336 = vxpose.xlu0.b32.cont [3/16] 0.0, 128
    %7337 = vxpose.xlu0.b32.cont [4/16] 0.0, 128
    %7338 = vxpose.xlu0.b32.cont [5/16] 0.0, 128
    %7339 = vxpose.xlu0.b32.cont [6/16] 0.0, 128
    %7340 = vxpose.xlu0.b32.cont [7/16] 0.0, 128
    %7341 = vxpose.xlu0.b32.cont [8/16] 0.0, 128
    %7342 = vxpose.xlu0.b32.cont [9/16] 0.0, 128
    %7343 = vxpose.xlu0.b32.cont [10/16] 0.0, 128
    %7344 = vxpose.xlu0.b32.cont [11/16] 0.0, 128
    %7345 = vxpose.xlu0.b32.cont [12/16] 0.0, 128
    %7346 = vxpose.xlu0.b32.cont [13/16] 0.0, 128
    %7347 = vxpose.xlu0.b32.cont [14/16] 0.0, 128
    %7348 = vxpose.xlu0.b32.cont [15/16] 0.0, 128
    %7349 = vxpose.xlu0.b32.end [16/16] 0.0, 128
    %v7350 = vpop.trf.xlu0
    %v7351 = vpop.trf.xlu0
    %v7352 = vpop.trf.xlu0
    %v7353 = vpop.trf.xlu0
    %v7354 = vpop.trf.xlu0
    %v7355 = vpop.trf.xlu0
    %v7356 = vpop.trf.xlu0
    %v7357 = vpop.trf.xlu0
    %v7358 = vpop.trf.xlu0
    %v7359 = vpop.trf.xlu0
    %v7360 = vpop.trf.xlu0
    %v7361 = vpop.trf.xlu0
    %v7362 = vpop.trf.xlu0
    %v7363 = vpop.trf.xlu0
    %v7364 = vpop.trf.xlu0
    %v7365 = vpop.trf.xlu0
    %7366 = vxpose.xlu0.b32.start [1/16] %v7256, 128
    %7367 = vxpose.xlu0.b32.cont [2/16] %v7260, 128
    %7368 = vxpose.xlu0.b32.cont [3/16] 0.0, 128
    %7369 = vxpose.xlu0.b32.cont [4/16] 0.0, 128
    %7370 = vxpose.xlu0.b32.cont [5/16] 0.0, 128
    %7371 = vxpose.xlu0.b32.cont [6/16] 0.0, 128
    %7372 = vxpose.xlu0.b32.cont [7/16] 0.0, 128
    %7373 = vxpose.xlu0.b32.cont [8/16] 0.0, 128
    %7374 = vxpose.xlu0.b32.cont [9/16] 0.0, 128
    %7375 = vxpose.xlu0.b32.cont [10/16] 0.0, 128
    %7376 = vxpose.xlu0.b32.cont [11/16] 0.0, 128
    %7377 = vxpose.xlu0.b32.cont [12/16] 0.0, 128
    %7378 = vxpose.xlu0.b32.cont [13/16] 0.0, 128
    %7379 = vxpose.xlu0.b32.cont [14/16] 0.0, 128
    %7380 = vxpose.xlu0.b32.cont [15/16] 0.0, 128
    %7381 = vxpose.xlu0.b32.end [16/16] 0.0, 128
    %v7382 = vpop.trf.xlu0
    %v7383 = vpop.trf.xlu0
    %v7384 = vpop.trf.xlu0
    %v7385 = vpop.trf.xlu0
    %v7386 = vpop.trf.xlu0
    %v7387 = vpop.trf.xlu0
    %v7388 = vpop.trf.xlu0
    %v7389 = vpop.trf.xlu0
    %v7390 = vpop.trf.xlu0
    %v7391 = vpop.trf.xlu0
    %v7392 = vpop.trf.xlu0
    %v7393 = vpop.trf.xlu0
    %v7394 = vpop.trf.xlu0
    %v7395 = vpop.trf.xlu0
    %v7396 = vpop.trf.xlu0
    %v7397 = vpop.trf.xlu0
    %7398 = vxpose.xlu0.b32.start [1/16] %v7264, 128
    %7399 = vxpose.xlu0.b32.cont [2/16] %v7268, 128
    %7400 = vxpose.xlu0.b32.cont [3/16] 0.0, 128
    %7401 = vxpose.xlu0.b32.cont [4/16] 0.0, 128
    %7402 = vxpose.xlu0.b32.cont [5/16] 0.0, 128
    %7403 = vxpose.xlu0.b32.cont [6/16] 0.0, 128
    %7404 = vxpose.xlu0.b32.cont [7/16] 0.0, 128
    %7405 = vxpose.xlu0.b32.cont [8/16] 0.0, 128
    %7406 = vxpose.xlu0.b32.cont [9/16] 0.0, 128
    %7407 = vxpose.xlu0.b32.cont [10/16] 0.0, 128
    %7408 = vxpose.xlu0.b32.cont [11/16] 0.0, 128
    %7409 = vxpose.xlu0.b32.cont [12/16] 0.0, 128
    %7410 = vxpose.xlu0.b32.cont [13/16] 0.0, 128
    %7411 = vxpose.xlu0.b32.cont [14/16] 0.0, 128
    %7412 = vxpose.xlu0.b32.cont [15/16] 0.0, 128
    %7413 = vxpose.xlu0.b32.end [16/16] 0.0, 128
    %v7414 = vpop.trf.xlu0
    %v7415 = vpop.trf.xlu0
    %v7416 = vpop.trf.xlu0
    %v7417 = vpop.trf.xlu0
    %v7418 = vpop.trf.xlu0
    %v7419 = vpop.trf.xlu0
    %v7420 = vpop.trf.xlu0
    %v7421 = vpop.trf.xlu0
    %v7422 = vpop.trf.xlu0
    %v7423 = vpop.trf.xlu0
    %v7424 = vpop.trf.xlu0
    %v7425 = vpop.trf.xlu0
    %v7426 = vpop.trf.xlu0
    %v7427 = vpop.trf.xlu0
    %v7428 = vpop.trf.xlu0
    %v7429 = vpop.trf.xlu0
    %7430 = vxpose.xlu0.b32.start [1/16] %v7272, 128
    %7431 = vxpose.xlu0.b32.cont [2/16] %v7276, 128
    %7432 = vxpose.xlu0.b32.cont [3/16] 0.0, 128
    %7433 = vxpose.xlu0.b32.cont [4/16] 0.0, 128
    %7434 = vxpose.xlu0.b32.cont [5/16] 0.0, 128
    %7435 = vxpose.xlu0.b32.cont [6/16] 0.0, 128
    %7436 = vxpose.xlu0.b32.cont [7/16] 0.0, 128
    %7437 = vxpose.xlu0.b32.cont [8/16] 0.0, 128
    %7438 = vxpose.xlu0.b32.cont [9/16] 0.0, 128
    %7439 = vxpose.xlu0.b32.cont [10/16] 0.0, 128
    %7440 = vxpose.xlu0.b32.cont [11/16] 0.0, 128
    %7441 = vxpose.xlu0.b32.cont [12/16] 0.0, 128
    %7442 = vxpose.xlu0.b32.cont [13/16] 0.0, 128
    %7443 = vxpose.xlu0.b32.cont [14/16] 0.0, 128
    %7444 = vxpose.xlu0.b32.cont [15/16] 0.0, 128
    %7445 = vxpose.xlu0.b32.end [16/16] 0.0, 128
    %v7446 = vpop.trf.xlu0
    %v7447 = vpop.trf.xlu0
    %v7448 = vpop.trf.xlu0
    %v7449 = vpop.trf.xlu0
    %v7450 = vpop.trf.xlu0
    %v7451 = vpop.trf.xlu0
    %v7452 = vpop.trf.xlu0
    %v7453 = vpop.trf.xlu0
    %v7454 = vpop.trf.xlu0
    %v7455 = vpop.trf.xlu0
    %v7456 = vpop.trf.xlu0
    %v7457 = vpop.trf.xlu0
    %v7458 = vpop.trf.xlu0
    %v7459 = vpop.trf.xlu0
    %v7460 = vpop.trf.xlu0
    %v7461 = vpop.trf.xlu0
    %7462 = vxpose.xlu0.b32.start [1/16] %v7280, 128
    %7463 = vxpose.xlu0.b32.cont [2/16] %v7284, 128
    %7464 = vxpose.xlu0.b32.cont [3/16] 0.0, 128
    %7465 = vxpose.xlu0.b32.cont [4/16] 0.0, 128
    %7466 = vxpose.xlu0.b32.cont [5/16] 0.0, 128
    %7467 = vxpose.xlu0.b32.cont [6/16] 0.0, 128
    %7468 = vxpose.xlu0.b32.cont [7/16] 0.0, 128
    %7469 = vxpose.xlu0.b32.cont [8/16] 0.0, 128
    %7470 = vxpose.xlu0.b32.cont [9/16] 0.0, 128
    %7471 = vxpose.xlu0.b32.cont [10/16] 0.0, 128
    %7472 = vxpose.xlu0.b32.cont [11/16] 0.0, 128
    %7473 = vxpose.xlu0.b32.cont [12/16] 0.0, 128
    %7474 = vxpose.xlu0.b32.cont [13/16] 0.0, 128
    %7475 = vxpose.xlu0.b32.cont [14/16] 0.0, 128
    %7476 = vxpose.xlu0.b32.cont [15/16] 0.0, 128
    %7477 = vxpose.xlu0.b32.end [16/16] 0.0, 128
    %v7478 = vpop.trf.xlu0
    %v7479 = vpop.trf.xlu0
    %v7480 = vpop.trf.xlu0
    %v7481 = vpop.trf.xlu0
    %v7482 = vpop.trf.xlu0
    %v7483 = vpop.trf.xlu0
    %v7484 = vpop.trf.xlu0
    %v7485 = vpop.trf.xlu0
    %v7486 = vpop.trf.xlu0
    %v7487 = vpop.trf.xlu0
    %v7488 = vpop.trf.xlu0
    %v7489 = vpop.trf.xlu0
    %v7490 = vpop.trf.xlu0
    %v7491 = vpop.trf.xlu0
    %v7492 = vpop.trf.xlu0
    %v7493 = vpop.trf.xlu0
    %7494 = vxpose.xlu0.b32.start [1/16] %v7288, 128
    %7495 = vxpose.xlu0.b32.cont [2/16] %v7292, 128
    %7496 = vxpose.xlu0.b32.cont [3/16] 0.0, 128
    %7497 = vxpose.xlu0.b32.cont [4/16] 0.0, 128
    %7498 = vxpose.xlu0.b32.cont [5/16] 0.0, 128
    %7499 = vxpose.xlu0.b32.cont [6/16] 0.0, 128
    %7500 = vxpose.xlu0.b32.cont [7/16] 0.0, 128
    %7501 = vxpose.xlu0.b32.cont [8/16] 0.0, 128
    %7502 = vxpose.xlu0.b32.cont [9/16] 0.0, 128
    %7503 = vxpose.xlu0.b32.cont [10/16] 0.0, 128
    %7504 = vxpose.xlu0.b32.cont [11/16] 0.0, 128
    %7505 = vxpose.xlu0.b32.cont [12/16] 0.0, 128
    %7506 = vxpose.xlu0.b32.cont [13/16] 0.0, 128
    %7507 = vxpose.xlu0.b32.cont [14/16] 0.0, 128
    %7508 = vxpose.xlu0.b32.cont [15/16] 0.0, 128
    %7509 = vxpose.xlu0.b32.end [16/16] 0.0, 128
    %v7510 = vpop.trf.xlu0
    %v7511 = vpop.trf.xlu0
    %v7512 = vpop.trf.xlu0
    %v7513 = vpop.trf.xlu0
    %v7514 = vpop.trf.xlu0
    %v7515 = vpop.trf.xlu0
    %v7516 = vpop.trf.xlu0
    %v7517 = vpop.trf.xlu0
    %v7518 = vpop.trf.xlu0
    %v7519 = vpop.trf.xlu0
    %v7520 = vpop.trf.xlu0
    %v7521 = vpop.trf.xlu0
    %v7522 = vpop.trf.xlu0
    %v7523 = vpop.trf.xlu0
    %v7524 = vpop.trf.xlu0
    %v7525 = vpop.trf.xlu0
    %7526 = vxpose.xlu0.b32.start [1/16] %v7296, 128
    %7527 = vxpose.xlu0.b32.cont [2/16] %v7300, 128
    %7528 = vxpose.xlu0.b32.cont [3/16] 0.0, 128
    %7529 = vxpose.xlu0.b32.cont [4/16] 0.0, 128
    %7530 = vxpose.xlu0.b32.cont [5/16] 0.0, 128
    %7531 = vxpose.xlu0.b32.cont [6/16] 0.0, 128
    %7532 = vxpose.xlu0.b32.cont [7/16] 0.0, 128
    %7533 = vxpose.xlu0.b32.cont [8/16] 0.0, 128
    %7534 = vxpose.xlu0.b32.cont [9/16] 0.0, 128
    %7535 = vxpose.xlu0.b32.cont [10/16] 0.0, 128
    %7536 = vxpose.xlu0.b32.cont [11/16] 0.0, 128
    %7537 = vxpose.xlu0.b32.cont [12/16] 0.0, 128
    %7538 = vxpose.xlu0.b32.cont [13/16] 0.0, 128
    %7539 = vxpose.xlu0.b32.cont [14/16] 0.0, 128
    %7540 = vxpose.xlu0.b32.cont [15/16] 0.0, 128
    %7541 = vxpose.xlu0.b32.end [16/16] 0.0, 128
    %v7542 = vpop.trf.xlu0
    %v7543 = vpop.trf.xlu0
    %v7544 = vpop.trf.xlu0
    %v7545 = vpop.trf.xlu0
    %v7546 = vpop.trf.xlu0
    %v7547 = vpop.trf.xlu0
    %v7548 = vpop.trf.xlu0
    %v7549 = vpop.trf.xlu0
    %v7550 = vpop.trf.xlu0
    %v7551 = vpop.trf.xlu0
    %v7552 = vpop.trf.xlu0
    %v7553 = vpop.trf.xlu0
    %v7554 = vpop.trf.xlu0
    %v7555 = vpop.trf.xlu0
    %v7556 = vpop.trf.xlu0
    %v7557 = vpop.trf.xlu0
    %v7559 = vsel %vm181, %v7318, 0
    %v7562 = vsel %vm181, %v7319, 0
    %v7565 = vsel %vm181, %v7350, 0
    %v7568 = vsel %vm181, %v7351, 0
    %v7571 = vsel %vm181, %v7382, 0
    %v7574 = vsel %vm181, %v7383, 0
    %v7577 = vsel %vm181, %v7414, 0
    %v7580 = vsel %vm181, %v7415, 0
    %v7583 = vsel %vm181, %v7446, 0
    %v7586 = vsel %vm181, %v7447, 0
    %v7589 = vsel %vm181, %v7478, 0
    %v7592 = vsel %vm181, %v7479, 0
    %v7595 = vsel %vm181, %v7510, 0
    %v7598 = vsel %vm181, %v7511, 0
    %v7601 = vsel %vm181, %v7542, 0
    %v7604 = vsel %vm181, %v7543, 0
    %7606 = vmatpush.msra.mxu0 0.0
    %7607 = vmatpush.msra.mxu0 0.0
    %7608 = vmatpush.msra.mxu0 0.0
    %7609 = vmatpush.msra.mxu0 0.0
    %7610 = vmatpush.msra.mxu0 0.0
    %7611 = vmatpush.msra.mxu0 0.0
    %7612 = vmatpush.msra.mxu0 0.0
    %7613 = vmatpush.msra.mxu0 0.0
    %7614 = vmatpush.msra.mxu0 0.0
    %7615 = vmatpush.msra.mxu0 0.0
    %7616 = vmatpush.msra.mxu0 0.0
    %7617 = vmatpush.msra.mxu0 0.0
    %7618 = vmatpush.msra.mxu0 0.0
    %7619 = vmatpush.msra.mxu0 0.0
    %v7620 = vand.u32 %v82, 4294901760
    %7621 = vmatpush.msra.mxu0 %v7620
    %v7622 = vand.u32 %v81, 4294901760
    %7623 = vmatpush.msra.mxu0 %v7622
    %v7624 = vand.u32 %v7559, 4294901760
    %v7625 = vsub.f32 %v7559, %v7624
    %v7626 = vand.u32 %v7625, 4294901760
    %v7627 = vsub.f32 %v7625, %v7626
    %v7628 = vand.u32 %v7627, 4294901760
    %7629 = vmatmul.f32.gmra.mxu0 %v7628
    %v7630 = vpop.f32.mrf.mxu0
    %v7631 = vadd.f32 0.0, %v7630
    %v7632 = vand.u32 %v7562, 4294901760
    %v7633 = vsub.f32 %v7562, %v7632
    %v7634 = vand.u32 %v7633, 4294901760
    %v7635 = vsub.f32 %v7633, %v7634
    %v7636 = vand.u32 %v7635, 4294901760
    %7637 = vmatmul.f32.gmra.mxu0 %v7636
    %v7638 = vpop.f32.mrf.mxu0
    %v7639 = vadd.f32 0.0, %v7638
    %v7640 = vand.u32 %v7565, 4294901760
    %v7641 = vsub.f32 %v7565, %v7640
    %v7642 = vand.u32 %v7641, 4294901760
    %v7643 = vsub.f32 %v7641, %v7642
    %v7644 = vand.u32 %v7643, 4294901760
    %7645 = vmatmul.f32.gmra.mxu0 %v7644
    %v7646 = vpop.f32.mrf.mxu0
    %v7647 = vadd.f32 0.0, %v7646
    %v7648 = vand.u32 %v7568, 4294901760
    %v7649 = vsub.f32 %v7568, %v7648
    %v7650 = vand.u32 %v7649, 4294901760
    %v7651 = vsub.f32 %v7649, %v7650
    %v7652 = vand.u32 %v7651, 4294901760
    %7653 = vmatmul.f32.gmra.mxu0 %v7652
    %v7654 = vpop.f32.mrf.mxu0
    %v7655 = vadd.f32 0.0, %v7654
    %v7656 = vand.u32 %v7571, 4294901760
    %v7657 = vsub.f32 %v7571, %v7656
    %v7658 = vand.u32 %v7657, 4294901760
    %v7659 = vsub.f32 %v7657, %v7658
    %v7660 = vand.u32 %v7659, 4294901760
    %7661 = vmatmul.f32.gmra.mxu0 %v7660
    %v7662 = vpop.f32.mrf.mxu0
    %v7663 = vadd.f32 0.0, %v7662
    %v7664 = vand.u32 %v7574, 4294901760
    %v7665 = vsub.f32 %v7574, %v7664
    %v7666 = vand.u32 %v7665, 4294901760
    %v7667 = vsub.f32 %v7665, %v7666
    %v7668 = vand.u32 %v7667, 4294901760
    %7669 = vmatmul.f32.gmra.mxu0 %v7668
    %v7670 = vpop.f32.mrf.mxu0
    %v7671 = vadd.f32 0.0, %v7670
    %v7672 = vand.u32 %v7577, 4294901760
    %v7673 = vsub.f32 %v7577, %v7672
    %v7674 = vand.u32 %v7673, 4294901760
    %v7675 = vsub.f32 %v7673, %v7674
    %v7676 = vand.u32 %v7675, 4294901760
    %7677 = vmatmul.f32.gmra.mxu0 %v7676
    %v7678 = vpop.f32.mrf.mxu0
    %v7679 = vadd.f32 0.0, %v7678
    %v7680 = vand.u32 %v7580, 4294901760
    %v7681 = vsub.f32 %v7580, %v7680
    %v7682 = vand.u32 %v7681, 4294901760
    %v7683 = vsub.f32 %v7681, %v7682
    %v7684 = vand.u32 %v7683, 4294901760
    %7685 = vmatmul.f32.gmra.mxu0 %v7684
    %v7686 = vpop.f32.mrf.mxu0
    %v7687 = vadd.f32 0.0, %v7686
    %v7688 = vand.u32 %v7583, 4294901760
    %v7689 = vsub.f32 %v7583, %v7688
    %v7690 = vand.u32 %v7689, 4294901760
    %v7691 = vsub.f32 %v7689, %v7690
    %v7692 = vand.u32 %v7691, 4294901760
    %7693 = vmatmul.f32.gmra.mxu0 %v7692
    %v7694 = vpop.f32.mrf.mxu0
    %v7695 = vadd.f32 0.0, %v7694
    %v7696 = vand.u32 %v7586, 4294901760
    %v7697 = vsub.f32 %v7586, %v7696
    %v7698 = vand.u32 %v7697, 4294901760
    %v7699 = vsub.f32 %v7697, %v7698
    %v7700 = vand.u32 %v7699, 4294901760
    %7701 = vmatmul.f32.gmra.mxu0 %v7700
    %v7702 = vpop.f32.mrf.mxu0
    %v7703 = vadd.f32 0.0, %v7702
    %v7704 = vand.u32 %v7589, 4294901760
    %v7705 = vsub.f32 %v7589, %v7704
    %v7706 = vand.u32 %v7705, 4294901760
    %v7707 = vsub.f32 %v7705, %v7706
    %v7708 = vand.u32 %v7707, 4294901760
    %7709 = vmatmul.f32.gmra.mxu0 %v7708
    %v7710 = vpop.f32.mrf.mxu0
    %v7711 = vadd.f32 0.0, %v7710
    %v7712 = vand.u32 %v7592, 4294901760
    %v7713 = vsub.f32 %v7592, %v7712
    %v7714 = vand.u32 %v7713, 4294901760
    %v7715 = vsub.f32 %v7713, %v7714
    %v7716 = vand.u32 %v7715, 4294901760
    %7717 = vmatmul.f32.gmra.mxu0 %v7716
    %v7718 = vpop.f32.mrf.mxu0
    %v7719 = vadd.f32 0.0, %v7718
    %v7720 = vand.u32 %v7595, 4294901760
    %v7721 = vsub.f32 %v7595, %v7720
    %v7722 = vand.u32 %v7721, 4294901760
    %v7723 = vsub.f32 %v7721, %v7722
    %v7724 = vand.u32 %v7723, 4294901760
    %7725 = vmatmul.f32.gmra.mxu0 %v7724
    %v7726 = vpop.f32.mrf.mxu0
    %v7727 = vadd.f32 0.0, %v7726
    %v7728 = vand.u32 %v7598, 4294901760
    %v7729 = vsub.f32 %v7598, %v7728
    %v7730 = vand.u32 %v7729, 4294901760
    %v7731 = vsub.f32 %v7729, %v7730
    %v7732 = vand.u32 %v7731, 4294901760
    %7733 = vmatmul.f32.gmra.mxu0 %v7732
    %v7734 = vpop.f32.mrf.mxu0
    %v7735 = vadd.f32 0.0, %v7734
    %v7736 = vand.u32 %v7601, 4294901760
    %v7737 = vsub.f32 %v7601, %v7736
    %v7738 = vand.u32 %v7737, 4294901760
    %v7739 = vsub.f32 %v7737, %v7738
    %v7740 = vand.u32 %v7739, 4294901760
    %7741 = vmatmul.f32.gmra.mxu0 %v7740
    %v7742 = vpop.f32.mrf.mxu0
    %v7743 = vadd.f32 0.0, %v7742
    %v7744 = vand.u32 %v7604, 4294901760
    %v7745 = vsub.f32 %v7604, %v7744
    %v7746 = vand.u32 %v7745, 4294901760
    %v7747 = vsub.f32 %v7745, %v7746
    %v7748 = vand.u32 %v7747, 4294901760
    %7749 = vmatmul.f32.gmra.mxu0 %v7748
    %v7750 = vpop.f32.mrf.mxu0
    %v7751 = vadd.f32 0.0, %v7750
    %7752 = vdwg.mxu0
    %7753 = vmatpush.msra.mxu0 0.0
    %7754 = vmatpush.msra.mxu0 0.0
    %7755 = vmatpush.msra.mxu0 0.0
    %7756 = vmatpush.msra.mxu0 0.0
    %7757 = vmatpush.msra.mxu0 0.0
    %7758 = vmatpush.msra.mxu0 0.0
    %7759 = vmatpush.msra.mxu0 0.0
    %7760 = vmatpush.msra.mxu0 0.0
    %7761 = vmatpush.msra.mxu0 0.0
    %7762 = vmatpush.msra.mxu0 0.0
    %7763 = vmatpush.msra.mxu0 0.0
    %7764 = vmatpush.msra.mxu0 0.0
    %7765 = vmatpush.msra.mxu0 0.0
    %7766 = vmatpush.msra.mxu0 0.0
    %v7767 = vand.u32 %v82, 4294901760
    %v7768 = vsub.f32 %v82, %v7767
    %v7769 = vand.u32 %v7768, 4294901760
    %v7770 = vsub.f32 %v7768, %v7769
    %v7771 = vand.u32 %v7770, 4294901760
    %7772 = vmatpush.msra.mxu0 %v7771
    %v7773 = vand.u32 %v81, 4294901760
    %v7774 = vsub.f32 %v81, %v7773
    %v7775 = vand.u32 %v7774, 4294901760
    %v7776 = vsub.f32 %v7774, %v7775
    %v7777 = vand.u32 %v7776, 4294901760
    %7778 = vmatpush.msra.mxu0 %v7777
    %v7779 = vand.u32 %v7559, 4294901760
    %7780 = vmatmul.f32.gmra.mxu0 %v7779
    %v7781 = vpop.f32.mrf.mxu0
    %v7782 = vadd.f32 %v7631, %v7781
    %v7783 = vand.u32 %v7562, 4294901760
    %7784 = vmatmul.f32.gmra.mxu0 %v7783
    %v7785 = vpop.f32.mrf.mxu0
    %v7786 = vadd.f32 %v7639, %v7785
    %v7787 = vand.u32 %v7565, 4294901760
    %7788 = vmatmul.f32.gmra.mxu0 %v7787
    %v7789 = vpop.f32.mrf.mxu0
    %v7790 = vadd.f32 %v7647, %v7789
    %v7791 = vand.u32 %v7568, 4294901760
    %7792 = vmatmul.f32.gmra.mxu0 %v7791
    %v7793 = vpop.f32.mrf.mxu0
    %v7794 = vadd.f32 %v7655, %v7793
    %v7795 = vand.u32 %v7571, 4294901760
    %7796 = vmatmul.f32.gmra.mxu0 %v7795
    %v7797 = vpop.f32.mrf.mxu0
    %v7798 = vadd.f32 %v7663, %v7797
    %v7799 = vand.u32 %v7574, 4294901760
    %7800 = vmatmul.f32.gmra.mxu0 %v7799
    %v7801 = vpop.f32.mrf.mxu0
    %v7802 = vadd.f32 %v7671, %v7801
    %v7803 = vand.u32 %v7577, 4294901760
    %7804 = vmatmul.f32.gmra.mxu0 %v7803
    %v7805 = vpop.f32.mrf.mxu0
    %v7806 = vadd.f32 %v7679, %v7805
    %v7807 = vand.u32 %v7580, 4294901760
    %7808 = vmatmul.f32.gmra.mxu0 %v7807
    %v7809 = vpop.f32.mrf.mxu0
    %v7810 = vadd.f32 %v7687, %v7809
    %v7811 = vand.u32 %v7583, 4294901760
    %7812 = vmatmul.f32.gmra.mxu0 %v7811
    %v7813 = vpop.f32.mrf.mxu0
    %v7814 = vadd.f32 %v7695, %v7813
    %v7815 = vand.u32 %v7586, 4294901760
    %7816 = vmatmul.f32.gmra.mxu0 %v7815
    %v7817 = vpop.f32.mrf.mxu0
    %v7818 = vadd.f32 %v7703, %v7817
    %v7819 = vand.u32 %v7589, 4294901760
    %7820 = vmatmul.f32.gmra.mxu0 %v7819
    %v7821 = vpop.f32.mrf.mxu0
    %v7822 = vadd.f32 %v7711, %v7821
    %v7823 = vand.u32 %v7592, 4294901760
    %7824 = vmatmul.f32.gmra.mxu0 %v7823
    %v7825 = vpop.f32.mrf.mxu0
    %v7826 = vadd.f32 %v7719, %v7825
    %v7827 = vand.u32 %v7595, 4294901760
    %7828 = vmatmul.f32.gmra.mxu0 %v7827
    %v7829 = vpop.f32.mrf.mxu0
    %v7830 = vadd.f32 %v7727, %v7829
    %v7831 = vand.u32 %v7598, 4294901760
    %7832 = vmatmul.f32.gmra.mxu0 %v7831
    %v7833 = vpop.f32.mrf.mxu0
    %v7834 = vadd.f32 %v7735, %v7833
    %v7835 = vand.u32 %v7601, 4294901760
    %7836 = vmatmul.f32.gmra.mxu0 %v7835
    %v7837 = vpop.f32.mrf.mxu0
    %v7838 = vadd.f32 %v7743, %v7837
    %v7839 = vand.u32 %v7604, 4294901760
    %7840 = vmatmul.f32.gmra.mxu0 %v7839
    %v7841 = vpop.f32.mrf.mxu0
    %v7842 = vadd.f32 %v7751, %v7841
    %7843 = vdwg.mxu0
    %7844 = vmatpush.msra.mxu0 0.0
    %7845 = vmatpush.msra.mxu0 0.0
    %7846 = vmatpush.msra.mxu0 0.0
    %7847 = vmatpush.msra.mxu0 0.0
    %7848 = vmatpush.msra.mxu0 0.0
    %7849 = vmatpush.msra.mxu0 0.0
    %7850 = vmatpush.msra.mxu0 0.0
    %7851 = vmatpush.msra.mxu0 0.0
    %7852 = vmatpush.msra.mxu0 0.0
    %7853 = vmatpush.msra.mxu0 0.0
    %7854 = vmatpush.msra.mxu0 0.0
    %7855 = vmatpush.msra.mxu0 0.0
    %7856 = vmatpush.msra.mxu0 0.0
    %7857 = vmatpush.msra.mxu0 0.0
    %v7858 = vand.u32 %v82, 4294901760
    %v7859 = vsub.f32 %v82, %v7858
    %7860 = vmatpush.msra.mxu0 %v7859
    %v7861 = vand.u32 %v81, 4294901760
    %v7862 = vsub.f32 %v81, %v7861
    %7863 = vmatpush.msra.mxu0 %v7862
    %v7864 = vand.u32 %v7559, 4294901760
    %v7865 = vsub.f32 %v7559, %v7864
    %7866 = vmatmul.f32.gmra.mxu0 %v7865
    %v7867 = vpop.f32.mrf.mxu0
    %v7868 = vadd.f32 %v7782, %v7867
    %v7869 = vand.u32 %v7562, 4294901760
    %v7870 = vsub.f32 %v7562, %v7869
    %7871 = vmatmul.f32.gmra.mxu0 %v7870
    %v7872 = vpop.f32.mrf.mxu0
    %v7873 = vadd.f32 %v7786, %v7872
    %v7874 = vand.u32 %v7565, 4294901760
    %v7875 = vsub.f32 %v7565, %v7874
    %7876 = vmatmul.f32.gmra.mxu0 %v7875
    %v7877 = vpop.f32.mrf.mxu0
    %v7878 = vadd.f32 %v7790, %v7877
    %v7879 = vand.u32 %v7568, 4294901760
    %v7880 = vsub.f32 %v7568, %v7879
    %7881 = vmatmul.f32.gmra.mxu0 %v7880
    %v7882 = vpop.f32.mrf.mxu0
    %v7883 = vadd.f32 %v7794, %v7882
    %v7884 = vand.u32 %v7571, 4294901760
    %v7885 = vsub.f32 %v7571, %v7884
    %7886 = vmatmul.f32.gmra.mxu0 %v7885
    %v7887 = vpop.f32.mrf.mxu0
    %v7888 = vadd.f32 %v7798, %v7887
    %v7889 = vand.u32 %v7574, 4294901760
    %v7890 = vsub.f32 %v7574, %v7889
    %7891 = vmatmul.f32.gmra.mxu0 %v7890
    %v7892 = vpop.f32.mrf.mxu0
    %v7893 = vadd.f32 %v7802, %v7892
    %v7894 = vand.u32 %v7577, 4294901760
    %v7895 = vsub.f32 %v7577, %v7894
    %7896 = vmatmul.f32.gmra.mxu0 %v7895
    %v7897 = vpop.f32.mrf.mxu0
    %v7898 = vadd.f32 %v7806, %v7897
    %v7899 = vand.u32 %v7580, 4294901760
    %v7900 = vsub.f32 %v7580, %v7899
    %7901 = vmatmul.f32.gmra.mxu0 %v7900
    %v7902 = vpop.f32.mrf.mxu0
    %v7903 = vadd.f32 %v7810, %v7902
    %v7904 = vand.u32 %v7583, 4294901760
    %v7905 = vsub.f32 %v7583, %v7904
    %7906 = vmatmul.f32.gmra.mxu0 %v7905
    %v7907 = vpop.f32.mrf.mxu0
    %v7908 = vadd.f32 %v7814, %v7907
    %v7909 = vand.u32 %v7586, 4294901760
    %v7910 = vsub.f32 %v7586, %v7909
    %7911 = vmatmul.f32.gmra.mxu0 %v7910
    %v7912 = vpop.f32.mrf.mxu0
    %v7913 = vadd.f32 %v7818, %v7912
    %v7914 = vand.u32 %v7589, 4294901760
    %v7915 = vsub.f32 %v7589, %v7914
    %7916 = vmatmul.f32.gmra.mxu0 %v7915
    %v7917 = vpop.f32.mrf.mxu0
    %v7918 = vadd.f32 %v7822, %v7917
    %v7919 = vand.u32 %v7592, 4294901760
    %v7920 = vsub.f32 %v7592, %v7919
    %7921 = vmatmul.f32.gmra.mxu0 %v7920
    %v7922 = vpop.f32.mrf.mxu0
    %v7923 = vadd.f32 %v7826, %v7922
    %v7924 = vand.u32 %v7595, 4294901760
    %v7925 = vsub.f32 %v7595, %v7924
    %7926 = vmatmul.f32.gmra.mxu0 %v7925
    %v7927 = vpop.f32.mrf.mxu0
    %v7928 = vadd.f32 %v7830, %v7927
    %v7929 = vand.u32 %v7598, 4294901760
    %v7930 = vsub.f32 %v7598, %v7929
    %7931 = vmatmul.f32.gmra.mxu0 %v7930
    %v7932 = vpop.f32.mrf.mxu0
    %v7933 = vadd.f32 %v7834, %v7932
    %v7934 = vand.u32 %v7601, 4294901760
    %v7935 = vsub.f32 %v7601, %v7934
    %7936 = vmatmul.f32.gmra.mxu0 %v7935
    %v7937 = vpop.f32.mrf.mxu0
    %v7938 = vadd.f32 %v7838, %v7937
    %v7939 = vand.u32 %v7604, 4294901760
    %v7940 = vsub.f32 %v7604, %v7939
    %7941 = vmatmul.f32.gmra.mxu0 %v7940
    %v7942 = vpop.f32.mrf.mxu0
    %v7943 = vadd.f32 %v7842, %v7942
    %7944 = vdwg.mxu0
    %7945 = vmatpush.msra.mxu0 0.0
    %7946 = vmatpush.msra.mxu0 0.0
    %7947 = vmatpush.msra.mxu0 0.0
    %7948 = vmatpush.msra.mxu0 0.0
    %7949 = vmatpush.msra.mxu0 0.0
    %7950 = vmatpush.msra.mxu0 0.0
    %7951 = vmatpush.msra.mxu0 0.0
    %7952 = vmatpush.msra.mxu0 0.0
    %7953 = vmatpush.msra.mxu0 0.0
    %7954 = vmatpush.msra.mxu0 0.0
    %7955 = vmatpush.msra.mxu0 0.0
    %7956 = vmatpush.msra.mxu0 0.0
    %7957 = vmatpush.msra.mxu0 0.0
    %7958 = vmatpush.msra.mxu0 0.0
    %v7959 = vand.u32 %v82, 4294901760
    %7960 = vmatpush.msra.mxu0 %v7959
    %v7961 = vand.u32 %v81, 4294901760
    %7962 = vmatpush.msra.mxu0 %v7961
    %v7963 = vand.u32 %v7559, 4294901760
    %v7964 = vsub.f32 %v7559, %v7963
    %v7965 = vand.u32 %v7964, 4294901760
    %7966 = vmatmul.f32.gmra.mxu0 %v7965
    %v7967 = vpop.f32.mrf.mxu0
    %v7968 = vadd.f32 %v7868, %v7967
    %v7969 = vand.u32 %v7562, 4294901760
    %v7970 = vsub.f32 %v7562, %v7969
    %v7971 = vand.u32 %v7970, 4294901760
    %7972 = vmatmul.f32.gmra.mxu0 %v7971
    %v7973 = vpop.f32.mrf.mxu0
    %v7974 = vadd.f32 %v7873, %v7973
    %v7975 = vand.u32 %v7565, 4294901760
    %v7976 = vsub.f32 %v7565, %v7975
    %v7977 = vand.u32 %v7976, 4294901760
    %7978 = vmatmul.f32.gmra.mxu0 %v7977
    %v7979 = vpop.f32.mrf.mxu0
    %v7980 = vadd.f32 %v7878, %v7979
    %v7981 = vand.u32 %v7568, 4294901760
    %v7982 = vsub.f32 %v7568, %v7981
    %v7983 = vand.u32 %v7982, 4294901760
    %7984 = vmatmul.f32.gmra.mxu0 %v7983
    %v7985 = vpop.f32.mrf.mxu0
    %v7986 = vadd.f32 %v7883, %v7985
    %v7987 = vand.u32 %v7571, 4294901760
    %v7988 = vsub.f32 %v7571, %v7987
    %v7989 = vand.u32 %v7988, 4294901760
    %7990 = vmatmul.f32.gmra.mxu0 %v7989
    %v7991 = vpop.f32.mrf.mxu0
    %v7992 = vadd.f32 %v7888, %v7991
    %v7993 = vand.u32 %v7574, 4294901760
    %v7994 = vsub.f32 %v7574, %v7993
    %v7995 = vand.u32 %v7994, 4294901760
    %7996 = vmatmul.f32.gmra.mxu0 %v7995
    %v7997 = vpop.f32.mrf.mxu0
    %v7998 = vadd.f32 %v7893, %v7997
    %v7999 = vand.u32 %v7577, 4294901760
    %v8000 = vsub.f32 %v7577, %v7999
    %v8001 = vand.u32 %v8000, 4294901760
    %8002 = vmatmul.f32.gmra.mxu0 %v8001
    %v8003 = vpop.f32.mrf.mxu0
    %v8004 = vadd.f32 %v7898, %v8003
    %v8005 = vand.u32 %v7580, 4294901760
    %v8006 = vsub.f32 %v7580, %v8005
    %v8007 = vand.u32 %v8006, 4294901760
    %8008 = vmatmul.f32.gmra.mxu0 %v8007
    %v8009 = vpop.f32.mrf.mxu0
    %v8010 = vadd.f32 %v7903, %v8009
    %v8011 = vand.u32 %v7583, 4294901760
    %v8012 = vsub.f32 %v7583, %v8011
    %v8013 = vand.u32 %v8012, 4294901760
    %8014 = vmatmul.f32.gmra.mxu0 %v8013
    %v8015 = vpop.f32.mrf.mxu0
    %v8016 = vadd.f32 %v7908, %v8015
    %v8017 = vand.u32 %v7586, 4294901760
    %v8018 = vsub.f32 %v7586, %v8017
    %v8019 = vand.u32 %v8018, 4294901760
    %8020 = vmatmul.f32.gmra.mxu0 %v8019
    %v8021 = vpop.f32.mrf.mxu0
    %v8022 = vadd.f32 %v7913, %v8021
    %v8023 = vand.u32 %v7589, 4294901760
    %v8024 = vsub.f32 %v7589, %v8023
    %v8025 = vand.u32 %v8024, 4294901760
    %8026 = vmatmul.f32.gmra.mxu0 %v8025
    %v8027 = vpop.f32.mrf.mxu0
    %v8028 = vadd.f32 %v7918, %v8027
    %v8029 = vand.u32 %v7592, 4294901760
    %v8030 = vsub.f32 %v7592, %v8029
    %v8031 = vand.u32 %v8030, 4294901760
    %8032 = vmatmul.f32.gmra.mxu0 %v8031
    %v8033 = vpop.f32.mrf.mxu0
    %v8034 = vadd.f32 %v7923, %v8033
    %v8035 = vand.u32 %v7595, 4294901760
    %v8036 = vsub.f32 %v7595, %v8035
    %v8037 = vand.u32 %v8036, 4294901760
    %8038 = vmatmul.f32.gmra.mxu0 %v8037
    %v8039 = vpop.f32.mrf.mxu0
    %v8040 = vadd.f32 %v7928, %v8039
    %v8041 = vand.u32 %v7598, 4294901760
    %v8042 = vsub.f32 %v7598, %v8041
    %v8043 = vand.u32 %v8042, 4294901760
    %8044 = vmatmul.f32.gmra.mxu0 %v8043
    %v8045 = vpop.f32.mrf.mxu0
    %v8046 = vadd.f32 %v7933, %v8045
    %v8047 = vand.u32 %v7601, 4294901760
    %v8048 = vsub.f32 %v7601, %v8047
    %v8049 = vand.u32 %v8048, 4294901760
    %8050 = vmatmul.f32.gmra.mxu0 %v8049
    %v8051 = vpop.f32.mrf.mxu0
    %v8052 = vadd.f32 %v7938, %v8051
    %v8053 = vand.u32 %v7604, 4294901760
    %v8054 = vsub.f32 %v7604, %v8053
    %v8055 = vand.u32 %v8054, 4294901760
    %8056 = vmatmul.f32.gmra.mxu0 %v8055
    %v8057 = vpop.f32.mrf.mxu0
    %v8058 = vadd.f32 %v7943, %v8057
    %8059 = vdwg.mxu0
    %8060 = vmatpush.msra.mxu0 0.0
    %8061 = vmatpush.msra.mxu0 0.0
    %8062 = vmatpush.msra.mxu0 0.0
    %8063 = vmatpush.msra.mxu0 0.0
    %8064 = vmatpush.msra.mxu0 0.0
    %8065 = vmatpush.msra.mxu0 0.0
    %8066 = vmatpush.msra.mxu0 0.0
    %8067 = vmatpush.msra.mxu0 0.0
    %8068 = vmatpush.msra.mxu0 0.0
    %8069 = vmatpush.msra.mxu0 0.0
    %8070 = vmatpush.msra.mxu0 0.0
    %8071 = vmatpush.msra.mxu0 0.0
    %8072 = vmatpush.msra.mxu0 0.0
    %8073 = vmatpush.msra.mxu0 0.0
    %v8074 = vand.u32 %v82, 4294901760
    %v8075 = vsub.f32 %v82, %v8074
    %v8076 = vand.u32 %v8075, 4294901760
    %8077 = vmatpush.msra.mxu0 %v8076
    %v8078 = vand.u32 %v81, 4294901760
    %v8079 = vsub.f32 %v81, %v8078
    %v8080 = vand.u32 %v8079, 4294901760
    %8081 = vmatpush.msra.mxu0 %v8080
    %v8082 = vand.u32 %v7559, 4294901760
    %8083 = vmatmul.f32.gmra.mxu0 %v8082
    %v8084 = vpop.f32.mrf.mxu0
    %v8085 = vadd.f32 %v7968, %v8084
    %v8086 = vand.u32 %v7562, 4294901760
    %8087 = vmatmul.f32.gmra.mxu0 %v8086
    %v8088 = vpop.f32.mrf.mxu0
    %v8089 = vadd.f32 %v7974, %v8088
    %v8090 = vand.u32 %v7565, 4294901760
    %8091 = vmatmul.f32.gmra.mxu0 %v8090
    %v8092 = vpop.f32.mrf.mxu0
    %v8093 = vadd.f32 %v7980, %v8092
    %v8094 = vand.u32 %v7568, 4294901760
    %8095 = vmatmul.f32.gmra.mxu0 %v8094
    %v8096 = vpop.f32.mrf.mxu0
    %v8097 = vadd.f32 %v7986, %v8096
    %v8098 = vand.u32 %v7571, 4294901760
    %8099 = vmatmul.f32.gmra.mxu0 %v8098
    %v8100 = vpop.f32.mrf.mxu0
    %v8101 = vadd.f32 %v7992, %v8100
    %v8102 = vand.u32 %v7574, 4294901760
    %8103 = vmatmul.f32.gmra.mxu0 %v8102
    %v8104 = vpop.f32.mrf.mxu0
    %v8105 = vadd.f32 %v7998, %v8104
    %v8106 = vand.u32 %v7577, 4294901760
    %8107 = vmatmul.f32.gmra.mxu0 %v8106
    %v8108 = vpop.f32.mrf.mxu0
    %v8109 = vadd.f32 %v8004, %v8108
    %v8110 = vand.u32 %v7580, 4294901760
    %8111 = vmatmul.f32.gmra.mxu0 %v8110
    %v8112 = vpop.f32.mrf.mxu0
    %v8113 = vadd.f32 %v8010, %v8112
    %v8114 = vand.u32 %v7583, 4294901760
    %8115 = vmatmul.f32.gmra.mxu0 %v8114
    %v8116 = vpop.f32.mrf.mxu0
    %v8117 = vadd.f32 %v8016, %v8116
    %v8118 = vand.u32 %v7586, 4294901760
    %8119 = vmatmul.f32.gmra.mxu0 %v8118
    %v8120 = vpop.f32.mrf.mxu0
    %v8121 = vadd.f32 %v8022, %v8120
    %v8122 = vand.u32 %v7589, 4294901760
    %8123 = vmatmul.f32.gmra.mxu0 %v8122
    %v8124 = vpop.f32.mrf.mxu0
    %v8125 = vadd.f32 %v8028, %v8124
    %v8126 = vand.u32 %v7592, 4294901760
    %8127 = vmatmul.f32.gmra.mxu0 %v8126
    %v8128 = vpop.f32.mrf.mxu0
    %v8129 = vadd.f32 %v8034, %v8128
    %v8130 = vand.u32 %v7595, 4294901760
    %8131 = vmatmul.f32.gmra.mxu0 %v8130
    %v8132 = vpop.f32.mrf.mxu0
    %v8133 = vadd.f32 %v8040, %v8132
    %v8134 = vand.u32 %v7598, 4294901760
    %8135 = vmatmul.f32.gmra.mxu0 %v8134
    %v8136 = vpop.f32.mrf.mxu0
    %v8137 = vadd.f32 %v8046, %v8136
    %v8138 = vand.u32 %v7601, 4294901760
    %8139 = vmatmul.f32.gmra.mxu0 %v8138
    %v8140 = vpop.f32.mrf.mxu0
    %v8141 = vadd.f32 %v8052, %v8140
    %v8142 = vand.u32 %v7604, 4294901760
    %8143 = vmatmul.f32.gmra.mxu0 %v8142
    %v8144 = vpop.f32.mrf.mxu0
    %v8145 = vadd.f32 %v8058, %v8144
    %8146 = vdwg.mxu0
    %8147 = vmatpush.msra.mxu0 0.0
    %8148 = vmatpush.msra.mxu0 0.0
    %8149 = vmatpush.msra.mxu0 0.0
    %8150 = vmatpush.msra.mxu0 0.0
    %8151 = vmatpush.msra.mxu0 0.0
    %8152 = vmatpush.msra.mxu0 0.0
    %8153 = vmatpush.msra.mxu0 0.0
    %8154 = vmatpush.msra.mxu0 0.0
    %8155 = vmatpush.msra.mxu0 0.0
    %8156 = vmatpush.msra.mxu0 0.0
    %8157 = vmatpush.msra.mxu0 0.0
    %8158 = vmatpush.msra.mxu0 0.0
    %8159 = vmatpush.msra.mxu0 0.0
    %8160 = vmatpush.msra.mxu0 0.0
    %v8161 = vand.u32 %v82, 4294901760
    %8162 = vmatpush.msra.mxu0 %v8161
    %v8163 = vand.u32 %v81, 4294901760
    %8164 = vmatpush.msra.mxu0 %v8163
    %v8165 = vand.u32 %v7559, 4294901760
    %8166 = vmatmul.f32.gmra.mxu0 %v8165
    %v8167 = vpop.f32.mrf.mxu0
    %v8168 = vadd.f32 %v8085, %v8167
    %v8169 = vand.u32 %v7562, 4294901760
    %8170 = vmatmul.f32.gmra.mxu0 %v8169
    %v8171 = vpop.f32.mrf.mxu0
    %v8172 = vadd.f32 %v8089, %v8171
    %v8173 = vand.u32 %v7565, 4294901760
    %8174 = vmatmul.f32.gmra.mxu0 %v8173
    %v8175 = vpop.f32.mrf.mxu0
    %v8176 = vadd.f32 %v8093, %v8175
    %v8177 = vand.u32 %v7568, 4294901760
    %8178 = vmatmul.f32.gmra.mxu0 %v8177
    %v8179 = vpop.f32.mrf.mxu0
    %v8180 = vadd.f32 %v8097, %v8179
    %v8181 = vand.u32 %v7571, 4294901760
    %8182 = vmatmul.f32.gmra.mxu0 %v8181
    %v8183 = vpop.f32.mrf.mxu0
    %v8184 = vadd.f32 %v8101, %v8183
    %v8185 = vand.u32 %v7574, 4294901760
    %8186 = vmatmul.f32.gmra.mxu0 %v8185
    %v8187 = vpop.f32.mrf.mxu0
    %v8188 = vadd.f32 %v8105, %v8187
    %v8189 = vand.u32 %v7577, 4294901760
    %8190 = vmatmul.f32.gmra.mxu0 %v8189
    %v8191 = vpop.f32.mrf.mxu0
    %v8192 = vadd.f32 %v8109, %v8191
    %v8193 = vand.u32 %v7580, 4294901760
    %8194 = vmatmul.f32.gmra.mxu0 %v8193
    %v8195 = vpop.f32.mrf.mxu0
    %v8196 = vadd.f32 %v8113, %v8195
    %v8197 = vand.u32 %v7583, 4294901760
    %8198 = vmatmul.f32.gmra.mxu0 %v8197
    %v8199 = vpop.f32.mrf.mxu0
    %v8200 = vadd.f32 %v8117, %v8199
    %v8201 = vand.u32 %v7586, 4294901760
    %8202 = vmatmul.f32.gmra.mxu0 %v8201
    %v8203 = vpop.f32.mrf.mxu0
    %v8204 = vadd.f32 %v8121, %v8203
    %v8205 = vand.u32 %v7589, 4294901760
    %8206 = vmatmul.f32.gmra.mxu0 %v8205
    %v8207 = vpop.f32.mrf.mxu0
    %v8208 = vadd.f32 %v8125, %v8207
    %v8209 = vand.u32 %v7592, 4294901760
    %8210 = vmatmul.f32.gmra.mxu0 %v8209
    %v8211 = vpop.f32.mrf.mxu0
    %v8212 = vadd.f32 %v8129, %v8211
    %v8213 = vand.u32 %v7595, 4294901760
    %8214 = vmatmul.f32.gmra.mxu0 %v8213
    %v8215 = vpop.f32.mrf.mxu0
    %v8216 = vadd.f32 %v8133, %v8215
    %v8217 = vand.u32 %v7598, 4294901760
    %8218 = vmatmul.f32.gmra.mxu0 %v8217
    %v8219 = vpop.f32.mrf.mxu0
    %v8220 = vadd.f32 %v8137, %v8219
    %v8221 = vand.u32 %v7601, 4294901760
    %8222 = vmatmul.f32.gmra.mxu0 %v8221
    %v8223 = vpop.f32.mrf.mxu0
    %v8224 = vadd.f32 %v8141, %v8223
    %v8225 = vand.u32 %v7604, 4294901760
    %8226 = vmatmul.f32.gmra.mxu0 %v8225
    %v8227 = vpop.f32.mrf.mxu0
    %v8228 = vadd.f32 %v8145, %v8227
    %8229 = vdwg.mxu0
    %v8230 = vmul.f32 %v1720, %v1720
    %v8231 = vmul.f32 %v1724, %v1724
    %v8232 = vmul.f32 %v1728, %v1728
    %v8233 = vmul.f32 %v1732, %v1732
    %v8234 = vmul.f32 %v1736, %v1736
    %v8235 = vmul.f32 %v1740, %v1740
    %v8236 = vmul.f32 %v1744, %v1744
    %v8237 = vmul.f32 %v1748, %v1748
    %v8238 = vmul.f32 %v1752, %v1752
    %v8239 = vmul.f32 %v1756, %v1756
    %v8240 = vmul.f32 %v1760, %v1760
    %v8241 = vmul.f32 %v1764, %v1764
    %v8242 = vmul.f32 %v1768, %v1768
    %v8243 = vmul.f32 %v1772, %v1772
    %v8244 = vmul.f32 %v1776, %v1776
    %v8245 = vmul.f32 %v1780, %v1780
    %v8246 = vmul.f32 %v3320, %v3320
    %v8247 = vmul.f32 %v3324, %v3324
    %v8248 = vmul.f32 %v3328, %v3328
    %v8249 = vmul.f32 %v3332, %v3332
    %v8250 = vmul.f32 %v3336, %v3336
    %v8251 = vmul.f32 %v3340, %v3340
    %v8252 = vmul.f32 %v3344, %v3344
    %v8253 = vmul.f32 %v3348, %v3348
    %v8254 = vmul.f32 %v3352, %v3352
    %v8255 = vmul.f32 %v3356, %v3356
    %v8256 = vmul.f32 %v3360, %v3360
    %v8257 = vmul.f32 %v3364, %v3364
    %v8258 = vmul.f32 %v3368, %v3368
    %v8259 = vmul.f32 %v3372, %v3372
    %v8260 = vmul.f32 %v3376, %v3376
    %v8261 = vmul.f32 %v3380, %v3380
    %v8262 = vmul.f32 %v1720, %v3320
    %v8263 = vmul.f32 %v1724, %v3324
    %v8264 = vmul.f32 %v1728, %v3328
    %v8265 = vmul.f32 %v1732, %v3332
    %v8266 = vmul.f32 %v1736, %v3336
    %v8267 = vmul.f32 %v1740, %v3340
    %v8268 = vmul.f32 %v1744, %v3344
    %v8269 = vmul.f32 %v1748, %v3348
    %v8270 = vmul.f32 %v1752, %v3352
    %v8271 = vmul.f32 %v1756, %v3356
    %v8272 = vmul.f32 %v1760, %v3360
    %v8273 = vmul.f32 %v1764, %v3364
    %v8274 = vmul.f32 %v1768, %v3368
    %v8275 = vmul.f32 %v1772, %v3372
    %v8276 = vmul.f32 %v1776, %v3376
    %v8277 = vmul.f32 %v1780, %v3380
    %v8278 = vsub.f32 %v4936, %v8230
    %v8279 = vsub.f32 %v4940, %v8231
    %v8280 = vsub.f32 %v4944, %v8232
    %v8281 = vsub.f32 %v4948, %v8233
    %v8282 = vsub.f32 %v4952, %v8234
    %v8283 = vsub.f32 %v4956, %v8235
    %v8284 = vsub.f32 %v4960, %v8236
    %v8285 = vsub.f32 %v4964, %v8237
    %v8286 = vsub.f32 %v4968, %v8238
    %v8287 = vsub.f32 %v4972, %v8239
    %v8288 = vsub.f32 %v4976, %v8240
    %v8289 = vsub.f32 %v4980, %v8241
    %v8290 = vsub.f32 %v4984, %v8242
    %v8291 = vsub.f32 %v4988, %v8243
    %v8292 = vsub.f32 %v4992, %v8244
    %v8293 = vsub.f32 %v4996, %v8245
    %v8294 = vsub.f32 %v6552, %v8246
    %v8295 = vsub.f32 %v6556, %v8247
    %v8296 = vsub.f32 %v6560, %v8248
    %v8297 = vsub.f32 %v6564, %v8249
    %v8298 = vsub.f32 %v6568, %v8250
    %v8299 = vsub.f32 %v6572, %v8251
    %v8300 = vsub.f32 %v6576, %v8252
    %v8301 = vsub.f32 %v6580, %v8253
    %v8302 = vsub.f32 %v6584, %v8254
    %v8303 = vsub.f32 %v6588, %v8255
    %v8304 = vsub.f32 %v6592, %v8256
    %v8305 = vsub.f32 %v6596, %v8257
    %v8306 = vsub.f32 %v6600, %v8258
    %v8307 = vsub.f32 %v6604, %v8259
    %v8308 = vsub.f32 %v6608, %v8260
    %v8309 = vsub.f32 %v6612, %v8261
    %v8310 = vsub.f32 %v8168, %v8262
    %v8311 = vsub.f32 %v8172, %v8263
    %v8312 = vsub.f32 %v8176, %v8264
    %v8313 = vsub.f32 %v8180, %v8265
    %v8314 = vsub.f32 %v8184, %v8266
    %v8315 = vsub.f32 %v8188, %v8267
    %v8316 = vsub.f32 %v8192, %v8268
    %v8317 = vsub.f32 %v8196, %v8269
    %v8318 = vsub.f32 %v8200, %v8270
    %v8319 = vsub.f32 %v8204, %v8271
    %v8320 = vsub.f32 %v8208, %v8272
    %v8321 = vsub.f32 %v8212, %v8273
    %v8322 = vsub.f32 %v8216, %v8274
    %v8323 = vsub.f32 %v8220, %v8275
    %v8324 = vsub.f32 %v8224, %v8276
    %v8325 = vsub.f32 %v8228, %v8277
    %v8326 = vmul.f32 %v8262, 2.0
    %v8327 = vmul.f32 %v8263, 2.0
    %v8328 = vmul.f32 %v8264, 2.0
    %v8329 = vmul.f32 %v8265, 2.0
    %v8330 = vmul.f32 %v8266, 2.0
    %v8331 = vmul.f32 %v8267, 2.0
    %v8332 = vmul.f32 %v8268, 2.0
    %v8333 = vmul.f32 %v8269, 2.0
    %v8334 = vmul.f32 %v8270, 2.0
    %v8335 = vmul.f32 %v8271, 2.0
    %v8336 = vmul.f32 %v8272, 2.0
    %v8337 = vmul.f32 %v8273, 2.0
    %v8338 = vmul.f32 %v8274, 2.0
    %v8339 = vmul.f32 %v8275, 2.0
    %v8340 = vmul.f32 %v8276, 2.0
    %v8341 = vmul.f32 %v8277, 2.0
    %v8342 = vadd.f32 %v8326, 0.0001
    %v8343 = vadd.f32 %v8327, 0.0001
    %v8344 = vadd.f32 %v8328, 0.0001
    %v8345 = vadd.f32 %v8329, 0.0001
    %v8346 = vadd.f32 %v8330, 0.0001
    %v8347 = vadd.f32 %v8331, 0.0001
    %v8348 = vadd.f32 %v8332, 0.0001
    %v8349 = vadd.f32 %v8333, 0.0001
    %v8350 = vadd.f32 %v8334, 0.0001
    %v8351 = vadd.f32 %v8335, 0.0001
    %v8352 = vadd.f32 %v8336, 0.0001
    %v8353 = vadd.f32 %v8337, 0.0001
    %v8354 = vadd.f32 %v8338, 0.0001
    %v8355 = vadd.f32 %v8339, 0.0001
    %v8356 = vadd.f32 %v8340, 0.0001
    %v8357 = vadd.f32 %v8341, 0.0001
    %v8358 = vmul.f32 %v8310, 2.0
    %v8359 = vmul.f32 %v8311, 2.0
    %v8360 = vmul.f32 %v8312, 2.0
    %v8361 = vmul.f32 %v8313, 2.0
    %v8362 = vmul.f32 %v8314, 2.0
    %v8363 = vmul.f32 %v8315, 2.0
    %v8364 = vmul.f32 %v8316, 2.0
    %v8365 = vmul.f32 %v8317, 2.0
    %v8366 = vmul.f32 %v8318, 2.0
    %v8367 = vmul.f32 %v8319, 2.0
    %v8368 = vmul.f32 %v8320, 2.0
    %v8369 = vmul.f32 %v8321, 2.0
    %v8370 = vmul.f32 %v8322, 2.0
    %v8371 = vmul.f32 %v8323, 2.0
    %v8372 = vmul.f32 %v8324, 2.0
    %v8373 = vmul.f32 %v8325, 2.0
    %v8374 = vadd.f32 %v8358, 0.0009
    %v8375 = vadd.f32 %v8359, 0.0009
    %v8376 = vadd.f32 %v8360, 0.0009
    %v8377 = vadd.f32 %v8361, 0.0009
    %v8378 = vadd.f32 %v8362, 0.0009
    %v8379 = vadd.f32 %v8363, 0.0009
    %v8380 = vadd.f32 %v8364, 0.0009
    %v8381 = vadd.f32 %v8365, 0.0009
    %v8382 = vadd.f32 %v8366, 0.0009
    %v8383 = vadd.f32 %v8367, 0.0009
    %v8384 = vadd.f32 %v8368, 0.0009
    %v8385 = vadd.f32 %v8369, 0.0009
    %v8386 = vadd.f32 %v8370, 0.0009
    %v8387 = vadd.f32 %v8371, 0.0009
    %v8388 = vadd.f32 %v8372, 0.0009
    %v8389 = vadd.f32 %v8373, 0.0009
    %v8390 = vmul.f32 %v8342, %v8374
    %v8391 = vmul.f32 %v8343, %v8375
    %v8392 = vmul.f32 %v8344, %v8376
    %v8393 = vmul.f32 %v8345, %v8377
    %v8394 = vmul.f32 %v8346, %v8378
    %v8395 = vmul.f32 %v8347, %v8379
    %v8396 = vmul.f32 %v8348, %v8380
    %v8397 = vmul.f32 %v8349, %v8381
    %v8398 = vmul.f32 %v8350, %v8382
    %v8399 = vmul.f32 %v8351, %v8383
    %v8400 = vmul.f32 %v8352, %v8384
    %v8401 = vmul.f32 %v8353, %v8385
    %v8402 = vmul.f32 %v8354, %v8386
    %v8403 = vmul.f32 %v8355, %v8387
    %v8404 = vmul.f32 %v8356, %v8388
    %v8405 = vmul.f32 %v8357, %v8389
    %v8406 = vadd.f32 %v8230, %v8246
    %v8407 = vadd.f32 %v8231, %v8247
    %v8408 = vadd.f32 %v8232, %v8248
    %v8409 = vadd.f32 %v8233, %v8249
    %v8410 = vadd.f32 %v8234, %v8250
    %v8411 = vadd.f32 %v8235, %v8251
    %v8412 = vadd.f32 %v8236, %v8252
    %v8413 = vadd.f32 %v8237, %v8253
    %v8414 = vadd.f32 %v8238, %v8254
    %v8415 = vadd.f32 %v8239, %v8255
    %v8416 = vadd.f32 %v8240, %v8256
    %v8417 = vadd.f32 %v8241, %v8257
    %v8418 = vadd.f32 %v8242, %v8258
    %v8419 = vadd.f32 %v8243, %v8259
    %v8420 = vadd.f32 %v8244, %v8260
    %v8421 = vadd.f32 %v8245, %v8261
    %v8422 = vadd.f32 %v8406, 0.0001
    %v8423 = vadd.f32 %v8407, 0.0001
    %v8424 = vadd.f32 %v8408, 0.0001
    %v8425 = vadd.f32 %v8409, 0.0001
    %v8426 = vadd.f32 %v8410, 0.0001
    %v8427 = vadd.f32 %v8411, 0.0001
    %v8428 = vadd.f32 %v8412, 0.0001
    %v8429 = vadd.f32 %v8413, 0.0001
    %v8430 = vadd.f32 %v8414, 0.0001
    %v8431 = vadd.f32 %v8415, 0.0001
    %v8432 = vadd.f32 %v8416, 0.0001
    %v8433 = vadd.f32 %v8417, 0.0001
    %v8434 = vadd.f32 %v8418, 0.0001
    %v8435 = vadd.f32 %v8419, 0.0001
    %v8436 = vadd.f32 %v8420, 0.0001
    %v8437 = vadd.f32 %v8421, 0.0001
    %v8438 = vadd.f32 %v8278, %v8294
    %v8439 = vadd.f32 %v8279, %v8295
    %v8440 = vadd.f32 %v8280, %v8296
    %v8441 = vadd.f32 %v8281, %v8297
    %v8442 = vadd.f32 %v8282, %v8298
    %v8443 = vadd.f32 %v8283, %v8299
    %v8444 = vadd.f32 %v8284, %v8300
    %v8445 = vadd.f32 %v8285, %v8301
    %v8446 = vadd.f32 %v8286, %v8302
    %v8447 = vadd.f32 %v8287, %v8303
    %v8448 = vadd.f32 %v8288, %v8304
    %v8449 = vadd.f32 %v8289, %v8305
    %v8450 = vadd.f32 %v8290, %v8306
    %v8451 = vadd.f32 %v8291, %v8307
    %v8452 = vadd.f32 %v8292, %v8308
    %v8453 = vadd.f32 %v8293, %v8309
    %v8454 = vadd.f32 %v8438, 0.0009
    %v8455 = vadd.f32 %v8439, 0.0009
    %v8456 = vadd.f32 %v8440, 0.0009
    %v8457 = vadd.f32 %v8441, 0.0009
    %v8458 = vadd.f32 %v8442, 0.0009
    %v8459 = vadd.f32 %v8443, 0.0009
    %v8460 = vadd.f32 %v8444, 0.0009
    %v8461 = vadd.f32 %v8445, 0.0009
    %v8462 = vadd.f32 %v8446, 0.0009
    %v8463 = vadd.f32 %v8447, 0.0009
    %v8464 = vadd.f32 %v8448, 0.0009
    %v8465 = vadd.f32 %v8449, 0.0009
    %v8466 = vadd.f32 %v8450, 0.0009
    %v8467 = vadd.f32 %v8451, 0.0009
    %v8468 = vadd.f32 %v8452, 0.0009
    %v8469 = vadd.f32 %v8453, 0.0009
    %v8470 = vmul.f32 %v8422, %v8454
    %v8471 = vmul.f32 %v8423, %v8455
    %v8472 = vmul.f32 %v8424, %v8456
    %v8473 = vmul.f32 %v8425, %v8457
    %v8474 = vmul.f32 %v8426, %v8458
    %v8475 = vmul.f32 %v8427, %v8459
    %v8476 = vmul.f32 %v8428, %v8460
    %v8477 = vmul.f32 %v8429, %v8461
    %v8478 = vmul.f32 %v8430, %v8462
    %v8479 = vmul.f32 %v8431, %v8463
    %v8480 = vmul.f32 %v8432, %v8464
    %v8481 = vmul.f32 %v8433, %v8465
    %v8482 = vmul.f32 %v8434, %v8466
    %v8483 = vmul.f32 %v8435, %v8467
    %v8484 = vmul.f32 %v8436, %v8468
    %v8485 = vmul.f32 %v8437, %v8469
    %v8486 = vrcp.pop %v8470
    %v8487 = vrcp.pop %v8471
    %v8488 = vrcp.pop %v8472
    %v8489 = vrcp.pop %v8473
    %v8490 = vrcp.pop %v8474
    %v8491 = vrcp.pop %v8475
    %v8492 = vrcp.pop %v8476
    %v8493 = vrcp.pop %v8477
    %v8494 = vrcp.pop %v8478
    %v8495 = vrcp.pop %v8479
    %v8496 = vrcp.pop %v8480
    %v8497 = vrcp.pop %v8481
    %v8498 = vrcp.pop %v8482
    %v8499 = vrcp.pop %v8483
    %v8500 = vrcp.pop %v8484
    %v8501 = vrcp.pop %v8485
    %v8502 = vmul.f32 %v8470, %v8486
    %v8503 = vmul.f32 %v8471, %v8487
    %v8504 = vmul.f32 %v8472, %v8488
    %v8505 = vmul.f32 %v8473, %v8489
    %v8506 = vmul.f32 %v8474, %v8490
    %v8507 = vmul.f32 %v8475, %v8491
    %v8508 = vmul.f32 %v8476, %v8492
    %v8509 = vmul.f32 %v8477, %v8493
    %v8510 = vmul.f32 %v8478, %v8494
    %v8511 = vmul.f32 %v8479, %v8495
    %v8512 = vmul.f32 %v8480, %v8496
    %v8513 = vmul.f32 %v8481, %v8497
    %v8514 = vmul.f32 %v8482, %v8498
    %v8515 = vmul.f32 %v8483, %v8499
    %v8516 = vmul.f32 %v8484, %v8500
    %v8517 = vmul.f32 %v8485, %v8501
    %v8518 = vsub.f32 2.0, %v8502
    %v8519 = vsub.f32 2.0, %v8503
    %v8520 = vsub.f32 2.0, %v8504
    %v8521 = vsub.f32 2.0, %v8505
    %v8522 = vsub.f32 2.0, %v8506
    %v8523 = vsub.f32 2.0, %v8507
    %v8524 = vsub.f32 2.0, %v8508
    %v8525 = vsub.f32 2.0, %v8509
    %v8526 = vsub.f32 2.0, %v8510
    %v8527 = vsub.f32 2.0, %v8511
    %v8528 = vsub.f32 2.0, %v8512
    %v8529 = vsub.f32 2.0, %v8513
    %v8530 = vsub.f32 2.0, %v8514
    %v8531 = vsub.f32 2.0, %v8515
    %v8532 = vsub.f32 2.0, %v8516
    %v8533 = vsub.f32 2.0, %v8517
    %v8534 = vmul.f32 %v8486, %v8518
    %v8535 = vmul.f32 %v8487, %v8519
    %v8536 = vmul.f32 %v8488, %v8520
    %v8537 = vmul.f32 %v8489, %v8521
    %v8538 = vmul.f32 %v8490, %v8522
    %v8539 = vmul.f32 %v8491, %v8523
    %v8540 = vmul.f32 %v8492, %v8524
    %v8541 = vmul.f32 %v8493, %v8525
    %v8542 = vmul.f32 %v8494, %v8526
    %v8543 = vmul.f32 %v8495, %v8527
    %v8544 = vmul.f32 %v8496, %v8528
    %v8545 = vmul.f32 %v8497, %v8529
    %v8546 = vmul.f32 %v8498, %v8530
    %v8547 = vmul.f32 %v8499, %v8531
    %v8548 = vmul.f32 %v8500, %v8532
    %v8549 = vmul.f32 %v8501, %v8533
    %v8550 = vmul.f32 %v8390, %v8534
    %v8551 = vmul.f32 %v8391, %v8535
    %v8552 = vmul.f32 %v8392, %v8536
    %v8553 = vmul.f32 %v8393, %v8537
    %v8554 = vmul.f32 %v8394, %v8538
    %v8555 = vmul.f32 %v8395, %v8539
    %v8556 = vmul.f32 %v8396, %v8540
    %v8557 = vmul.f32 %v8397, %v8541
    %v8558 = vmul.f32 %v8398, %v8542
    %v8559 = vmul.f32 %v8399, %v8543
    %v8560 = vmul.f32 %v8400, %v8544
    %v8561 = vmul.f32 %v8401, %v8545
    %v8562 = vmul.f32 %v8402, %v8546
    %v8563 = vmul.f32 %v8403, %v8547
    %v8564 = vmul.f32 %v8404, %v8548
    %v8565 = vmul.f32 %v8405, %v8549
    %v8566 = vsel %vm181, %v8550, 0.0
    %v8567 = vsel %vm181, %v8551, 0.0
    %v8568 = vadd.f32 %v8566, %v8567
    %v8569 = vsel %vm181, %v8552, 0.0
    %v8570 = vadd.f32 %v8568, %v8569
    %v8571 = vsel %vm181, %v8553, 0.0
    %v8572 = vadd.f32 %v8570, %v8571
    %v8573 = vsel %vm181, %v8554, 0.0
    %v8574 = vadd.f32 %v8572, %v8573
    %v8575 = vsel %vm181, %v8555, 0.0
    %v8576 = vadd.f32 %v8574, %v8575
    %v8577 = vsel %vm181, %v8556, 0.0
    %v8578 = vadd.f32 %v8576, %v8577
    %v8579 = vsel %vm181, %v8557, 0.0
    %v8580 = vadd.f32 %v8578, %v8579
    %v8581 = vsel %vm181, %v8558, 0.0
    %v8582 = vadd.f32 %v8580, %v8581
    %v8583 = vsel %vm181, %v8559, 0.0
    %v8584 = vadd.f32 %v8582, %v8583
    %v8585 = vsel %vm181, %v8560, 0.0
    %v8586 = vadd.f32 %v8584, %v8585
    %v8587 = vsel %vm181, %v8561, 0.0
    %v8588 = vadd.f32 %v8586, %v8587
    %v8589 = vsel %vm181, %v8562, 0.0
    %v8590 = vadd.f32 %v8588, %v8589
    %v8591 = vsel %vm181, %v8563, 0.0
    %v8592 = vadd.f32 %v8590, %v8591
    %v8593 = vsel %vm181, %v8564, 0.0
    %v8594 = vadd.f32 %v8592, %v8593
    %v8595 = vsel %vm181, %v8565, 0.0
    %v8596 = vadd.f32 %v8594, %v8595
    %8597 = vadd.xlane.f32.xlu0 %v8596
    %v8598 = vpop.xlane.xlu0 %8597
    %v8599 = vrot.slane %v8598, 4
    %v8600 = vadd.f32 %v8598, %v8599
    %v8601 = vrot.slane %v8600, 2
    %v8602 = vadd.f32 %v8600, %v8601
    %v8603 = vrot.slane %v8602, 1
    %v8604 = vadd.f32 %v8602, %v8603
    %s8605 = vtos %v8604
    %v8606 = vstv %s8605
    %vm8607 = vcmask 0
    %8608 = vst.msk [vmem:[#allocation10] sm:$0x1] %vm8607, %v8606
    // Predicated region
    $region34: #{tpu_custom_call.1} parent=1 // pred_check
      _
    $region35: #{tpu_custom_call.1} parent=1 // pred_check_branch
      %8610 = sbr.rel (0) target = $region37
    $region36: #{tpu_custom_call.1} parent=1 // pred_region
      %8612 = vsyncadd [#allocation4], 0
      %s8614 = sshll.u32 [#allocation10], 4
      %s8615 = int_to_ptr.vmem [resolvable:$true] %s8614
      %s8616 = sshll.u32 %s4, 4
      %s8617 = int_to_ptr.hbm [resolvable:$true] %s8616
      %8619 = dma.vmem_to_hbm [thread:$0]  %s8615, 16, %s8617, [#allocation4]
    $region37: #{tpu_custom_call.1} parent=1 // pred_fallthru
      _
    // Predicated region
    $region38: #{tpu_custom_call.1} parent=1 // pred_check
      _
    $region39: #{tpu_custom_call.1} parent=1 // pred_check_branch
      %8621 = sbr.rel (0) target = $region41
    $region40: #{tpu_custom_call.1} parent=1 // pred_region
      %8623 = dma.done [#allocation4], 16
    $region41: #{tpu_custom_call.1} parent=1 // pred_fallthru
      _
    %8624 = vsyncpa [#allocation3], 1
    %8625 = vsyncpa [#allocation6], 1
    %8626 = vsyncpa [#allocation9], 1
    %8627 = vsyncpa [#allocation4], 1

</llo_original>
